<compile_context>
chip_gen: v7x
topology: tpu7x:2x2x1
jax: 0.10.0
libtpu: 0.0.40
codegen_flags: <defaults>
</compile_context>

<pallas_src>
import functools

import jax
import jax.numpy as jnp
from jax.experimental import pallas as pl
from jax.experimental.pallas import tpu as pltpu

K = 3  # the module's `k` (Transform(k=3))


# --------------------------------------------------------------------------- #
# helpers
# --------------------------------------------------------------------------- #
def _round_up(a, m):
    return ((a + m - 1) // m) * m


def _pick_chunk(n_pad, max_units):
    """Largest multiple of 128 that divides n_pad and is <= 128*max_units."""
    u = n_pad // 128
    for d in range(min(max_units, u), 0, -1):
        if u % d == 0:
            return 128 * d
    return 128


def _const_spec(a):
    """BlockSpec for a weight/bias that is fully resident every grid step."""
    zeros = (0,) * a.ndim

    def idx(*_):
        return zeros

    return pl.BlockSpec(a.shape, idx)


# --------------------------------------------------------------------------- #
# Kernel A: conv1/conv2/conv3 (1x1 convs) + global max-pool
# --------------------------------------------------------------------------- #
def _conv_pool_kernel(x_ref, w1, b1, w2, b2, w3, b3, pooled_ref, *, bpc, csz):
    """One grid step = one (K, L) slab of columns (bpc batches x csz points).

    x_ref      : (1, 1, K, L) f32, columns ordered (batch-in-group, point)
    pooled_ref : (1, C3, bpc) f32, running max across the chunk grid axis
    weights    : (C_out, C_in) bf16, biases (C_out, 1) f32
    """
    xc = x_ref[0, 0].astype(jnp.bfloat16)                              # (K, L)
    h = jnp.dot(w1[...], xc, preferred_element_type=jnp.float32) + b1[...]
    h = jnp.maximum(h, 0.0)
    h = jnp.dot(w2[...], h.astype(jnp.bfloat16),
                preferred_element_type=jnp.float32) + b2[...]
    h = jnp.maximum(h, 0.0)
    h = jnp.dot(w3[...], h.astype(jnp.bfloat16),
                preferred_element_type=jnp.float32) + b3[...]
    h = jnp.maximum(h, 0.0)                                            # (C3, L)

    @pl.when(pl.program_id(1) == 0)
    def _():
        pooled_ref[...] = jnp.full(pooled_ref.shape, -jnp.inf,
                                   dtype=pooled_ref.dtype)

    for sb in range(bpc):                      # static, small (batches per step)
        seg = h[:, sb * csz:(sb + 1) * csz]                            # (C3, csz)
        g = jnp.max(seg, axis=1, keepdims=True)                        # (C3, 1)
        pooled_ref[0, :, sb:sb + 1] = jnp.maximum(pooled_ref[0, :, sb:sb + 1], g)


def _conv_pool(x, conv_params, *, lane_target=512):
    B, k, N = x.shape
    n_pad = _round_up(N, 128)
    csz = _pick_chunk(n_pad, max(1, lane_target // 128))   # divides n_pad
    cpb = n_pad // csz                                      # chunks per batch
    bpc = max(1, lane_target // csz)                        # batches merged per step
    bpc = min(bpc, max(1, (B + 1) // 2))   # keep >=2 batch groups when B>1 (v7x)
    b_pad = _round_up(B, bpc)
    ng = b_pad // bpc
    L = bpc * csz

    xp = x.astype(jnp.float32)
    if n_pad != N:
        # Replicate the last point: keeps the max-pool exact, no in-kernel mask.
        xp = jnp.concatenate(
            [xp, jnp.broadcast_to(xp[:, :, N - 1:N], (B, k, n_pad - N))], axis=2)
    if b_pad != B:
        xp = jnp.concatenate([xp, jnp.zeros((b_pad - B, k, n_pad), jnp.float32)],
                             axis=0)
    # (b_pad, K, n_pad) -> (ng, cpb, K, L): column (sb*csz + i) of step (g, j)
    # is point (j*csz + i) of batch (g*bpc + sb).  Pure layout plumbing.
    xa = (xp.reshape(ng, bpc, k, cpb, csz)
            .transpose(0, 3, 2, 1, 4)
            .reshape(ng, cpb, k, L))

    (w1, b1), (w2, b2), (w3, b3) = conv_params
    c3 = w3.shape[0]

    flops = 2 * b_pad * n_pad * (k * w1.shape[0]
                                 + w1.shape[0] * w2.shape[0]
                                 + w2.shape[0] * c3)
    bytes_accessed = int(xa.size * 4 + ng * c3 * bpc * 4
                         + sum(int(w.size * w.dtype.itemsize) + int(b.size) * 4
                               for (w, b) in conv_params))

    pooled = pl.pallas_call(
        functools.partial(_conv_pool_kernel, bpc=bpc, csz=csz),
        out_shape=jax.ShapeDtypeStruct((ng, c3, bpc), jnp.float32),
        grid_spec=pltpu.PrefetchScalarGridSpec(
            num_scalar_prefetch=0,
            grid=(ng, cpb),
            in_specs=[
                pl.BlockSpec((1, 1, k, L), lambda g, j: (g, j, 0, 0)),
                _const_spec(w1), _const_spec(b1),
                _const_spec(w2), _const_spec(b2),
                _const_spec(w3), _const_spec(b3),
            ],
            out_specs=pl.BlockSpec((1, c3, bpc), lambda g, j: (g, 0, 0)),
        ),
        compiler_params=pltpu.CompilerParams(
            dimension_semantics=("parallel", "arbitrary"),
            vmem_limit_bytes=32 * 1024 * 1024),
        cost_estimate=pl.CostEstimate(flops=int(flops), transcendentals=0,
                                      bytes_accessed=bytes_accessed),
    )(xa, w1, b1, w2, b2, w3, b3)
    return pooled                     # (ng, C3, bpc); batch b = g*bpc + sb


# --------------------------------------------------------------------------- #
# Kernel B: FC head 1024 -> 512 -> 256 -> K*K, all batches at once
# --------------------------------------------------------------------------- #
def _fc_kernel(g_ref, w4, b4, w5, b5, w6, b6, m_ref):
    g = g_ref[...].astype(jnp.bfloat16)                                # (C3, Bp)
    f = jnp.maximum(jnp.dot(w4[...], g,
                            preferred_element_type=jnp.float32) + b4[...], 0.0)
    f = jnp.maximum(jnp.dot(w5[...], f.astype(jnp.bfloat16),
                            preferred_element_type=jnp.float32) + b5[...], 0.0)
    m_ref[...] = jnp.dot(w6[...], f.astype(jnp.bfloat16),
                         preferred_element_type=jnp.float32) + b6[...]


def _fc_head(pooled_cols, fc_params):
    (w4, b4), (w5, b5), (w6, b6) = fc_params
    c_in, b_pad = pooled_cols.shape
    kk = w6.shape[0]
    return pl.pallas_call(
        _fc_kernel,
        out_shape=jax.ShapeDtypeStruct((kk, b_pad), jnp.float32),
        grid_spec=pltpu.PrefetchScalarGridSpec(
            num_scalar_prefetch=0,
            grid=(1,),
            in_specs=[
                pl.BlockSpec((c_in, b_pad), lambda i: (0, 0)),
                _const_spec(w4), _const_spec(b4),
                _const_spec(w5), _const_spec(b5),
                _const_spec(w6), _const_spec(b6),
            ],
            out_specs=pl.BlockSpec((kk, b_pad), lambda i: (0, 0)),
        ),
        compiler_params=pltpu.CompilerParams(
            dimension_semantics=("arbitrary",),
            vmem_limit_bytes=32 * 1024 * 1024),
    )(pooled_cols, w4, b4, w5, b5, w6, b6)        # (K*K, b_pad)


# --------------------------------------------------------------------------- #
# Kernel C: residual  out[b, j, :] = x[b, j, :] + sum_i mx[b, i, j] * x[b, i, :]
# --------------------------------------------------------------------------- #
def _residual_kernel(m_ref, x_ref, o_ref, *, bc, k):
    for sb in range(bc):                                   # static, small
        xk = x_ref[sb]                                     # (K, csz)
        acc = xk
        for i in range(k):
            coef = m_ref[0, i * k:(i + 1) * k, sb:sb + 1]  # (K, 1) = mx[b, i, :]
            acc = acc + coef * xk[i:i + 1, :]
        o_ref[sb] = acc


def _residual(x, m_cols, *, block_b=8, lane_chunk=2048):
    B, k, N = x.shape
    kk = k * k
    csz = min(lane_chunk, _round_up(N, 128))
    n_pad = _round_up(N, csz)
    nc = n_pad // csz
    bc = min(block_b, B)
    b_pad = _round_up(B, bc)
    ng = b_pad // bc

    xp = x.astype(jnp.float32)
    if n_pad != N:
        xp = jnp.concatenate([xp, jnp.zeros((B, k, n_pad - N), jnp.float32)],
                             axis=2)
    if b_pad != B:
        xp = jnp.concatenate([xp, jnp.zeros((b_pad - B, k, n_pad), jnp.float32)],
                             axis=0)

    mc = m_cols                                            # (kk, B)
    if b_pad != B:
        mc = jnp.concatenate([mc, jnp.zeros((kk, b_pad - B), jnp.float32)], axis=1)
    mg = mc.reshape(kk, ng, bc).transpose(1, 0, 2)         # (ng, kk, bc)

    out = pl.pallas_call(
        functools.partial(_residual_kernel, bc=bc, k=k),
        out_shape=jax.ShapeDtypeStruct((b_pad, k, n_pad), jnp.float32),
        grid_spec=pltpu.PrefetchScalarGridSpec(
            num_scalar_prefetch=0,
            grid=(ng, nc),
            in_specs=[
                pl.BlockSpec((1, kk, bc), lambda g, c: (g, 0, 0)),
                pl.BlockSpec((bc, k, csz), lambda g, c: (g, 0, c)),
            ],
            out_specs=pl.BlockSpec((bc, k, csz), lambda g, c: (g, 0, c)),
        ),
        compiler_params=pltpu.CompilerParams(
            dimension_semantics=("parallel", "parallel"),
            vmem_limit_bytes=32 * 1024 * 1024),
    )(mg, xp)
    return out[:B, :, :N]


# --------------------------------------------------------------------------- #
# Full forward
# --------------------------------------------------------------------------- #
def transform_forward(x, params, *, lane_target=512, res_block_b=8,
                      res_lane_chunk=2048):
    """x: (B, K, N) float32 (PyTorch layout).  Returns (out (B,K,N), mx (B,K,K)).

    params: output of prepare_params(): [(w (out,in) bf16, b (out,1) f32)] * 6.
    """
    B, k, N = x.shape
    assert k == K
    conv_params, fc_params = params[:3], params[3:]

    pooled = _conv_pool(x, conv_params, lane_target=lane_target)   # (ng, C3, bpc)
    ng, c3, bpc = pooled.shape
    b_pad = ng * bpc
    pooled_cols = pooled.transpose(1, 0, 2).reshape(c3, b_pad)     # (C3, b_pad)

    m = _fc_head(pooled_cols, fc_params)                           # (K*K, b_pad)
    m = m[:, :B]
    mx = m.T.reshape(B, k, k)

    out = _residual(x, m, block_b=res_block_b, lane_chunk=res_lane_chunk)
    return out, mx


# --------------------------------------------------------------------------- #
# Parameters (synthetic, deterministic) + eval-mode BN folding
# --------------------------------------------------------------------------- #
def make_raw_params(key):
    dims = [(K, 64), (64, 128), (128, 1024), (1024, 512), (512, 256), (256, K * K)]
    has_bn = [True, True, True, True, True, False]
    raw = []
    for (cin, cout), bn in zip(dims, has_bn):
        key, kw, kb, kg, kbe, km, kv = jax.random.split(key, 7)
        w = jax.random.normal(kw, (cout, cin), jnp.float32) * 0.05
        b = jax.random.normal(kb, (cout,), jnp.float32) * 0.05
        bn_p = None
        if bn:
            bn_p = dict(
                gamma=1.0 + 0.1 * jax.random.normal(kg, (cout,), jnp.float32),
                beta=0.1 * jax.random.normal(kbe, (cout,), jnp.float32),
                running_mean=0.1 * jax.random.normal(km, (cout,), jnp.float32),
                running_var=1.0 + 0.2 * jax.random.uniform(kv, (cout,), jnp.float32),
            )
        raw.append((w, b, bn_p))
    return raw


def prepare_params(raw, eps=1e-5):
    """Fold eval-mode BatchNorm into the conv/fc weights; weights -> bf16."""
    out = []
    for (w, b, bn_p) in raw:
        w = w.astype(jnp.float32)
        b = b.astype(jnp.float32)
        if bn_p is not None:
            s = bn_p["gamma"] / jnp.sqrt(bn_p["running_var"] + eps)
            w = w * s[:, None]
            b = s * (b - bn_p["running_mean"]) + bn_p["beta"]
        out.append((w.astype(jnp.bfloat16), b[:, None]))
    return out


# --------------------------------------------------------------------------- #
# Pure-JAX reference (same bf16 operand / f32 accumulation structure)
# --------------------------------------------------------------------------- #
def reference_forward(x, params):
    (w1, b1), (w2, b2), (w3, b3), (w4, b4), (w5, b5), (w6, b6) = params
    B, k, N = x.shape
    h = x.astype(jnp.float32)
    for (w, b) in ((w1, b1), (w2, b2), (w3, b3)):
        y = jnp.einsum('oc,bcn->bon', w, h.astype(jnp.bfloat16),
                       preferred_element_type=jnp.float32)
        h = jnp.maximum(y + b[None, :, :], 0.0)
    g = jnp.max(h, axis=2)                                      # (B, 1024)
    f = g
    for (w, b) in ((w4, b4), (w5, b5)):
        f = jnp.maximum(
            jnp.einsum('oc,bc->bo', w, f.astype(jnp.bfloat16),
                       preferred_element_type=jnp.float32) + b[:, 0][None, :], 0.0)
    m = jnp.einsum('oc,bc->bo', w6, f.astype(jnp.bfloat16),
                   preferred_element_type=jnp.float32) + b6[:, 0][None, :]
    mx = m.reshape(B, k, k)
    xt = jnp.transpose(x.astype(jnp.float32), (0, 2, 1))        # (B, N, K)
    out = jnp.einsum('bni,bij->bnj', xt, mx,
                     precision=jax.lax.Precision.HIGHEST) + xt
    return jnp.transpose(out, (0, 2, 1)), mx


if __name__ == "__main__":
    key = jax.random.PRNGKey(0)
    kx, kp = jax.random.split(key)

    # Small demo shapes.  N=600 exercises point padding (600 -> 640), multi-chunk
    # pooled accumulation (5 chunks/batch), batch-merged lanes (3 batches/step)
    # and a 2-wide parallel batch-group grid; B=6 exercises the batch grouping.
    B, N = 6, 600
    x = jax.random.normal(kx, (B, K, N), jnp.float32)      # PyTorch layout (B, k, N)
    params = prepare_params(make_raw_params(kp))

    fwd = jax.jit(transform_forward)
    out, mx = fwd(x, params)
    jax.block_until_ready((out, mx))

    out_want, mx_want = reference_forward(x, params)
    assert out.shape == (B, K, N) and mx.shape == (B, K, K)
    # bf16 matmul operands -> allow a small tolerance.
    assert jnp.allclose(mx, mx_want, atol=1e-2, rtol=1e-2), \
        float(jnp.max(jnp.abs(mx - mx_want)))
    assert jnp.allclose(out, out_want, atol=1e-2, rtol=1e-2), \
        float(jnp.max(jnp.abs(out - out_want)))

    print("KERNEL_OK")
</pallas_src>

<mosaic_0001>
module attributes {stable_mosaic.version = 11 : i64} {
  func.func @_conv_pool_kernel(%arg0: i32, %arg1: i32, %arg2: memref<1x1x3x384xf32, #tpu.memory_space<vmem>>, %arg3: memref<64x3xbf16, #tpu.memory_space<vmem>>, %arg4: memref<64x1xf32, #tpu.memory_space<vmem>>, %arg5: memref<128x64xbf16, #tpu.memory_space<vmem>>, %arg6: memref<128x1xf32, #tpu.memory_space<vmem>>, %arg7: memref<1024x128xbf16, #tpu.memory_space<vmem>>, %arg8: memref<1024x1xf32, #tpu.memory_space<vmem>>, %arg9: memref<1x1024x3xf32, #tpu.memory_space<vmem>>) attributes {dimension_semantics = [#tpu.dimension_semantics<parallel>, #tpu.dimension_semantics<arbitrary>], iteration_bounds = array<i64: 2, 5>, scalar_prefetch = 0 : i64, scratch_operands = 0 : i64, tpu.core_type = #tpu.core_type<tc>, window_params = [{transform_indices = @transform_0, window_bounds = array<i64: 1, 1, 3, 384>}, {pipeline_mode = #tpu.pipeline_mode<synchronous>, transform_indices = @transform_1, window_bounds = array<i64: 64, 3>}, {pipeline_mode = #tpu.pipeline_mode<synchronous>, transform_indices = @transform_2, window_bounds = array<i64: 64, 1>}, {pipeline_mode = #tpu.pipeline_mode<synchronous>, transform_indices = @transform_3, window_bounds = array<i64: 128, 64>}, {pipeline_mode = #tpu.pipeline_mode<synchronous>, transform_indices = @transform_4, window_bounds = array<i64: 128, 1>}, {pipeline_mode = #tpu.pipeline_mode<synchronous>, transform_indices = @transform_5, window_bounds = array<i64: 1024, 128>}, {pipeline_mode = #tpu.pipeline_mode<synchronous>, transform_indices = @transform_6, window_bounds = array<i64: 1024, 1>}, {transform_indices = @transform_7, window_bounds = array<i64: 1, 1024, 3>}]} {
    %c0 = arith.constant 0 : index
    %c0_0 = arith.constant 0 : index
    %c0_1 = arith.constant 0 : index
    %c0_2 = arith.constant 0 : index
    %0 = vector.load %arg2[%c0, %c0_0, %c0_1, %c0_2] : memref<1x1x3x384xf32, #tpu.memory_space<vmem>>, vector<1x1x3x384xf32>
    %1 = vector.shape_cast %0 : vector<1x1x3x384xf32> to vector<3x384xf32>
    %2 = arith.truncf %1 : vector<3x384xf32> to vector<3x384xbf16>
    %c0_3 = arith.constant 0 : index
    %c0_4 = arith.constant 0 : index
    %3 = vector.load %arg3[%c0_3, %c0_4] : memref<64x3xbf16, #tpu.memory_space<vmem>>, vector<64x3xbf16>
    %cst = arith.constant dense<0.000000e+00> : vector<64x384xf32>
    %4 = tpu.matmul %3, %2, %cst {dimension_numbers = #tpu.dot_dimension_numbers<[1], [0], [0], [1], [0, 0, 1, 1], [], []>} : vector<64x3xbf16>, vector<3x384xbf16>, vector<64x384xf32> -> vector<64x384xf32>
    %c0_5 = arith.constant 0 : index
    %c0_6 = arith.constant 0 : index
    %5 = vector.load %arg4[%c0_5, %c0_6] : memref<64x1xf32, #tpu.memory_space<vmem>>, vector<64x1xf32>
    %6 = vector.broadcast %5 : vector<64x1xf32> to vector<64x384xf32>
    %7 = arith.addf %4, %6 : vector<64x384xf32>
    %cst_7 = arith.constant 0.000000e+00 : f32
    %8 = vector.broadcast %cst_7 : f32 to vector<64x384xf32>
    %9 = arith.maximumf %7, %8 : vector<64x384xf32>
    %c0_8 = arith.constant 0 : index
    %c0_9 = arith.constant 0 : index
    %10 = vector.load %arg5[%c0_8, %c0_9] : memref<128x64xbf16, #tpu.memory_space<vmem>>, vector<128x64xbf16>
    %11 = arith.truncf %9 : vector<64x384xf32> to vector<64x384xbf16>
    %cst_10 = arith.constant dense<0.000000e+00> : vector<128x384xf32>
    %12 = tpu.matmul %10, %11, %cst_10 {dimension_numbers = #tpu.dot_dimension_numbers<[1], [0], [0], [1], [0, 0, 1, 1], [], []>} : vector<128x64xbf16>, vector<64x384xbf16>, vector<128x384xf32> -> vector<128x384xf32>
    %c0_11 = arith.constant 0 : index
    %c0_12 = arith.constant 0 : index
    %13 = vector.load %arg6[%c0_11, %c0_12] : memref<128x1xf32, #tpu.memory_space<vmem>>, vector<128x1xf32>
    %14 = vector.broadcast %13 : vector<128x1xf32> to vector<128x384xf32>
    %15 = arith.addf %12, %14 : vector<128x384xf32>
    %cst_13 = arith.constant 0.000000e+00 : f32
    %16 = vector.broadcast %cst_13 : f32 to vector<128x384xf32>
    %17 = arith.maximumf %15, %16 : vector<128x384xf32>
    %c0_14 = arith.constant 0 : index
    %c0_15 = arith.constant 0 : index
    %18 = vector.load %arg7[%c0_14, %c0_15] : memref<1024x128xbf16, #tpu.memory_space<vmem>>, vector<1024x128xbf16>
    %19 = arith.truncf %17 : vector<128x384xf32> to vector<128x384xbf16>
    %cst_16 = arith.constant dense<0.000000e+00> : vector<1024x384xf32>
    %20 = tpu.matmul %18, %19, %cst_16 {dimension_numbers = #tpu.dot_dimension_numbers<[1], [0], [0], [1], [0, 0, 1, 1], [], []>} : vector<1024x128xbf16>, vector<128x384xbf16>, vector<1024x384xf32> -> vector<1024x384xf32>
    %c0_17 = arith.constant 0 : index
    %c0_18 = arith.constant 0 : index
    %21 = vector.load %arg8[%c0_17, %c0_18] : memref<1024x1xf32, #tpu.memory_space<vmem>>, vector<1024x1xf32>
    %22 = vector.broadcast %21 : vector<1024x1xf32> to vector<1024x384xf32>
    %23 = arith.addf %20, %22 : vector<1024x384xf32>
    %cst_19 = arith.constant 0.000000e+00 : f32
    %24 = vector.broadcast %cst_19 : f32 to vector<1024x384xf32>
    %25 = arith.maximumf %23, %24 : vector<1024x384xf32>
    %c0_i32 = arith.constant 0 : i32
    %26 = arith.cmpi eq, %arg1, %c0_i32 : i32
    %27 = arith.extui %26 : i1 to i32
    %c0_i32_20 = arith.constant 0 : i32
    %28 = arith.cmpi ne, %27, %c0_i32_20 : i32
    scf.if %28 {
      %cst_40 = arith.constant 0xFF800000 : f32
      %56 = vector.broadcast %cst_40 : f32 to vector<1x1024x3xf32>
      %c0_41 = arith.constant 0 : index
      %c0_42 = arith.constant 0 : index
      %c0_43 = arith.constant 0 : index
      %57 = vector.load %arg9[%c0_41, %c0_42, %c0_43] : memref<1x1024x3xf32, #tpu.memory_space<vmem>>, vector<1x1024x3xf32>
      tpu.vector_store %arg9[%c0_41, %c0_42, %c0_43], %56 {strides = array<i32>} : memref<1x1024x3xf32, #tpu.memory_space<vmem>>, vector<1x1024x3xf32>,
    } else {
    }
    %29 = vector.extract_strided_slice %25 {offsets = [0, 0], sizes = [1024, 128], strides = [1, 1]} : vector<1024x384xf32> to vector<1024x128xf32>
    %cst_21 = arith.constant dense<0xFF800000> : vector<1024xf32>
    %30 = vector.multi_reduction <maximumf>, %29, %cst_21 [1] : vector<1024x128xf32> to vector<1024xf32>
    %31 = vector.shape_cast %30 : vector<1024xf32> to vector<1024x1xf32>
    %c0_22 = arith.constant 0 : index
    %c0_23 = arith.constant 0 : index
    %c0_24 = arith.constant 0 : index
    %32 = vector.load %arg9[%c0_22, %c0_23, %c0_24] : memref<1x1024x3xf32, #tpu.memory_space<vmem>>, vector<1x1024x1xf32>
    %33 = vector.shape_cast %32 : vector<1x1024x1xf32> to vector<1024x1xf32>
    %34 = arith.maximumf %33, %31 : vector<1024x1xf32>
    %c0_25 = arith.constant 0 : index
    %c0_26 = arith.constant 0 : index
    %c0_27 = arith.constant 0 : index
    %35 = vector.load %arg9[%c0_25, %c0_26, %c0_27] : memref<1x1024x3xf32, #tpu.memory_space<vmem>>, vector<1x1024x1xf32>
    %36 = vector.shape_cast %35 : vector<1x1024x1xf32> to vector<1024x1xf32>
    %37 = vector.shape_cast %34 : vector<1024x1xf32> to vector<1x1024x1xf32>
    tpu.vector_store %arg9[%c0_25, %c0_26, %c0_27], %37 {strides = array<i32>} : memref<1x1024x3xf32, #tpu.memory_space<vmem>>, vector<1x1024x1xf32>,
    %38 = vector.extract_strided_slice %25 {offsets = [0, 128], sizes = [1024, 128], strides = [1, 1]} : vector<1024x384xf32> to vector<1024x128xf32>
    %cst_28 = arith.constant dense<0xFF800000> : vector<1024xf32>
    %39 = vector.multi_reduction <maximumf>, %38, %cst_28 [1] : vector<1024x128xf32> to vector<1024xf32>
    %40 = vector.shape_cast %39 : vector<1024xf32> to vector<1024x1xf32>
    %c0_29 = arith.constant 0 : index
    %c0_30 = arith.constant 0 : index
    %c1 = arith.constant 1 : index
    %41 = vector.load %arg9[%c0_29, %c0_30, %c1] : memref<1x1024x3xf32, #tpu.memory_space<vmem>>, vector<1x1024x1xf32>
    %42 = vector.shape_cast %41 : vector<1x1024x1xf32> to vector<1024x1xf32>
    %43 = arith.maximumf %42, %40 : vector<1024x1xf32>
    %c0_31 = arith.constant 0 : index
    %c0_32 = arith.constant 0 : index
    %c1_33 = arith.constant 1 : index
    %44 = vector.load %arg9[%c0_31, %c0_32, %c1_33] : memref<1x1024x3xf32, #tpu.memory_space<vmem>>, vector<1x1024x1xf32>
    %45 = vector.shape_cast %44 : vector<1x1024x1xf32> to vector<1024x1xf32>
    %46 = vector.shape_cast %43 : vector<1024x1xf32> to vector<1x1024x1xf32>
    tpu.vector_store %arg9[%c0_31, %c0_32, %c1_33], %46 {strides = array<i32>} : memref<1x1024x3xf32, #tpu.memory_space<vmem>>, vector<1x1024x1xf32>,
    %47 = vector.extract_strided_slice %25 {offsets = [0, 256], sizes = [1024, 128], strides = [1, 1]} : vector<1024x384xf32> to vector<1024x128xf32>
    %cst_34 = arith.constant dense<0xFF800000> : vector<1024xf32>
    %48 = vector.multi_reduction <maximumf>, %47, %cst_34 [1] : vector<1024x128xf32> to vector<1024xf32>
    %49 = vector.shape_cast %48 : vector<1024xf32> to vector<1024x1xf32>
    %c0_35 = arith.constant 0 : index
    %c0_36 = arith.constant 0 : index
    %c2 = arith.constant 2 : index
    %50 = vector.load %arg9[%c0_35, %c0_36, %c2] : memref<1x1024x3xf32, #tpu.memory_space<vmem>>, vector<1x1024x1xf32>
    %51 = vector.shape_cast %50 : vector<1x1024x1xf32> to vector<1024x1xf32>
    %52 = arith.maximumf %51, %49 : vector<1024x1xf32>
    %c0_37 = arith.constant 0 : index
    %c0_38 = arith.constant 0 : index
    %c2_39 = arith.constant 2 : index
    %53 = vector.load %arg9[%c0_37, %c0_38, %c2_39] : memref<1x1024x3xf32, #tpu.memory_space<vmem>>, vector<1x1024x1xf32>
    %54 = vector.shape_cast %53 : vector<1x1024x1xf32> to vector<1024x1xf32>
    %55 = vector.shape_cast %52 : vector<1024x1xf32> to vector<1x1024x1xf32>
    tpu.vector_store %arg9[%c0_37, %c0_38, %c2_39], %55 {strides = array<i32>} : memref<1x1024x3xf32, #tpu.memory_space<vmem>>, vector<1x1024x1xf32>,
    return
  }
  func.func @transform_0(%arg0: i32, %arg1: i32) -> (i32, i32, i32, i32) {
    %c0_i32 = arith.constant 0 : i32
    %c0_i32_0 = arith.constant 0 : i32
    %c0_i32_1 = arith.constant 0 : i32
    return %arg0, %arg1, %c0_i32, %c0_i32_0 : i32, i32, i32, i32
  }
  func.func @transform_1(%arg0: i32, %arg1: i32) -> (i32, i32) {
    %c0_i32 = arith.constant 0 : i32
    %c0_i32_0 = arith.constant 0 : i32
    %c0_i32_1 = arith.constant 0 : i32
    return %c0_i32, %c0_i32_0 : i32, i32
  }
  func.func @transform_2(%arg0: i32, %arg1: i32) -> (i32, i32) {
    %c0_i32 = arith.constant 0 : i32
    %c0_i32_0 = arith.constant 0 : i32
    %c0_i32_1 = arith.constant 0 : i32
    return %c0_i32, %c0_i32_0 : i32, i32
  }
  func.func @transform_3(%arg0: i32, %arg1: i32) -> (i32, i32) {
    %c0_i32 = arith.constant 0 : i32
    %c0_i32_0 = arith.constant 0 : i32
    %c0_i32_1 = arith.constant 0 : i32
    return %c0_i32, %c0_i32_0 : i32, i32
  }
  func.func @transform_4(%arg0: i32, %arg1: i32) -> (i32, i32) {
    %c0_i32 = arith.constant 0 : i32
    %c0_i32_0 = arith.constant 0 : i32
    %c0_i32_1 = arith.constant 0 : i32
    return %c0_i32, %c0_i32_0 : i32, i32
  }
  func.func @transform_5(%arg0: i32, %arg1: i32) -> (i32, i32) {
    %c0_i32 = arith.constant 0 : i32
    %c0_i32_0 = arith.constant 0 : i32
    %c0_i32_1 = arith.constant 0 : i32
    return %c0_i32, %c0_i32_0 : i32, i32
  }
  func.func @transform_6(%arg0: i32, %arg1: i32) -> (i32, i32) {
    %c0_i32 = arith.constant 0 : i32
    %c0_i32_0 = arith.constant 0 : i32
    %c0_i32_1 = arith.constant 0 : i32
    return %c0_i32, %c0_i32_0 : i32, i32
  }
  func.func @transform_7(%arg0: i32, %arg1: i32) -> (i32, i32, i32) {
    %c0_i32 = arith.constant 0 : i32
    %c0_i32_0 = arith.constant 0 : i32
    %c0_i32_1 = arith.constant 0 : i32
    return %arg0, %c0_i32, %c0_i32_0 : i32, i32, i32
  }
}

module attributes {stable_mosaic.version = 11 : i64} {
  func.func @_fc_kernel(%arg0: i32, %arg1: memref<1024x6xf32, #tpu.memory_space<vmem>>, %arg2: memref<512x1024xbf16, #tpu.memory_space<vmem>>, %arg3: memref<512x1xf32, #tpu.memory_space<vmem>>, %arg4: memref<256x512xbf16, #tpu.memory_space<vmem>>, %arg5: memref<256x1xf32, #tpu.memory_space<vmem>>, %arg6: memref<9x256xbf16, #tpu.memory_space<vmem>>, %arg7: memref<9x1xf32, #tpu.memory_space<vmem>>, %arg8: memref<9x6xf32, #tpu.memory_space<vmem>>) attributes {dimension_semantics = [#tpu.dimension_semantics<arbitrary>], iteration_bounds = array<i64: 1>, scalar_prefetch = 0 : i64, scratch_operands = 0 : i64, tpu.core_type = #tpu.core_type<tc>, window_params = [{pipeline_mode = #tpu.pipeline_mode<synchronous>, transform_indices = @transform_0, window_bounds = array<i64: 1024, 6>}, {pipeline_mode = #tpu.pipeline_mode<synchronous>, transform_indices = @transform_1, window_bounds = array<i64: 512, 1024>}, {pipeline_mode = #tpu.pipeline_mode<synchronous>, transform_indices = @transform_2, window_bounds = array<i64: 512, 1>}, {pipeline_mode = #tpu.pipeline_mode<synchronous>, transform_indices = @transform_3, window_bounds = array<i64: 256, 512>}, {pipeline_mode = #tpu.pipeline_mode<synchronous>, transform_indices = @transform_4, window_bounds = array<i64: 256, 1>}, {pipeline_mode = #tpu.pipeline_mode<synchronous>, transform_indices = @transform_5, window_bounds = array<i64: 9, 256>}, {pipeline_mode = #tpu.pipeline_mode<synchronous>, transform_indices = @transform_6, window_bounds = array<i64: 9, 1>}, {pipeline_mode = #tpu.pipeline_mode<synchronous>, transform_indices = @transform_7, window_bounds = array<i64: 9, 6>}]} {
    %c0 = arith.constant 0 : index
    %c0_0 = arith.constant 0 : index
    %0 = vector.load %arg1[%c0, %c0_0] : memref<1024x6xf32, #tpu.memory_space<vmem>>, vector<1024x6xf32>
    %1 = arith.truncf %0 : vector<1024x6xf32> to vector<1024x6xbf16>
    %c0_1 = arith.constant 0 : index
    %c0_2 = arith.constant 0 : index
    %2 = vector.load %arg2[%c0_1, %c0_2] : memref<512x1024xbf16, #tpu.memory_space<vmem>>, vector<512x1024xbf16>
    %cst = arith.constant dense<0.000000e+00> : vector<512x6xf32>
    %3 = tpu.matmul %2, %1, %cst {dimension_numbers = #tpu.dot_dimension_numbers<[1], [0], [0], [1], [0, 0, 1, 1], [], []>} : vector<512x1024xbf16>, vector<1024x6xbf16>, vector<512x6xf32> -> vector<512x6xf32>
    %c0_3 = arith.constant 0 : index
    %c0_4 = arith.constant 0 : index
    %4 = vector.load %arg3[%c0_3, %c0_4] : memref<512x1xf32, #tpu.memory_space<vmem>>, vector<512x1xf32>
    %5 = vector.broadcast %4 : vector<512x1xf32> to vector<512x6xf32>
    %6 = arith.addf %3, %5 : vector<512x6xf32>
    %cst_5 = arith.constant 0.000000e+00 : f32
    %7 = vector.broadcast %cst_5 : f32 to vector<512x6xf32>
    %8 = arith.maximumf %6, %7 : vector<512x6xf32>
    %c0_6 = arith.constant 0 : index
    %c0_7 = arith.constant 0 : index
    %9 = vector.load %arg4[%c0_6, %c0_7] : memref<256x512xbf16, #tpu.memory_space<vmem>>, vector<256x512xbf16>
    %10 = arith.truncf %8 : vector<512x6xf32> to vector<512x6xbf16>
    %cst_8 = arith.constant dense<0.000000e+00> : vector<256x6xf32>
    %11 = tpu.matmul %9, %10, %cst_8 {dimension_numbers = #tpu.dot_dimension_numbers<[1], [0], [0], [1], [0, 0, 1, 1], [], []>} : vector<256x512xbf16>, vector<512x6xbf16>, vector<256x6xf32> -> vector<256x6xf32>
    %c0_9 = arith.constant 0 : index
    %c0_10 = arith.constant 0 : index
    %12 = vector.load %arg5[%c0_9, %c0_10] : memref<256x1xf32, #tpu.memory_space<vmem>>, vector<256x1xf32>
    %13 = vector.broadcast %12 : vector<256x1xf32> to vector<256x6xf32>
    %14 = arith.addf %11, %13 : vector<256x6xf32>
    %cst_11 = arith.constant 0.000000e+00 : f32
    %15 = vector.broadcast %cst_11 : f32 to vector<256x6xf32>
    %16 = arith.maximumf %14, %15 : vector<256x6xf32>
    %c0_12 = arith.constant 0 : index
    %c0_13 = arith.constant 0 : index
    %17 = vector.load %arg6[%c0_12, %c0_13] : memref<9x256xbf16, #tpu.memory_space<vmem>>, vector<9x256xbf16>
    %18 = arith.truncf %16 : vector<256x6xf32> to vector<256x6xbf16>
    %cst_14 = arith.constant dense<0.000000e+00> : vector<9x6xf32>
    %19 = tpu.matmul %17, %18, %cst_14 {dimension_numbers = #tpu.dot_dimension_numbers<[1], [0], [0], [1], [0, 0, 1, 1], [], []>} : vector<9x256xbf16>, vector<256x6xbf16>, vector<9x6xf32> -> vector<9x6xf32>
    %c0_15 = arith.constant 0 : index
    %c0_16 = arith.constant 0 : index
    %20 = vector.load %arg7[%c0_15, %c0_16] : memref<9x1xf32, #tpu.memory_space<vmem>>, vector<9x1xf32>
    %21 = vector.broadcast %20 : vector<9x1xf32> to vector<9x6xf32>
    %22 = arith.addf %19, %21 : vector<9x6xf32>
    %c0_17 = arith.constant 0 : index
    %c0_18 = arith.constant 0 : index
    %23 = vector.load %arg8[%c0_17, %c0_18] : memref<9x6xf32, #tpu.memory_space<vmem>>, vector<9x6xf32>
    tpu.vector_store %arg8[%c0_17, %c0_18], %22 {strides = array<i32>} : memref<9x6xf32, #tpu.memory_space<vmem>>, vector<9x6xf32>,
    return
  }
  func.func @transform_0(%arg0: i32) -> (i32, i32) {
    %c0_i32 = arith.constant 0 : i32
    %c0_i32_0 = arith.constant 0 : i32
    %c0_i32_1 = arith.constant 0 : i32
    return %c0_i32, %c0_i32_0 : i32, i32
  }
  func.func @transform_1(%arg0: i32) -> (i32, i32) {
    %c0_i32 = arith.constant 0 : i32
    %c0_i32_0 = arith.constant 0 : i32
    %c0_i32_1 = arith.constant 0 : i32
    return %c0_i32, %c0_i32_0 : i32, i32
  }
  func.func @transform_2(%arg0: i32) -> (i32, i32) {
    %c0_i32 = arith.constant 0 : i32
    %c0_i32_0 = arith.constant 0 : i32
    %c0_i32_1 = arith.constant 0 : i32
    return %c0_i32, %c0_i32_0 : i32, i32
  }
  func.func @transform_3(%arg0: i32) -> (i32, i32) {
    %c0_i32 = arith.constant 0 : i32
    %c0_i32_0 = arith.constant 0 : i32
    %c0_i32_1 = arith.constant 0 : i32
    return %c0_i32, %c0_i32_0 : i32, i32
  }
  func.func @transform_4(%arg0: i32) -> (i32, i32) {
    %c0_i32 = arith.constant 0 : i32
    %c0_i32_0 = arith.constant 0 : i32
    %c0_i32_1 = arith.constant 0 : i32
    return %c0_i32, %c0_i32_0 : i32, i32
  }
  func.func @transform_5(%arg0: i32) -> (i32, i32) {
    %c0_i32 = arith.constant 0 : i32
    %c0_i32_0 = arith.constant 0 : i32
    %c0_i32_1 = arith.constant 0 : i32
    return %c0_i32, %c0_i32_0 : i32, i32
  }
  func.func @transform_6(%arg0: i32) -> (i32, i32) {
    %c0_i32 = arith.constant 0 : i32
    %c0_i32_0 = arith.constant 0 : i32
    %c0_i32_1 = arith.constant 0 : i32
    return %c0_i32, %c0_i32_0 : i32, i32
  }
  func.func @transform_7(%arg0: i32) -> (i32, i32) {
    %c0_i32 = arith.constant 0 : i32
    %c0_i32_0 = arith.constant 0 : i32
    %c0_i32_1 = arith.constant 0 : i32
    return %c0_i32, %c0_i32_0 : i32, i32
  }
}

module attributes {stable_mosaic.version = 11 : i64} {
  func.func @_residual_kernel(%arg0: i32, %arg1: i32, %arg2: memref<1x9x6xf32, #tpu.memory_space<vmem>>, %arg3: memref<6x3x640xf32, #tpu.memory_space<vmem>>, %arg4: memref<6x3x640xf32, #tpu.memory_space<vmem>>) attributes {dimension_semantics = [#tpu.dimension_semantics<parallel>, #tpu.dimension_semantics<parallel>], iteration_bounds = array<i64: 1, 1>, scalar_prefetch = 0 : i64, scratch_operands = 0 : i64, tpu.core_type = #tpu.core_type<tc>, window_params = [{transform_indices = @transform_0, window_bounds = array<i64: 1, 9, 6>}, {transform_indices = @transform_1, window_bounds = array<i64: 6, 3, 640>}, {transform_indices = @transform_2, window_bounds = array<i64: 6, 3, 640>}]} {
    %c0 = arith.constant 0 : index
    %c0_0 = arith.constant 0 : index
    %c0_1 = arith.constant 0 : index
    %0 = vector.load %arg3[%c0, %c0_0, %c0_1] : memref<6x3x640xf32, #tpu.memory_space<vmem>>, vector<1x3x640xf32>
    %1 = vector.shape_cast %0 : vector<1x3x640xf32> to vector<3x640xf32>
    %c0_2 = arith.constant 0 : index
    %c0_3 = arith.constant 0 : index
    %c0_4 = arith.constant 0 : index
    %2 = vector.load %arg2[%c0_2, %c0_3, %c0_4] : memref<1x9x6xf32, #tpu.memory_space<vmem>>, vector<1x3x1xf32>
    %3 = vector.shape_cast %2 : vector<1x3x1xf32> to vector<3x1xf32>
    %4 = vector.extract_strided_slice %1 {offsets = [0, 0], sizes = [1, 640], strides = [1, 1]} : vector<3x640xf32> to vector<1x640xf32>
    %5 = vector.broadcast %3 : vector<3x1xf32> to vector<3x640xf32>
    %6 = vector.broadcast %4 : vector<1x640xf32> to vector<3x640xf32>
    %7 = arith.mulf %5, %6 : vector<3x640xf32>
    %8 = arith.addf %1, %7 : vector<3x640xf32>
    %c0_5 = arith.constant 0 : index
    %c3 = arith.constant 3 : index
    %c0_6 = arith.constant 0 : index
    %9 = vector.load %arg2[%c0_5, %c3, %c0_6] : memref<1x9x6xf32, #tpu.memory_space<vmem>>, vector<1x3x1xf32>
    %10 = vector.shape_cast %9 : vector<1x3x1xf32> to vector<3x1xf32>
    %11 = vector.extract_strided_slice %1 {offsets = [1, 0], sizes = [1, 640], strides = [1, 1]} : vector<3x640xf32> to vector<1x640xf32>
    %12 = vector.broadcast %10 : vector<3x1xf32> to vector<3x640xf32>
    %13 = vector.broadcast %11 : vector<1x640xf32> to vector<3x640xf32>
    %14 = arith.mulf %12, %13 : vector<3x640xf32>
    %15 = arith.addf %8, %14 : vector<3x640xf32>
    %c0_7 = arith.constant 0 : index
    %c6 = arith.constant 6 : index
    %c0_8 = arith.constant 0 : index
    %16 = vector.load %arg2[%c0_7, %c6, %c0_8] : memref<1x9x6xf32, #tpu.memory_space<vmem>>, vector<1x3x1xf32>
    %17 = vector.shape_cast %16 : vector<1x3x1xf32> to vector<3x1xf32>
    %18 = vector.extract_strided_slice %1 {offsets = [2, 0], sizes = [1, 640], strides = [1, 1]} : vector<3x640xf32> to vector<1x640xf32>
    %19 = vector.broadcast %17 : vector<3x1xf32> to vector<3x640xf32>
    %20 = vector.broadcast %18 : vector<1x640xf32> to vector<3x640xf32>
    %21 = arith.mulf %19, %20 : vector<3x640xf32>
    %22 = arith.addf %15, %21 : vector<3x640xf32>
    %c0_9 = arith.constant 0 : index
    %c0_10 = arith.constant 0 : index
    %c0_11 = arith.constant 0 : index
    %23 = vector.load %arg4[%c0_9, %c0_10, %c0_11] : memref<6x3x640xf32, #tpu.memory_space<vmem>>, vector<1x3x640xf32>
    %24 = vector.shape_cast %23 : vector<1x3x640xf32> to vector<3x640xf32>
    %25 = vector.shape_cast %22 : vector<3x640xf32> to vector<1x3x640xf32>
    tpu.vector_store %arg4[%c0_9, %c0_10, %c0_11], %25 {strides = array<i32>} : memref<6x3x640xf32, #tpu.memory_space<vmem>>, vector<1x3x640xf32>,
    %c1 = arith.constant 1 : index
    %c0_12 = arith.constant 0 : index
    %c0_13 = arith.constant 0 : index
    %26 = vector.load %arg3[%c1, %c0_12, %c0_13] : memref<6x3x640xf32, #tpu.memory_space<vmem>>, vector<1x3x640xf32>
    %27 = vector.shape_cast %26 : vector<1x3x640xf32> to vector<3x640xf32>
    %c0_14 = arith.constant 0 : index
    %c0_15 = arith.constant 0 : index
    %c1_16 = arith.constant 1 : index
    %28 = vector.load %arg2[%c0_14, %c0_15, %c1_16] : memref<1x9x6xf32, #tpu.memory_space<vmem>>, vector<1x3x1xf32>
    %29 = vector.shape_cast %28 : vector<1x3x1xf32> to vector<3x1xf32>
    %30 = vector.extract_strided_slice %27 {offsets = [0, 0], sizes = [1, 640], strides = [1, 1]} : vector<3x640xf32> to vector<1x640xf32>
    %31 = vector.broadcast %29 : vector<3x1xf32> to vector<3x640xf32>
    %32 = vector.broadcast %30 : vector<1x640xf32> to vector<3x640xf32>
    %33 = arith.mulf %31, %32 : vector<3x640xf32>
    %34 = arith.addf %27, %33 : vector<3x640xf32>
    %c0_17 = arith.constant 0 : index
    %c3_18 = arith.constant 3 : index
    %c1_19 = arith.constant 1 : index
    %35 = vector.load %arg2[%c0_17, %c3_18, %c1_19] : memref<1x9x6xf32, #tpu.memory_space<vmem>>, vector<1x3x1xf32>
    %36 = vector.shape_cast %35 : vector<1x3x1xf32> to vector<3x1xf32>
    %37 = vector.extract_strided_slice %27 {offsets = [1, 0], sizes = [1, 640], strides = [1, 1]} : vector<3x640xf32> to vector<1x640xf32>
    %38 = vector.broadcast %36 : vector<3x1xf32> to vector<3x640xf32>
    %39 = vector.broadcast %37 : vector<1x640xf32> to vector<3x640xf32>
    %40 = arith.mulf %38, %39 : vector<3x640xf32>
    %41 = arith.addf %34, %40 : vector<3x640xf32>
    %c0_20 = arith.constant 0 : index
    %c6_21 = arith.constant 6 : index
    %c1_22 = arith.constant 1 : index
    %42 = vector.load %arg2[%c0_20, %c6_21, %c1_22] : memref<1x9x6xf32, #tpu.memory_space<vmem>>, vector<1x3x1xf32>
    %43 = vector.shape_cast %42 : vector<1x3x1xf32> to vector<3x1xf32>
    %44 = vector.extract_strided_slice %27 {offsets = [2, 0], sizes = [1, 640], strides = [1, 1]} : vector<3x640xf32> to vector<1x640xf32>
    %45 = vector.broadcast %43 : vector<3x1xf32> to vector<3x640xf32>
    %46 = vector.broadcast %44 : vector<1x640xf32> to vector<3x640xf32>
    %47 = arith.mulf %45, %46 : vector<3x640xf32>
    %48 = arith.addf %41, %47 : vector<3x640xf32>
    %c1_23 = arith.constant 1 : index
    %c0_24 = arith.constant 0 : index
    %c0_25 = arith.constant 0 : index
    %49 = vector.load %arg4[%c1_23, %c0_24, %c0_25] : memref<6x3x640xf32, #tpu.memory_space<vmem>>, vector<1x3x640xf32>
    %50 = vector.shape_cast %49 : vector<1x3x640xf32> to vector<3x640xf32>
    %51 = vector.shape_cast %48 : vector<3x640xf32> to vector<1x3x640xf32>
    tpu.vector_store %arg4[%c1_23, %c0_24, %c0_25], %51 {strides = array<i32>} : memref<6x3x640xf32, #tpu.memory_space<vmem>>, vector<1x3x640xf32>,
    %c2 = arith.constant 2 : index
    %c0_26 = arith.constant 0 : index
    %c0_27 = arith.constant 0 : index
    %52 = vector.load %arg3[%c2, %c0_26, %c0_27] : memref<6x3x640xf32, #tpu.memory_space<vmem>>, vector<1x3x640xf32>
    %53 = vector.shape_cast %52 : vector<1x3x640xf32> to vector<3x640xf32>
    %c0_28 = arith.constant 0 : index
    %c0_29 = arith.constant 0 : index
    %c2_30 = arith.constant 2 : index
    %54 = vector.load %arg2[%c0_28, %c0_29, %c2_30] : memref<1x9x6xf32, #tpu.memory_space<vmem>>, vector<1x3x1xf32>
    %55 = vector.shape_cast %54 : vector<1x3x1xf32> to vector<3x1xf32>
    %56 = vector.extract_strided_slice %53 {offsets = [0, 0], sizes = [1, 640], strides = [1, 1]} : vector<3x640xf32> to vector<1x640xf32>
    %57 = vector.broadcast %55 : vector<3x1xf32> to vector<3x640xf32>
    %58 = vector.broadcast %56 : vector<1x640xf32> to vector<3x640xf32>
    %59 = arith.mulf %57, %58 : vector<3x640xf32>
    %60 = arith.addf %53, %59 : vector<3x640xf32>
    %c0_31 = arith.constant 0 : index
    %c3_32 = arith.constant 3 : index
    %c2_33 = arith.constant 2 : index
    %61 = vector.load %arg2[%c0_31, %c3_32, %c2_33] : memref<1x9x6xf32, #tpu.memory_space<vmem>>, vector<1x3x1xf32>
    %62 = vector.shape_cast %61 : vector<1x3x1xf32> to vector<3x1xf32>
    %63 = vector.extract_strided_slice %53 {offsets = [1, 0], sizes = [1, 640], strides = [1, 1]} : vector<3x640xf32> to vector<1x640xf32>
    %64 = vector.broadcast %62 : vector<3x1xf32> to vector<3x640xf32>
    %65 = vector.broadcast %63 : vector<1x640xf32> to vector<3x640xf32>
    %66 = arith.mulf %64, %65 : vector<3x640xf32>
    %67 = arith.addf %60, %66 : vector<3x640xf32>
    %c0_34 = arith.constant 0 : index
    %c6_35 = arith.constant 6 : index
    %c2_36 = arith.constant 2 : index
    %68 = vector.load %arg2[%c0_34, %c6_35, %c2_36] : memref<1x9x6xf32, #tpu.memory_space<vmem>>, vector<1x3x1xf32>
    %69 = vector.shape_cast %68 : vector<1x3x1xf32> to vector<3x1xf32>
    %70 = vector.extract_strided_slice %53 {offsets = [2, 0], sizes = [1, 640], strides = [1, 1]} : vector<3x640xf32> to vector<1x640xf32>
    %71 = vector.broadcast %69 : vector<3x1xf32> to vector<3x640xf32>
    %72 = vector.broadcast %70 : vector<1x640xf32> to vector<3x640xf32>
    %73 = arith.mulf %71, %72 : vector<3x640xf32>
    %74 = arith.addf %67, %73 : vector<3x640xf32>
    %c2_37 = arith.constant 2 : index
    %c0_38 = arith.constant 0 : index
    %c0_39 = arith.constant 0 : index
    %75 = vector.load %arg4[%c2_37, %c0_38, %c0_39] : memref<6x3x640xf32, #tpu.memory_space<vmem>>, vector<1x3x640xf32>
    %76 = vector.shape_cast %75 : vector<1x3x640xf32> to vector<3x640xf32>
    %77 = vector.shape_cast %74 : vector<3x640xf32> to vector<1x3x640xf32>
    tpu.vector_store %arg4[%c2_37, %c0_38, %c0_39], %77 {strides = array<i32>} : memref<6x3x640xf32, #tpu.memory_space<vmem>>, vector<1x3x640xf32>,
    %c3_40 = arith.constant 3 : index
    %c0_41 = arith.constant 0 : index
    %c0_42 = arith.constant 0 : index
    %78 = vector.load %arg3[%c3_40, %c0_41, %c0_42] : memref<6x3x640xf32, #tpu.memory_space<vmem>>, vector<1x3x640xf32>
    %79 = vector.shape_cast %78 : vector<1x3x640xf32> to vector<3x640xf32>
    %c0_43 = arith.constant 0 : index
    %c0_44 = arith.constant 0 : index
    %c3_45 = arith.constant 3 : index
    %80 = vector.load %arg2[%c0_43, %c0_44, %c3_45] : memref<1x9x6xf32, #tpu.memory_space<vmem>>, vector<1x3x1xf32>
    %81 = vector.shape_cast %80 : vector<1x3x1xf32> to vector<3x1xf32>
    %82 = vector.extract_strided_slice %79 {offsets = [0, 0], sizes = [1, 640], strides = [1, 1]} : vector<3x640xf32> to vector<1x640xf32>
    %83 = vector.broadcast %81 : vector<3x1xf32> to vector<3x640xf32>
    %84 = vector.broadcast %82 : vector<1x640xf32> to vector<3x640xf32>
    %85 = arith.mulf %83, %84 : vector<3x640xf32>
    %86 = arith.addf %79, %85 : vector<3x640xf32>
    %c0_46 = arith.constant 0 : index
    %c3_47 = arith.constant 3 : index
    %c3_48 = arith.constant 3 : index
    %87 = vector.load %arg2[%c0_46, %c3_47, %c3_48] : memref<1x9x6xf32, #tpu.memory_space<vmem>>, vector<1x3x1xf32>
    %88 = vector.shape_cast %87 : vector<1x3x1xf32> to vector<3x1xf32>
    %89 = vector.extract_strided_slice %79 {offsets = [1, 0], sizes = [1, 640], strides = [1, 1]} : vector<3x640xf32> to vector<1x640xf32>
    %90 = vector.broadcast %88 : vector<3x1xf32> to vector<3x640xf32>
    %91 = vector.broadcast %89 : vector<1x640xf32> to vector<3x640xf32>
    %92 = arith.mulf %90, %91 : vector<3x640xf32>
    %93 = arith.addf %86, %92 : vector<3x640xf32>
    %c0_49 = arith.constant 0 : index
    %c6_50 = arith.constant 6 : index
    %c3_51 = arith.constant 3 : index
    %94 = vector.load %arg2[%c0_49, %c6_50, %c3_51] : memref<1x9x6xf32, #tpu.memory_space<vmem>>, vector<1x3x1xf32>
    %95 = vector.shape_cast %94 : vector<1x3x1xf32> to vector<3x1xf32>
    %96 = vector.extract_strided_slice %79 {offsets = [2, 0], sizes = [1, 640], strides = [1, 1]} : vector<3x640xf32> to vector<1x640xf32>
    %97 = vector.broadcast %95 : vector<3x1xf32> to vector<3x640xf32>
    %98 = vector.broadcast %96 : vector<1x640xf32> to vector<3x640xf32>
    %99 = arith.mulf %97, %98 : vector<3x640xf32>
    %100 = arith.addf %93, %99 : vector<3x640xf32>
    %c3_52 = arith.constant 3 : index
    %c0_53 = arith.constant 0 : index
    %c0_54 = arith.constant 0 : index
    %101 = vector.load %arg4[%c3_52, %c0_53, %c0_54] : memref<6x3x640xf32, #tpu.memory_space<vmem>>, vector<1x3x640xf32>
    %102 = vector.shape_cast %101 : vector<1x3x640xf32> to vector<3x640xf32>
    %103 = vector.shape_cast %100 : vector<3x640xf32> to vector<1x3x640xf32>
    tpu.vector_store %arg4[%c3_52, %c0_53, %c0_54], %103 {strides = array<i32>} : memref<6x3x640xf32, #tpu.memory_space<vmem>>, vector<1x3x640xf32>,
    %c4 = arith.constant 4 : index
    %c0_55 = arith.constant 0 : index
    %c0_56 = arith.constant 0 : index
    %104 = vector.load %arg3[%c4, %c0_55, %c0_56] : memref<6x3x640xf32, #tpu.memory_space<vmem>>, vector<1x3x640xf32>
    %105 = vector.shape_cast %104 : vector<1x3x640xf32> to vector<3x640xf32>
    %c0_57 = arith.constant 0 : index
    %c0_58 = arith.constant 0 : index
    %c4_59 = arith.constant 4 : index
    %106 = vector.load %arg2[%c0_57, %c0_58, %c4_59] : memref<1x9x6xf32, #tpu.memory_space<vmem>>, vector<1x3x1xf32>
    %107 = vector.shape_cast %106 : vector<1x3x1xf32> to vector<3x1xf32>
    %108 = vector.extract_strided_slice %105 {offsets = [0, 0], sizes = [1, 640], strides = [1, 1]} : vector<3x640xf32> to vector<1x640xf32>
    %109 = vector.broadcast %107 : vector<3x1xf32> to vector<3x640xf32>
    %110 = vector.broadcast %108 : vector<1x640xf32> to vector<3x640xf32>
    %111 = arith.mulf %109, %110 : vector<3x640xf32>
    %112 = arith.addf %105, %111 : vector<3x640xf32>
    %c0_60 = arith.constant 0 : index
    %c3_61 = arith.constant 3 : index
    %c4_62 = arith.constant 4 : index
    %113 = vector.load %arg2[%c0_60, %c3_61, %c4_62] : memref<1x9x6xf32, #tpu.memory_space<vmem>>, vector<1x3x1xf32>
    %114 = vector.shape_cast %113 : vector<1x3x1xf32> to vector<3x1xf32>
    %115 = vector.extract_strided_slice %105 {offsets = [1, 0], sizes = [1, 640], strides = [1, 1]} : vector<3x640xf32> to vector<1x640xf32>
    %116 = vector.broadcast %114 : vector<3x1xf32> to vector<3x640xf32>
    %117 = vector.broadcast %115 : vector<1x640xf32> to vector<3x640xf32>
    %118 = arith.mulf %116, %117 : vector<3x640xf32>
    %119 = arith.addf %112, %118 : vector<3x640xf32>
    %c0_63 = arith.constant 0 : index
    %c6_64 = arith.constant 6 : index
    %c4_65 = arith.constant 4 : index
    %120 = vector.load %arg2[%c0_63, %c6_64, %c4_65] : memref<1x9x6xf32, #tpu.memory_space<vmem>>, vector<1x3x1xf32>
    %121 = vector.shape_cast %120 : vector<1x3x1xf32> to vector<3x1xf32>
    %122 = vector.extract_strided_slice %105 {offsets = [2, 0], sizes = [1, 640], strides = [1, 1]} : vector<3x640xf32> to vector<1x640xf32>
    %123 = vector.broadcast %121 : vector<3x1xf32> to vector<3x640xf32>
    %124 = vector.broadcast %122 : vector<1x640xf32> to vector<3x640xf32>
    %125 = arith.mulf %123, %124 : vector<3x640xf32>
    %126 = arith.addf %119, %125 : vector<3x640xf32>
    %c4_66 = arith.constant 4 : index
    %c0_67 = arith.constant 0 : index
    %c0_68 = arith.constant 0 : index
    %127 = vector.load %arg4[%c4_66, %c0_67, %c0_68] : memref<6x3x640xf32, #tpu.memory_space<vmem>>, vector<1x3x640xf32>
    %128 = vector.shape_cast %127 : vector<1x3x640xf32> to vector<3x640xf32>
    %129 = vector.shape_cast %126 : vector<3x640xf32> to vector<1x3x640xf32>
    tpu.vector_store %arg4[%c4_66, %c0_67, %c0_68], %129 {strides = array<i32>} : memref<6x3x640xf32, #tpu.memory_space<vmem>>, vector<1x3x640xf32>,
    %c5 = arith.constant 5 : index
    %c0_69 = arith.constant 0 : index
    %c0_70 = arith.constant 0 : index
    %130 = vector.load %arg3[%c5, %c0_69, %c0_70] : memref<6x3x640xf32, #tpu.memory_space<vmem>>, vector<1x3x640xf32>
    %131 = vector.shape_cast %130 : vector<1x3x640xf32> to vector<3x640xf32>
    %c0_71 = arith.constant 0 : index
    %c0_72 = arith.constant 0 : index
    %c5_73 = arith.constant 5 : index
    %132 = vector.load %arg2[%c0_71, %c0_72, %c5_73] : memref<1x9x6xf32, #tpu.memory_space<vmem>>, vector<1x3x1xf32>
    %133 = vector.shape_cast %132 : vector<1x3x1xf32> to vector<3x1xf32>
    %134 = vector.extract_strided_slice %131 {offsets = [0, 0], sizes = [1, 640], strides = [1, 1]} : vector<3x640xf32> to vector<1x640xf32>
    %135 = vector.broadcast %133 : vector<3x1xf32> to vector<3x640xf32>
    %136 = vector.broadcast %134 : vector<1x640xf32> to vector<3x640xf32>
    %137 = arith.mulf %135, %136 : vector<3x640xf32>
    %138 = arith.addf %131, %137 : vector<3x640xf32>
    %c0_74 = arith.constant 0 : index
    %c3_75 = arith.constant 3 : index
    %c5_76 = arith.constant 5 : index
    %139 = vector.load %arg2[%c0_74, %c3_75, %c5_76] : memref<1x9x6xf32, #tpu.memory_space<vmem>>, vector<1x3x1xf32>
    %140 = vector.shape_cast %139 : vector<1x3x1xf32> to vector<3x1xf32>
    %141 = vector.extract_strided_slice %131 {offsets = [1, 0], sizes = [1, 640], strides = [1, 1]} : vector<3x640xf32> to vector<1x640xf32>
    %142 = vector.broadcast %140 : vector<3x1xf32> to vector<3x640xf32>
    %143 = vector.broadcast %141 : vector<1x640xf32> to vector<3x640xf32>
    %144 = arith.mulf %142, %143 : vector<3x640xf32>
    %145 = arith.addf %138, %144 : vector<3x640xf32>
    %c0_77 = arith.constant 0 : index
    %c6_78 = arith.constant 6 : index
    %c5_79 = arith.constant 5 : index
    %146 = vector.load %arg2[%c0_77, %c6_78, %c5_79] : memref<1x9x6xf32, #tpu.memory_space<vmem>>, vector<1x3x1xf32>
    %147 = vector.shape_cast %146 : vector<1x3x1xf32> to vector<3x1xf32>
    %148 = vector.extract_strided_slice %131 {offsets = [2, 0], sizes = [1, 640], strides = [1, 1]} : vector<3x640xf32> to vector<1x640xf32>
    %149 = vector.broadcast %147 : vector<3x1xf32> to vector<3x640xf32>
    %150 = vector.broadcast %148 : vector<1x640xf32> to vector<3x640xf32>
    %151 = arith.mulf %149, %150 : vector<3x640xf32>
    %152 = arith.addf %145, %151 : vector<3x640xf32>
    %c5_80 = arith.constant 5 : index
    %c0_81 = arith.constant 0 : index
    %c0_82 = arith.constant 0 : index
    %153 = vector.load %arg4[%c5_80, %c0_81, %c0_82] : memref<6x3x640xf32, #tpu.memory_space<vmem>>, vector<1x3x640xf32>
    %154 = vector.shape_cast %153 : vector<1x3x640xf32> to vector<3x640xf32>
    %155 = vector.shape_cast %152 : vector<3x640xf32> to vector<1x3x640xf32>
    tpu.vector_store %arg4[%c5_80, %c0_81, %c0_82], %155 {strides = array<i32>} : memref<6x3x640xf32, #tpu.memory_space<vmem>>, vector<1x3x640xf32>,
    return
  }
  func.func @transform_0(%arg0: i32, %arg1: i32) -> (i32, i32, i32) {
    %c0_i32 = arith.constant 0 : i32
    %c0_i32_0 = arith.constant 0 : i32
    %c0_i32_1 = arith.constant 0 : i32
    return %arg0, %c0_i32, %c0_i32_0 : i32, i32, i32
  }
  func.func @transform_1(%arg0: i32, %arg1: i32) -> (i32, i32, i32) {
    %c0_i32 = arith.constant 0 : i32
    %c0_i32_0 = arith.constant 0 : i32
    return %arg0, %c0_i32, %arg1 : i32, i32, i32
  }
  func.func @transform_2(%arg0: i32, %arg1: i32) -> (i32, i32, i32) {
    %c0_i32 = arith.constant 0 : i32
    %c0_i32_0 = arith.constant 0 : i32
    return %arg0, %c0_i32, %arg1 : i32, i32, i32
  }
}

</mosaic_0001>

<llo_original>
// kernel: transform_forward.5
$region0: #{transform_forward.5}
  #allocation0 [shape = 'u32[]', space=smem, size = 0x4, offset = 0x4, fixed_abs, tag = 'smem constant byte address 0x4 - core index']
  #allocation1 [shape = 'u32[144,128]{1,0:T(1,128)}', space=vmem, size = 0x12000, scoped, tag = 'internal scratch']
  %s0 = inlined_call_operand.vmem [shape: f32[1,9,6], index: 0, kind: input, shape index: {}]
  %s1 = inlined_call_operand.vmem [shape: f32[6,3,640], index: 1, kind: input, shape index: {}]
  %s2 = inlined_call_operand.hbm [shape: f32[6,3,640], index: 2, kind: output, shape index: {}]
  %s3 = sld [smem:[#allocation0]]
  $region18: #{transform_forward.5} parent=0
    _
  %s5 = ssub.s32 1, %s3
  %s6 = scalar_select 0, %s5, %s3
  $region1: #{transform_forward.5} parent=0
    #allocation2 [shape = 'u8[61440]{0}', space=vmem, size = 0xf000, scoped, tag = 'output window, operand 0, single buffered']
    #allocation3 [shape = 's32[1]{0}', space=sflag, size = 0x4, scoped, tag = 'scoped memory for transform_forward.5']
    %7 = vsyncpa [#allocation3], 0
    // Predicated region
    $region2: #{transform_forward.5} parent=1 // pred_check
      _
    $region3: #{transform_forward.5} parent=1 // pred_check_branch
      %9 = sbr.rel (0) target = $region5
    $region4: #{transform_forward.5} parent=1 // pred_region
      _
    $region5: #{transform_forward.5} parent=1 // pred_fallthru
      _
    // Predicated region
    $region6: #{transform_forward.5} parent=1 // pred_check
      _
    $region7: #{transform_forward.5} parent=1 // pred_check_branch
      %11 = sbr.rel (0) target = $region9
    $region8: #{transform_forward.5} parent=1 // pred_region
      _
    $region9: #{transform_forward.5} parent=1 // pred_fallthru
      _
    %v12 = vld [vmem:[%s1] sm:$0x77]
    %v13 = vld [vmem:[%s1 + $0x8] sm:$0x77]
    %v14 = vld [vmem:[%s1 + $0x10] sm:$0x7]
    %v15 = vld [vmem:[%s0] sm:$0x7]
    %17 = vset.pattern.permute.xlu0 0
    %18 = vperm.xlu0 %17, %v15
    %v19 = vpop.permute.xlu0 %18
    %v24 = vlaneseq
    %v25 = vshrl.u32 %v24, 7
    %v26 = vsub.s32 0, %v25
    %v27 = vrot.slane %v12, %v26
    %v28 = vlaneseq
    %v29 = vshrl.u32 %v28, 7
    %v30 = vsub.s32 4, %v29
    %v31 = vrot.slane %v12, %v30
    %v32 = vlaneseq
    %v33 = vshrl.u32 %v32, 7
    %v34 = vsub.s32 0, %v33
    %v35 = vrot.slane %v13, %v34
    %v36 = vlaneseq
    %v37 = vshrl.u32 %v36, 7
    %v38 = vsub.s32 4, %v37
    %v39 = vrot.slane %v13, %v38
    %v40 = vlaneseq
    %v41 = vshrl.u32 %v40, 7
    %v42 = vsub.s32 0, %v41
    %v43 = vrot.slane %v14, %v42
    %v49 = vlaneseq
    %v50 = vshrl.u32 %v49, 7
    %v51 = vsub.s32 0, %v50
    %v52 = vrot.slane %v27, %v51
    %v53 = vlaneseq
    %v54 = vshrl.u32 %v53, 7
    %v55 = vsub.s32 0, %v54
    %v56 = vrot.slane %v31, %v55
    %v57 = vlaneseq
    %v58 = vshrl.u32 %v57, 7
    %v59 = vsub.s32 0, %v58
    %v60 = vrot.slane %v35, %v59
    %v61 = vlaneseq
    %v62 = vshrl.u32 %v61, 7
    %v63 = vsub.s32 0, %v62
    %v64 = vrot.slane %v39, %v63
    %v65 = vlaneseq
    %v66 = vshrl.u32 %v65, 7
    %v67 = vsub.s32 0, %v66
    %v68 = vrot.slane %v43, %v67
    %v69 = vmul.f32 %v19, %v52
    %v70 = vmul.f32 %v19, %v56
    %v71 = vmul.f32 %v19, %v60
    %v72 = vmul.f32 %v19, %v64
    %v73 = vmul.f32 %v19, %v68
    %v78 = vcombine.low %v69, %v70
    %v79 = vcombine.low %v71, %v72
    %v82 = vadd.f32 %v12, %v78
    %v83 = vadd.f32 %v13, %v79
    %v84 = vadd.f32 %v14, %v73
    %v85 = vld [vmem:[%s0 + $0x3] sm:$0x7]
    %87 = vset.pattern.permute.xlu0 0
    %88 = vperm.xlu0 %87, %v85
    %v89 = vpop.permute.xlu0 %88
    %v91 = vlaneseq
    %v92 = vshrl.u32 %v91, 7
    %v93 = vsub.s32 1, %v92
    %v94 = vrot.slane %v12, %v93
    %v95 = vlaneseq
    %v96 = vshrl.u32 %v95, 7
    %v97 = vsub.s32 5, %v96
    %v98 = vrot.slane %v12, %v97
    %v99 = vlaneseq
    %v100 = vshrl.u32 %v99, 7
    %v101 = vsub.s32 1, %v100
    %v102 = vrot.slane %v13, %v101
    %v103 = vlaneseq
    %v104 = vshrl.u32 %v103, 7
    %v105 = vsub.s32 5, %v104
    %v106 = vrot.slane %v13, %v105
    %v107 = vlaneseq
    %v108 = vshrl.u32 %v107, 7
    %v109 = vsub.s32 1, %v108
    %v110 = vrot.slane %v14, %v109
    %v116 = vlaneseq
    %v117 = vshrl.u32 %v116, 7
    %v118 = vsub.s32 1, %v117
    %v119 = vrot.slane %v94, %v118
    %v120 = vlaneseq
    %v121 = vshrl.u32 %v120, 7
    %v122 = vsub.s32 1, %v121
    %v123 = vrot.slane %v98, %v122
    %v124 = vlaneseq
    %v125 = vshrl.u32 %v124, 7
    %v126 = vsub.s32 1, %v125
    %v127 = vrot.slane %v102, %v126
    %v128 = vlaneseq
    %v129 = vshrl.u32 %v128, 7
    %v130 = vsub.s32 1, %v129
    %v131 = vrot.slane %v106, %v130
    %v132 = vlaneseq
    %v133 = vshrl.u32 %v132, 7
    %v134 = vsub.s32 1, %v133
    %v135 = vrot.slane %v110, %v134
    %v136 = vmul.f32 %v89, %v119
    %v137 = vmul.f32 %v89, %v123
    %v138 = vmul.f32 %v89, %v127
    %v139 = vmul.f32 %v89, %v131
    %v140 = vmul.f32 %v89, %v135
    %v145 = vcombine.low %v136, %v137
    %v146 = vcombine.low %v138, %v139
    %v149 = vadd.f32 %v82, %v145
    %v150 = vadd.f32 %v83, %v146
    %v151 = vadd.f32 %v84, %v140
    %v152 = vld [vmem:[%s0 + $0x6] sm:$0x7]
    %154 = vset.pattern.permute.xlu0 0
    %155 = vperm.xlu0 %154, %v152
    %v156 = vpop.permute.xlu0 %155
    %v158 = vlaneseq
    %v159 = vshrl.u32 %v158, 7
    %v160 = vsub.s32 2, %v159
    %v161 = vrot.slane %v12, %v160
    %v162 = vlaneseq
    %v163 = vshrl.u32 %v162, 7
    %v164 = vsub.s32 6, %v163
    %v165 = vrot.slane %v12, %v164
    %v166 = vlaneseq
    %v167 = vshrl.u32 %v166, 7
    %v168 = vsub.s32 2, %v167
    %v169 = vrot.slane %v13, %v168
    %v170 = vlaneseq
    %v171 = vshrl.u32 %v170, 7
    %v172 = vsub.s32 6, %v171
    %v173 = vrot.slane %v13, %v172
    %v174 = vlaneseq
    %v175 = vshrl.u32 %v174, 7
    %v176 = vsub.s32 2, %v175
    %v177 = vrot.slane %v14, %v176
    %v183 = vlaneseq
    %v184 = vshrl.u32 %v183, 7
    %v185 = vsub.s32 2, %v184
    %v186 = vrot.slane %v161, %v185
    %v187 = vlaneseq
    %v188 = vshrl.u32 %v187, 7
    %v189 = vsub.s32 2, %v188
    %v190 = vrot.slane %v165, %v189
    %v191 = vlaneseq
    %v192 = vshrl.u32 %v191, 7
    %v193 = vsub.s32 2, %v192
    %v194 = vrot.slane %v169, %v193
    %v195 = vlaneseq
    %v196 = vshrl.u32 %v195, 7
    %v197 = vsub.s32 2, %v196
    %v198 = vrot.slane %v173, %v197
    %v199 = vlaneseq
    %v200 = vshrl.u32 %v199, 7
    %v201 = vsub.s32 2, %v200
    %v202 = vrot.slane %v177, %v201
    %v203 = vmul.f32 %v156, %v186
    %v204 = vmul.f32 %v156, %v190
    %v205 = vmul.f32 %v156, %v194
    %v206 = vmul.f32 %v156, %v198
    %v207 = vmul.f32 %v156, %v202
    %v212 = vcombine.low %v203, %v204
    %v213 = vcombine.low %v205, %v206
    %v216 = vadd.f32 %v149, %v212
    %v217 = vadd.f32 %v150, %v213
    %v218 = vadd.f32 %v151, %v207
    %219 = vst [vmem:[#allocation2] sm:$0x77] %v216
    %220 = vst [vmem:[#allocation2 + $0x8] sm:$0x77] %v217
    %221 = vst [vmem:[#allocation2 + $0x10] sm:$0x7] %v218
    %s222 = scalar_lea.vmem %s1, 20
    %v223 = vld [vmem:[%s222] sm:$0x77]
    %v224 = vld [vmem:[%s222 + $0x8] sm:$0x77]
    %v225 = vld [vmem:[%s222 + $0x10] sm:$0x7]
    %v226 = vld [vmem:[%s0] sm:$0x7]
    %228 = vset.pattern.permute.xlu0 1
    %229 = vperm.xlu0 %228, %v226
    %v230 = vpop.permute.xlu0 %229
    %v235 = vlaneseq
    %v236 = vshrl.u32 %v235, 7
    %v237 = vsub.s32 0, %v236
    %v238 = vrot.slane %v223, %v237
    %v239 = vlaneseq
    %v240 = vshrl.u32 %v239, 7
    %v241 = vsub.s32 4, %v240
    %v242 = vrot.slane %v223, %v241
    %v243 = vlaneseq
    %v244 = vshrl.u32 %v243, 7
    %v245 = vsub.s32 0, %v244
    %v246 = vrot.slane %v224, %v245
    %v247 = vlaneseq
    %v248 = vshrl.u32 %v247, 7
    %v249 = vsub.s32 4, %v248
    %v250 = vrot.slane %v224, %v249
    %v251 = vlaneseq
    %v252 = vshrl.u32 %v251, 7
    %v253 = vsub.s32 0, %v252
    %v254 = vrot.slane %v225, %v253
    %v260 = vlaneseq
    %v261 = vshrl.u32 %v260, 7
    %v262 = vsub.s32 0, %v261
    %v263 = vrot.slane %v238, %v262
    %v264 = vlaneseq
    %v265 = vshrl.u32 %v264, 7
    %v266 = vsub.s32 0, %v265
    %v267 = vrot.slane %v242, %v266
    %v268 = vlaneseq
    %v269 = vshrl.u32 %v268, 7
    %v270 = vsub.s32 0, %v269
    %v271 = vrot.slane %v246, %v270
    %v272 = vlaneseq
    %v273 = vshrl.u32 %v272, 7
    %v274 = vsub.s32 0, %v273
    %v275 = vrot.slane %v250, %v274
    %v276 = vlaneseq
    %v277 = vshrl.u32 %v276, 7
    %v278 = vsub.s32 0, %v277
    %v279 = vrot.slane %v254, %v278
    %v280 = vmul.f32 %v230, %v263
    %v281 = vmul.f32 %v230, %v267
    %v282 = vmul.f32 %v230, %v271
    %v283 = vmul.f32 %v230, %v275
    %v284 = vmul.f32 %v230, %v279
    %v289 = vcombine.low %v280, %v281
    %v290 = vcombine.low %v282, %v283
    %v293 = vadd.f32 %v223, %v289
    %v294 = vadd.f32 %v224, %v290
    %v295 = vadd.f32 %v225, %v284
    %v296 = vld [vmem:[%s0 + $0x3] sm:$0x7]
    %298 = vset.pattern.permute.xlu0 1
    %299 = vperm.xlu0 %298, %v296
    %v300 = vpop.permute.xlu0 %299
    %v302 = vlaneseq
    %v303 = vshrl.u32 %v302, 7
    %v304 = vsub.s32 1, %v303
    %v305 = vrot.slane %v223, %v304
    %v306 = vlaneseq
    %v307 = vshrl.u32 %v306, 7
    %v308 = vsub.s32 5, %v307
    %v309 = vrot.slane %v223, %v308
    %v310 = vlaneseq
    %v311 = vshrl.u32 %v310, 7
    %v312 = vsub.s32 1, %v311
    %v313 = vrot.slane %v224, %v312
    %v314 = vlaneseq
    %v315 = vshrl.u32 %v314, 7
    %v316 = vsub.s32 5, %v315
    %v317 = vrot.slane %v224, %v316
    %v318 = vlaneseq
    %v319 = vshrl.u32 %v318, 7
    %v320 = vsub.s32 1, %v319
    %v321 = vrot.slane %v225, %v320
    %v327 = vlaneseq
    %v328 = vshrl.u32 %v327, 7
    %v329 = vsub.s32 1, %v328
    %v330 = vrot.slane %v305, %v329
    %v331 = vlaneseq
    %v332 = vshrl.u32 %v331, 7
    %v333 = vsub.s32 1, %v332
    %v334 = vrot.slane %v309, %v333
    %v335 = vlaneseq
    %v336 = vshrl.u32 %v335, 7
    %v337 = vsub.s32 1, %v336
    %v338 = vrot.slane %v313, %v337
    %v339 = vlaneseq
    %v340 = vshrl.u32 %v339, 7
    %v341 = vsub.s32 1, %v340
    %v342 = vrot.slane %v317, %v341
    %v343 = vlaneseq
    %v344 = vshrl.u32 %v343, 7
    %v345 = vsub.s32 1, %v344
    %v346 = vrot.slane %v321, %v345
    %v347 = vmul.f32 %v300, %v330
    %v348 = vmul.f32 %v300, %v334
    %v349 = vmul.f32 %v300, %v338
    %v350 = vmul.f32 %v300, %v342
    %v351 = vmul.f32 %v300, %v346
    %v356 = vcombine.low %v347, %v348
    %v357 = vcombine.low %v349, %v350
    %v360 = vadd.f32 %v293, %v356
    %v361 = vadd.f32 %v294, %v357
    %v362 = vadd.f32 %v295, %v351
    %v363 = vld [vmem:[%s0 + $0x6] sm:$0x7]
    %365 = vset.pattern.permute.xlu0 1
    %366 = vperm.xlu0 %365, %v363
    %v367 = vpop.permute.xlu0 %366
    %v369 = vlaneseq
    %v370 = vshrl.u32 %v369, 7
    %v371 = vsub.s32 2, %v370
    %v372 = vrot.slane %v223, %v371
    %v373 = vlaneseq
    %v374 = vshrl.u32 %v373, 7
    %v375 = vsub.s32 6, %v374
    %v376 = vrot.slane %v223, %v375
    %v377 = vlaneseq
    %v378 = vshrl.u32 %v377, 7
    %v379 = vsub.s32 2, %v378
    %v380 = vrot.slane %v224, %v379
    %v381 = vlaneseq
    %v382 = vshrl.u32 %v381, 7
    %v383 = vsub.s32 6, %v382
    %v384 = vrot.slane %v224, %v383
    %v385 = vlaneseq
    %v386 = vshrl.u32 %v385, 7
    %v387 = vsub.s32 2, %v386
    %v388 = vrot.slane %v225, %v387
    %v394 = vlaneseq
    %v395 = vshrl.u32 %v394, 7
    %v396 = vsub.s32 2, %v395
    %v397 = vrot.slane %v372, %v396
    %v398 = vlaneseq
    %v399 = vshrl.u32 %v398, 7
    %v400 = vsub.s32 2, %v399
    %v401 = vrot.slane %v376, %v400
    %v402 = vlaneseq
    %v403 = vshrl.u32 %v402, 7
    %v404 = vsub.s32 2, %v403
    %v405 = vrot.slane %v380, %v404
    %v406 = vlaneseq
    %v407 = vshrl.u32 %v406, 7
    %v408 = vsub.s32 2, %v407
    %v409 = vrot.slane %v384, %v408
    %v410 = vlaneseq
    %v411 = vshrl.u32 %v410, 7
    %v412 = vsub.s32 2, %v411
    %v413 = vrot.slane %v388, %v412
    %v414 = vmul.f32 %v367, %v397
    %v415 = vmul.f32 %v367, %v401
    %v416 = vmul.f32 %v367, %v405
    %v417 = vmul.f32 %v367, %v409
    %v418 = vmul.f32 %v367, %v413
    %v423 = vcombine.low %v414, %v415
    %v424 = vcombine.low %v416, %v417
    %v427 = vadd.f32 %v360, %v423
    %v428 = vadd.f32 %v361, %v424
    %v429 = vadd.f32 %v362, %v418
    %s430 = scalar_lea.vmem [#allocation2], 20
    %431 = vst [vmem:[%s430] sm:$0x77] %v427
    %432 = vst [vmem:[%s430 + $0x8] sm:$0x77] %v428
    %433 = vst [vmem:[%s430 + $0x10] sm:$0x7] %v429
    %s434 = scalar_lea.vmem %s1, 40
    %v435 = vld [vmem:[%s434] sm:$0x77]
    %v436 = vld [vmem:[%s434 + $0x8] sm:$0x77]
    %v437 = vld [vmem:[%s434 + $0x10] sm:$0x7]
    %v438 = vld [vmem:[%s0] sm:$0x7]
    %440 = vset.pattern.permute.xlu0 2
    %441 = vperm.xlu0 %440, %v438
    %v442 = vpop.permute.xlu0 %441
    %v447 = vlaneseq
    %v448 = vshrl.u32 %v447, 7
    %v449 = vsub.s32 0, %v448
    %v450 = vrot.slane %v435, %v449
    %v451 = vlaneseq
    %v452 = vshrl.u32 %v451, 7
    %v453 = vsub.s32 4, %v452
    %v454 = vrot.slane %v435, %v453
    %v455 = vlaneseq
    %v456 = vshrl.u32 %v455, 7
    %v457 = vsub.s32 0, %v456
    %v458 = vrot.slane %v436, %v457
    %v459 = vlaneseq
    %v460 = vshrl.u32 %v459, 7
    %v461 = vsub.s32 4, %v460
    %v462 = vrot.slane %v436, %v461
    %v463 = vlaneseq
    %v464 = vshrl.u32 %v463, 7
    %v465 = vsub.s32 0, %v464
    %v466 = vrot.slane %v437, %v465
    %v472 = vlaneseq
    %v473 = vshrl.u32 %v472, 7
    %v474 = vsub.s32 0, %v473
    %v475 = vrot.slane %v450, %v474
    %v476 = vlaneseq
    %v477 = vshrl.u32 %v476, 7
    %v478 = vsub.s32 0, %v477
    %v479 = vrot.slane %v454, %v478
    %v480 = vlaneseq
    %v481 = vshrl.u32 %v480, 7
    %v482 = vsub.s32 0, %v481
    %v483 = vrot.slane %v458, %v482
    %v484 = vlaneseq
    %v485 = vshrl.u32 %v484, 7
    %v486 = vsub.s32 0, %v485
    %v487 = vrot.slane %v462, %v486
    %v488 = vlaneseq
    %v489 = vshrl.u32 %v488, 7
    %v490 = vsub.s32 0, %v489
    %v491 = vrot.slane %v466, %v490
    %v492 = vmul.f32 %v442, %v475
    %v493 = vmul.f32 %v442, %v479
    %v494 = vmul.f32 %v442, %v483
    %v495 = vmul.f32 %v442, %v487
    %v496 = vmul.f32 %v442, %v491
    %v501 = vcombine.low %v492, %v493
    %v502 = vcombine.low %v494, %v495
    %v505 = vadd.f32 %v435, %v501
    %v506 = vadd.f32 %v436, %v502
    %v507 = vadd.f32 %v437, %v496
    %v508 = vld [vmem:[%s0 + $0x3] sm:$0x7]
    %510 = vset.pattern.permute.xlu0 2
    %511 = vperm.xlu0 %510, %v508
    %v512 = vpop.permute.xlu0 %511
    %v514 = vlaneseq
    %v515 = vshrl.u32 %v514, 7
    %v516 = vsub.s32 1, %v515
    %v517 = vrot.slane %v435, %v516
    %v518 = vlaneseq
    %v519 = vshrl.u32 %v518, 7
    %v520 = vsub.s32 5, %v519
    %v521 = vrot.slane %v435, %v520
    %v522 = vlaneseq
    %v523 = vshrl.u32 %v522, 7
    %v524 = vsub.s32 1, %v523
    %v525 = vrot.slane %v436, %v524
    %v526 = vlaneseq
    %v527 = vshrl.u32 %v526, 7
    %v528 = vsub.s32 5, %v527
    %v529 = vrot.slane %v436, %v528
    %v530 = vlaneseq
    %v531 = vshrl.u32 %v530, 7
    %v532 = vsub.s32 1, %v531
    %v533 = vrot.slane %v437, %v532
    %v539 = vlaneseq
    %v540 = vshrl.u32 %v539, 7
    %v541 = vsub.s32 1, %v540
    %v542 = vrot.slane %v517, %v541
    %v543 = vlaneseq
    %v544 = vshrl.u32 %v543, 7
    %v545 = vsub.s32 1, %v544
    %v546 = vrot.slane %v521, %v545
    %v547 = vlaneseq
    %v548 = vshrl.u32 %v547, 7
    %v549 = vsub.s32 1, %v548
    %v550 = vrot.slane %v525, %v549
    %v551 = vlaneseq
    %v552 = vshrl.u32 %v551, 7
    %v553 = vsub.s32 1, %v552
    %v554 = vrot.slane %v529, %v553
    %v555 = vlaneseq
    %v556 = vshrl.u32 %v555, 7
    %v557 = vsub.s32 1, %v556
    %v558 = vrot.slane %v533, %v557
    %v559 = vmul.f32 %v512, %v542
    %v560 = vmul.f32 %v512, %v546
    %v561 = vmul.f32 %v512, %v550
    %v562 = vmul.f32 %v512, %v554
    %v563 = vmul.f32 %v512, %v558
    %v568 = vcombine.low %v559, %v560
    %v569 = vcombine.low %v561, %v562
    %v572 = vadd.f32 %v505, %v568
    %v573 = vadd.f32 %v506, %v569
    %v574 = vadd.f32 %v507, %v563
    %v575 = vld [vmem:[%s0 + $0x6] sm:$0x7]
    %577 = vset.pattern.permute.xlu0 2
    %578 = vperm.xlu0 %577, %v575
    %v579 = vpop.permute.xlu0 %578
    %v581 = vlaneseq
    %v582 = vshrl.u32 %v581, 7
    %v583 = vsub.s32 2, %v582
    %v584 = vrot.slane %v435, %v583
    %v585 = vlaneseq
    %v586 = vshrl.u32 %v585, 7
    %v587 = vsub.s32 6, %v586
    %v588 = vrot.slane %v435, %v587
    %v589 = vlaneseq
    %v590 = vshrl.u32 %v589, 7
    %v591 = vsub.s32 2, %v590
    %v592 = vrot.slane %v436, %v591
    %v593 = vlaneseq
    %v594 = vshrl.u32 %v593, 7
    %v595 = vsub.s32 6, %v594
    %v596 = vrot.slane %v436, %v595
    %v597 = vlaneseq
    %v598 = vshrl.u32 %v597, 7
    %v599 = vsub.s32 2, %v598
    %v600 = vrot.slane %v437, %v599
    %v606 = vlaneseq
    %v607 = vshrl.u32 %v606, 7
    %v608 = vsub.s32 2, %v607
    %v609 = vrot.slane %v584, %v608
    %v610 = vlaneseq
    %v611 = vshrl.u32 %v610, 7
    %v612 = vsub.s32 2, %v611
    %v613 = vrot.slane %v588, %v612
    %v614 = vlaneseq
    %v615 = vshrl.u32 %v614, 7
    %v616 = vsub.s32 2, %v615
    %v617 = vrot.slane %v592, %v616
    %v618 = vlaneseq
    %v619 = vshrl.u32 %v618, 7
    %v620 = vsub.s32 2, %v619
    %v621 = vrot.slane %v596, %v620
    %v622 = vlaneseq
    %v623 = vshrl.u32 %v622, 7
    %v624 = vsub.s32 2, %v623
    %v625 = vrot.slane %v600, %v624
    %v626 = vmul.f32 %v579, %v609
    %v627 = vmul.f32 %v579, %v613
    %v628 = vmul.f32 %v579, %v617
    %v629 = vmul.f32 %v579, %v621
    %v630 = vmul.f32 %v579, %v625
    %v635 = vcombine.low %v626, %v627
    %v636 = vcombine.low %v628, %v629
    %v639 = vadd.f32 %v572, %v635
    %v640 = vadd.f32 %v573, %v636
    %v641 = vadd.f32 %v574, %v630
    %s642 = scalar_lea.vmem [#allocation2], 40
    %643 = vst [vmem:[%s642] sm:$0x77] %v639
    %644 = vst [vmem:[%s642 + $0x8] sm:$0x77] %v640
    %645 = vst [vmem:[%s642 + $0x10] sm:$0x7] %v641
    %s646 = scalar_lea.vmem %s1, 60
    %v647 = vld [vmem:[%s646] sm:$0x77]
    %v648 = vld [vmem:[%s646 + $0x8] sm:$0x77]
    %v649 = vld [vmem:[%s646 + $0x10] sm:$0x7]
    %v650 = vld [vmem:[%s0] sm:$0x7]
    %652 = vset.pattern.permute.xlu0 3
    %653 = vperm.xlu0 %652, %v650
    %v654 = vpop.permute.xlu0 %653
    %v659 = vlaneseq
    %v660 = vshrl.u32 %v659, 7
    %v661 = vsub.s32 0, %v660
    %v662 = vrot.slane %v647, %v661
    %v663 = vlaneseq
    %v664 = vshrl.u32 %v663, 7
    %v665 = vsub.s32 4, %v664
    %v666 = vrot.slane %v647, %v665
    %v667 = vlaneseq
    %v668 = vshrl.u32 %v667, 7
    %v669 = vsub.s32 0, %v668
    %v670 = vrot.slane %v648, %v669
    %v671 = vlaneseq
    %v672 = vshrl.u32 %v671, 7
    %v673 = vsub.s32 4, %v672
    %v674 = vrot.slane %v648, %v673
    %v675 = vlaneseq
    %v676 = vshrl.u32 %v675, 7
    %v677 = vsub.s32 0, %v676
    %v678 = vrot.slane %v649, %v677
    %v684 = vlaneseq
    %v685 = vshrl.u32 %v684, 7
    %v686 = vsub.s32 0, %v685
    %v687 = vrot.slane %v662, %v686
    %v688 = vlaneseq
    %v689 = vshrl.u32 %v688, 7
    %v690 = vsub.s32 0, %v689
    %v691 = vrot.slane %v666, %v690
    %v692 = vlaneseq
    %v693 = vshrl.u32 %v692, 7
    %v694 = vsub.s32 0, %v693
    %v695 = vrot.slane %v670, %v694
    %v696 = vlaneseq
    %v697 = vshrl.u32 %v696, 7
    %v698 = vsub.s32 0, %v697
    %v699 = vrot.slane %v674, %v698
    %v700 = vlaneseq
    %v701 = vshrl.u32 %v700, 7
    %v702 = vsub.s32 0, %v701
    %v703 = vrot.slane %v678, %v702
    %v704 = vmul.f32 %v654, %v687
    %v705 = vmul.f32 %v654, %v691
    %v706 = vmul.f32 %v654, %v695
    %v707 = vmul.f32 %v654, %v699
    %v708 = vmul.f32 %v654, %v703
    %v713 = vcombine.low %v704, %v705
    %v714 = vcombine.low %v706, %v707
    %v717 = vadd.f32 %v647, %v713
    %v718 = vadd.f32 %v648, %v714
    %v719 = vadd.f32 %v649, %v708
    %v720 = vld [vmem:[%s0 + $0x3] sm:$0x7]
    %722 = vset.pattern.permute.xlu0 3
    %723 = vperm.xlu0 %722, %v720
    %v724 = vpop.permute.xlu0 %723
    %v726 = vlaneseq
    %v727 = vshrl.u32 %v726, 7
    %v728 = vsub.s32 1, %v727
    %v729 = vrot.slane %v647, %v728
    %v730 = vlaneseq
    %v731 = vshrl.u32 %v730, 7
    %v732 = vsub.s32 5, %v731
    %v733 = vrot.slane %v647, %v732
    %v734 = vlaneseq
    %v735 = vshrl.u32 %v734, 7
    %v736 = vsub.s32 1, %v735
    %v737 = vrot.slane %v648, %v736
    %v738 = vlaneseq
    %v739 = vshrl.u32 %v738, 7
    %v740 = vsub.s32 5, %v739
    %v741 = vrot.slane %v648, %v740
    %v742 = vlaneseq
    %v743 = vshrl.u32 %v742, 7
    %v744 = vsub.s32 1, %v743
    %v745 = vrot.slane %v649, %v744
    %v751 = vlaneseq
    %v752 = vshrl.u32 %v751, 7
    %v753 = vsub.s32 1, %v752
    %v754 = vrot.slane %v729, %v753
    %v755 = vlaneseq
    %v756 = vshrl.u32 %v755, 7
    %v757 = vsub.s32 1, %v756
    %v758 = vrot.slane %v733, %v757
    %v759 = vlaneseq
    %v760 = vshrl.u32 %v759, 7
    %v761 = vsub.s32 1, %v760
    %v762 = vrot.slane %v737, %v761
    %v763 = vlaneseq
    %v764 = vshrl.u32 %v763, 7
    %v765 = vsub.s32 1, %v764
    %v766 = vrot.slane %v741, %v765
    %v767 = vlaneseq
    %v768 = vshrl.u32 %v767, 7
    %v769 = vsub.s32 1, %v768
    %v770 = vrot.slane %v745, %v769
    %v771 = vmul.f32 %v724, %v754
    %v772 = vmul.f32 %v724, %v758
    %v773 = vmul.f32 %v724, %v762
    %v774 = vmul.f32 %v724, %v766
    %v775 = vmul.f32 %v724, %v770
    %v780 = vcombine.low %v771, %v772
    %v781 = vcombine.low %v773, %v774
    %v784 = vadd.f32 %v717, %v780
    %v785 = vadd.f32 %v718, %v781
    %v786 = vadd.f32 %v719, %v775
    %v787 = vld [vmem:[%s0 + $0x6] sm:$0x7]
    %789 = vset.pattern.permute.xlu0 3
    %790 = vperm.xlu0 %789, %v787
    %v791 = vpop.permute.xlu0 %790
    %v793 = vlaneseq
    %v794 = vshrl.u32 %v793, 7
    %v795 = vsub.s32 2, %v794
    %v796 = vrot.slane %v647, %v795
    %v797 = vlaneseq
    %v798 = vshrl.u32 %v797, 7
    %v799 = vsub.s32 6, %v798
    %v800 = vrot.slane %v647, %v799
    %v801 = vlaneseq
    %v802 = vshrl.u32 %v801, 7
    %v803 = vsub.s32 2, %v802
    %v804 = vrot.slane %v648, %v803
    %v805 = vlaneseq
    %v806 = vshrl.u32 %v805, 7
    %v807 = vsub.s32 6, %v806
    %v808 = vrot.slane %v648, %v807
    %v809 = vlaneseq
    %v810 = vshrl.u32 %v809, 7
    %v811 = vsub.s32 2, %v810
    %v812 = vrot.slane %v649, %v811
    %v818 = vlaneseq
    %v819 = vshrl.u32 %v818, 7
    %v820 = vsub.s32 2, %v819
    %v821 = vrot.slane %v796, %v820
    %v822 = vlaneseq
    %v823 = vshrl.u32 %v822, 7
    %v824 = vsub.s32 2, %v823
    %v825 = vrot.slane %v800, %v824
    %v826 = vlaneseq
    %v827 = vshrl.u32 %v826, 7
    %v828 = vsub.s32 2, %v827
    %v829 = vrot.slane %v804, %v828
    %v830 = vlaneseq
    %v831 = vshrl.u32 %v830, 7
    %v832 = vsub.s32 2, %v831
    %v833 = vrot.slane %v808, %v832
    %v834 = vlaneseq
    %v835 = vshrl.u32 %v834, 7
    %v836 = vsub.s32 2, %v835
    %v837 = vrot.slane %v812, %v836
    %v838 = vmul.f32 %v791, %v821
    %v839 = vmul.f32 %v791, %v825
    %v840 = vmul.f32 %v791, %v829
    %v841 = vmul.f32 %v791, %v833
    %v842 = vmul.f32 %v791, %v837
    %v847 = vcombine.low %v838, %v839
    %v848 = vcombine.low %v840, %v841
    %v851 = vadd.f32 %v784, %v847
    %v852 = vadd.f32 %v785, %v848
    %v853 = vadd.f32 %v786, %v842
    %s854 = scalar_lea.vmem [#allocation2], 60
    %855 = vst [vmem:[%s854] sm:$0x77] %v851
    %856 = vst [vmem:[%s854 + $0x8] sm:$0x77] %v852
    %857 = vst [vmem:[%s854 + $0x10] sm:$0x7] %v853
    %s858 = scalar_lea.vmem %s1, 80
    %v859 = vld [vmem:[%s858] sm:$0x77]
    %v860 = vld [vmem:[%s858 + $0x8] sm:$0x77]
    %v861 = vld [vmem:[%s858 + $0x10] sm:$0x7]
    %v862 = vld [vmem:[%s0] sm:$0x7]
    %864 = vset.pattern.permute.xlu0 4
    %865 = vperm.xlu0 %864, %v862
    %v866 = vpop.permute.xlu0 %865
    %v871 = vlaneseq
    %v872 = vshrl.u32 %v871, 7
    %v873 = vsub.s32 0, %v872
    %v874 = vrot.slane %v859, %v873
    %v875 = vlaneseq
    %v876 = vshrl.u32 %v875, 7
    %v877 = vsub.s32 4, %v876
    %v878 = vrot.slane %v859, %v877
    %v879 = vlaneseq
    %v880 = vshrl.u32 %v879, 7
    %v881 = vsub.s32 0, %v880
    %v882 = vrot.slane %v860, %v881
    %v883 = vlaneseq
    %v884 = vshrl.u32 %v883, 7
    %v885 = vsub.s32 4, %v884
    %v886 = vrot.slane %v860, %v885
    %v887 = vlaneseq
    %v888 = vshrl.u32 %v887, 7
    %v889 = vsub.s32 0, %v888
    %v890 = vrot.slane %v861, %v889
    %v896 = vlaneseq
    %v897 = vshrl.u32 %v896, 7
    %v898 = vsub.s32 0, %v897
    %v899 = vrot.slane %v874, %v898
    %v900 = vlaneseq
    %v901 = vshrl.u32 %v900, 7
    %v902 = vsub.s32 0, %v901
    %v903 = vrot.slane %v878, %v902
    %v904 = vlaneseq
    %v905 = vshrl.u32 %v904, 7
    %v906 = vsub.s32 0, %v905
    %v907 = vrot.slane %v882, %v906
    %v908 = vlaneseq
    %v909 = vshrl.u32 %v908, 7
    %v910 = vsub.s32 0, %v909
    %v911 = vrot.slane %v886, %v910
    %v912 = vlaneseq
    %v913 = vshrl.u32 %v912, 7
    %v914 = vsub.s32 0, %v913
    %v915 = vrot.slane %v890, %v914
    %v916 = vmul.f32 %v866, %v899
    %v917 = vmul.f32 %v866, %v903
    %v918 = vmul.f32 %v866, %v907
    %v919 = vmul.f32 %v866, %v911
    %v920 = vmul.f32 %v866, %v915
    %v925 = vcombine.low %v916, %v917
    %v926 = vcombine.low %v918, %v919
    %v929 = vadd.f32 %v859, %v925
    %v930 = vadd.f32 %v860, %v926
    %v931 = vadd.f32 %v861, %v920
    %v932 = vld [vmem:[%s0 + $0x3] sm:$0x7]
    %934 = vset.pattern.permute.xlu0 4
    %935 = vperm.xlu0 %934, %v932
    %v936 = vpop.permute.xlu0 %935
    %v938 = vlaneseq
    %v939 = vshrl.u32 %v938, 7
    %v940 = vsub.s32 1, %v939
    %v941 = vrot.slane %v859, %v940
    %v942 = vlaneseq
    %v943 = vshrl.u32 %v942, 7
    %v944 = vsub.s32 5, %v943
    %v945 = vrot.slane %v859, %v944
    %v946 = vlaneseq
    %v947 = vshrl.u32 %v946, 7
    %v948 = vsub.s32 1, %v947
    %v949 = vrot.slane %v860, %v948
    %v950 = vlaneseq
    %v951 = vshrl.u32 %v950, 7
    %v952 = vsub.s32 5, %v951
    %v953 = vrot.slane %v860, %v952
    %v954 = vlaneseq
    %v955 = vshrl.u32 %v954, 7
    %v956 = vsub.s32 1, %v955
    %v957 = vrot.slane %v861, %v956
    %v963 = vlaneseq
    %v964 = vshrl.u32 %v963, 7
    %v965 = vsub.s32 1, %v964
    %v966 = vrot.slane %v941, %v965
    %v967 = vlaneseq
    %v968 = vshrl.u32 %v967, 7
    %v969 = vsub.s32 1, %v968
    %v970 = vrot.slane %v945, %v969
    %v971 = vlaneseq
    %v972 = vshrl.u32 %v971, 7
    %v973 = vsub.s32 1, %v972
    %v974 = vrot.slane %v949, %v973
    %v975 = vlaneseq
    %v976 = vshrl.u32 %v975, 7
    %v977 = vsub.s32 1, %v976
    %v978 = vrot.slane %v953, %v977
    %v979 = vlaneseq
    %v980 = vshrl.u32 %v979, 7
    %v981 = vsub.s32 1, %v980
    %v982 = vrot.slane %v957, %v981
    %v983 = vmul.f32 %v936, %v966
    %v984 = vmul.f32 %v936, %v970
    %v985 = vmul.f32 %v936, %v974
    %v986 = vmul.f32 %v936, %v978
    %v987 = vmul.f32 %v936, %v982
    %v992 = vcombine.low %v983, %v984
    %v993 = vcombine.low %v985, %v986
    %v996 = vadd.f32 %v929, %v992
    %v997 = vadd.f32 %v930, %v993
    %v998 = vadd.f32 %v931, %v987
    %v999 = vld [vmem:[%s0 + $0x6] sm:$0x7]
    %1001 = vset.pattern.permute.xlu0 4
    %1002 = vperm.xlu0 %1001, %v999
    %v1003 = vpop.permute.xlu0 %1002
    %v1005 = vlaneseq
    %v1006 = vshrl.u32 %v1005, 7
    %v1007 = vsub.s32 2, %v1006
    %v1008 = vrot.slane %v859, %v1007
    %v1009 = vlaneseq
    %v1010 = vshrl.u32 %v1009, 7
    %v1011 = vsub.s32 6, %v1010
    %v1012 = vrot.slane %v859, %v1011
    %v1013 = vlaneseq
    %v1014 = vshrl.u32 %v1013, 7
    %v1015 = vsub.s32 2, %v1014
    %v1016 = vrot.slane %v860, %v1015
    %v1017 = vlaneseq
    %v1018 = vshrl.u32 %v1017, 7
    %v1019 = vsub.s32 6, %v1018
    %v1020 = vrot.slane %v860, %v1019
    %v1021 = vlaneseq
    %v1022 = vshrl.u32 %v1021, 7
    %v1023 = vsub.s32 2, %v1022
    %v1024 = vrot.slane %v861, %v1023
    %v1030 = vlaneseq
    %v1031 = vshrl.u32 %v1030, 7
    %v1032 = vsub.s32 2, %v1031
    %v1033 = vrot.slane %v1008, %v1032
    %v1034 = vlaneseq
    %v1035 = vshrl.u32 %v1034, 7
    %v1036 = vsub.s32 2, %v1035
    %v1037 = vrot.slane %v1012, %v1036
    %v1038 = vlaneseq
    %v1039 = vshrl.u32 %v1038, 7
    %v1040 = vsub.s32 2, %v1039
    %v1041 = vrot.slane %v1016, %v1040
    %v1042 = vlaneseq
    %v1043 = vshrl.u32 %v1042, 7
    %v1044 = vsub.s32 2, %v1043
    %v1045 = vrot.slane %v1020, %v1044
    %v1046 = vlaneseq
    %v1047 = vshrl.u32 %v1046, 7
    %v1048 = vsub.s32 2, %v1047
    %v1049 = vrot.slane %v1024, %v1048
    %v1050 = vmul.f32 %v1003, %v1033
    %v1051 = vmul.f32 %v1003, %v1037
    %v1052 = vmul.f32 %v1003, %v1041
    %v1053 = vmul.f32 %v1003, %v1045
    %v1054 = vmul.f32 %v1003, %v1049
    %v1059 = vcombine.low %v1050, %v1051
    %v1060 = vcombine.low %v1052, %v1053
    %v1063 = vadd.f32 %v996, %v1059
    %v1064 = vadd.f32 %v997, %v1060
    %v1065 = vadd.f32 %v998, %v1054
    %s1066 = scalar_lea.vmem [#allocation2], 80
    %1067 = vst [vmem:[%s1066] sm:$0x77] %v1063
    %1068 = vst [vmem:[%s1066 + $0x8] sm:$0x77] %v1064
    %1069 = vst [vmem:[%s1066 + $0x10] sm:$0x7] %v1065
    %s1070 = scalar_lea.vmem %s1, 100
    %v1071 = vld [vmem:[%s1070] sm:$0x77]
    %v1072 = vld [vmem:[%s1070 + $0x8] sm:$0x77]
    %v1073 = vld [vmem:[%s1070 + $0x10] sm:$0x7]
    %v1074 = vld [vmem:[%s0] sm:$0x7]
    %1076 = vset.pattern.permute.xlu0 5
    %1077 = vperm.xlu0 %1076, %v1074
    %v1078 = vpop.permute.xlu0 %1077
    %v1083 = vlaneseq
    %v1084 = vshrl.u32 %v1083, 7
    %v1085 = vsub.s32 0, %v1084
    %v1086 = vrot.slane %v1071, %v1085
    %v1087 = vlaneseq
    %v1088 = vshrl.u32 %v1087, 7
    %v1089 = vsub.s32 4, %v1088
    %v1090 = vrot.slane %v1071, %v1089
    %v1091 = vlaneseq
    %v1092 = vshrl.u32 %v1091, 7
    %v1093 = vsub.s32 0, %v1092
    %v1094 = vrot.slane %v1072, %v1093
    %v1095 = vlaneseq
    %v1096 = vshrl.u32 %v1095, 7
    %v1097 = vsub.s32 4, %v1096
    %v1098 = vrot.slane %v1072, %v1097
    %v1099 = vlaneseq
    %v1100 = vshrl.u32 %v1099, 7
    %v1101 = vsub.s32 0, %v1100
    %v1102 = vrot.slane %v1073, %v1101
    %v1108 = vlaneseq
    %v1109 = vshrl.u32 %v1108, 7
    %v1110 = vsub.s32 0, %v1109
    %v1111 = vrot.slane %v1086, %v1110
    %v1112 = vlaneseq
    %v1113 = vshrl.u32 %v1112, 7
    %v1114 = vsub.s32 0, %v1113
    %v1115 = vrot.slane %v1090, %v1114
    %v1116 = vlaneseq
    %v1117 = vshrl.u32 %v1116, 7
    %v1118 = vsub.s32 0, %v1117
    %v1119 = vrot.slane %v1094, %v1118
    %v1120 = vlaneseq
    %v1121 = vshrl.u32 %v1120, 7
    %v1122 = vsub.s32 0, %v1121
    %v1123 = vrot.slane %v1098, %v1122
    %v1124 = vlaneseq
    %v1125 = vshrl.u32 %v1124, 7
    %v1126 = vsub.s32 0, %v1125
    %v1127 = vrot.slane %v1102, %v1126
    %v1128 = vmul.f32 %v1078, %v1111
    %v1129 = vmul.f32 %v1078, %v1115
    %v1130 = vmul.f32 %v1078, %v1119
    %v1131 = vmul.f32 %v1078, %v1123
    %v1132 = vmul.f32 %v1078, %v1127
    %v1137 = vcombine.low %v1128, %v1129
    %v1138 = vcombine.low %v1130, %v1131
    %v1141 = vadd.f32 %v1071, %v1137
    %v1142 = vadd.f32 %v1072, %v1138
    %v1143 = vadd.f32 %v1073, %v1132
    %v1144 = vld [vmem:[%s0 + $0x3] sm:$0x7]
    %1146 = vset.pattern.permute.xlu0 5
    %1147 = vperm.xlu0 %1146, %v1144
    %v1148 = vpop.permute.xlu0 %1147
    %v1150 = vlaneseq
    %v1151 = vshrl.u32 %v1150, 7
    %v1152 = vsub.s32 1, %v1151
    %v1153 = vrot.slane %v1071, %v1152
    %v1154 = vlaneseq
    %v1155 = vshrl.u32 %v1154, 7
    %v1156 = vsub.s32 5, %v1155
    %v1157 = vrot.slane %v1071, %v1156
    %v1158 = vlaneseq
    %v1159 = vshrl.u32 %v1158, 7
    %v1160 = vsub.s32 1, %v1159
    %v1161 = vrot.slane %v1072, %v1160
    %v1162 = vlaneseq
    %v1163 = vshrl.u32 %v1162, 7
    %v1164 = vsub.s32 5, %v1163
    %v1165 = vrot.slane %v1072, %v1164
    %v1166 = vlaneseq
    %v1167 = vshrl.u32 %v1166, 7
    %v1168 = vsub.s32 1, %v1167
    %v1169 = vrot.slane %v1073, %v1168
    %v1175 = vlaneseq
    %v1176 = vshrl.u32 %v1175, 7
    %v1177 = vsub.s32 1, %v1176
    %v1178 = vrot.slane %v1153, %v1177
    %v1179 = vlaneseq
    %v1180 = vshrl.u32 %v1179, 7
    %v1181 = vsub.s32 1, %v1180
    %v1182 = vrot.slane %v1157, %v1181
    %v1183 = vlaneseq
    %v1184 = vshrl.u32 %v1183, 7
    %v1185 = vsub.s32 1, %v1184
    %v1186 = vrot.slane %v1161, %v1185
    %v1187 = vlaneseq
    %v1188 = vshrl.u32 %v1187, 7
    %v1189 = vsub.s32 1, %v1188
    %v1190 = vrot.slane %v1165, %v1189
    %v1191 = vlaneseq
    %v1192 = vshrl.u32 %v1191, 7
    %v1193 = vsub.s32 1, %v1192
    %v1194 = vrot.slane %v1169, %v1193
    %v1195 = vmul.f32 %v1148, %v1178
    %v1196 = vmul.f32 %v1148, %v1182
    %v1197 = vmul.f32 %v1148, %v1186
    %v1198 = vmul.f32 %v1148, %v1190
    %v1199 = vmul.f32 %v1148, %v1194
    %v1204 = vcombine.low %v1195, %v1196
    %v1205 = vcombine.low %v1197, %v1198
    %v1208 = vadd.f32 %v1141, %v1204
    %v1209 = vadd.f32 %v1142, %v1205
    %v1210 = vadd.f32 %v1143, %v1199
    %v1211 = vld [vmem:[%s0 + $0x6] sm:$0x7]
    %1213 = vset.pattern.permute.xlu0 5
    %1214 = vperm.xlu0 %1213, %v1211
    %v1215 = vpop.permute.xlu0 %1214
    %v1217 = vlaneseq
    %v1218 = vshrl.u32 %v1217, 7
    %v1219 = vsub.s32 2, %v1218
    %v1220 = vrot.slane %v1071, %v1219
    %v1221 = vlaneseq
    %v1222 = vshrl.u32 %v1221, 7
    %v1223 = vsub.s32 6, %v1222
    %v1224 = vrot.slane %v1071, %v1223
    %v1225 = vlaneseq
    %v1226 = vshrl.u32 %v1225, 7
    %v1227 = vsub.s32 2, %v1226
    %v1228 = vrot.slane %v1072, %v1227
    %v1229 = vlaneseq
    %v1230 = vshrl.u32 %v1229, 7
    %v1231 = vsub.s32 6, %v1230
    %v1232 = vrot.slane %v1072, %v1231
    %v1233 = vlaneseq
    %v1234 = vshrl.u32 %v1233, 7
    %v1235 = vsub.s32 2, %v1234
    %v1236 = vrot.slane %v1073, %v1235
    %v1242 = vlaneseq
    %v1243 = vshrl.u32 %v1242, 7
    %v1244 = vsub.s32 2, %v1243
    %v1245 = vrot.slane %v1220, %v1244
    %v1246 = vlaneseq
    %v1247 = vshrl.u32 %v1246, 7
    %v1248 = vsub.s32 2, %v1247
    %v1249 = vrot.slane %v1224, %v1248
    %v1250 = vlaneseq
    %v1251 = vshrl.u32 %v1250, 7
    %v1252 = vsub.s32 2, %v1251
    %v1253 = vrot.slane %v1228, %v1252
    %v1254 = vlaneseq
    %v1255 = vshrl.u32 %v1254, 7
    %v1256 = vsub.s32 2, %v1255
    %v1257 = vrot.slane %v1232, %v1256
    %v1258 = vlaneseq
    %v1259 = vshrl.u32 %v1258, 7
    %v1260 = vsub.s32 2, %v1259
    %v1261 = vrot.slane %v1236, %v1260
    %v1262 = vmul.f32 %v1215, %v1245
    %v1263 = vmul.f32 %v1215, %v1249
    %v1264 = vmul.f32 %v1215, %v1253
    %v1265 = vmul.f32 %v1215, %v1257
    %v1266 = vmul.f32 %v1215, %v1261
    %v1271 = vcombine.low %v1262, %v1263
    %v1272 = vcombine.low %v1264, %v1265
    %v1275 = vadd.f32 %v1208, %v1271
    %v1276 = vadd.f32 %v1209, %v1272
    %v1277 = vadd.f32 %v1210, %v1266
    %s1278 = scalar_lea.vmem [#allocation2], 100
    %1279 = vst [vmem:[%s1278] sm:$0x77] %v1275
    %1280 = vst [vmem:[%s1278 + $0x8] sm:$0x77] %v1276
    %1281 = vst [vmem:[%s1278 + $0x10] sm:$0x7] %v1277
    // Predicated region
    $region10: #{transform_forward.5} parent=1 // pred_check
      _
    $region11: #{transform_forward.5} parent=1 // pred_check_branch
      %1283 = sbr.rel (0) target = $region13
    $region12: #{transform_forward.5} parent=1 // pred_region
      %s1285 = ssub.s32 1920, 1920
      %1286 = vsyncadd [#allocation3], %s1285
      %s1287 = sshll.u32 [#allocation2], 4
      %s1288 = int_to_ptr.vmem [resolvable:$true] %s1287
      %1293 = dma.vmem_to_hbm [thread:$0]  %s1288, 1920, %s2, [#allocation3], 320, 320, 20
    $region13: #{transform_forward.5} parent=1 // pred_fallthru
      _
    // Predicated region
    $region14: #{transform_forward.5} parent=1 // pred_check
      _
    $region15: #{transform_forward.5} parent=1 // pred_check_branch
      %1295 = sbr.rel (0) target = $region17
    $region16: #{transform_forward.5} parent=1 // pred_region
      %1296 = dma.done [#allocation3], 1920
    $region17: #{transform_forward.5} parent=1 // pred_fallthru
      _
    %1297 = vsyncpa [#allocation3], 1

// kernel: transform_forward.4
$region0: #{transform_forward.4}
  #allocation0 [shape = 'u32[]', space=smem, size = 0x4, offset = 0x4, fixed_abs, tag = 'smem constant byte address 0x4 - core index']
  #allocation1 [shape = 'u32[144,128]{1,0:T(1,128)}', space=vmem, size = 0x12000, scoped, tag = 'internal scratch']
  %s0 = inlined_call_operand.vmem [shape: f32[1024,6], index: 0, kind: input, shape index: {}]
  %s1 = inlined_call_operand.vmem [shape: bf16[512,1024], index: 1, kind: input, shape index: {}]
  %s2 = inlined_call_operand.vmem [shape: f32[512,1], index: 2, kind: input, shape index: {}]
  %s3 = inlined_call_operand.vmem [shape: bf16[256,512], index: 3, kind: input, shape index: {}]
  %s4 = inlined_call_operand.vmem [shape: f32[256,1], index: 4, kind: input, shape index: {}]
  %s5 = inlined_call_operand.vmem [shape: bf16[9,256], index: 5, kind: input, shape index: {}]
  %s6 = inlined_call_operand.vmem [shape: f32[9,1], index: 6, kind: input, shape index: {}]
  %s7 = inlined_call_operand.vmem [shape: f32[9,6], index: 7, kind: output, shape index: {}]
  %s8 = sld [smem:[#allocation0]]
  $region38: #{transform_forward.4} parent=0
    _
  %s10 = ssub.s32 1, %s8
  %s11 = scalar_select 0, %s10, %s8
  // Predicated region
  $region2: #{transform_forward.4} parent=0 // pred_check
    _
  $region3: #{transform_forward.4} parent=0 // pred_check_branch
    %13 = sbr.rel (0) target = $region5
  $region4: #{transform_forward.4} parent=0 // pred_region
    _
  $region5: #{transform_forward.4} parent=0 // pred_fallthru
    _
  // Predicated region
  $region6: #{transform_forward.4} parent=0 // pred_check
    _
  $region7: #{transform_forward.4} parent=0 // pred_check_branch
    %15 = sbr.rel (0) target = $region9
  $region8: #{transform_forward.4} parent=0 // pred_region
    _
  $region9: #{transform_forward.4} parent=0 // pred_fallthru
    _
  // Predicated region
  $region10: #{transform_forward.4} parent=0 // pred_check
    _
  $region11: #{transform_forward.4} parent=0 // pred_check_branch
    %17 = sbr.rel (0) target = $region13
  $region12: #{transform_forward.4} parent=0 // pred_region
    _
  $region13: #{transform_forward.4} parent=0 // pred_fallthru
    _
  // Predicated region
  $region14: #{transform_forward.4} parent=0 // pred_check
    _
  $region15: #{transform_forward.4} parent=0 // pred_check_branch
    %19 = sbr.rel (0) target = $region17
  $region16: #{transform_forward.4} parent=0 // pred_region
    _
  $region17: #{transform_forward.4} parent=0 // pred_fallthru
    _
  // Predicated region
  $region18: #{transform_forward.4} parent=0 // pred_check
    _
  $region19: #{transform_forward.4} parent=0 // pred_check_branch
    %21 = sbr.rel (0) target = $region21
  $region20: #{transform_forward.4} parent=0 // pred_region
    _
  $region21: #{transform_forward.4} parent=0 // pred_fallthru
    _
  // Predicated region
  $region22: #{transform_forward.4} parent=0 // pred_check
    _
  $region23: #{transform_forward.4} parent=0 // pred_check_branch
    %23 = sbr.rel (0) target = $region25
  $region24: #{transform_forward.4} parent=0 // pred_region
    _
  $region25: #{transform_forward.4} parent=0 // pred_fallthru
    _
  // Predicated region
  $region26: #{transform_forward.4} parent=0 // pred_check
    _
  $region27: #{transform_forward.4} parent=0 // pred_check_branch
    %25 = sbr.rel (0) target = $region29
  $region28: #{transform_forward.4} parent=0 // pred_region
    _
  $region29: #{transform_forward.4} parent=0 // pred_fallthru
    _
  %v27 = vld [vmem:[%s0] sm:$0xff]
  %v28 = vld [vmem:[%s0 + $0x8] sm:$0xff]
  %v29 = vld [vmem:[%s0 + $0x10] sm:$0xff]
  %v30 = vld [vmem:[%s0 + $0x18] sm:$0xff]
  %v31 = vld [vmem:[%s0 + $0x20] sm:$0xff]
  %v32 = vld [vmem:[%s0 + $0x28] sm:$0xff]
  %v33 = vld [vmem:[%s0 + $0x30] sm:$0xff]
  %v34 = vld [vmem:[%s0 + $0x38] sm:$0xff]
  %v35 = vld [vmem:[%s0 + $0x40] sm:$0xff]
  %v36 = vld [vmem:[%s0 + $0x48] sm:$0xff]
  %v37 = vld [vmem:[%s0 + $0x50] sm:$0xff]
  %v38 = vld [vmem:[%s0 + $0x58] sm:$0xff]
  %v39 = vld [vmem:[%s0 + $0x60] sm:$0xff]
  %v40 = vld [vmem:[%s0 + $0x68] sm:$0xff]
  %v41 = vld [vmem:[%s0 + $0x70] sm:$0xff]
  %v42 = vld [vmem:[%s0 + $0x78] sm:$0xff]
  %v43 = vld [vmem:[%s0 + $0x80] sm:$0xff]
  %v44 = vld [vmem:[%s0 + $0x88] sm:$0xff]
  %v45 = vld [vmem:[%s0 + $0x90] sm:$0xff]
  %v46 = vld [vmem:[%s0 + $0x98] sm:$0xff]
  %v47 = vld [vmem:[%s0 + $0xa0] sm:$0xff]
  %v48 = vld [vmem:[%s0 + $0xa8] sm:$0xff]
  %v49 = vld [vmem:[%s0 + $0xb0] sm:$0xff]
  %v50 = vld [vmem:[%s0 + $0xb8] sm:$0xff]
  %v51 = vld [vmem:[%s0 + $0xc0] sm:$0xff]
  %v52 = vld [vmem:[%s0 + $0xc8] sm:$0xff]
  %v53 = vld [vmem:[%s0 + $0xd0] sm:$0xff]
  %v54 = vld [vmem:[%s0 + $0xd8] sm:$0xff]
  %v55 = vld [vmem:[%s0 + $0xe0] sm:$0xff]
  %v56 = vld [vmem:[%s0 + $0xe8] sm:$0xff]
  %v57 = vld [vmem:[%s0 + $0xf0] sm:$0xff]
  %v58 = vld [vmem:[%s0 + $0xf8] sm:$0xff]
  %v59 = vld [vmem:[%s0 + $0x100] sm:$0xff]
  %v60 = vld [vmem:[%s0 + $0x108] sm:$0xff]
  %v61 = vld [vmem:[%s0 + $0x110] sm:$0xff]
  %v62 = vld [vmem:[%s0 + $0x118] sm:$0xff]
  %v63 = vld [vmem:[%s0 + $0x120] sm:$0xff]
  %v64 = vld [vmem:[%s0 + $0x128] sm:$0xff]
  %v65 = vld [vmem:[%s0 + $0x130] sm:$0xff]
  %v66 = vld [vmem:[%s0 + $0x138] sm:$0xff]
  %v67 = vld [vmem:[%s0 + $0x140] sm:$0xff]
  %v68 = vld [vmem:[%s0 + $0x148] sm:$0xff]
  %v69 = vld [vmem:[%s0 + $0x150] sm:$0xff]
  %v70 = vld [vmem:[%s0 + $0x158] sm:$0xff]
  %v71 = vld [vmem:[%s0 + $0x160] sm:$0xff]
  %v72 = vld [vmem:[%s0 + $0x168] sm:$0xff]
  %v73 = vld [vmem:[%s0 + $0x170] sm:$0xff]
  %v74 = vld [vmem:[%s0 + $0x178] sm:$0xff]
  %v75 = vld [vmem:[%s0 + $0x180] sm:$0xff]
  %v76 = vld [vmem:[%s0 + $0x188] sm:$0xff]
  %v77 = vld [vmem:[%s0 + $0x190] sm:$0xff]
  %v78 = vld [vmem:[%s0 + $0x198] sm:$0xff]
  %v79 = vld [vmem:[%s0 + $0x1a0] sm:$0xff]
  %v80 = vld [vmem:[%s0 + $0x1a8] sm:$0xff]
  %v81 = vld [vmem:[%s0 + $0x1b0] sm:$0xff]
  %v82 = vld [vmem:[%s0 + $0x1b8] sm:$0xff]
  %v83 = vld [vmem:[%s0 + $0x1c0] sm:$0xff]
  %v84 = vld [vmem:[%s0 + $0x1c8] sm:$0xff]
  %v85 = vld [vmem:[%s0 + $0x1d0] sm:$0xff]
  %v86 = vld [vmem:[%s0 + $0x1d8] sm:$0xff]
  %v87 = vld [vmem:[%s0 + $0x1e0] sm:$0xff]
  %v88 = vld [vmem:[%s0 + $0x1e8] sm:$0xff]
  %v89 = vld [vmem:[%s0 + $0x1f0] sm:$0xff]
  %v90 = vld [vmem:[%s0 + $0x1f8] sm:$0xff]
  %v91 = vld [vmem:[%s0 + $0x200] sm:$0xff]
  %v92 = vld [vmem:[%s0 + $0x208] sm:$0xff]
  %v93 = vld [vmem:[%s0 + $0x210] sm:$0xff]
  %v94 = vld [vmem:[%s0 + $0x218] sm:$0xff]
  %v95 = vld [vmem:[%s0 + $0x220] sm:$0xff]
  %v96 = vld [vmem:[%s0 + $0x228] sm:$0xff]
  %v97 = vld [vmem:[%s0 + $0x230] sm:$0xff]
  %v98 = vld [vmem:[%s0 + $0x238] sm:$0xff]
  %v99 = vld [vmem:[%s0 + $0x240] sm:$0xff]
  %v100 = vld [vmem:[%s0 + $0x248] sm:$0xff]
  %v101 = vld [vmem:[%s0 + $0x250] sm:$0xff]
  %v102 = vld [vmem:[%s0 + $0x258] sm:$0xff]
  %v103 = vld [vmem:[%s0 + $0x260] sm:$0xff]
  %v104 = vld [vmem:[%s0 + $0x268] sm:$0xff]
  %v105 = vld [vmem:[%s0 + $0x270] sm:$0xff]
  %v106 = vld [vmem:[%s0 + $0x278] sm:$0xff]
  %v107 = vld [vmem:[%s0 + $0x280] sm:$0xff]
  %v108 = vld [vmem:[%s0 + $0x288] sm:$0xff]
  %v109 = vld [vmem:[%s0 + $0x290] sm:$0xff]
  %v110 = vld [vmem:[%s0 + $0x298] sm:$0xff]
  %v111 = vld [vmem:[%s0 + $0x2a0] sm:$0xff]
  %v112 = vld [vmem:[%s0 + $0x2a8] sm:$0xff]
  %v113 = vld [vmem:[%s0 + $0x2b0] sm:$0xff]
  %v114 = vld [vmem:[%s0 + $0x2b8] sm:$0xff]
  %v115 = vld [vmem:[%s0 + $0x2c0] sm:$0xff]
  %v116 = vld [vmem:[%s0 + $0x2c8] sm:$0xff]
  %v117 = vld [vmem:[%s0 + $0x2d0] sm:$0xff]
  %v118 = vld [vmem:[%s0 + $0x2d8] sm:$0xff]
  %v119 = vld [vmem:[%s0 + $0x2e0] sm:$0xff]
  %v120 = vld [vmem:[%s0 + $0x2e8] sm:$0xff]
  %v121 = vld [vmem:[%s0 + $0x2f0] sm:$0xff]
  %v122 = vld [vmem:[%s0 + $0x2f8] sm:$0xff]
  %v123 = vld [vmem:[%s0 + $0x300] sm:$0xff]
  %v124 = vld [vmem:[%s0 + $0x308] sm:$0xff]
  %v125 = vld [vmem:[%s0 + $0x310] sm:$0xff]
  %v126 = vld [vmem:[%s0 + $0x318] sm:$0xff]
  %v127 = vld [vmem:[%s0 + $0x320] sm:$0xff]
  %v128 = vld [vmem:[%s0 + $0x328] sm:$0xff]
  %v129 = vld [vmem:[%s0 + $0x330] sm:$0xff]
  %v130 = vld [vmem:[%s0 + $0x338] sm:$0xff]
  %v131 = vld [vmem:[%s0 + $0x340] sm:$0xff]
  %v132 = vld [vmem:[%s0 + $0x348] sm:$0xff]
  %v133 = vld [vmem:[%s0 + $0x350] sm:$0xff]
  %v134 = vld [vmem:[%s0 + $0x358] sm:$0xff]
  %v135 = vld [vmem:[%s0 + $0x360] sm:$0xff]
  %v136 = vld [vmem:[%s0 + $0x368] sm:$0xff]
  %v137 = vld [vmem:[%s0 + $0x370] sm:$0xff]
  %v138 = vld [vmem:[%s0 + $0x378] sm:$0xff]
  %v139 = vld [vmem:[%s0 + $0x380] sm:$0xff]
  %v140 = vld [vmem:[%s0 + $0x388] sm:$0xff]
  %v141 = vld [vmem:[%s0 + $0x390] sm:$0xff]
  %v142 = vld [vmem:[%s0 + $0x398] sm:$0xff]
  %v143 = vld [vmem:[%s0 + $0x3a0] sm:$0xff]
  %v144 = vld [vmem:[%s0 + $0x3a8] sm:$0xff]
  %v145 = vld [vmem:[%s0 + $0x3b0] sm:$0xff]
  %v146 = vld [vmem:[%s0 + $0x3b8] sm:$0xff]
  %v147 = vld [vmem:[%s0 + $0x3c0] sm:$0xff]
  %v148 = vld [vmem:[%s0 + $0x3c8] sm:$0xff]
  %v149 = vld [vmem:[%s0 + $0x3d0] sm:$0xff]
  %v150 = vld [vmem:[%s0 + $0x3d8] sm:$0xff]
  %v151 = vld [vmem:[%s0 + $0x3e0] sm:$0xff]
  %v152 = vld [vmem:[%s0 + $0x3e8] sm:$0xff]
  %v153 = vld [vmem:[%s0 + $0x3f0] sm:$0xff]
  %v154 = vld [vmem:[%s0 + $0x3f8] sm:$0xff]
  %v155 = vpack.c.bf16 %v28, %v27
  %v156 = vpack.c.bf16 %v30, %v29
  %v157 = vpack.c.bf16 %v32, %v31
  %v158 = vpack.c.bf16 %v34, %v33
  %v159 = vpack.c.bf16 %v36, %v35
  %v160 = vpack.c.bf16 %v38, %v37
  %v161 = vpack.c.bf16 %v40, %v39
  %v162 = vpack.c.bf16 %v42, %v41
  %v163 = vpack.c.bf16 %v44, %v43
  %v164 = vpack.c.bf16 %v46, %v45
  %v165 = vpack.c.bf16 %v48, %v47
  %v166 = vpack.c.bf16 %v50, %v49
  %v167 = vpack.c.bf16 %v52, %v51
  %v168 = vpack.c.bf16 %v54, %v53
  %v169 = vpack.c.bf16 %v56, %v55
  %v170 = vpack.c.bf16 %v58, %v57
  %v171 = vpack.c.bf16 %v60, %v59
  %v172 = vpack.c.bf16 %v62, %v61
  %v173 = vpack.c.bf16 %v64, %v63
  %v174 = vpack.c.bf16 %v66, %v65
  %v175 = vpack.c.bf16 %v68, %v67
  %v176 = vpack.c.bf16 %v70, %v69
  %v177 = vpack.c.bf16 %v72, %v71
  %v178 = vpack.c.bf16 %v74, %v73
  %v179 = vpack.c.bf16 %v76, %v75
  %v180 = vpack.c.bf16 %v78, %v77
  %v181 = vpack.c.bf16 %v80, %v79
  %v182 = vpack.c.bf16 %v82, %v81
  %v183 = vpack.c.bf16 %v84, %v83
  %v184 = vpack.c.bf16 %v86, %v85
  %v185 = vpack.c.bf16 %v88, %v87
  %v186 = vpack.c.bf16 %v90, %v89
  %v187 = vpack.c.bf16 %v92, %v91
  %v188 = vpack.c.bf16 %v94, %v93
  %v189 = vpack.c.bf16 %v96, %v95
  %v190 = vpack.c.bf16 %v98, %v97
  %v191 = vpack.c.bf16 %v100, %v99
  %v192 = vpack.c.bf16 %v102, %v101
  %v193 = vpack.c.bf16 %v104, %v103
  %v194 = vpack.c.bf16 %v106, %v105
  %v195 = vpack.c.bf16 %v108, %v107
  %v196 = vpack.c.bf16 %v110, %v109
  %v197 = vpack.c.bf16 %v112, %v111
  %v198 = vpack.c.bf16 %v114, %v113
  %v199 = vpack.c.bf16 %v116, %v115
  %v200 = vpack.c.bf16 %v118, %v117
  %v201 = vpack.c.bf16 %v120, %v119
  %v202 = vpack.c.bf16 %v122, %v121
  %v203 = vpack.c.bf16 %v124, %v123
  %v204 = vpack.c.bf16 %v126, %v125
  %v205 = vpack.c.bf16 %v128, %v127
  %v206 = vpack.c.bf16 %v130, %v129
  %v207 = vpack.c.bf16 %v132, %v131
  %v208 = vpack.c.bf16 %v134, %v133
  %v209 = vpack.c.bf16 %v136, %v135
  %v210 = vpack.c.bf16 %v138, %v137
  %v211 = vpack.c.bf16 %v140, %v139
  %v212 = vpack.c.bf16 %v142, %v141
  %v213 = vpack.c.bf16 %v144, %v143
  %v214 = vpack.c.bf16 %v146, %v145
  %v215 = vpack.c.bf16 %v148, %v147
  %v216 = vpack.c.bf16 %v150, %v149
  %v217 = vpack.c.bf16 %v152, %v151
  %v218 = vpack.c.bf16 %v154, %v153
  %v219 = vld [vmem:[%s1] sm:$0xff]
  %v220 = vld [vmem:[%s1 + $0x8] sm:$0xff]
  %v221 = vld [vmem:[%s1 + $0x10] sm:$0xff]
  %v222 = vld [vmem:[%s1 + $0x18] sm:$0xff]
  %v223 = vld [vmem:[%s1 + $0x20] sm:$0xff]
  %v224 = vld [vmem:[%s1 + $0x28] sm:$0xff]
  %v225 = vld [vmem:[%s1 + $0x30] sm:$0xff]
  %v226 = vld [vmem:[%s1 + $0x38] sm:$0xff]
  %v227 = vld [vmem:[%s1 + $0x40] sm:$0xff]
  %v228 = vld [vmem:[%s1 + $0x48] sm:$0xff]
  %v229 = vld [vmem:[%s1 + $0x50] sm:$0xff]
  %v230 = vld [vmem:[%s1 + $0x58] sm:$0xff]
  %v231 = vld [vmem:[%s1 + $0x60] sm:$0xff]
  %v232 = vld [vmem:[%s1 + $0x68] sm:$0xff]
  %v233 = vld [vmem:[%s1 + $0x70] sm:$0xff]
  %v234 = vld [vmem:[%s1 + $0x78] sm:$0xff]
  %v235 = vld [vmem:[%s1 + $0x80] sm:$0xff]
  %v236 = vld [vmem:[%s1 + $0x88] sm:$0xff]
  %v237 = vld [vmem:[%s1 + $0x90] sm:$0xff]
  %v238 = vld [vmem:[%s1 + $0x98] sm:$0xff]
  %v239 = vld [vmem:[%s1 + $0xa0] sm:$0xff]
  %v240 = vld [vmem:[%s1 + $0xa8] sm:$0xff]
  %v241 = vld [vmem:[%s1 + $0xb0] sm:$0xff]
  %v242 = vld [vmem:[%s1 + $0xb8] sm:$0xff]
  %v243 = vld [vmem:[%s1 + $0xc0] sm:$0xff]
  %v244 = vld [vmem:[%s1 + $0xc8] sm:$0xff]
  %v245 = vld [vmem:[%s1 + $0xd0] sm:$0xff]
  %v246 = vld [vmem:[%s1 + $0xd8] sm:$0xff]
  %v247 = vld [vmem:[%s1 + $0xe0] sm:$0xff]
  %v248 = vld [vmem:[%s1 + $0xe8] sm:$0xff]
  %v249 = vld [vmem:[%s1 + $0xf0] sm:$0xff]
  %v250 = vld [vmem:[%s1 + $0xf8] sm:$0xff]
  %v251 = vld [vmem:[%s1 + $0x100] sm:$0xff]
  %v252 = vld [vmem:[%s1 + $0x108] sm:$0xff]
  %v253 = vld [vmem:[%s1 + $0x110] sm:$0xff]
  %v254 = vld [vmem:[%s1 + $0x118] sm:$0xff]
  %v255 = vld [vmem:[%s1 + $0x120] sm:$0xff]
  %v256 = vld [vmem:[%s1 + $0x128] sm:$0xff]
  %v257 = vld [vmem:[%s1 + $0x130] sm:$0xff]
  %v258 = vld [vmem:[%s1 + $0x138] sm:$0xff]
  %v259 = vld [vmem:[%s1 + $0x140] sm:$0xff]
  %v260 = vld [vmem:[%s1 + $0x148] sm:$0xff]
  %v261 = vld [vmem:[%s1 + $0x150] sm:$0xff]
  %v262 = vld [vmem:[%s1 + $0x158] sm:$0xff]
  %v263 = vld [vmem:[%s1 + $0x160] sm:$0xff]
  %v264 = vld [vmem:[%s1 + $0x168] sm:$0xff]
  %v265 = vld [vmem:[%s1 + $0x170] sm:$0xff]
  %v266 = vld [vmem:[%s1 + $0x178] sm:$0xff]
  %v267 = vld [vmem:[%s1 + $0x180] sm:$0xff]
  %v268 = vld [vmem:[%s1 + $0x188] sm:$0xff]
  %v269 = vld [vmem:[%s1 + $0x190] sm:$0xff]
  %v270 = vld [vmem:[%s1 + $0x198] sm:$0xff]
  %v271 = vld [vmem:[%s1 + $0x1a0] sm:$0xff]
  %v272 = vld [vmem:[%s1 + $0x1a8] sm:$0xff]
  %v273 = vld [vmem:[%s1 + $0x1b0] sm:$0xff]
  %v274 = vld [vmem:[%s1 + $0x1b8] sm:$0xff]
  %v275 = vld [vmem:[%s1 + $0x1c0] sm:$0xff]
  %v276 = vld [vmem:[%s1 + $0x1c8] sm:$0xff]
  %v277 = vld [vmem:[%s1 + $0x1d0] sm:$0xff]
  %v278 = vld [vmem:[%s1 + $0x1d8] sm:$0xff]
  %v279 = vld [vmem:[%s1 + $0x1e0] sm:$0xff]
  %v280 = vld [vmem:[%s1 + $0x1e8] sm:$0xff]
  %v281 = vld [vmem:[%s1 + $0x1f0] sm:$0xff]
  %v282 = vld [vmem:[%s1 + $0x1f8] sm:$0xff]
  %v283 = vld [vmem:[%s1 + $0x200] sm:$0xff]
  %v284 = vld [vmem:[%s1 + $0x208] sm:$0xff]
  %v285 = vld [vmem:[%s1 + $0x210] sm:$0xff]
  %v286 = vld [vmem:[%s1 + $0x218] sm:$0xff]
  %v287 = vld [vmem:[%s1 + $0x220] sm:$0xff]
  %v288 = vld [vmem:[%s1 + $0x228] sm:$0xff]
  %v289 = vld [vmem:[%s1 + $0x230] sm:$0xff]
  %v290 = vld [vmem:[%s1 + $0x238] sm:$0xff]
  %v291 = vld [vmem:[%s1 + $0x240] sm:$0xff]
  %v292 = vld [vmem:[%s1 + $0x248] sm:$0xff]
  %v293 = vld [vmem:[%s1 + $0x250] sm:$0xff]
  %v294 = vld [vmem:[%s1 + $0x258] sm:$0xff]
  %v295 = vld [vmem:[%s1 + $0x260] sm:$0xff]
  %v296 = vld [vmem:[%s1 + $0x268] sm:$0xff]
  %v297 = vld [vmem:[%s1 + $0x270] sm:$0xff]
  %v298 = vld [vmem:[%s1 + $0x278] sm:$0xff]
  %v299 = vld [vmem:[%s1 + $0x280] sm:$0xff]
  %v300 = vld [vmem:[%s1 + $0x288] sm:$0xff]
  %v301 = vld [vmem:[%s1 + $0x290] sm:$0xff]
  %v302 = vld [vmem:[%s1 + $0x298] sm:$0xff]
  %v303 = vld [vmem:[%s1 + $0x2a0] sm:$0xff]
  %v304 = vld [vmem:[%s1 + $0x2a8] sm:$0xff]
  %v305 = vld [vmem:[%s1 + $0x2b0] sm:$0xff]
  %v306 = vld [vmem:[%s1 + $0x2b8] sm:$0xff]
  %v307 = vld [vmem:[%s1 + $0x2c0] sm:$0xff]
  %v308 = vld [vmem:[%s1 + $0x2c8] sm:$0xff]
  %v309 = vld [vmem:[%s1 + $0x2d0] sm:$0xff]
  %v310 = vld [vmem:[%s1 + $0x2d8] sm:$0xff]
  %v311 = vld [vmem:[%s1 + $0x2e0] sm:$0xff]
  %v312 = vld [vmem:[%s1 + $0x2e8] sm:$0xff]
  %v313 = vld [vmem:[%s1 + $0x2f0] sm:$0xff]
  %v314 = vld [vmem:[%s1 + $0x2f8] sm:$0xff]
  %v315 = vld [vmem:[%s1 + $0x300] sm:$0xff]
  %v316 = vld [vmem:[%s1 + $0x308] sm:$0xff]
  %v317 = vld [vmem:[%s1 + $0x310] sm:$0xff]
  %v318 = vld [vmem:[%s1 + $0x318] sm:$0xff]
  %v319 = vld [vmem:[%s1 + $0x320] sm:$0xff]
  %v320 = vld [vmem:[%s1 + $0x328] sm:$0xff]
  %v321 = vld [vmem:[%s1 + $0x330] sm:$0xff]
  %v322 = vld [vmem:[%s1 + $0x338] sm:$0xff]
  %v323 = vld [vmem:[%s1 + $0x340] sm:$0xff]
  %v324 = vld [vmem:[%s1 + $0x348] sm:$0xff]
  %v325 = vld [vmem:[%s1 + $0x350] sm:$0xff]
  %v326 = vld [vmem:[%s1 + $0x358] sm:$0xff]
  %v327 = vld [vmem:[%s1 + $0x360] sm:$0xff]
  %v328 = vld [vmem:[%s1 + $0x368] sm:$0xff]
  %v329 = vld [vmem:[%s1 + $0x370] sm:$0xff]
  %v330 = vld [vmem:[%s1 + $0x378] sm:$0xff]
  %v331 = vld [vmem:[%s1 + $0x380] sm:$0xff]
  %v332 = vld [vmem:[%s1 + $0x388] sm:$0xff]
  %v333 = vld [vmem:[%s1 + $0x390] sm:$0xff]
  %v334 = vld [vmem:[%s1 + $0x398] sm:$0xff]
  %v335 = vld [vmem:[%s1 + $0x3a0] sm:$0xff]
  %v336 = vld [vmem:[%s1 + $0x3a8] sm:$0xff]
  %v337 = vld [vmem:[%s1 + $0x3b0] sm:$0xff]
  %v338 = vld [vmem:[%s1 + $0x3b8] sm:$0xff]
  %v339 = vld [vmem:[%s1 + $0x3c0] sm:$0xff]
  %v340 = vld [vmem:[%s1 + $0x3c8] sm:$0xff]
  %v341 = vld [vmem:[%s1 + $0x3d0] sm:$0xff]
  %v342 = vld [vmem:[%s1 + $0x3d8] sm:$0xff]
  %v343 = vld [vmem:[%s1 + $0x3e0] sm:$0xff]
  %v344 = vld [vmem:[%s1 + $0x3e8] sm:$0xff]
  %v345 = vld [vmem:[%s1 + $0x3f0] sm:$0xff]
  %v346 = vld [vmem:[%s1 + $0x3f8] sm:$0xff]
  %v347 = vld [vmem:[%s1 + $0x400] sm:$0xff]
  %v348 = vld [vmem:[%s1 + $0x408] sm:$0xff]
  %v349 = vld [vmem:[%s1 + $0x410] sm:$0xff]
  %v350 = vld [vmem:[%s1 + $0x418] sm:$0xff]
  %v351 = vld [vmem:[%s1 + $0x420] sm:$0xff]
  %v352 = vld [vmem:[%s1 + $0x428] sm:$0xff]
  %v353 = vld [vmem:[%s1 + $0x430] sm:$0xff]
  %v354 = vld [vmem:[%s1 + $0x438] sm:$0xff]
  %v355 = vld [vmem:[%s1 + $0x440] sm:$0xff]
  %v356 = vld [vmem:[%s1 + $0x448] sm:$0xff]
  %v357 = vld [vmem:[%s1 + $0x450] sm:$0xff]
  %v358 = vld [vmem:[%s1 + $0x458] sm:$0xff]
  %v359 = vld [vmem:[%s1 + $0x460] sm:$0xff]
  %v360 = vld [vmem:[%s1 + $0x468] sm:$0xff]
  %v361 = vld [vmem:[%s1 + $0x470] sm:$0xff]
  %v362 = vld [vmem:[%s1 + $0x478] sm:$0xff]
  %v363 = vld [vmem:[%s1 + $0x480] sm:$0xff]
  %v364 = vld [vmem:[%s1 + $0x488] sm:$0xff]
  %v365 = vld [vmem:[%s1 + $0x490] sm:$0xff]
  %v366 = vld [vmem:[%s1 + $0x498] sm:$0xff]
  %v367 = vld [vmem:[%s1 + $0x4a0] sm:$0xff]
  %v368 = vld [vmem:[%s1 + $0x4a8] sm:$0xff]
  %v369 = vld [vmem:[%s1 + $0x4b0] sm:$0xff]
  %v370 = vld [vmem:[%s1 + $0x4b8] sm:$0xff]
  %v371 = vld [vmem:[%s1 + $0x4c0] sm:$0xff]
  %v372 = vld [vmem:[%s1 + $0x4c8] sm:$0xff]
  %v373 = vld [vmem:[%s1 + $0x4d0] sm:$0xff]
  %v374 = vld [vmem:[%s1 + $0x4d8] sm:$0xff]
  %v375 = vld [vmem:[%s1 + $0x4e0] sm:$0xff]
  %v376 = vld [vmem:[%s1 + $0x4e8] sm:$0xff]
  %v377 = vld [vmem:[%s1 + $0x4f0] sm:$0xff]
  %v378 = vld [vmem:[%s1 + $0x4f8] sm:$0xff]
  %v379 = vld [vmem:[%s1 + $0x500] sm:$0xff]
  %v380 = vld [vmem:[%s1 + $0x508] sm:$0xff]
  %v381 = vld [vmem:[%s1 + $0x510] sm:$0xff]
  %v382 = vld [vmem:[%s1 + $0x518] sm:$0xff]
  %v383 = vld [vmem:[%s1 + $0x520] sm:$0xff]
  %v384 = vld [vmem:[%s1 + $0x528] sm:$0xff]
  %v385 = vld [vmem:[%s1 + $0x530] sm:$0xff]
  %v386 = vld [vmem:[%s1 + $0x538] sm:$0xff]
  %v387 = vld [vmem:[%s1 + $0x540] sm:$0xff]
  %v388 = vld [vmem:[%s1 + $0x548] sm:$0xff]
  %v389 = vld [vmem:[%s1 + $0x550] sm:$0xff]
  %v390 = vld [vmem:[%s1 + $0x558] sm:$0xff]
  %v391 = vld [vmem:[%s1 + $0x560] sm:$0xff]
  %v392 = vld [vmem:[%s1 + $0x568] sm:$0xff]
  %v393 = vld [vmem:[%s1 + $0x570] sm:$0xff]
  %v394 = vld [vmem:[%s1 + $0x578] sm:$0xff]
  %v395 = vld [vmem:[%s1 + $0x580] sm:$0xff]
  %v396 = vld [vmem:[%s1 + $0x588] sm:$0xff]
  %v397 = vld [vmem:[%s1 + $0x590] sm:$0xff]
  %v398 = vld [vmem:[%s1 + $0x598] sm:$0xff]
  %v399 = vld [vmem:[%s1 + $0x5a0] sm:$0xff]
  %v400 = vld [vmem:[%s1 + $0x5a8] sm:$0xff]
  %v401 = vld [vmem:[%s1 + $0x5b0] sm:$0xff]
  %v402 = vld [vmem:[%s1 + $0x5b8] sm:$0xff]
  %v403 = vld [vmem:[%s1 + $0x5c0] sm:$0xff]
  %v404 = vld [vmem:[%s1 + $0x5c8] sm:$0xff]
  %v405 = vld [vmem:[%s1 + $0x5d0] sm:$0xff]
  %v406 = vld [vmem:[%s1 + $0x5d8] sm:$0xff]
  %v407 = vld [vmem:[%s1 + $0x5e0] sm:$0xff]
  %v408 = vld [vmem:[%s1 + $0x5e8] sm:$0xff]
  %v409 = vld [vmem:[%s1 + $0x5f0] sm:$0xff]
  %v410 = vld [vmem:[%s1 + $0x5f8] sm:$0xff]
  %v411 = vld [vmem:[%s1 + $0x600] sm:$0xff]
  %v412 = vld [vmem:[%s1 + $0x608] sm:$0xff]
  %v413 = vld [vmem:[%s1 + $0x610] sm:$0xff]
  %v414 = vld [vmem:[%s1 + $0x618] sm:$0xff]
  %v415 = vld [vmem:[%s1 + $0x620] sm:$0xff]
  %v416 = vld [vmem:[%s1 + $0x628] sm:$0xff]
  %v417 = vld [vmem:[%s1 + $0x630] sm:$0xff]
  %v418 = vld [vmem:[%s1 + $0x638] sm:$0xff]
  %v419 = vld [vmem:[%s1 + $0x640] sm:$0xff]
  %v420 = vld [vmem:[%s1 + $0x648] sm:$0xff]
  %v421 = vld [vmem:[%s1 + $0x650] sm:$0xff]
  %v422 = vld [vmem:[%s1 + $0x658] sm:$0xff]
  %v423 = vld [vmem:[%s1 + $0x660] sm:$0xff]
  %v424 = vld [vmem:[%s1 + $0x668] sm:$0xff]
  %v425 = vld [vmem:[%s1 + $0x670] sm:$0xff]
  %v426 = vld [vmem:[%s1 + $0x678] sm:$0xff]
  %v427 = vld [vmem:[%s1 + $0x680] sm:$0xff]
  %v428 = vld [vmem:[%s1 + $0x688] sm:$0xff]
  %v429 = vld [vmem:[%s1 + $0x690] sm:$0xff]
  %v430 = vld [vmem:[%s1 + $0x698] sm:$0xff]
  %v431 = vld [vmem:[%s1 + $0x6a0] sm:$0xff]
  %v432 = vld [vmem:[%s1 + $0x6a8] sm:$0xff]
  %v433 = vld [vmem:[%s1 + $0x6b0] sm:$0xff]
  %v434 = vld [vmem:[%s1 + $0x6b8] sm:$0xff]
  %v435 = vld [vmem:[%s1 + $0x6c0] sm:$0xff]
  %v436 = vld [vmem:[%s1 + $0x6c8] sm:$0xff]
  %v437 = vld [vmem:[%s1 + $0x6d0] sm:$0xff]
  %v438 = vld [vmem:[%s1 + $0x6d8] sm:$0xff]
  %v439 = vld [vmem:[%s1 + $0x6e0] sm:$0xff]
  %v440 = vld [vmem:[%s1 + $0x6e8] sm:$0xff]
  %v441 = vld [vmem:[%s1 + $0x6f0] sm:$0xff]
  %v442 = vld [vmem:[%s1 + $0x6f8] sm:$0xff]
  %v443 = vld [vmem:[%s1 + $0x700] sm:$0xff]
  %v444 = vld [vmem:[%s1 + $0x708] sm:$0xff]
  %v445 = vld [vmem:[%s1 + $0x710] sm:$0xff]
  %v446 = vld [vmem:[%s1 + $0x718] sm:$0xff]
  %v447 = vld [vmem:[%s1 + $0x720] sm:$0xff]
  %v448 = vld [vmem:[%s1 + $0x728] sm:$0xff]
  %v449 = vld [vmem:[%s1 + $0x730] sm:$0xff]
  %v450 = vld [vmem:[%s1 + $0x738] sm:$0xff]
  %v451 = vld [vmem:[%s1 + $0x740] sm:$0xff]
  %v452 = vld [vmem:[%s1 + $0x748] sm:$0xff]
  %v453 = vld [vmem:[%s1 + $0x750] sm:$0xff]
  %v454 = vld [vmem:[%s1 + $0x758] sm:$0xff]
  %v455 = vld [vmem:[%s1 + $0x760] sm:$0xff]
  %v456 = vld [vmem:[%s1 + $0x768] sm:$0xff]
  %v457 = vld [vmem:[%s1 + $0x770] sm:$0xff]
  %v458 = vld [vmem:[%s1 + $0x778] sm:$0xff]
  %v459 = vld [vmem:[%s1 + $0x780] sm:$0xff]
  %v460 = vld [vmem:[%s1 + $0x788] sm:$0xff]
  %v461 = vld [vmem:[%s1 + $0x790] sm:$0xff]
  %v462 = vld [vmem:[%s1 + $0x798] sm:$0xff]
  %v463 = vld [vmem:[%s1 + $0x7a0] sm:$0xff]
  %v464 = vld [vmem:[%s1 + $0x7a8] sm:$0xff]
  %v465 = vld [vmem:[%s1 + $0x7b0] sm:$0xff]
  %v466 = vld [vmem:[%s1 + $0x7b8] sm:$0xff]
  %v467 = vld [vmem:[%s1 + $0x7c0] sm:$0xff]
  %v468 = vld [vmem:[%s1 + $0x7c8] sm:$0xff]
  %v469 = vld [vmem:[%s1 + $0x7d0] sm:$0xff]
  %v470 = vld [vmem:[%s1 + $0x7d8] sm:$0xff]
  %v471 = vld [vmem:[%s1 + $0x7e0] sm:$0xff]
  %v472 = vld [vmem:[%s1 + $0x7e8] sm:$0xff]
  %v473 = vld [vmem:[%s1 + $0x7f0] sm:$0xff]
  %v474 = vld [vmem:[%s1 + $0x7f8] sm:$0xff]
  %v475 = vld [vmem:[%s2] sm:$0xff]
  %v476 = vld [vmem:[%s2 + $0x8] sm:$0xff]
  %v477 = vld [vmem:[%s2 + $0x10] sm:$0xff]
  %v478 = vld [vmem:[%s2 + $0x18] sm:$0xff]
  %v479 = vld [vmem:[%s2 + $0x20] sm:$0xff]
  %v480 = vld [vmem:[%s2 + $0x28] sm:$0xff]
  %v481 = vld [vmem:[%s2 + $0x30] sm:$0xff]
  %v482 = vld [vmem:[%s2 + $0x38] sm:$0xff]
  %v483 = vld [vmem:[%s2 + $0x40] sm:$0xff]
  %v484 = vld [vmem:[%s2 + $0x48] sm:$0xff]
  %v485 = vld [vmem:[%s2 + $0x50] sm:$0xff]
  %v486 = vld [vmem:[%s2 + $0x58] sm:$0xff]
  %v487 = vld [vmem:[%s2 + $0x60] sm:$0xff]
  %v488 = vld [vmem:[%s2 + $0x68] sm:$0xff]
  %v489 = vld [vmem:[%s2 + $0x70] sm:$0xff]
  %v490 = vld [vmem:[%s2 + $0x78] sm:$0xff]
  %v491 = vld [vmem:[%s2 + $0x80] sm:$0xff]
  %v492 = vld [vmem:[%s2 + $0x88] sm:$0xff]
  %v493 = vld [vmem:[%s2 + $0x90] sm:$0xff]
  %v494 = vld [vmem:[%s2 + $0x98] sm:$0xff]
  %v495 = vld [vmem:[%s2 + $0xa0] sm:$0xff]
  %v496 = vld [vmem:[%s2 + $0xa8] sm:$0xff]
  %v497 = vld [vmem:[%s2 + $0xb0] sm:$0xff]
  %v498 = vld [vmem:[%s2 + $0xb8] sm:$0xff]
  %v499 = vld [vmem:[%s2 + $0xc0] sm:$0xff]
  %v500 = vld [vmem:[%s2 + $0xc8] sm:$0xff]
  %v501 = vld [vmem:[%s2 + $0xd0] sm:$0xff]
  %v502 = vld [vmem:[%s2 + $0xd8] sm:$0xff]
  %v503 = vld [vmem:[%s2 + $0xe0] sm:$0xff]
  %v504 = vld [vmem:[%s2 + $0xe8] sm:$0xff]
  %v505 = vld [vmem:[%s2 + $0xf0] sm:$0xff]
  %v506 = vld [vmem:[%s2 + $0xf8] sm:$0xff]
  %v507 = vld [vmem:[%s2 + $0x100] sm:$0xff]
  %v508 = vld [vmem:[%s2 + $0x108] sm:$0xff]
  %v509 = vld [vmem:[%s2 + $0x110] sm:$0xff]
  %v510 = vld [vmem:[%s2 + $0x118] sm:$0xff]
  %v511 = vld [vmem:[%s2 + $0x120] sm:$0xff]
  %v512 = vld [vmem:[%s2 + $0x128] sm:$0xff]
  %v513 = vld [vmem:[%s2 + $0x130] sm:$0xff]
  %v514 = vld [vmem:[%s2 + $0x138] sm:$0xff]
  %v515 = vld [vmem:[%s2 + $0x140] sm:$0xff]
  %v516 = vld [vmem:[%s2 + $0x148] sm:$0xff]
  %v517 = vld [vmem:[%s2 + $0x150] sm:$0xff]
  %v518 = vld [vmem:[%s2 + $0x158] sm:$0xff]
  %v519 = vld [vmem:[%s2 + $0x160] sm:$0xff]
  %v520 = vld [vmem:[%s2 + $0x168] sm:$0xff]
  %v521 = vld [vmem:[%s2 + $0x170] sm:$0xff]
  %v522 = vld [vmem:[%s2 + $0x178] sm:$0xff]
  %v523 = vld [vmem:[%s2 + $0x180] sm:$0xff]
  %v524 = vld [vmem:[%s2 + $0x188] sm:$0xff]
  %v525 = vld [vmem:[%s2 + $0x190] sm:$0xff]
  %v526 = vld [vmem:[%s2 + $0x198] sm:$0xff]
  %v527 = vld [vmem:[%s2 + $0x1a0] sm:$0xff]
  %v528 = vld [vmem:[%s2 + $0x1a8] sm:$0xff]
  %v529 = vld [vmem:[%s2 + $0x1b0] sm:$0xff]
  %v530 = vld [vmem:[%s2 + $0x1b8] sm:$0xff]
  %v531 = vld [vmem:[%s2 + $0x1c0] sm:$0xff]
  %v532 = vld [vmem:[%s2 + $0x1c8] sm:$0xff]
  %v533 = vld [vmem:[%s2 + $0x1d0] sm:$0xff]
  %v534 = vld [vmem:[%s2 + $0x1d8] sm:$0xff]
  %v535 = vld [vmem:[%s2 + $0x1e0] sm:$0xff]
  %v536 = vld [vmem:[%s2 + $0x1e8] sm:$0xff]
  %v537 = vld [vmem:[%s2 + $0x1f0] sm:$0xff]
  %v538 = vld [vmem:[%s2 + $0x1f8] sm:$0xff]
  %540 = vset.pattern.permute.xlu0 0
  %541 = vperm.xlu0 %540, %v475
  %v542 = vpop.permute.xlu0 %541
  %545 = vset.pattern.permute.xlu0 0
  %546 = vperm.xlu0 %545, %v476
  %v547 = vpop.permute.xlu0 %546
  %550 = vset.pattern.permute.xlu0 0
  %551 = vperm.xlu0 %550, %v477
  %v552 = vpop.permute.xlu0 %551
  %555 = vset.pattern.permute.xlu0 0
  %556 = vperm.xlu0 %555, %v478
  %v557 = vpop.permute.xlu0 %556
  %560 = vset.pattern.permute.xlu0 0
  %561 = vperm.xlu0 %560, %v479
  %v562 = vpop.permute.xlu0 %561
  %565 = vset.pattern.permute.xlu0 0
  %566 = vperm.xlu0 %565, %v480
  %v567 = vpop.permute.xlu0 %566
  %570 = vset.pattern.permute.xlu0 0
  %571 = vperm.xlu0 %570, %v481
  %v572 = vpop.permute.xlu0 %571
  %575 = vset.pattern.permute.xlu0 0
  %576 = vperm.xlu0 %575, %v482
  %v577 = vpop.permute.xlu0 %576
  %580 = vset.pattern.permute.xlu0 0
  %581 = vperm.xlu0 %580, %v483
  %v582 = vpop.permute.xlu0 %581
  %585 = vset.pattern.permute.xlu0 0
  %586 = vperm.xlu0 %585, %v484
  %v587 = vpop.permute.xlu0 %586
  %590 = vset.pattern.permute.xlu0 0
  %591 = vperm.xlu0 %590, %v485
  %v592 = vpop.permute.xlu0 %591
  %595 = vset.pattern.permute.xlu0 0
  %596 = vperm.xlu0 %595, %v486
  %v597 = vpop.permute.xlu0 %596
  %600 = vset.pattern.permute.xlu0 0
  %601 = vperm.xlu0 %600, %v487
  %v602 = vpop.permute.xlu0 %601
  %605 = vset.pattern.permute.xlu0 0
  %606 = vperm.xlu0 %605, %v488
  %v607 = vpop.permute.xlu0 %606
  %610 = vset.pattern.permute.xlu0 0
  %611 = vperm.xlu0 %610, %v489
  %v612 = vpop.permute.xlu0 %611
  %615 = vset.pattern.permute.xlu0 0
  %616 = vperm.xlu0 %615, %v490
  %v617 = vpop.permute.xlu0 %616
  %620 = vset.pattern.permute.xlu0 0
  %621 = vperm.xlu0 %620, %v491
  %v622 = vpop.permute.xlu0 %621
  %625 = vset.pattern.permute.xlu0 0
  %626 = vperm.xlu0 %625, %v492
  %v627 = vpop.permute.xlu0 %626
  %630 = vset.pattern.permute.xlu0 0
  %631 = vperm.xlu0 %630, %v493
  %v632 = vpop.permute.xlu0 %631
  %635 = vset.pattern.permute.xlu0 0
  %636 = vperm.xlu0 %635, %v494
  %v637 = vpop.permute.xlu0 %636
  %640 = vset.pattern.permute.xlu0 0
  %641 = vperm.xlu0 %640, %v495
  %v642 = vpop.permute.xlu0 %641
  %645 = vset.pattern.permute.xlu0 0
  %646 = vperm.xlu0 %645, %v496
  %v647 = vpop.permute.xlu0 %646
  %650 = vset.pattern.permute.xlu0 0
  %651 = vperm.xlu0 %650, %v497
  %v652 = vpop.permute.xlu0 %651
  %655 = vset.pattern.permute.xlu0 0
  %656 = vperm.xlu0 %655, %v498
  %v657 = vpop.permute.xlu0 %656
  %660 = vset.pattern.permute.xlu0 0
  %661 = vperm.xlu0 %660, %v499
  %v662 = vpop.permute.xlu0 %661
  %665 = vset.pattern.permute.xlu0 0
  %666 = vperm.xlu0 %665, %v500
  %v667 = vpop.permute.xlu0 %666
  %670 = vset.pattern.permute.xlu0 0
  %671 = vperm.xlu0 %670, %v501
  %v672 = vpop.permute.xlu0 %671
  %675 = vset.pattern.permute.xlu0 0
  %676 = vperm.xlu0 %675, %v502
  %v677 = vpop.permute.xlu0 %676
  %680 = vset.pattern.permute.xlu0 0
  %681 = vperm.xlu0 %680, %v503
  %v682 = vpop.permute.xlu0 %681
  %685 = vset.pattern.permute.xlu0 0
  %686 = vperm.xlu0 %685, %v504
  %v687 = vpop.permute.xlu0 %686
  %690 = vset.pattern.permute.xlu0 0
  %691 = vperm.xlu0 %690, %v505
  %v692 = vpop.permute.xlu0 %691
  %695 = vset.pattern.permute.xlu0 0
  %696 = vperm.xlu0 %695, %v506
  %v697 = vpop.permute.xlu0 %696
  %700 = vset.pattern.permute.xlu0 0
  %701 = vperm.xlu0 %700, %v507
  %v702 = vpop.permute.xlu0 %701
  %705 = vset.pattern.permute.xlu0 0
  %706 = vperm.xlu0 %705, %v508
  %v707 = vpop.permute.xlu0 %706
  %710 = vset.pattern.permute.xlu0 0
  %711 = vperm.xlu0 %710, %v509
  %v712 = vpop.permute.xlu0 %711
  %715 = vset.pattern.permute.xlu0 0
  %716 = vperm.xlu0 %715, %v510
  %v717 = vpop.permute.xlu0 %716
  %720 = vset.pattern.permute.xlu0 0
  %721 = vperm.xlu0 %720, %v511
  %v722 = vpop.permute.xlu0 %721
  %725 = vset.pattern.permute.xlu0 0
  %726 = vperm.xlu0 %725, %v512
  %v727 = vpop.permute.xlu0 %726
  %730 = vset.pattern.permute.xlu0 0
  %731 = vperm.xlu0 %730, %v513
  %v732 = vpop.permute.xlu0 %731
  %735 = vset.pattern.permute.xlu0 0
  %736 = vperm.xlu0 %735, %v514
  %v737 = vpop.permute.xlu0 %736
  %740 = vset.pattern.permute.xlu0 0
  %741 = vperm.xlu0 %740, %v515
  %v742 = vpop.permute.xlu0 %741
  %745 = vset.pattern.permute.xlu0 0
  %746 = vperm.xlu0 %745, %v516
  %v747 = vpop.permute.xlu0 %746
  %750 = vset.pattern.permute.xlu0 0
  %751 = vperm.xlu0 %750, %v517
  %v752 = vpop.permute.xlu0 %751
  %755 = vset.pattern.permute.xlu0 0
  %756 = vperm.xlu0 %755, %v518
  %v757 = vpop.permute.xlu0 %756
  %760 = vset.pattern.permute.xlu0 0
  %761 = vperm.xlu0 %760, %v519
  %v762 = vpop.permute.xlu0 %761
  %765 = vset.pattern.permute.xlu0 0
  %766 = vperm.xlu0 %765, %v520
  %v767 = vpop.permute.xlu0 %766
  %770 = vset.pattern.permute.xlu0 0
  %771 = vperm.xlu0 %770, %v521
  %v772 = vpop.permute.xlu0 %771
  %775 = vset.pattern.permute.xlu0 0
  %776 = vperm.xlu0 %775, %v522
  %v777 = vpop.permute.xlu0 %776
  %780 = vset.pattern.permute.xlu0 0
  %781 = vperm.xlu0 %780, %v523
  %v782 = vpop.permute.xlu0 %781
  %785 = vset.pattern.permute.xlu0 0
  %786 = vperm.xlu0 %785, %v524
  %v787 = vpop.permute.xlu0 %786
  %790 = vset.pattern.permute.xlu0 0
  %791 = vperm.xlu0 %790, %v525
  %v792 = vpop.permute.xlu0 %791
  %795 = vset.pattern.permute.xlu0 0
  %796 = vperm.xlu0 %795, %v526
  %v797 = vpop.permute.xlu0 %796
  %800 = vset.pattern.permute.xlu0 0
  %801 = vperm.xlu0 %800, %v527
  %v802 = vpop.permute.xlu0 %801
  %805 = vset.pattern.permute.xlu0 0
  %806 = vperm.xlu0 %805, %v528
  %v807 = vpop.permute.xlu0 %806
  %810 = vset.pattern.permute.xlu0 0
  %811 = vperm.xlu0 %810, %v529
  %v812 = vpop.permute.xlu0 %811
  %815 = vset.pattern.permute.xlu0 0
  %816 = vperm.xlu0 %815, %v530
  %v817 = vpop.permute.xlu0 %816
  %820 = vset.pattern.permute.xlu0 0
  %821 = vperm.xlu0 %820, %v531
  %v822 = vpop.permute.xlu0 %821
  %825 = vset.pattern.permute.xlu0 0
  %826 = vperm.xlu0 %825, %v532
  %v827 = vpop.permute.xlu0 %826
  %830 = vset.pattern.permute.xlu0 0
  %831 = vperm.xlu0 %830, %v533
  %v832 = vpop.permute.xlu0 %831
  %835 = vset.pattern.permute.xlu0 0
  %836 = vperm.xlu0 %835, %v534
  %v837 = vpop.permute.xlu0 %836
  %840 = vset.pattern.permute.xlu0 0
  %841 = vperm.xlu0 %840, %v535
  %v842 = vpop.permute.xlu0 %841
  %845 = vset.pattern.permute.xlu0 0
  %846 = vperm.xlu0 %845, %v536
  %v847 = vpop.permute.xlu0 %846
  %850 = vset.pattern.permute.xlu0 0
  %851 = vperm.xlu0 %850, %v537
  %v852 = vpop.permute.xlu0 %851
  %855 = vset.pattern.permute.xlu0 0
  %856 = vperm.xlu0 %855, %v538
  %v857 = vpop.permute.xlu0 %856
  %v1115 = vunpack.c.l.b16 %v219
  %v1116 = vunpack.c.h.b16 %v219
  %v1117 = vunpack.c.l.b16 %v220
  %v1118 = vunpack.c.h.b16 %v220
  %v1119 = vunpack.c.l.b16 %v221
  %v1120 = vunpack.c.h.b16 %v221
  %v1121 = vunpack.c.l.b16 %v222
  %v1122 = vunpack.c.h.b16 %v222
  %v1123 = vunpack.c.l.b16 %v223
  %v1124 = vunpack.c.h.b16 %v223
  %v1125 = vunpack.c.l.b16 %v224
  %v1126 = vunpack.c.h.b16 %v224
  %v1127 = vunpack.c.l.b16 %v225
  %v1128 = vunpack.c.h.b16 %v225
  %v1129 = vunpack.c.l.b16 %v226
  %v1130 = vunpack.c.h.b16 %v226
  %v1131 = vunpack.c.l.b16 %v227
  %v1132 = vunpack.c.h.b16 %v227
  %v1133 = vunpack.c.l.b16 %v228
  %v1134 = vunpack.c.h.b16 %v228
  %v1135 = vunpack.c.l.b16 %v229
  %v1136 = vunpack.c.h.b16 %v229
  %v1137 = vunpack.c.l.b16 %v230
  %v1138 = vunpack.c.h.b16 %v230
  %v1139 = vunpack.c.l.b16 %v231
  %v1140 = vunpack.c.h.b16 %v231
  %v1141 = vunpack.c.l.b16 %v232
  %v1142 = vunpack.c.h.b16 %v232
  %v1143 = vunpack.c.l.b16 %v233
  %v1144 = vunpack.c.h.b16 %v233
  %v1145 = vunpack.c.l.b16 %v234
  %v1146 = vunpack.c.h.b16 %v234
  %v1147 = vunpack.c.l.b16 %v235
  %v1148 = vunpack.c.h.b16 %v235
  %v1149 = vunpack.c.l.b16 %v236
  %v1150 = vunpack.c.h.b16 %v236
  %v1151 = vunpack.c.l.b16 %v237
  %v1152 = vunpack.c.h.b16 %v237
  %v1153 = vunpack.c.l.b16 %v238
  %v1154 = vunpack.c.h.b16 %v238
  %v1155 = vunpack.c.l.b16 %v239
  %v1156 = vunpack.c.h.b16 %v239
  %v1157 = vunpack.c.l.b16 %v240
  %v1158 = vunpack.c.h.b16 %v240
  %v1159 = vunpack.c.l.b16 %v241
  %v1160 = vunpack.c.h.b16 %v241
  %v1161 = vunpack.c.l.b16 %v242
  %v1162 = vunpack.c.h.b16 %v242
  %v1163 = vunpack.c.l.b16 %v243
  %v1164 = vunpack.c.h.b16 %v243
  %v1165 = vunpack.c.l.b16 %v244
  %v1166 = vunpack.c.h.b16 %v244
  %v1167 = vunpack.c.l.b16 %v245
  %v1168 = vunpack.c.h.b16 %v245
  %v1169 = vunpack.c.l.b16 %v246
  %v1170 = vunpack.c.h.b16 %v246
  %v1171 = vunpack.c.l.b16 %v247
  %v1172 = vunpack.c.h.b16 %v247
  %v1173 = vunpack.c.l.b16 %v248
  %v1174 = vunpack.c.h.b16 %v248
  %v1175 = vunpack.c.l.b16 %v249
  %v1176 = vunpack.c.h.b16 %v249
  %v1177 = vunpack.c.l.b16 %v250
  %v1178 = vunpack.c.h.b16 %v250
  %v1179 = vunpack.c.l.b16 %v251
  %v1180 = vunpack.c.h.b16 %v251
  %v1181 = vunpack.c.l.b16 %v252
  %v1182 = vunpack.c.h.b16 %v252
  %v1183 = vunpack.c.l.b16 %v253
  %v1184 = vunpack.c.h.b16 %v253
  %v1185 = vunpack.c.l.b16 %v254
  %v1186 = vunpack.c.h.b16 %v254
  %v1187 = vunpack.c.l.b16 %v255
  %v1188 = vunpack.c.h.b16 %v255
  %v1189 = vunpack.c.l.b16 %v256
  %v1190 = vunpack.c.h.b16 %v256
  %v1191 = vunpack.c.l.b16 %v257
  %v1192 = vunpack.c.h.b16 %v257
  %v1193 = vunpack.c.l.b16 %v258
  %v1194 = vunpack.c.h.b16 %v258
  %v1195 = vunpack.c.l.b16 %v259
  %v1196 = vunpack.c.h.b16 %v259
  %v1197 = vunpack.c.l.b16 %v260
  %v1198 = vunpack.c.h.b16 %v260
  %v1199 = vunpack.c.l.b16 %v261
  %v1200 = vunpack.c.h.b16 %v261
  %v1201 = vunpack.c.l.b16 %v262
  %v1202 = vunpack.c.h.b16 %v262
  %v1203 = vunpack.c.l.b16 %v263
  %v1204 = vunpack.c.h.b16 %v263
  %v1205 = vunpack.c.l.b16 %v264
  %v1206 = vunpack.c.h.b16 %v264
  %v1207 = vunpack.c.l.b16 %v265
  %v1208 = vunpack.c.h.b16 %v265
  %v1209 = vunpack.c.l.b16 %v266
  %v1210 = vunpack.c.h.b16 %v266
  %v1211 = vunpack.c.l.b16 %v267
  %v1212 = vunpack.c.h.b16 %v267
  %v1213 = vunpack.c.l.b16 %v268
  %v1214 = vunpack.c.h.b16 %v268
  %v1215 = vunpack.c.l.b16 %v269
  %v1216 = vunpack.c.h.b16 %v269
  %v1217 = vunpack.c.l.b16 %v270
  %v1218 = vunpack.c.h.b16 %v270
  %v1219 = vunpack.c.l.b16 %v271
  %v1220 = vunpack.c.h.b16 %v271
  %v1221 = vunpack.c.l.b16 %v272
  %v1222 = vunpack.c.h.b16 %v272
  %v1223 = vunpack.c.l.b16 %v273
  %v1224 = vunpack.c.h.b16 %v273
  %v1225 = vunpack.c.l.b16 %v274
  %v1226 = vunpack.c.h.b16 %v274
  %v1227 = vunpack.c.l.b16 %v275
  %v1228 = vunpack.c.h.b16 %v275
  %v1229 = vunpack.c.l.b16 %v276
  %v1230 = vunpack.c.h.b16 %v276
  %v1231 = vunpack.c.l.b16 %v277
  %v1232 = vunpack.c.h.b16 %v277
  %v1233 = vunpack.c.l.b16 %v278
  %v1234 = vunpack.c.h.b16 %v278
  %v1235 = vunpack.c.l.b16 %v279
  %v1236 = vunpack.c.h.b16 %v279
  %v1237 = vunpack.c.l.b16 %v280
  %v1238 = vunpack.c.h.b16 %v280
  %v1239 = vunpack.c.l.b16 %v281
  %v1240 = vunpack.c.h.b16 %v281
  %v1241 = vunpack.c.l.b16 %v282
  %v1242 = vunpack.c.h.b16 %v282
  %v1243 = vunpack.c.l.b16 %v283
  %v1244 = vunpack.c.h.b16 %v283
  %v1245 = vunpack.c.l.b16 %v284
  %v1246 = vunpack.c.h.b16 %v284
  %v1247 = vunpack.c.l.b16 %v285
  %v1248 = vunpack.c.h.b16 %v285
  %v1249 = vunpack.c.l.b16 %v286
  %v1250 = vunpack.c.h.b16 %v286
  %v1251 = vunpack.c.l.b16 %v287
  %v1252 = vunpack.c.h.b16 %v287
  %v1253 = vunpack.c.l.b16 %v288
  %v1254 = vunpack.c.h.b16 %v288
  %v1255 = vunpack.c.l.b16 %v289
  %v1256 = vunpack.c.h.b16 %v289
  %v1257 = vunpack.c.l.b16 %v290
  %v1258 = vunpack.c.h.b16 %v290
  %v1259 = vunpack.c.l.b16 %v291
  %v1260 = vunpack.c.h.b16 %v291
  %v1261 = vunpack.c.l.b16 %v292
  %v1262 = vunpack.c.h.b16 %v292
  %v1263 = vunpack.c.l.b16 %v293
  %v1264 = vunpack.c.h.b16 %v293
  %v1265 = vunpack.c.l.b16 %v294
  %v1266 = vunpack.c.h.b16 %v294
  %v1267 = vunpack.c.l.b16 %v295
  %v1268 = vunpack.c.h.b16 %v295
  %v1269 = vunpack.c.l.b16 %v296
  %v1270 = vunpack.c.h.b16 %v296
  %v1271 = vunpack.c.l.b16 %v297
  %v1272 = vunpack.c.h.b16 %v297
  %v1273 = vunpack.c.l.b16 %v298
  %v1274 = vunpack.c.h.b16 %v298
  %v1275 = vunpack.c.l.b16 %v299
  %v1276 = vunpack.c.h.b16 %v299
  %v1277 = vunpack.c.l.b16 %v300
  %v1278 = vunpack.c.h.b16 %v300
  %v1279 = vunpack.c.l.b16 %v301
  %v1280 = vunpack.c.h.b16 %v301
  %v1281 = vunpack.c.l.b16 %v302
  %v1282 = vunpack.c.h.b16 %v302
  %v1283 = vunpack.c.l.b16 %v303
  %v1284 = vunpack.c.h.b16 %v303
  %v1285 = vunpack.c.l.b16 %v304
  %v1286 = vunpack.c.h.b16 %v304
  %v1287 = vunpack.c.l.b16 %v305
  %v1288 = vunpack.c.h.b16 %v305
  %v1289 = vunpack.c.l.b16 %v306
  %v1290 = vunpack.c.h.b16 %v306
  %v1291 = vunpack.c.l.b16 %v307
  %v1292 = vunpack.c.h.b16 %v307
  %v1293 = vunpack.c.l.b16 %v308
  %v1294 = vunpack.c.h.b16 %v308
  %v1295 = vunpack.c.l.b16 %v309
  %v1296 = vunpack.c.h.b16 %v309
  %v1297 = vunpack.c.l.b16 %v310
  %v1298 = vunpack.c.h.b16 %v310
  %v1299 = vunpack.c.l.b16 %v311
  %v1300 = vunpack.c.h.b16 %v311
  %v1301 = vunpack.c.l.b16 %v312
  %v1302 = vunpack.c.h.b16 %v312
  %v1303 = vunpack.c.l.b16 %v313
  %v1304 = vunpack.c.h.b16 %v313
  %v1305 = vunpack.c.l.b16 %v314
  %v1306 = vunpack.c.h.b16 %v314
  %v1307 = vunpack.c.l.b16 %v315
  %v1308 = vunpack.c.h.b16 %v315
  %v1309 = vunpack.c.l.b16 %v316
  %v1310 = vunpack.c.h.b16 %v316
  %v1311 = vunpack.c.l.b16 %v317
  %v1312 = vunpack.c.h.b16 %v317
  %v1313 = vunpack.c.l.b16 %v318
  %v1314 = vunpack.c.h.b16 %v318
  %v1315 = vunpack.c.l.b16 %v319
  %v1316 = vunpack.c.h.b16 %v319
  %v1317 = vunpack.c.l.b16 %v320
  %v1318 = vunpack.c.h.b16 %v320
  %v1319 = vunpack.c.l.b16 %v321
  %v1320 = vunpack.c.h.b16 %v321
  %v1321 = vunpack.c.l.b16 %v322
  %v1322 = vunpack.c.h.b16 %v322
  %v1323 = vunpack.c.l.b16 %v323
  %v1324 = vunpack.c.h.b16 %v323
  %v1325 = vunpack.c.l.b16 %v324
  %v1326 = vunpack.c.h.b16 %v324
  %v1327 = vunpack.c.l.b16 %v325
  %v1328 = vunpack.c.h.b16 %v325
  %v1329 = vunpack.c.l.b16 %v326
  %v1330 = vunpack.c.h.b16 %v326
  %v1331 = vunpack.c.l.b16 %v327
  %v1332 = vunpack.c.h.b16 %v327
  %v1333 = vunpack.c.l.b16 %v328
  %v1334 = vunpack.c.h.b16 %v328
  %v1335 = vunpack.c.l.b16 %v329
  %v1336 = vunpack.c.h.b16 %v329
  %v1337 = vunpack.c.l.b16 %v330
  %v1338 = vunpack.c.h.b16 %v330
  %v1339 = vunpack.c.l.b16 %v331
  %v1340 = vunpack.c.h.b16 %v331
  %v1341 = vunpack.c.l.b16 %v332
  %v1342 = vunpack.c.h.b16 %v332
  %v1343 = vunpack.c.l.b16 %v333
  %v1344 = vunpack.c.h.b16 %v333
  %v1345 = vunpack.c.l.b16 %v334
  %v1346 = vunpack.c.h.b16 %v334
  %v1347 = vunpack.c.l.b16 %v335
  %v1348 = vunpack.c.h.b16 %v335
  %v1349 = vunpack.c.l.b16 %v336
  %v1350 = vunpack.c.h.b16 %v336
  %v1351 = vunpack.c.l.b16 %v337
  %v1352 = vunpack.c.h.b16 %v337
  %v1353 = vunpack.c.l.b16 %v338
  %v1354 = vunpack.c.h.b16 %v338
  %v1355 = vunpack.c.l.b16 %v339
  %v1356 = vunpack.c.h.b16 %v339
  %v1357 = vunpack.c.l.b16 %v340
  %v1358 = vunpack.c.h.b16 %v340
  %v1359 = vunpack.c.l.b16 %v341
  %v1360 = vunpack.c.h.b16 %v341
  %v1361 = vunpack.c.l.b16 %v342
  %v1362 = vunpack.c.h.b16 %v342
  %v1363 = vunpack.c.l.b16 %v343
  %v1364 = vunpack.c.h.b16 %v343
  %v1365 = vunpack.c.l.b16 %v344
  %v1366 = vunpack.c.h.b16 %v344
  %v1367 = vunpack.c.l.b16 %v345
  %v1368 = vunpack.c.h.b16 %v345
  %v1369 = vunpack.c.l.b16 %v346
  %v1370 = vunpack.c.h.b16 %v346
  %v1371 = vunpack.c.l.b16 %v347
  %v1372 = vunpack.c.h.b16 %v347
  %v1373 = vunpack.c.l.b16 %v348
  %v1374 = vunpack.c.h.b16 %v348
  %v1375 = vunpack.c.l.b16 %v349
  %v1376 = vunpack.c.h.b16 %v349
  %v1377 = vunpack.c.l.b16 %v350
  %v1378 = vunpack.c.h.b16 %v350
  %v1379 = vunpack.c.l.b16 %v351
  %v1380 = vunpack.c.h.b16 %v351
  %v1381 = vunpack.c.l.b16 %v352
  %v1382 = vunpack.c.h.b16 %v352
  %v1383 = vunpack.c.l.b16 %v353
  %v1384 = vunpack.c.h.b16 %v353
  %v1385 = vunpack.c.l.b16 %v354
  %v1386 = vunpack.c.h.b16 %v354
  %v1387 = vunpack.c.l.b16 %v355
  %v1388 = vunpack.c.h.b16 %v355
  %v1389 = vunpack.c.l.b16 %v356
  %v1390 = vunpack.c.h.b16 %v356
  %v1391 = vunpack.c.l.b16 %v357
  %v1392 = vunpack.c.h.b16 %v357
  %v1393 = vunpack.c.l.b16 %v358
  %v1394 = vunpack.c.h.b16 %v358
  %v1395 = vunpack.c.l.b16 %v359
  %v1396 = vunpack.c.h.b16 %v359
  %v1397 = vunpack.c.l.b16 %v360
  %v1398 = vunpack.c.h.b16 %v360
  %v1399 = vunpack.c.l.b16 %v361
  %v1400 = vunpack.c.h.b16 %v361
  %v1401 = vunpack.c.l.b16 %v362
  %v1402 = vunpack.c.h.b16 %v362
  %v1403 = vunpack.c.l.b16 %v363
  %v1404 = vunpack.c.h.b16 %v363
  %v1405 = vunpack.c.l.b16 %v364
  %v1406 = vunpack.c.h.b16 %v364
  %v1407 = vunpack.c.l.b16 %v365
  %v1408 = vunpack.c.h.b16 %v365
  %v1409 = vunpack.c.l.b16 %v366
  %v1410 = vunpack.c.h.b16 %v366
  %v1411 = vunpack.c.l.b16 %v367
  %v1412 = vunpack.c.h.b16 %v367
  %v1413 = vunpack.c.l.b16 %v368
  %v1414 = vunpack.c.h.b16 %v368
  %v1415 = vunpack.c.l.b16 %v369
  %v1416 = vunpack.c.h.b16 %v369
  %v1417 = vunpack.c.l.b16 %v370
  %v1418 = vunpack.c.h.b16 %v370
  %v1419 = vunpack.c.l.b16 %v371
  %v1420 = vunpack.c.h.b16 %v371
  %v1421 = vunpack.c.l.b16 %v372
  %v1422 = vunpack.c.h.b16 %v372
  %v1423 = vunpack.c.l.b16 %v373
  %v1424 = vunpack.c.h.b16 %v373
  %v1425 = vunpack.c.l.b16 %v374
  %v1426 = vunpack.c.h.b16 %v374
  %v1427 = vunpack.c.l.b16 %v375
  %v1428 = vunpack.c.h.b16 %v375
  %v1429 = vunpack.c.l.b16 %v376
  %v1430 = vunpack.c.h.b16 %v376
  %v1431 = vunpack.c.l.b16 %v377
  %v1432 = vunpack.c.h.b16 %v377
  %v1433 = vunpack.c.l.b16 %v378
  %v1434 = vunpack.c.h.b16 %v378
  %v1435 = vunpack.c.l.b16 %v379
  %v1436 = vunpack.c.h.b16 %v379
  %v1437 = vunpack.c.l.b16 %v380
  %v1438 = vunpack.c.h.b16 %v380
  %v1439 = vunpack.c.l.b16 %v381
  %v1440 = vunpack.c.h.b16 %v381
  %v1441 = vunpack.c.l.b16 %v382
  %v1442 = vunpack.c.h.b16 %v382
  %v1443 = vunpack.c.l.b16 %v383
  %v1444 = vunpack.c.h.b16 %v383
  %v1445 = vunpack.c.l.b16 %v384
  %v1446 = vunpack.c.h.b16 %v384
  %v1447 = vunpack.c.l.b16 %v385
  %v1448 = vunpack.c.h.b16 %v385
  %v1449 = vunpack.c.l.b16 %v386
  %v1450 = vunpack.c.h.b16 %v386
  %v1451 = vunpack.c.l.b16 %v387
  %v1452 = vunpack.c.h.b16 %v387
  %v1453 = vunpack.c.l.b16 %v388
  %v1454 = vunpack.c.h.b16 %v388
  %v1455 = vunpack.c.l.b16 %v389
  %v1456 = vunpack.c.h.b16 %v389
  %v1457 = vunpack.c.l.b16 %v390
  %v1458 = vunpack.c.h.b16 %v390
  %v1459 = vunpack.c.l.b16 %v391
  %v1460 = vunpack.c.h.b16 %v391
  %v1461 = vunpack.c.l.b16 %v392
  %v1462 = vunpack.c.h.b16 %v392
  %v1463 = vunpack.c.l.b16 %v393
  %v1464 = vunpack.c.h.b16 %v393
  %v1465 = vunpack.c.l.b16 %v394
  %v1466 = vunpack.c.h.b16 %v394
  %v1467 = vunpack.c.l.b16 %v395
  %v1468 = vunpack.c.h.b16 %v395
  %v1469 = vunpack.c.l.b16 %v396
  %v1470 = vunpack.c.h.b16 %v396
  %v1471 = vunpack.c.l.b16 %v397
  %v1472 = vunpack.c.h.b16 %v397
  %v1473 = vunpack.c.l.b16 %v398
  %v1474 = vunpack.c.h.b16 %v398
  %v1475 = vunpack.c.l.b16 %v399
  %v1476 = vunpack.c.h.b16 %v399
  %v1477 = vunpack.c.l.b16 %v400
  %v1478 = vunpack.c.h.b16 %v400
  %v1479 = vunpack.c.l.b16 %v401
  %v1480 = vunpack.c.h.b16 %v401
  %v1481 = vunpack.c.l.b16 %v402
  %v1482 = vunpack.c.h.b16 %v402
  %v1483 = vunpack.c.l.b16 %v403
  %v1484 = vunpack.c.h.b16 %v403
  %v1485 = vunpack.c.l.b16 %v404
  %v1486 = vunpack.c.h.b16 %v404
  %v1487 = vunpack.c.l.b16 %v405
  %v1488 = vunpack.c.h.b16 %v405
  %v1489 = vunpack.c.l.b16 %v406
  %v1490 = vunpack.c.h.b16 %v406
  %v1491 = vunpack.c.l.b16 %v407
  %v1492 = vunpack.c.h.b16 %v407
  %v1493 = vunpack.c.l.b16 %v408
  %v1494 = vunpack.c.h.b16 %v408
  %v1495 = vunpack.c.l.b16 %v409
  %v1496 = vunpack.c.h.b16 %v409
  %v1497 = vunpack.c.l.b16 %v410
  %v1498 = vunpack.c.h.b16 %v410
  %v1499 = vunpack.c.l.b16 %v411
  %v1500 = vunpack.c.h.b16 %v411
  %v1501 = vunpack.c.l.b16 %v412
  %v1502 = vunpack.c.h.b16 %v412
  %v1503 = vunpack.c.l.b16 %v413
  %v1504 = vunpack.c.h.b16 %v413
  %v1505 = vunpack.c.l.b16 %v414
  %v1506 = vunpack.c.h.b16 %v414
  %v1507 = vunpack.c.l.b16 %v415
  %v1508 = vunpack.c.h.b16 %v415
  %v1509 = vunpack.c.l.b16 %v416
  %v1510 = vunpack.c.h.b16 %v416
  %v1511 = vunpack.c.l.b16 %v417
  %v1512 = vunpack.c.h.b16 %v417
  %v1513 = vunpack.c.l.b16 %v418
  %v1514 = vunpack.c.h.b16 %v418
  %v1515 = vunpack.c.l.b16 %v419
  %v1516 = vunpack.c.h.b16 %v419
  %v1517 = vunpack.c.l.b16 %v420
  %v1518 = vunpack.c.h.b16 %v420
  %v1519 = vunpack.c.l.b16 %v421
  %v1520 = vunpack.c.h.b16 %v421
  %v1521 = vunpack.c.l.b16 %v422
  %v1522 = vunpack.c.h.b16 %v422
  %v1523 = vunpack.c.l.b16 %v423
  %v1524 = vunpack.c.h.b16 %v423
  %v1525 = vunpack.c.l.b16 %v424
  %v1526 = vunpack.c.h.b16 %v424
  %v1527 = vunpack.c.l.b16 %v425
  %v1528 = vunpack.c.h.b16 %v425
  %v1529 = vunpack.c.l.b16 %v426
  %v1530 = vunpack.c.h.b16 %v426
  %v1531 = vunpack.c.l.b16 %v427
  %v1532 = vunpack.c.h.b16 %v427
  %v1533 = vunpack.c.l.b16 %v428
  %v1534 = vunpack.c.h.b16 %v428
  %v1535 = vunpack.c.l.b16 %v429
  %v1536 = vunpack.c.h.b16 %v429
  %v1537 = vunpack.c.l.b16 %v430
  %v1538 = vunpack.c.h.b16 %v430
  %v1539 = vunpack.c.l.b16 %v431
  %v1540 = vunpack.c.h.b16 %v431
  %v1541 = vunpack.c.l.b16 %v432
  %v1542 = vunpack.c.h.b16 %v432
  %v1543 = vunpack.c.l.b16 %v433
  %v1544 = vunpack.c.h.b16 %v433
  %v1545 = vunpack.c.l.b16 %v434
  %v1546 = vunpack.c.h.b16 %v434
  %v1547 = vunpack.c.l.b16 %v435
  %v1548 = vunpack.c.h.b16 %v435
  %v1549 = vunpack.c.l.b16 %v436
  %v1550 = vunpack.c.h.b16 %v436
  %v1551 = vunpack.c.l.b16 %v437
  %v1552 = vunpack.c.h.b16 %v437
  %v1553 = vunpack.c.l.b16 %v438
  %v1554 = vunpack.c.h.b16 %v438
  %v1555 = vunpack.c.l.b16 %v439
  %v1556 = vunpack.c.h.b16 %v439
  %v1557 = vunpack.c.l.b16 %v440
  %v1558 = vunpack.c.h.b16 %v440
  %v1559 = vunpack.c.l.b16 %v441
  %v1560 = vunpack.c.h.b16 %v441
  %v1561 = vunpack.c.l.b16 %v442
  %v1562 = vunpack.c.h.b16 %v442
  %v1563 = vunpack.c.l.b16 %v443
  %v1564 = vunpack.c.h.b16 %v443
  %v1565 = vunpack.c.l.b16 %v444
  %v1566 = vunpack.c.h.b16 %v444
  %v1567 = vunpack.c.l.b16 %v445
  %v1568 = vunpack.c.h.b16 %v445
  %v1569 = vunpack.c.l.b16 %v446
  %v1570 = vunpack.c.h.b16 %v446
  %v1571 = vunpack.c.l.b16 %v447
  %v1572 = vunpack.c.h.b16 %v447
  %v1573 = vunpack.c.l.b16 %v448
  %v1574 = vunpack.c.h.b16 %v448
  %v1575 = vunpack.c.l.b16 %v449
  %v1576 = vunpack.c.h.b16 %v449
  %v1577 = vunpack.c.l.b16 %v450
  %v1578 = vunpack.c.h.b16 %v450
  %v1579 = vunpack.c.l.b16 %v451
  %v1580 = vunpack.c.h.b16 %v451
  %v1581 = vunpack.c.l.b16 %v452
  %v1582 = vunpack.c.h.b16 %v452
  %v1583 = vunpack.c.l.b16 %v453
  %v1584 = vunpack.c.h.b16 %v453
  %v1585 = vunpack.c.l.b16 %v454
  %v1586 = vunpack.c.h.b16 %v454
  %v1587 = vunpack.c.l.b16 %v455
  %v1588 = vunpack.c.h.b16 %v455
  %v1589 = vunpack.c.l.b16 %v456
  %v1590 = vunpack.c.h.b16 %v456
  %v1591 = vunpack.c.l.b16 %v457
  %v1592 = vunpack.c.h.b16 %v457
  %v1593 = vunpack.c.l.b16 %v458
  %v1594 = vunpack.c.h.b16 %v458
  %v1595 = vunpack.c.l.b16 %v459
  %v1596 = vunpack.c.h.b16 %v459
  %v1597 = vunpack.c.l.b16 %v460
  %v1598 = vunpack.c.h.b16 %v460
  %v1599 = vunpack.c.l.b16 %v461
  %v1600 = vunpack.c.h.b16 %v461
  %v1601 = vunpack.c.l.b16 %v462
  %v1602 = vunpack.c.h.b16 %v462
  %v1603 = vunpack.c.l.b16 %v463
  %v1604 = vunpack.c.h.b16 %v463
  %v1605 = vunpack.c.l.b16 %v464
  %v1606 = vunpack.c.h.b16 %v464
  %v1607 = vunpack.c.l.b16 %v465
  %v1608 = vunpack.c.h.b16 %v465
  %v1609 = vunpack.c.l.b16 %v466
  %v1610 = vunpack.c.h.b16 %v466
  %v1611 = vunpack.c.l.b16 %v467
  %v1612 = vunpack.c.h.b16 %v467
  %v1613 = vunpack.c.l.b16 %v468
  %v1614 = vunpack.c.h.b16 %v468
  %v1615 = vunpack.c.l.b16 %v469
  %v1616 = vunpack.c.h.b16 %v469
  %v1617 = vunpack.c.l.b16 %v470
  %v1618 = vunpack.c.h.b16 %v470
  %v1619 = vunpack.c.l.b16 %v471
  %v1620 = vunpack.c.h.b16 %v471
  %v1621 = vunpack.c.l.b16 %v472
  %v1622 = vunpack.c.h.b16 %v472
  %v1623 = vunpack.c.l.b16 %v473
  %v1624 = vunpack.c.h.b16 %v473
  %v1625 = vunpack.c.l.b16 %v474
  %v1626 = vunpack.c.h.b16 %v474
  %v1627 = vpack.c.b16 %v1123, %v1115
  %v1628 = vpack.c.b16 %v1124, %v1116
  %v1629 = vpack.c.b16 %v1125, %v1117
  %v1630 = vpack.c.b16 %v1126, %v1118
  %v1631 = vpack.c.b16 %v1127, %v1119
  %v1632 = vpack.c.b16 %v1128, %v1120
  %v1633 = vpack.c.b16 %v1129, %v1121
  %v1634 = vpack.c.b16 %v1130, %v1122
  %v1635 = vpack.c.b16 %v1139, %v1131
  %v1636 = vpack.c.b16 %v1140, %v1132
  %v1637 = vpack.c.b16 %v1141, %v1133
  %v1638 = vpack.c.b16 %v1142, %v1134
  %v1639 = vpack.c.b16 %v1143, %v1135
  %v1640 = vpack.c.b16 %v1144, %v1136
  %v1641 = vpack.c.b16 %v1145, %v1137
  %v1642 = vpack.c.b16 %v1146, %v1138
  %v1643 = vpack.c.b16 %v1155, %v1147
  %v1644 = vpack.c.b16 %v1156, %v1148
  %v1645 = vpack.c.b16 %v1157, %v1149
  %v1646 = vpack.c.b16 %v1158, %v1150
  %v1647 = vpack.c.b16 %v1159, %v1151
  %v1648 = vpack.c.b16 %v1160, %v1152
  %v1649 = vpack.c.b16 %v1161, %v1153
  %v1650 = vpack.c.b16 %v1162, %v1154
  %v1651 = vpack.c.b16 %v1171, %v1163
  %v1652 = vpack.c.b16 %v1172, %v1164
  %v1653 = vpack.c.b16 %v1173, %v1165
  %v1654 = vpack.c.b16 %v1174, %v1166
  %v1655 = vpack.c.b16 %v1175, %v1167
  %v1656 = vpack.c.b16 %v1176, %v1168
  %v1657 = vpack.c.b16 %v1177, %v1169
  %v1658 = vpack.c.b16 %v1178, %v1170
  %v1659 = vpack.c.b16 %v1187, %v1179
  %v1660 = vpack.c.b16 %v1188, %v1180
  %v1661 = vpack.c.b16 %v1189, %v1181
  %v1662 = vpack.c.b16 %v1190, %v1182
  %v1663 = vpack.c.b16 %v1191, %v1183
  %v1664 = vpack.c.b16 %v1192, %v1184
  %v1665 = vpack.c.b16 %v1193, %v1185
  %v1666 = vpack.c.b16 %v1194, %v1186
  %v1667 = vpack.c.b16 %v1203, %v1195
  %v1668 = vpack.c.b16 %v1204, %v1196
  %v1669 = vpack.c.b16 %v1205, %v1197
  %v1670 = vpack.c.b16 %v1206, %v1198
  %v1671 = vpack.c.b16 %v1207, %v1199
  %v1672 = vpack.c.b16 %v1208, %v1200
  %v1673 = vpack.c.b16 %v1209, %v1201
  %v1674 = vpack.c.b16 %v1210, %v1202
  %v1675 = vpack.c.b16 %v1219, %v1211
  %v1676 = vpack.c.b16 %v1220, %v1212
  %v1677 = vpack.c.b16 %v1221, %v1213
  %v1678 = vpack.c.b16 %v1222, %v1214
  %v1679 = vpack.c.b16 %v1223, %v1215
  %v1680 = vpack.c.b16 %v1224, %v1216
  %v1681 = vpack.c.b16 %v1225, %v1217
  %v1682 = vpack.c.b16 %v1226, %v1218
  %v1683 = vpack.c.b16 %v1235, %v1227
  %v1684 = vpack.c.b16 %v1236, %v1228
  %v1685 = vpack.c.b16 %v1237, %v1229
  %v1686 = vpack.c.b16 %v1238, %v1230
  %v1687 = vpack.c.b16 %v1239, %v1231
  %v1688 = vpack.c.b16 %v1240, %v1232
  %v1689 = vpack.c.b16 %v1241, %v1233
  %v1690 = vpack.c.b16 %v1242, %v1234
  %v1691 = vpack.c.b16 %v1251, %v1243
  %v1692 = vpack.c.b16 %v1252, %v1244
  %v1693 = vpack.c.b16 %v1253, %v1245
  %v1694 = vpack.c.b16 %v1254, %v1246
  %v1695 = vpack.c.b16 %v1255, %v1247
  %v1696 = vpack.c.b16 %v1256, %v1248
  %v1697 = vpack.c.b16 %v1257, %v1249
  %v1698 = vpack.c.b16 %v1258, %v1250
  %v1699 = vpack.c.b16 %v1267, %v1259
  %v1700 = vpack.c.b16 %v1268, %v1260
  %v1701 = vpack.c.b16 %v1269, %v1261
  %v1702 = vpack.c.b16 %v1270, %v1262
  %v1703 = vpack.c.b16 %v1271, %v1263
  %v1704 = vpack.c.b16 %v1272, %v1264
  %v1705 = vpack.c.b16 %v1273, %v1265
  %v1706 = vpack.c.b16 %v1274, %v1266
  %v1707 = vpack.c.b16 %v1283, %v1275
  %v1708 = vpack.c.b16 %v1284, %v1276
  %v1709 = vpack.c.b16 %v1285, %v1277
  %v1710 = vpack.c.b16 %v1286, %v1278
  %v1711 = vpack.c.b16 %v1287, %v1279
  %v1712 = vpack.c.b16 %v1288, %v1280
  %v1713 = vpack.c.b16 %v1289, %v1281
  %v1714 = vpack.c.b16 %v1290, %v1282
  %v1715 = vpack.c.b16 %v1299, %v1291
  %v1716 = vpack.c.b16 %v1300, %v1292
  %v1717 = vpack.c.b16 %v1301, %v1293
  %v1718 = vpack.c.b16 %v1302, %v1294
  %v1719 = vpack.c.b16 %v1303, %v1295
  %v1720 = vpack.c.b16 %v1304, %v1296
  %v1721 = vpack.c.b16 %v1305, %v1297
  %v1722 = vpack.c.b16 %v1306, %v1298
  %v1723 = vpack.c.b16 %v1315, %v1307
  %v1724 = vpack.c.b16 %v1316, %v1308
  %v1725 = vpack.c.b16 %v1317, %v1309
  %v1726 = vpack.c.b16 %v1318, %v1310
  %v1727 = vpack.c.b16 %v1319, %v1311
  %v1728 = vpack.c.b16 %v1320, %v1312
  %v1729 = vpack.c.b16 %v1321, %v1313
  %v1730 = vpack.c.b16 %v1322, %v1314
  %v1731 = vpack.c.b16 %v1331, %v1323
  %v1732 = vpack.c.b16 %v1332, %v1324
  %v1733 = vpack.c.b16 %v1333, %v1325
  %v1734 = vpack.c.b16 %v1334, %v1326
  %v1735 = vpack.c.b16 %v1335, %v1327
  %v1736 = vpack.c.b16 %v1336, %v1328
  %v1737 = vpack.c.b16 %v1337, %v1329
  %v1738 = vpack.c.b16 %v1338, %v1330
  %v1739 = vpack.c.b16 %v1347, %v1339
  %v1740 = vpack.c.b16 %v1348, %v1340
  %v1741 = vpack.c.b16 %v1349, %v1341
  %v1742 = vpack.c.b16 %v1350, %v1342
  %v1743 = vpack.c.b16 %v1351, %v1343
  %v1744 = vpack.c.b16 %v1352, %v1344
  %v1745 = vpack.c.b16 %v1353, %v1345
  %v1746 = vpack.c.b16 %v1354, %v1346
  %v1747 = vpack.c.b16 %v1363, %v1355
  %v1748 = vpack.c.b16 %v1364, %v1356
  %v1749 = vpack.c.b16 %v1365, %v1357
  %v1750 = vpack.c.b16 %v1366, %v1358
  %v1751 = vpack.c.b16 %v1367, %v1359
  %v1752 = vpack.c.b16 %v1368, %v1360
  %v1753 = vpack.c.b16 %v1369, %v1361
  %v1754 = vpack.c.b16 %v1370, %v1362
  %v1755 = vpack.c.b16 %v1379, %v1371
  %v1756 = vpack.c.b16 %v1380, %v1372
  %v1757 = vpack.c.b16 %v1381, %v1373
  %v1758 = vpack.c.b16 %v1382, %v1374
  %v1759 = vpack.c.b16 %v1383, %v1375
  %v1760 = vpack.c.b16 %v1384, %v1376
  %v1761 = vpack.c.b16 %v1385, %v1377
  %v1762 = vpack.c.b16 %v1386, %v1378
  %v1763 = vpack.c.b16 %v1395, %v1387
  %v1764 = vpack.c.b16 %v1396, %v1388
  %v1765 = vpack.c.b16 %v1397, %v1389
  %v1766 = vpack.c.b16 %v1398, %v1390
  %v1767 = vpack.c.b16 %v1399, %v1391
  %v1768 = vpack.c.b16 %v1400, %v1392
  %v1769 = vpack.c.b16 %v1401, %v1393
  %v1770 = vpack.c.b16 %v1402, %v1394
  %v1771 = vpack.c.b16 %v1411, %v1403
  %v1772 = vpack.c.b16 %v1412, %v1404
  %v1773 = vpack.c.b16 %v1413, %v1405
  %v1774 = vpack.c.b16 %v1414, %v1406
  %v1775 = vpack.c.b16 %v1415, %v1407
  %v1776 = vpack.c.b16 %v1416, %v1408
  %v1777 = vpack.c.b16 %v1417, %v1409
  %v1778 = vpack.c.b16 %v1418, %v1410
  %v1779 = vpack.c.b16 %v1427, %v1419
  %v1780 = vpack.c.b16 %v1428, %v1420
  %v1781 = vpack.c.b16 %v1429, %v1421
  %v1782 = vpack.c.b16 %v1430, %v1422
  %v1783 = vpack.c.b16 %v1431, %v1423
  %v1784 = vpack.c.b16 %v1432, %v1424
  %v1785 = vpack.c.b16 %v1433, %v1425
  %v1786 = vpack.c.b16 %v1434, %v1426
  %v1787 = vpack.c.b16 %v1443, %v1435
  %v1788 = vpack.c.b16 %v1444, %v1436
  %v1789 = vpack.c.b16 %v1445, %v1437
  %v1790 = vpack.c.b16 %v1446, %v1438
  %v1791 = vpack.c.b16 %v1447, %v1439
  %v1792 = vpack.c.b16 %v1448, %v1440
  %v1793 = vpack.c.b16 %v1449, %v1441
  %v1794 = vpack.c.b16 %v1450, %v1442
  %v1795 = vpack.c.b16 %v1459, %v1451
  %v1796 = vpack.c.b16 %v1460, %v1452
  %v1797 = vpack.c.b16 %v1461, %v1453
  %v1798 = vpack.c.b16 %v1462, %v1454
  %v1799 = vpack.c.b16 %v1463, %v1455
  %v1800 = vpack.c.b16 %v1464, %v1456
  %v1801 = vpack.c.b16 %v1465, %v1457
  %v1802 = vpack.c.b16 %v1466, %v1458
  %v1803 = vpack.c.b16 %v1475, %v1467
  %v1804 = vpack.c.b16 %v1476, %v1468
  %v1805 = vpack.c.b16 %v1477, %v1469
  %v1806 = vpack.c.b16 %v1478, %v1470
  %v1807 = vpack.c.b16 %v1479, %v1471
  %v1808 = vpack.c.b16 %v1480, %v1472
  %v1809 = vpack.c.b16 %v1481, %v1473
  %v1810 = vpack.c.b16 %v1482, %v1474
  %v1811 = vpack.c.b16 %v1491, %v1483
  %v1812 = vpack.c.b16 %v1492, %v1484
  %v1813 = vpack.c.b16 %v1493, %v1485
  %v1814 = vpack.c.b16 %v1494, %v1486
  %v1815 = vpack.c.b16 %v1495, %v1487
  %v1816 = vpack.c.b16 %v1496, %v1488
  %v1817 = vpack.c.b16 %v1497, %v1489
  %v1818 = vpack.c.b16 %v1498, %v1490
  %v1819 = vpack.c.b16 %v1507, %v1499
  %v1820 = vpack.c.b16 %v1508, %v1500
  %v1821 = vpack.c.b16 %v1509, %v1501
  %v1822 = vpack.c.b16 %v1510, %v1502
  %v1823 = vpack.c.b16 %v1511, %v1503
  %v1824 = vpack.c.b16 %v1512, %v1504
  %v1825 = vpack.c.b16 %v1513, %v1505
  %v1826 = vpack.c.b16 %v1514, %v1506
  %v1827 = vpack.c.b16 %v1523, %v1515
  %v1828 = vpack.c.b16 %v1524, %v1516
  %v1829 = vpack.c.b16 %v1525, %v1517
  %v1830 = vpack.c.b16 %v1526, %v1518
  %v1831 = vpack.c.b16 %v1527, %v1519
  %v1832 = vpack.c.b16 %v1528, %v1520
  %v1833 = vpack.c.b16 %v1529, %v1521
  %v1834 = vpack.c.b16 %v1530, %v1522
  %v1835 = vpack.c.b16 %v1539, %v1531
  %v1836 = vpack.c.b16 %v1540, %v1532
  %v1837 = vpack.c.b16 %v1541, %v1533
  %v1838 = vpack.c.b16 %v1542, %v1534
  %v1839 = vpack.c.b16 %v1543, %v1535
  %v1840 = vpack.c.b16 %v1544, %v1536
  %v1841 = vpack.c.b16 %v1545, %v1537
  %v1842 = vpack.c.b16 %v1546, %v1538
  %v1843 = vpack.c.b16 %v1555, %v1547
  %v1844 = vpack.c.b16 %v1556, %v1548
  %v1845 = vpack.c.b16 %v1557, %v1549
  %v1846 = vpack.c.b16 %v1558, %v1550
  %v1847 = vpack.c.b16 %v1559, %v1551
  %v1848 = vpack.c.b16 %v1560, %v1552
  %v1849 = vpack.c.b16 %v1561, %v1553
  %v1850 = vpack.c.b16 %v1562, %v1554
  %v1851 = vpack.c.b16 %v1571, %v1563
  %v1852 = vpack.c.b16 %v1572, %v1564
  %v1853 = vpack.c.b16 %v1573, %v1565
  %v1854 = vpack.c.b16 %v1574, %v1566
  %v1855 = vpack.c.b16 %v1575, %v1567
  %v1856 = vpack.c.b16 %v1576, %v1568
  %v1857 = vpack.c.b16 %v1577, %v1569
  %v1858 = vpack.c.b16 %v1578, %v1570
  %v1859 = vpack.c.b16 %v1587, %v1579
  %v1860 = vpack.c.b16 %v1588, %v1580
  %v1861 = vpack.c.b16 %v1589, %v1581
  %v1862 = vpack.c.b16 %v1590, %v1582
  %v1863 = vpack.c.b16 %v1591, %v1583
  %v1864 = vpack.c.b16 %v1592, %v1584
  %v1865 = vpack.c.b16 %v1593, %v1585
  %v1866 = vpack.c.b16 %v1594, %v1586
  %v1867 = vpack.c.b16 %v1603, %v1595
  %v1868 = vpack.c.b16 %v1604, %v1596
  %v1869 = vpack.c.b16 %v1605, %v1597
  %v1870 = vpack.c.b16 %v1606, %v1598
  %v1871 = vpack.c.b16 %v1607, %v1599
  %v1872 = vpack.c.b16 %v1608, %v1600
  %v1873 = vpack.c.b16 %v1609, %v1601
  %v1874 = vpack.c.b16 %v1610, %v1602
  %v1875 = vpack.c.b16 %v1619, %v1611
  %v1876 = vpack.c.b16 %v1620, %v1612
  %v1877 = vpack.c.b16 %v1621, %v1613
  %v1878 = vpack.c.b16 %v1622, %v1614
  %v1879 = vpack.c.b16 %v1623, %v1615
  %v1880 = vpack.c.b16 %v1624, %v1616
  %v1881 = vpack.c.b16 %v1625, %v1617
  %v1882 = vpack.c.b16 %v1626, %v1618
  %2139 = vmatprep.subr.bf16.mxu0 0
  %2140 = vmatpush1.bf16.msra.mxu0 %v155
  %2141 = vmatprep.subr.bf16.mxu0 0
  %2142 = vmatpush1.bf16.msra.mxu0 %v156
  %2143 = vmatprep.subr.bf16.mxu0 0
  %2144 = vmatpush1.bf16.msra.mxu0 %v157
  %2145 = vmatprep.subr.bf16.mxu0 0
  %2146 = vmatpush1.bf16.msra.mxu0 %v158
  %2147 = vmatprep.subr.bf16.mxu0 0
  %2148 = vmatpush1.bf16.msra.mxu0 %v159
  %2149 = vmatprep.subr.bf16.mxu0 0
  %2150 = vmatpush1.bf16.msra.mxu0 %v160
  %2151 = vmatprep.subr.bf16.mxu0 0
  %2152 = vmatpush1.bf16.msra.mxu0 %v161
  %2153 = vmatprep.subr.bf16.mxu0 0
  %2154 = vmatpush1.bf16.msra.mxu0 %v162
  %2155 = vmatprep.subr.bf16.mxu0 0
  %2156 = vmatpush1.bf16.msra.mxu0 %v163
  %2157 = vmatprep.subr.bf16.mxu0 0
  %2158 = vmatpush1.bf16.msra.mxu0 %v164
  %2159 = vmatprep.subr.bf16.mxu0 0
  %2160 = vmatpush1.bf16.msra.mxu0 %v165
  %2161 = vmatprep.subr.bf16.mxu0 0
  %2162 = vmatpush1.bf16.msra.mxu0 %v166
  %2163 = vmatprep.subr.bf16.mxu0 0
  %2164 = vmatpush1.bf16.msra.mxu0 %v167
  %2165 = vmatprep.subr.bf16.mxu0 0
  %2166 = vmatpush1.bf16.msra.mxu0 %v168
  %2167 = vmatprep.subr.bf16.mxu0 0
  %2168 = vmatpush1.bf16.msra.mxu0 %v169
  %2169 = vmatprep.subr.bf16.mxu0 0
  %2170 = vmatpush1.bf16.msra.mxu0 %v170
  %2171 = vmatprep.mubr.bf16.mxu0 %v1628
  %2172 = vmatmul.mubr.bf16.gmra.mrb[0].mxu0 %v1627
  %v2173 = vpop.f32.mrb[0].mxu0
  %v2174 = vadd.f32 %v542, %v2173
  %v2175 = vpop.f32.mrb[0].mxu0
  %v2176 = vpop.f32.mrb[0].mxu0
  %v2177 = vadd.f32 %v547, %v2176
  %v2178 = vpop.f32.mrb[0].mxu0
  %2179 = vmatprep.mubr.bf16.mxu0 %v1636
  %2180 = vmatmul.mubr.bf16.gmra.mrb[0].mxu0 %v1635
  %v2181 = vpop.f32.mrb[0].mxu0
  %v2182 = vadd.f32 %v552, %v2181
  %v2183 = vpop.f32.mrb[0].mxu0
  %v2184 = vpop.f32.mrb[0].mxu0
  %v2185 = vadd.f32 %v557, %v2184
  %v2186 = vpop.f32.mrb[0].mxu0
  %2187 = vmatprep.mubr.bf16.mxu0 %v1644
  %2188 = vmatmul.mubr.bf16.gmra.mrb[0].mxu0 %v1643
  %v2189 = vpop.f32.mrb[0].mxu0
  %v2190 = vadd.f32 %v562, %v2189
  %v2191 = vpop.f32.mrb[0].mxu0
  %v2192 = vpop.f32.mrb[0].mxu0
  %v2193 = vadd.f32 %v567, %v2192
  %v2194 = vpop.f32.mrb[0].mxu0
  %2195 = vmatprep.mubr.bf16.mxu0 %v1652
  %2196 = vmatmul.mubr.bf16.gmra.mrb[0].mxu0 %v1651
  %v2197 = vpop.f32.mrb[0].mxu0
  %v2198 = vadd.f32 %v572, %v2197
  %v2199 = vpop.f32.mrb[0].mxu0
  %v2200 = vpop.f32.mrb[0].mxu0
  %v2201 = vadd.f32 %v577, %v2200
  %v2202 = vpop.f32.mrb[0].mxu0
  %2203 = vmatprep.mubr.bf16.mxu0 %v1660
  %2204 = vmatmul.mubr.bf16.gmra.mrb[0].mxu0 %v1659
  %v2205 = vpop.f32.mrb[0].mxu0
  %v2206 = vadd.f32 %v582, %v2205
  %v2207 = vpop.f32.mrb[0].mxu0
  %v2208 = vpop.f32.mrb[0].mxu0
  %v2209 = vadd.f32 %v587, %v2208
  %v2210 = vpop.f32.mrb[0].mxu0
  %2211 = vmatprep.mubr.bf16.mxu0 %v1668
  %2212 = vmatmul.mubr.bf16.gmra.mrb[0].mxu0 %v1667
  %v2213 = vpop.f32.mrb[0].mxu0
  %v2214 = vadd.f32 %v592, %v2213
  %v2215 = vpop.f32.mrb[0].mxu0
  %v2216 = vpop.f32.mrb[0].mxu0
  %v2217 = vadd.f32 %v597, %v2216
  %v2218 = vpop.f32.mrb[0].mxu0
  %2219 = vmatprep.mubr.bf16.mxu0 %v1676
  %2220 = vmatmul.mubr.bf16.gmra.mrb[0].mxu0 %v1675
  %v2221 = vpop.f32.mrb[0].mxu0
  %v2222 = vadd.f32 %v602, %v2221
  %v2223 = vpop.f32.mrb[0].mxu0
  %v2224 = vpop.f32.mrb[0].mxu0
  %v2225 = vadd.f32 %v607, %v2224
  %v2226 = vpop.f32.mrb[0].mxu0
  %2227 = vmatprep.mubr.bf16.mxu0 %v1684
  %2228 = vmatmul.mubr.bf16.gmra.mrb[0].mxu0 %v1683
  %v2229 = vpop.f32.mrb[0].mxu0
  %v2230 = vadd.f32 %v612, %v2229
  %v2231 = vpop.f32.mrb[0].mxu0
  %v2232 = vpop.f32.mrb[0].mxu0
  %v2233 = vadd.f32 %v617, %v2232
  %v2234 = vpop.f32.mrb[0].mxu0
  %2235 = vmatprep.mubr.bf16.mxu0 %v1692
  %2236 = vmatmul.mubr.bf16.gmra.mrb[0].mxu0 %v1691
  %v2237 = vpop.f32.mrb[0].mxu0
  %v2238 = vadd.f32 %v622, %v2237
  %v2239 = vpop.f32.mrb[0].mxu0
  %v2240 = vpop.f32.mrb[0].mxu0
  %v2241 = vadd.f32 %v627, %v2240
  %v2242 = vpop.f32.mrb[0].mxu0
  %2243 = vmatprep.mubr.bf16.mxu0 %v1700
  %2244 = vmatmul.mubr.bf16.gmra.mrb[0].mxu0 %v1699
  %v2245 = vpop.f32.mrb[0].mxu0
  %v2246 = vadd.f32 %v632, %v2245
  %v2247 = vpop.f32.mrb[0].mxu0
  %v2248 = vpop.f32.mrb[0].mxu0
  %v2249 = vadd.f32 %v637, %v2248
  %v2250 = vpop.f32.mrb[0].mxu0
  %2251 = vmatprep.mubr.bf16.mxu0 %v1708
  %2252 = vmatmul.mubr.bf16.gmra.mrb[0].mxu0 %v1707
  %v2253 = vpop.f32.mrb[0].mxu0
  %v2254 = vadd.f32 %v642, %v2253
  %v2255 = vpop.f32.mrb[0].mxu0
  %v2256 = vpop.f32.mrb[0].mxu0
  %v2257 = vadd.f32 %v647, %v2256
  %v2258 = vpop.f32.mrb[0].mxu0
  %2259 = vmatprep.mubr.bf16.mxu0 %v1716
  %2260 = vmatmul.mubr.bf16.gmra.mrb[0].mxu0 %v1715
  %v2261 = vpop.f32.mrb[0].mxu0
  %v2262 = vadd.f32 %v652, %v2261
  %v2263 = vpop.f32.mrb[0].mxu0
  %v2264 = vpop.f32.mrb[0].mxu0
  %v2265 = vadd.f32 %v657, %v2264
  %v2266 = vpop.f32.mrb[0].mxu0
  %2267 = vmatprep.mubr.bf16.mxu0 %v1724
  %2268 = vmatmul.mubr.bf16.gmra.mrb[0].mxu0 %v1723
  %v2269 = vpop.f32.mrb[0].mxu0
  %v2270 = vadd.f32 %v662, %v2269
  %v2271 = vpop.f32.mrb[0].mxu0
  %v2272 = vpop.f32.mrb[0].mxu0
  %v2273 = vadd.f32 %v667, %v2272
  %v2274 = vpop.f32.mrb[0].mxu0
  %2275 = vmatprep.mubr.bf16.mxu0 %v1732
  %2276 = vmatmul.mubr.bf16.gmra.mrb[0].mxu0 %v1731
  %v2277 = vpop.f32.mrb[0].mxu0
  %v2278 = vadd.f32 %v672, %v2277
  %v2279 = vpop.f32.mrb[0].mxu0
  %v2280 = vpop.f32.mrb[0].mxu0
  %v2281 = vadd.f32 %v677, %v2280
  %v2282 = vpop.f32.mrb[0].mxu0
  %2283 = vmatprep.mubr.bf16.mxu0 %v1740
  %2284 = vmatmul.mubr.bf16.gmra.mrb[0].mxu0 %v1739
  %v2285 = vpop.f32.mrb[0].mxu0
  %v2286 = vadd.f32 %v682, %v2285
  %v2287 = vpop.f32.mrb[0].mxu0
  %v2288 = vpop.f32.mrb[0].mxu0
  %v2289 = vadd.f32 %v687, %v2288
  %v2290 = vpop.f32.mrb[0].mxu0
  %2291 = vmatprep.mubr.bf16.mxu0 %v1748
  %2292 = vmatmul.mubr.bf16.gmra.mrb[0].mxu0 %v1747
  %v2293 = vpop.f32.mrb[0].mxu0
  %v2294 = vadd.f32 %v692, %v2293
  %v2295 = vpop.f32.mrb[0].mxu0
  %v2296 = vpop.f32.mrb[0].mxu0
  %v2297 = vadd.f32 %v697, %v2296
  %v2298 = vpop.f32.mrb[0].mxu0
  %2299 = vmatprep.mubr.bf16.mxu0 %v1756
  %2300 = vmatmul.mubr.bf16.gmra.mrb[0].mxu0 %v1755
  %v2301 = vpop.f32.mrb[0].mxu0
  %v2302 = vadd.f32 %v702, %v2301
  %v2303 = vpop.f32.mrb[0].mxu0
  %v2304 = vpop.f32.mrb[0].mxu0
  %v2305 = vadd.f32 %v707, %v2304
  %v2306 = vpop.f32.mrb[0].mxu0
  %2307 = vmatprep.mubr.bf16.mxu0 %v1764
  %2308 = vmatmul.mubr.bf16.gmra.mrb[0].mxu0 %v1763
  %v2309 = vpop.f32.mrb[0].mxu0
  %v2310 = vadd.f32 %v712, %v2309
  %v2311 = vpop.f32.mrb[0].mxu0
  %v2312 = vpop.f32.mrb[0].mxu0
  %v2313 = vadd.f32 %v717, %v2312
  %v2314 = vpop.f32.mrb[0].mxu0
  %2315 = vmatprep.mubr.bf16.mxu0 %v1772
  %2316 = vmatmul.mubr.bf16.gmra.mrb[0].mxu0 %v1771
  %v2317 = vpop.f32.mrb[0].mxu0
  %v2318 = vadd.f32 %v722, %v2317
  %v2319 = vpop.f32.mrb[0].mxu0
  %v2320 = vpop.f32.mrb[0].mxu0
  %v2321 = vadd.f32 %v727, %v2320
  %v2322 = vpop.f32.mrb[0].mxu0
  %2323 = vmatprep.mubr.bf16.mxu0 %v1780
  %2324 = vmatmul.mubr.bf16.gmra.mrb[0].mxu0 %v1779
  %v2325 = vpop.f32.mrb[0].mxu0
  %v2326 = vadd.f32 %v732, %v2325
  %v2327 = vpop.f32.mrb[0].mxu0
  %v2328 = vpop.f32.mrb[0].mxu0
  %v2329 = vadd.f32 %v737, %v2328
  %v2330 = vpop.f32.mrb[0].mxu0
  %2331 = vmatprep.mubr.bf16.mxu0 %v1788
  %2332 = vmatmul.mubr.bf16.gmra.mrb[0].mxu0 %v1787
  %v2333 = vpop.f32.mrb[0].mxu0
  %v2334 = vadd.f32 %v742, %v2333
  %v2335 = vpop.f32.mrb[0].mxu0
  %v2336 = vpop.f32.mrb[0].mxu0
  %v2337 = vadd.f32 %v747, %v2336
  %v2338 = vpop.f32.mrb[0].mxu0
  %2339 = vmatprep.mubr.bf16.mxu0 %v1796
  %2340 = vmatmul.mubr.bf16.gmra.mrb[0].mxu0 %v1795
  %v2341 = vpop.f32.mrb[0].mxu0
  %v2342 = vadd.f32 %v752, %v2341
  %v2343 = vpop.f32.mrb[0].mxu0
  %v2344 = vpop.f32.mrb[0].mxu0
  %v2345 = vadd.f32 %v757, %v2344
  %v2346 = vpop.f32.mrb[0].mxu0
  %2347 = vmatprep.mubr.bf16.mxu0 %v1804
  %2348 = vmatmul.mubr.bf16.gmra.mrb[0].mxu0 %v1803
  %v2349 = vpop.f32.mrb[0].mxu0
  %v2350 = vadd.f32 %v762, %v2349
  %v2351 = vpop.f32.mrb[0].mxu0
  %v2352 = vpop.f32.mrb[0].mxu0
  %v2353 = vadd.f32 %v767, %v2352
  %v2354 = vpop.f32.mrb[0].mxu0
  %2355 = vmatprep.mubr.bf16.mxu0 %v1812
  %2356 = vmatmul.mubr.bf16.gmra.mrb[0].mxu0 %v1811
  %v2357 = vpop.f32.mrb[0].mxu0
  %v2358 = vadd.f32 %v772, %v2357
  %v2359 = vpop.f32.mrb[0].mxu0
  %v2360 = vpop.f32.mrb[0].mxu0
  %v2361 = vadd.f32 %v777, %v2360
  %v2362 = vpop.f32.mrb[0].mxu0
  %2363 = vmatprep.mubr.bf16.mxu0 %v1820
  %2364 = vmatmul.mubr.bf16.gmra.mrb[0].mxu0 %v1819
  %v2365 = vpop.f32.mrb[0].mxu0
  %v2366 = vadd.f32 %v782, %v2365
  %v2367 = vpop.f32.mrb[0].mxu0
  %v2368 = vpop.f32.mrb[0].mxu0
  %v2369 = vadd.f32 %v787, %v2368
  %v2370 = vpop.f32.mrb[0].mxu0
  %2371 = vmatprep.mubr.bf16.mxu0 %v1828
  %2372 = vmatmul.mubr.bf16.gmra.mrb[0].mxu0 %v1827
  %v2373 = vpop.f32.mrb[0].mxu0
  %v2374 = vadd.f32 %v792, %v2373
  %v2375 = vpop.f32.mrb[0].mxu0
  %v2376 = vpop.f32.mrb[0].mxu0
  %v2377 = vadd.f32 %v797, %v2376
  %v2378 = vpop.f32.mrb[0].mxu0
  %2379 = vmatprep.mubr.bf16.mxu0 %v1836
  %2380 = vmatmul.mubr.bf16.gmra.mrb[0].mxu0 %v1835
  %v2381 = vpop.f32.mrb[0].mxu0
  %v2382 = vadd.f32 %v802, %v2381
  %v2383 = vpop.f32.mrb[0].mxu0
  %v2384 = vpop.f32.mrb[0].mxu0
  %v2385 = vadd.f32 %v807, %v2384
  %v2386 = vpop.f32.mrb[0].mxu0
  %2387 = vmatprep.mubr.bf16.mxu0 %v1844
  %2388 = vmatmul.mubr.bf16.gmra.mrb[0].mxu0 %v1843
  %v2389 = vpop.f32.mrb[0].mxu0
  %v2390 = vadd.f32 %v812, %v2389
  %v2391 = vpop.f32.mrb[0].mxu0
  %v2392 = vpop.f32.mrb[0].mxu0
  %v2393 = vadd.f32 %v817, %v2392
  %v2394 = vpop.f32.mrb[0].mxu0
  %2395 = vmatprep.mubr.bf16.mxu0 %v1852
  %2396 = vmatmul.mubr.bf16.gmra.mrb[0].mxu0 %v1851
  %v2397 = vpop.f32.mrb[0].mxu0
  %v2398 = vadd.f32 %v822, %v2397
  %v2399 = vpop.f32.mrb[0].mxu0
  %v2400 = vpop.f32.mrb[0].mxu0
  %v2401 = vadd.f32 %v827, %v2400
  %v2402 = vpop.f32.mrb[0].mxu0
  %2403 = vmatprep.mubr.bf16.mxu0 %v1860
  %2404 = vmatmul.mubr.bf16.gmra.mrb[0].mxu0 %v1859
  %v2405 = vpop.f32.mrb[0].mxu0
  %v2406 = vadd.f32 %v832, %v2405
  %v2407 = vpop.f32.mrb[0].mxu0
  %v2408 = vpop.f32.mrb[0].mxu0
  %v2409 = vadd.f32 %v837, %v2408
  %v2410 = vpop.f32.mrb[0].mxu0
  %2411 = vmatprep.mubr.bf16.mxu0 %v1868
  %2412 = vmatmul.mubr.bf16.gmra.mrb[0].mxu0 %v1867
  %v2413 = vpop.f32.mrb[0].mxu0
  %v2414 = vadd.f32 %v842, %v2413
  %v2415 = vpop.f32.mrb[0].mxu0
  %v2416 = vpop.f32.mrb[0].mxu0
  %v2417 = vadd.f32 %v847, %v2416
  %v2418 = vpop.f32.mrb[0].mxu0
  %2419 = vmatprep.mubr.bf16.mxu0 %v1876
  %2420 = vmatmul.mubr.bf16.gmra.mrb[0].mxu0 %v1875
  %v2421 = vpop.f32.mrb[0].mxu0
  %v2422 = vadd.f32 %v852, %v2421
  %v2423 = vpop.f32.mrb[0].mxu0
  %v2424 = vpop.f32.mrb[0].mxu0
  %v2425 = vadd.f32 %v857, %v2424
  %v2426 = vpop.f32.mrb[0].mxu0
  %2427 = vdwg.mxu0
  %2428 = vmatprep.subr.bf16.mxu0 0
  %2429 = vmatpush1.bf16.msra.mxu0 %v171
  %2430 = vmatprep.subr.bf16.mxu0 0
  %2431 = vmatpush1.bf16.msra.mxu0 %v172
  %2432 = vmatprep.subr.bf16.mxu0 0
  %2433 = vmatpush1.bf16.msra.mxu0 %v173
  %2434 = vmatprep.subr.bf16.mxu0 0
  %2435 = vmatpush1.bf16.msra.mxu0 %v174
  %2436 = vmatprep.subr.bf16.mxu0 0
  %2437 = vmatpush1.bf16.msra.mxu0 %v175
  %2438 = vmatprep.subr.bf16.mxu0 0
  %2439 = vmatpush1.bf16.msra.mxu0 %v176
  %2440 = vmatprep.subr.bf16.mxu0 0
  %2441 = vmatpush1.bf16.msra.mxu0 %v177
  %2442 = vmatprep.subr.bf16.mxu0 0
  %2443 = vmatpush1.bf16.msra.mxu0 %v178
  %2444 = vmatprep.subr.bf16.mxu0 0
  %2445 = vmatpush1.bf16.msra.mxu0 %v179
  %2446 = vmatprep.subr.bf16.mxu0 0
  %2447 = vmatpush1.bf16.msra.mxu0 %v180
  %2448 = vmatprep.subr.bf16.mxu0 0
  %2449 = vmatpush1.bf16.msra.mxu0 %v181
  %2450 = vmatprep.subr.bf16.mxu0 0
  %2451 = vmatpush1.bf16.msra.mxu0 %v182
  %2452 = vmatprep.subr.bf16.mxu0 0
  %2453 = vmatpush1.bf16.msra.mxu0 %v183
  %2454 = vmatprep.subr.bf16.mxu0 0
  %2455 = vmatpush1.bf16.msra.mxu0 %v184
  %2456 = vmatprep.subr.bf16.mxu0 0
  %2457 = vmatpush1.bf16.msra.mxu0 %v185
  %2458 = vmatprep.subr.bf16.mxu0 0
  %2459 = vmatpush1.bf16.msra.mxu0 %v186
  %2460 = vmatprep.mubr.bf16.mxu0 %v1630
  %2461 = vmatmul.mubr.bf16.gmra.mrb[0].mxu0 %v1629
  %v2462 = vpop.f32.mrb[0].mxu0
  %v2463 = vadd.f32 %v2174, %v2462
  %v2464 = vpop.f32.mrb[0].mxu0
  %v2465 = vpop.f32.mrb[0].mxu0
  %v2466 = vadd.f32 %v2177, %v2465
  %v2467 = vpop.f32.mrb[0].mxu0
  %2468 = vmatprep.mubr.bf16.mxu0 %v1638
  %2469 = vmatmul.mubr.bf16.gmra.mrb[0].mxu0 %v1637
  %v2470 = vpop.f32.mrb[0].mxu0
  %v2471 = vadd.f32 %v2182, %v2470
  %v2472 = vpop.f32.mrb[0].mxu0
  %v2473 = vpop.f32.mrb[0].mxu0
  %v2474 = vadd.f32 %v2185, %v2473
  %v2475 = vpop.f32.mrb[0].mxu0
  %2476 = vmatprep.mubr.bf16.mxu0 %v1646
  %2477 = vmatmul.mubr.bf16.gmra.mrb[0].mxu0 %v1645
  %v2478 = vpop.f32.mrb[0].mxu0
  %v2479 = vadd.f32 %v2190, %v2478
  %v2480 = vpop.f32.mrb[0].mxu0
  %v2481 = vpop.f32.mrb[0].mxu0
  %v2482 = vadd.f32 %v2193, %v2481
  %v2483 = vpop.f32.mrb[0].mxu0
  %2484 = vmatprep.mubr.bf16.mxu0 %v1654
  %2485 = vmatmul.mubr.bf16.gmra.mrb[0].mxu0 %v1653
  %v2486 = vpop.f32.mrb[0].mxu0
  %v2487 = vadd.f32 %v2198, %v2486
  %v2488 = vpop.f32.mrb[0].mxu0
  %v2489 = vpop.f32.mrb[0].mxu0
  %v2490 = vadd.f32 %v2201, %v2489
  %v2491 = vpop.f32.mrb[0].mxu0
  %2492 = vmatprep.mubr.bf16.mxu0 %v1662
  %2493 = vmatmul.mubr.bf16.gmra.mrb[0].mxu0 %v1661
  %v2494 = vpop.f32.mrb[0].mxu0
  %v2495 = vadd.f32 %v2206, %v2494
  %v2496 = vpop.f32.mrb[0].mxu0
  %v2497 = vpop.f32.mrb[0].mxu0
  %v2498 = vadd.f32 %v2209, %v2497
  %v2499 = vpop.f32.mrb[0].mxu0
  %2500 = vmatprep.mubr.bf16.mxu0 %v1670
  %2501 = vmatmul.mubr.bf16.gmra.mrb[0].mxu0 %v1669
  %v2502 = vpop.f32.mrb[0].mxu0
  %v2503 = vadd.f32 %v2214, %v2502
  %v2504 = vpop.f32.mrb[0].mxu0
  %v2505 = vpop.f32.mrb[0].mxu0
  %v2506 = vadd.f32 %v2217, %v2505
  %v2507 = vpop.f32.mrb[0].mxu0
  %2508 = vmatprep.mubr.bf16.mxu0 %v1678
  %2509 = vmatmul.mubr.bf16.gmra.mrb[0].mxu0 %v1677
  %v2510 = vpop.f32.mrb[0].mxu0
  %v2511 = vadd.f32 %v2222, %v2510
  %v2512 = vpop.f32.mrb[0].mxu0
  %v2513 = vpop.f32.mrb[0].mxu0
  %v2514 = vadd.f32 %v2225, %v2513
  %v2515 = vpop.f32.mrb[0].mxu0
  %2516 = vmatprep.mubr.bf16.mxu0 %v1686
  %2517 = vmatmul.mubr.bf16.gmra.mrb[0].mxu0 %v1685
  %v2518 = vpop.f32.mrb[0].mxu0
  %v2519 = vadd.f32 %v2230, %v2518
  %v2520 = vpop.f32.mrb[0].mxu0
  %v2521 = vpop.f32.mrb[0].mxu0
  %v2522 = vadd.f32 %v2233, %v2521
  %v2523 = vpop.f32.mrb[0].mxu0
  %2524 = vmatprep.mubr.bf16.mxu0 %v1694
  %2525 = vmatmul.mubr.bf16.gmra.mrb[0].mxu0 %v1693
  %v2526 = vpop.f32.mrb[0].mxu0
  %v2527 = vadd.f32 %v2238, %v2526
  %v2528 = vpop.f32.mrb[0].mxu0
  %v2529 = vpop.f32.mrb[0].mxu0
  %v2530 = vadd.f32 %v2241, %v2529
  %v2531 = vpop.f32.mrb[0].mxu0
  %2532 = vmatprep.mubr.bf16.mxu0 %v1702
  %2533 = vmatmul.mubr.bf16.gmra.mrb[0].mxu0 %v1701
  %v2534 = vpop.f32.mrb[0].mxu0
  %v2535 = vadd.f32 %v2246, %v2534
  %v2536 = vpop.f32.mrb[0].mxu0
  %v2537 = vpop.f32.mrb[0].mxu0
  %v2538 = vadd.f32 %v2249, %v2537
  %v2539 = vpop.f32.mrb[0].mxu0
  %2540 = vmatprep.mubr.bf16.mxu0 %v1710
  %2541 = vmatmul.mubr.bf16.gmra.mrb[0].mxu0 %v1709
  %v2542 = vpop.f32.mrb[0].mxu0
  %v2543 = vadd.f32 %v2254, %v2542
  %v2544 = vpop.f32.mrb[0].mxu0
  %v2545 = vpop.f32.mrb[0].mxu0
  %v2546 = vadd.f32 %v2257, %v2545
  %v2547 = vpop.f32.mrb[0].mxu0
  %2548 = vmatprep.mubr.bf16.mxu0 %v1718
  %2549 = vmatmul.mubr.bf16.gmra.mrb[0].mxu0 %v1717
  %v2550 = vpop.f32.mrb[0].mxu0
  %v2551 = vadd.f32 %v2262, %v2550
  %v2552 = vpop.f32.mrb[0].mxu0
  %v2553 = vpop.f32.mrb[0].mxu0
  %v2554 = vadd.f32 %v2265, %v2553
  %v2555 = vpop.f32.mrb[0].mxu0
  %2556 = vmatprep.mubr.bf16.mxu0 %v1726
  %2557 = vmatmul.mubr.bf16.gmra.mrb[0].mxu0 %v1725
  %v2558 = vpop.f32.mrb[0].mxu0
  %v2559 = vadd.f32 %v2270, %v2558
  %v2560 = vpop.f32.mrb[0].mxu0
  %v2561 = vpop.f32.mrb[0].mxu0
  %v2562 = vadd.f32 %v2273, %v2561
  %v2563 = vpop.f32.mrb[0].mxu0
  %2564 = vmatprep.mubr.bf16.mxu0 %v1734
  %2565 = vmatmul.mubr.bf16.gmra.mrb[0].mxu0 %v1733
  %v2566 = vpop.f32.mrb[0].mxu0
  %v2567 = vadd.f32 %v2278, %v2566
  %v2568 = vpop.f32.mrb[0].mxu0
  %v2569 = vpop.f32.mrb[0].mxu0
  %v2570 = vadd.f32 %v2281, %v2569
  %v2571 = vpop.f32.mrb[0].mxu0
  %2572 = vmatprep.mubr.bf16.mxu0 %v1742
  %2573 = vmatmul.mubr.bf16.gmra.mrb[0].mxu0 %v1741
  %v2574 = vpop.f32.mrb[0].mxu0
  %v2575 = vadd.f32 %v2286, %v2574
  %v2576 = vpop.f32.mrb[0].mxu0
  %v2577 = vpop.f32.mrb[0].mxu0
  %v2578 = vadd.f32 %v2289, %v2577
  %v2579 = vpop.f32.mrb[0].mxu0
  %2580 = vmatprep.mubr.bf16.mxu0 %v1750
  %2581 = vmatmul.mubr.bf16.gmra.mrb[0].mxu0 %v1749
  %v2582 = vpop.f32.mrb[0].mxu0
  %v2583 = vadd.f32 %v2294, %v2582
  %v2584 = vpop.f32.mrb[0].mxu0
  %v2585 = vpop.f32.mrb[0].mxu0
  %v2586 = vadd.f32 %v2297, %v2585
  %v2587 = vpop.f32.mrb[0].mxu0
  %2588 = vmatprep.mubr.bf16.mxu0 %v1758
  %2589 = vmatmul.mubr.bf16.gmra.mrb[0].mxu0 %v1757
  %v2590 = vpop.f32.mrb[0].mxu0
  %v2591 = vadd.f32 %v2302, %v2590
  %v2592 = vpop.f32.mrb[0].mxu0
  %v2593 = vpop.f32.mrb[0].mxu0
  %v2594 = vadd.f32 %v2305, %v2593
  %v2595 = vpop.f32.mrb[0].mxu0
  %2596 = vmatprep.mubr.bf16.mxu0 %v1766
  %2597 = vmatmul.mubr.bf16.gmra.mrb[0].mxu0 %v1765
  %v2598 = vpop.f32.mrb[0].mxu0
  %v2599 = vadd.f32 %v2310, %v2598
  %v2600 = vpop.f32.mrb[0].mxu0
  %v2601 = vpop.f32.mrb[0].mxu0
  %v2602 = vadd.f32 %v2313, %v2601
  %v2603 = vpop.f32.mrb[0].mxu0
  %2604 = vmatprep.mubr.bf16.mxu0 %v1774
  %2605 = vmatmul.mubr.bf16.gmra.mrb[0].mxu0 %v1773
  %v2606 = vpop.f32.mrb[0].mxu0
  %v2607 = vadd.f32 %v2318, %v2606
  %v2608 = vpop.f32.mrb[0].mxu0
  %v2609 = vpop.f32.mrb[0].mxu0
  %v2610 = vadd.f32 %v2321, %v2609
  %v2611 = vpop.f32.mrb[0].mxu0
  %2612 = vmatprep.mubr.bf16.mxu0 %v1782
  %2613 = vmatmul.mubr.bf16.gmra.mrb[0].mxu0 %v1781
  %v2614 = vpop.f32.mrb[0].mxu0
  %v2615 = vadd.f32 %v2326, %v2614
  %v2616 = vpop.f32.mrb[0].mxu0
  %v2617 = vpop.f32.mrb[0].mxu0
  %v2618 = vadd.f32 %v2329, %v2617
  %v2619 = vpop.f32.mrb[0].mxu0
  %2620 = vmatprep.mubr.bf16.mxu0 %v1790
  %2621 = vmatmul.mubr.bf16.gmra.mrb[0].mxu0 %v1789
  %v2622 = vpop.f32.mrb[0].mxu0
  %v2623 = vadd.f32 %v2334, %v2622
  %v2624 = vpop.f32.mrb[0].mxu0
  %v2625 = vpop.f32.mrb[0].mxu0
  %v2626 = vadd.f32 %v2337, %v2625
  %v2627 = vpop.f32.mrb[0].mxu0
  %2628 = vmatprep.mubr.bf16.mxu0 %v1798
  %2629 = vmatmul.mubr.bf16.gmra.mrb[0].mxu0 %v1797
  %v2630 = vpop.f32.mrb[0].mxu0
  %v2631 = vadd.f32 %v2342, %v2630
  %v2632 = vpop.f32.mrb[0].mxu0
  %v2633 = vpop.f32.mrb[0].mxu0
  %v2634 = vadd.f32 %v2345, %v2633
  %v2635 = vpop.f32.mrb[0].mxu0
  %2636 = vmatprep.mubr.bf16.mxu0 %v1806
  %2637 = vmatmul.mubr.bf16.gmra.mrb[0].mxu0 %v1805
  %v2638 = vpop.f32.mrb[0].mxu0
  %v2639 = vadd.f32 %v2350, %v2638
  %v2640 = vpop.f32.mrb[0].mxu0
  %v2641 = vpop.f32.mrb[0].mxu0
  %v2642 = vadd.f32 %v2353, %v2641
  %v2643 = vpop.f32.mrb[0].mxu0
  %2644 = vmatprep.mubr.bf16.mxu0 %v1814
  %2645 = vmatmul.mubr.bf16.gmra.mrb[0].mxu0 %v1813
  %v2646 = vpop.f32.mrb[0].mxu0
  %v2647 = vadd.f32 %v2358, %v2646
  %v2648 = vpop.f32.mrb[0].mxu0
  %v2649 = vpop.f32.mrb[0].mxu0
  %v2650 = vadd.f32 %v2361, %v2649
  %v2651 = vpop.f32.mrb[0].mxu0
  %2652 = vmatprep.mubr.bf16.mxu0 %v1822
  %2653 = vmatmul.mubr.bf16.gmra.mrb[0].mxu0 %v1821
  %v2654 = vpop.f32.mrb[0].mxu0
  %v2655 = vadd.f32 %v2366, %v2654
  %v2656 = vpop.f32.mrb[0].mxu0
  %v2657 = vpop.f32.mrb[0].mxu0
  %v2658 = vadd.f32 %v2369, %v2657
  %v2659 = vpop.f32.mrb[0].mxu0
  %2660 = vmatprep.mubr.bf16.mxu0 %v1830
  %2661 = vmatmul.mubr.bf16.gmra.mrb[0].mxu0 %v1829
  %v2662 = vpop.f32.mrb[0].mxu0
  %v2663 = vadd.f32 %v2374, %v2662
  %v2664 = vpop.f32.mrb[0].mxu0
  %v2665 = vpop.f32.mrb[0].mxu0
  %v2666 = vadd.f32 %v2377, %v2665
  %v2667 = vpop.f32.mrb[0].mxu0
  %2668 = vmatprep.mubr.bf16.mxu0 %v1838
  %2669 = vmatmul.mubr.bf16.gmra.mrb[0].mxu0 %v1837
  %v2670 = vpop.f32.mrb[0].mxu0
  %v2671 = vadd.f32 %v2382, %v2670
  %v2672 = vpop.f32.mrb[0].mxu0
  %v2673 = vpop.f32.mrb[0].mxu0
  %v2674 = vadd.f32 %v2385, %v2673
  %v2675 = vpop.f32.mrb[0].mxu0
  %2676 = vmatprep.mubr.bf16.mxu0 %v1846
  %2677 = vmatmul.mubr.bf16.gmra.mrb[0].mxu0 %v1845
  %v2678 = vpop.f32.mrb[0].mxu0
  %v2679 = vadd.f32 %v2390, %v2678
  %v2680 = vpop.f32.mrb[0].mxu0
  %v2681 = vpop.f32.mrb[0].mxu0
  %v2682 = vadd.f32 %v2393, %v2681
  %v2683 = vpop.f32.mrb[0].mxu0
  %2684 = vmatprep.mubr.bf16.mxu0 %v1854
  %2685 = vmatmul.mubr.bf16.gmra.mrb[0].mxu0 %v1853
  %v2686 = vpop.f32.mrb[0].mxu0
  %v2687 = vadd.f32 %v2398, %v2686
  %v2688 = vpop.f32.mrb[0].mxu0
  %v2689 = vpop.f32.mrb[0].mxu0
  %v2690 = vadd.f32 %v2401, %v2689
  %v2691 = vpop.f32.mrb[0].mxu0
  %2692 = vmatprep.mubr.bf16.mxu0 %v1862
  %2693 = vmatmul.mubr.bf16.gmra.mrb[0].mxu0 %v1861
  %v2694 = vpop.f32.mrb[0].mxu0
  %v2695 = vadd.f32 %v2406, %v2694
  %v2696 = vpop.f32.mrb[0].mxu0
  %v2697 = vpop.f32.mrb[0].mxu0
  %v2698 = vadd.f32 %v2409, %v2697
  %v2699 = vpop.f32.mrb[0].mxu0
  %2700 = vmatprep.mubr.bf16.mxu0 %v1870
  %2701 = vmatmul.mubr.bf16.gmra.mrb[0].mxu0 %v1869
  %v2702 = vpop.f32.mrb[0].mxu0
  %v2703 = vadd.f32 %v2414, %v2702
  %v2704 = vpop.f32.mrb[0].mxu0
  %v2705 = vpop.f32.mrb[0].mxu0
  %v2706 = vadd.f32 %v2417, %v2705
  %v2707 = vpop.f32.mrb[0].mxu0
  %2708 = vmatprep.mubr.bf16.mxu0 %v1878
  %2709 = vmatmul.mubr.bf16.gmra.mrb[0].mxu0 %v1877
  %v2710 = vpop.f32.mrb[0].mxu0
  %v2711 = vadd.f32 %v2422, %v2710
  %v2712 = vpop.f32.mrb[0].mxu0
  %v2713 = vpop.f32.mrb[0].mxu0
  %v2714 = vadd.f32 %v2425, %v2713
  %v2715 = vpop.f32.mrb[0].mxu0
  %2716 = vdwg.mxu0
  %2717 = vmatprep.subr.bf16.mxu0 0
  %2718 = vmatpush1.bf16.msra.mxu0 %v187
  %2719 = vmatprep.subr.bf16.mxu0 0
  %2720 = vmatpush1.bf16.msra.mxu0 %v188
  %2721 = vmatprep.subr.bf16.mxu0 0
  %2722 = vmatpush1.bf16.msra.mxu0 %v189
  %2723 = vmatprep.subr.bf16.mxu0 0
  %2724 = vmatpush1.bf16.msra.mxu0 %v190
  %2725 = vmatprep.subr.bf16.mxu0 0
  %2726 = vmatpush1.bf16.msra.mxu0 %v191
  %2727 = vmatprep.subr.bf16.mxu0 0
  %2728 = vmatpush1.bf16.msra.mxu0 %v192
  %2729 = vmatprep.subr.bf16.mxu0 0
  %2730 = vmatpush1.bf16.msra.mxu0 %v193
  %2731 = vmatprep.subr.bf16.mxu0 0
  %2732 = vmatpush1.bf16.msra.mxu0 %v194
  %2733 = vmatprep.subr.bf16.mxu0 0
  %2734 = vmatpush1.bf16.msra.mxu0 %v195
  %2735 = vmatprep.subr.bf16.mxu0 0
  %2736 = vmatpush1.bf16.msra.mxu0 %v196
  %2737 = vmatprep.subr.bf16.mxu0 0
  %2738 = vmatpush1.bf16.msra.mxu0 %v197
  %2739 = vmatprep.subr.bf16.mxu0 0
  %2740 = vmatpush1.bf16.msra.mxu0 %v198
  %2741 = vmatprep.subr.bf16.mxu0 0
  %2742 = vmatpush1.bf16.msra.mxu0 %v199
  %2743 = vmatprep.subr.bf16.mxu0 0
  %2744 = vmatpush1.bf16.msra.mxu0 %v200
  %2745 = vmatprep.subr.bf16.mxu0 0
  %2746 = vmatpush1.bf16.msra.mxu0 %v201
  %2747 = vmatprep.subr.bf16.mxu0 0
  %2748 = vmatpush1.bf16.msra.mxu0 %v202
  %2749 = vmatprep.mubr.bf16.mxu0 %v1632
  %2750 = vmatmul.mubr.bf16.gmra.mrb[0].mxu0 %v1631
  %v2751 = vpop.f32.mrb[0].mxu0
  %v2752 = vadd.f32 %v2463, %v2751
  %v2753 = vpop.f32.mrb[0].mxu0
  %v2754 = vpop.f32.mrb[0].mxu0
  %v2755 = vadd.f32 %v2466, %v2754
  %v2756 = vpop.f32.mrb[0].mxu0
  %2757 = vmatprep.mubr.bf16.mxu0 %v1640
  %2758 = vmatmul.mubr.bf16.gmra.mrb[0].mxu0 %v1639
  %v2759 = vpop.f32.mrb[0].mxu0
  %v2760 = vadd.f32 %v2471, %v2759
  %v2761 = vpop.f32.mrb[0].mxu0
  %v2762 = vpop.f32.mrb[0].mxu0
  %v2763 = vadd.f32 %v2474, %v2762
  %v2764 = vpop.f32.mrb[0].mxu0
  %2765 = vmatprep.mubr.bf16.mxu0 %v1648
  %2766 = vmatmul.mubr.bf16.gmra.mrb[0].mxu0 %v1647
  %v2767 = vpop.f32.mrb[0].mxu0
  %v2768 = vadd.f32 %v2479, %v2767
  %v2769 = vpop.f32.mrb[0].mxu0
  %v2770 = vpop.f32.mrb[0].mxu0
  %v2771 = vadd.f32 %v2482, %v2770
  %v2772 = vpop.f32.mrb[0].mxu0
  %2773 = vmatprep.mubr.bf16.mxu0 %v1656
  %2774 = vmatmul.mubr.bf16.gmra.mrb[0].mxu0 %v1655
  %v2775 = vpop.f32.mrb[0].mxu0
  %v2776 = vadd.f32 %v2487, %v2775
  %v2777 = vpop.f32.mrb[0].mxu0
  %v2778 = vpop.f32.mrb[0].mxu0
  %v2779 = vadd.f32 %v2490, %v2778
  %v2780 = vpop.f32.mrb[0].mxu0
  %2781 = vmatprep.mubr.bf16.mxu0 %v1664
  %2782 = vmatmul.mubr.bf16.gmra.mrb[0].mxu0 %v1663
  %v2783 = vpop.f32.mrb[0].mxu0
  %v2784 = vadd.f32 %v2495, %v2783
  %v2785 = vpop.f32.mrb[0].mxu0
  %v2786 = vpop.f32.mrb[0].mxu0
  %v2787 = vadd.f32 %v2498, %v2786
  %v2788 = vpop.f32.mrb[0].mxu0
  %2789 = vmatprep.mubr.bf16.mxu0 %v1672
  %2790 = vmatmul.mubr.bf16.gmra.mrb[0].mxu0 %v1671
  %v2791 = vpop.f32.mrb[0].mxu0
  %v2792 = vadd.f32 %v2503, %v2791
  %v2793 = vpop.f32.mrb[0].mxu0
  %v2794 = vpop.f32.mrb[0].mxu0
  %v2795 = vadd.f32 %v2506, %v2794
  %v2796 = vpop.f32.mrb[0].mxu0
  %2797 = vmatprep.mubr.bf16.mxu0 %v1680
  %2798 = vmatmul.mubr.bf16.gmra.mrb[0].mxu0 %v1679
  %v2799 = vpop.f32.mrb[0].mxu0
  %v2800 = vadd.f32 %v2511, %v2799
  %v2801 = vpop.f32.mrb[0].mxu0
  %v2802 = vpop.f32.mrb[0].mxu0
  %v2803 = vadd.f32 %v2514, %v2802
  %v2804 = vpop.f32.mrb[0].mxu0
  %2805 = vmatprep.mubr.bf16.mxu0 %v1688
  %2806 = vmatmul.mubr.bf16.gmra.mrb[0].mxu0 %v1687
  %v2807 = vpop.f32.mrb[0].mxu0
  %v2808 = vadd.f32 %v2519, %v2807
  %v2809 = vpop.f32.mrb[0].mxu0
  %v2810 = vpop.f32.mrb[0].mxu0
  %v2811 = vadd.f32 %v2522, %v2810
  %v2812 = vpop.f32.mrb[0].mxu0
  %2813 = vmatprep.mubr.bf16.mxu0 %v1696
  %2814 = vmatmul.mubr.bf16.gmra.mrb[0].mxu0 %v1695
  %v2815 = vpop.f32.mrb[0].mxu0
  %v2816 = vadd.f32 %v2527, %v2815
  %v2817 = vpop.f32.mrb[0].mxu0
  %v2818 = vpop.f32.mrb[0].mxu0
  %v2819 = vadd.f32 %v2530, %v2818
  %v2820 = vpop.f32.mrb[0].mxu0
  %2821 = vmatprep.mubr.bf16.mxu0 %v1704
  %2822 = vmatmul.mubr.bf16.gmra.mrb[0].mxu0 %v1703
  %v2823 = vpop.f32.mrb[0].mxu0
  %v2824 = vadd.f32 %v2535, %v2823
  %v2825 = vpop.f32.mrb[0].mxu0
  %v2826 = vpop.f32.mrb[0].mxu0
  %v2827 = vadd.f32 %v2538, %v2826
  %v2828 = vpop.f32.mrb[0].mxu0
  %2829 = vmatprep.mubr.bf16.mxu0 %v1712
  %2830 = vmatmul.mubr.bf16.gmra.mrb[0].mxu0 %v1711
  %v2831 = vpop.f32.mrb[0].mxu0
  %v2832 = vadd.f32 %v2543, %v2831
  %v2833 = vpop.f32.mrb[0].mxu0
  %v2834 = vpop.f32.mrb[0].mxu0
  %v2835 = vadd.f32 %v2546, %v2834
  %v2836 = vpop.f32.mrb[0].mxu0
  %2837 = vmatprep.mubr.bf16.mxu0 %v1720
  %2838 = vmatmul.mubr.bf16.gmra.mrb[0].mxu0 %v1719
  %v2839 = vpop.f32.mrb[0].mxu0
  %v2840 = vadd.f32 %v2551, %v2839
  %v2841 = vpop.f32.mrb[0].mxu0
  %v2842 = vpop.f32.mrb[0].mxu0
  %v2843 = vadd.f32 %v2554, %v2842
  %v2844 = vpop.f32.mrb[0].mxu0
  %2845 = vmatprep.mubr.bf16.mxu0 %v1728
  %2846 = vmatmul.mubr.bf16.gmra.mrb[0].mxu0 %v1727
  %v2847 = vpop.f32.mrb[0].mxu0
  %v2848 = vadd.f32 %v2559, %v2847
  %v2849 = vpop.f32.mrb[0].mxu0
  %v2850 = vpop.f32.mrb[0].mxu0
  %v2851 = vadd.f32 %v2562, %v2850
  %v2852 = vpop.f32.mrb[0].mxu0
  %2853 = vmatprep.mubr.bf16.mxu0 %v1736
  %2854 = vmatmul.mubr.bf16.gmra.mrb[0].mxu0 %v1735
  %v2855 = vpop.f32.mrb[0].mxu0
  %v2856 = vadd.f32 %v2567, %v2855
  %v2857 = vpop.f32.mrb[0].mxu0
  %v2858 = vpop.f32.mrb[0].mxu0
  %v2859 = vadd.f32 %v2570, %v2858
  %v2860 = vpop.f32.mrb[0].mxu0
  %2861 = vmatprep.mubr.bf16.mxu0 %v1744
  %2862 = vmatmul.mubr.bf16.gmra.mrb[0].mxu0 %v1743
  %v2863 = vpop.f32.mrb[0].mxu0
  %v2864 = vadd.f32 %v2575, %v2863
  %v2865 = vpop.f32.mrb[0].mxu0
  %v2866 = vpop.f32.mrb[0].mxu0
  %v2867 = vadd.f32 %v2578, %v2866
  %v2868 = vpop.f32.mrb[0].mxu0
  %2869 = vmatprep.mubr.bf16.mxu0 %v1752
  %2870 = vmatmul.mubr.bf16.gmra.mrb[0].mxu0 %v1751
  %v2871 = vpop.f32.mrb[0].mxu0
  %v2872 = vadd.f32 %v2583, %v2871
  %v2873 = vpop.f32.mrb[0].mxu0
  %v2874 = vpop.f32.mrb[0].mxu0
  %v2875 = vadd.f32 %v2586, %v2874
  %v2876 = vpop.f32.mrb[0].mxu0
  %2877 = vmatprep.mubr.bf16.mxu0 %v1760
  %2878 = vmatmul.mubr.bf16.gmra.mrb[0].mxu0 %v1759
  %v2879 = vpop.f32.mrb[0].mxu0
  %v2880 = vadd.f32 %v2591, %v2879
  %v2881 = vpop.f32.mrb[0].mxu0
  %v2882 = vpop.f32.mrb[0].mxu0
  %v2883 = vadd.f32 %v2594, %v2882
  %v2884 = vpop.f32.mrb[0].mxu0
  %2885 = vmatprep.mubr.bf16.mxu0 %v1768
  %2886 = vmatmul.mubr.bf16.gmra.mrb[0].mxu0 %v1767
  %v2887 = vpop.f32.mrb[0].mxu0
  %v2888 = vadd.f32 %v2599, %v2887
  %v2889 = vpop.f32.mrb[0].mxu0
  %v2890 = vpop.f32.mrb[0].mxu0
  %v2891 = vadd.f32 %v2602, %v2890
  %v2892 = vpop.f32.mrb[0].mxu0
  %2893 = vmatprep.mubr.bf16.mxu0 %v1776
  %2894 = vmatmul.mubr.bf16.gmra.mrb[0].mxu0 %v1775
  %v2895 = vpop.f32.mrb[0].mxu0
  %v2896 = vadd.f32 %v2607, %v2895
  %v2897 = vpop.f32.mrb[0].mxu0
  %v2898 = vpop.f32.mrb[0].mxu0
  %v2899 = vadd.f32 %v2610, %v2898
  %v2900 = vpop.f32.mrb[0].mxu0
  %2901 = vmatprep.mubr.bf16.mxu0 %v1784
  %2902 = vmatmul.mubr.bf16.gmra.mrb[0].mxu0 %v1783
  %v2903 = vpop.f32.mrb[0].mxu0
  %v2904 = vadd.f32 %v2615, %v2903
  %v2905 = vpop.f32.mrb[0].mxu0
  %v2906 = vpop.f32.mrb[0].mxu0
  %v2907 = vadd.f32 %v2618, %v2906
  %v2908 = vpop.f32.mrb[0].mxu0
  %2909 = vmatprep.mubr.bf16.mxu0 %v1792
  %2910 = vmatmul.mubr.bf16.gmra.mrb[0].mxu0 %v1791
  %v2911 = vpop.f32.mrb[0].mxu0
  %v2912 = vadd.f32 %v2623, %v2911
  %v2913 = vpop.f32.mrb[0].mxu0
  %v2914 = vpop.f32.mrb[0].mxu0
  %v2915 = vadd.f32 %v2626, %v2914
  %v2916 = vpop.f32.mrb[0].mxu0
  %2917 = vmatprep.mubr.bf16.mxu0 %v1800
  %2918 = vmatmul.mubr.bf16.gmra.mrb[0].mxu0 %v1799
  %v2919 = vpop.f32.mrb[0].mxu0
  %v2920 = vadd.f32 %v2631, %v2919
  %v2921 = vpop.f32.mrb[0].mxu0
  %v2922 = vpop.f32.mrb[0].mxu0
  %v2923 = vadd.f32 %v2634, %v2922
  %v2924 = vpop.f32.mrb[0].mxu0
  %2925 = vmatprep.mubr.bf16.mxu0 %v1808
  %2926 = vmatmul.mubr.bf16.gmra.mrb[0].mxu0 %v1807
  %v2927 = vpop.f32.mrb[0].mxu0
  %v2928 = vadd.f32 %v2639, %v2927
  %v2929 = vpop.f32.mrb[0].mxu0
  %v2930 = vpop.f32.mrb[0].mxu0
  %v2931 = vadd.f32 %v2642, %v2930
  %v2932 = vpop.f32.mrb[0].mxu0
  %2933 = vmatprep.mubr.bf16.mxu0 %v1816
  %2934 = vmatmul.mubr.bf16.gmra.mrb[0].mxu0 %v1815
  %v2935 = vpop.f32.mrb[0].mxu0
  %v2936 = vadd.f32 %v2647, %v2935
  %v2937 = vpop.f32.mrb[0].mxu0
  %v2938 = vpop.f32.mrb[0].mxu0
  %v2939 = vadd.f32 %v2650, %v2938
  %v2940 = vpop.f32.mrb[0].mxu0
  %2941 = vmatprep.mubr.bf16.mxu0 %v1824
  %2942 = vmatmul.mubr.bf16.gmra.mrb[0].mxu0 %v1823
  %v2943 = vpop.f32.mrb[0].mxu0
  %v2944 = vadd.f32 %v2655, %v2943
  %v2945 = vpop.f32.mrb[0].mxu0
  %v2946 = vpop.f32.mrb[0].mxu0
  %v2947 = vadd.f32 %v2658, %v2946
  %v2948 = vpop.f32.mrb[0].mxu0
  %2949 = vmatprep.mubr.bf16.mxu0 %v1832
  %2950 = vmatmul.mubr.bf16.gmra.mrb[0].mxu0 %v1831
  %v2951 = vpop.f32.mrb[0].mxu0
  %v2952 = vadd.f32 %v2663, %v2951
  %v2953 = vpop.f32.mrb[0].mxu0
  %v2954 = vpop.f32.mrb[0].mxu0
  %v2955 = vadd.f32 %v2666, %v2954
  %v2956 = vpop.f32.mrb[0].mxu0
  %2957 = vmatprep.mubr.bf16.mxu0 %v1840
  %2958 = vmatmul.mubr.bf16.gmra.mrb[0].mxu0 %v1839
  %v2959 = vpop.f32.mrb[0].mxu0
  %v2960 = vadd.f32 %v2671, %v2959
  %v2961 = vpop.f32.mrb[0].mxu0
  %v2962 = vpop.f32.mrb[0].mxu0
  %v2963 = vadd.f32 %v2674, %v2962
  %v2964 = vpop.f32.mrb[0].mxu0
  %2965 = vmatprep.mubr.bf16.mxu0 %v1848
  %2966 = vmatmul.mubr.bf16.gmra.mrb[0].mxu0 %v1847
  %v2967 = vpop.f32.mrb[0].mxu0
  %v2968 = vadd.f32 %v2679, %v2967
  %v2969 = vpop.f32.mrb[0].mxu0
  %v2970 = vpop.f32.mrb[0].mxu0
  %v2971 = vadd.f32 %v2682, %v2970
  %v2972 = vpop.f32.mrb[0].mxu0
  %2973 = vmatprep.mubr.bf16.mxu0 %v1856
  %2974 = vmatmul.mubr.bf16.gmra.mrb[0].mxu0 %v1855
  %v2975 = vpop.f32.mrb[0].mxu0
  %v2976 = vadd.f32 %v2687, %v2975
  %v2977 = vpop.f32.mrb[0].mxu0
  %v2978 = vpop.f32.mrb[0].mxu0
  %v2979 = vadd.f32 %v2690, %v2978
  %v2980 = vpop.f32.mrb[0].mxu0
  %2981 = vmatprep.mubr.bf16.mxu0 %v1864
  %2982 = vmatmul.mubr.bf16.gmra.mrb[0].mxu0 %v1863
  %v2983 = vpop.f32.mrb[0].mxu0
  %v2984 = vadd.f32 %v2695, %v2983
  %v2985 = vpop.f32.mrb[0].mxu0
  %v2986 = vpop.f32.mrb[0].mxu0
  %v2987 = vadd.f32 %v2698, %v2986
  %v2988 = vpop.f32.mrb[0].mxu0
  %2989 = vmatprep.mubr.bf16.mxu0 %v1872
  %2990 = vmatmul.mubr.bf16.gmra.mrb[0].mxu0 %v1871
  %v2991 = vpop.f32.mrb[0].mxu0
  %v2992 = vadd.f32 %v2703, %v2991
  %v2993 = vpop.f32.mrb[0].mxu0
  %v2994 = vpop.f32.mrb[0].mxu0
  %v2995 = vadd.f32 %v2706, %v2994
  %v2996 = vpop.f32.mrb[0].mxu0
  %2997 = vmatprep.mubr.bf16.mxu0 %v1880
  %2998 = vmatmul.mubr.bf16.gmra.mrb[0].mxu0 %v1879
  %v2999 = vpop.f32.mrb[0].mxu0
  %v3000 = vadd.f32 %v2711, %v2999
  %v3001 = vpop.f32.mrb[0].mxu0
  %v3002 = vpop.f32.mrb[0].mxu0
  %v3003 = vadd.f32 %v2714, %v3002
  %v3004 = vpop.f32.mrb[0].mxu0
  %3005 = vdwg.mxu0
  %3006 = vmatprep.subr.bf16.mxu0 0
  %3007 = vmatpush1.bf16.msra.mxu0 %v203
  %3008 = vmatprep.subr.bf16.mxu0 0
  %3009 = vmatpush1.bf16.msra.mxu0 %v204
  %3010 = vmatprep.subr.bf16.mxu0 0
  %3011 = vmatpush1.bf16.msra.mxu0 %v205
  %3012 = vmatprep.subr.bf16.mxu0 0
  %3013 = vmatpush1.bf16.msra.mxu0 %v206
  %3014 = vmatprep.subr.bf16.mxu0 0
  %3015 = vmatpush1.bf16.msra.mxu0 %v207
  %3016 = vmatprep.subr.bf16.mxu0 0
  %3017 = vmatpush1.bf16.msra.mxu0 %v208
  %3018 = vmatprep.subr.bf16.mxu0 0
  %3019 = vmatpush1.bf16.msra.mxu0 %v209
  %3020 = vmatprep.subr.bf16.mxu0 0
  %3021 = vmatpush1.bf16.msra.mxu0 %v210
  %3022 = vmatprep.subr.bf16.mxu0 0
  %3023 = vmatpush1.bf16.msra.mxu0 %v211
  %3024 = vmatprep.subr.bf16.mxu0 0
  %3025 = vmatpush1.bf16.msra.mxu0 %v212
  %3026 = vmatprep.subr.bf16.mxu0 0
  %3027 = vmatpush1.bf16.msra.mxu0 %v213
  %3028 = vmatprep.subr.bf16.mxu0 0
  %3029 = vmatpush1.bf16.msra.mxu0 %v214
  %3030 = vmatprep.subr.bf16.mxu0 0
  %3031 = vmatpush1.bf16.msra.mxu0 %v215
  %3032 = vmatprep.subr.bf16.mxu0 0
  %3033 = vmatpush1.bf16.msra.mxu0 %v216
  %3034 = vmatprep.subr.bf16.mxu0 0
  %3035 = vmatpush1.bf16.msra.mxu0 %v217
  %3036 = vmatprep.subr.bf16.mxu0 0
  %3037 = vmatpush1.bf16.msra.mxu0 %v218
  %3038 = vmatprep.mubr.bf16.mxu0 %v1634
  %3039 = vmatmul.mubr.bf16.gmra.mrb[0].mxu0 %v1633
  %v3040 = vpop.f32.mrb[0].mxu0
  %v3041 = vadd.f32 %v2752, %v3040
  %v3042 = vpop.f32.mrb[0].mxu0
  %v3043 = vpop.f32.mrb[0].mxu0
  %v3044 = vadd.f32 %v2755, %v3043
  %v3045 = vpop.f32.mrb[0].mxu0
  %3046 = vmatprep.mubr.bf16.mxu0 %v1642
  %3047 = vmatmul.mubr.bf16.gmra.mrb[0].mxu0 %v1641
  %v3048 = vpop.f32.mrb[0].mxu0
  %v3049 = vadd.f32 %v2760, %v3048
  %v3050 = vpop.f32.mrb[0].mxu0
  %v3051 = vpop.f32.mrb[0].mxu0
  %v3052 = vadd.f32 %v2763, %v3051
  %v3053 = vpop.f32.mrb[0].mxu0
  %3054 = vmatprep.mubr.bf16.mxu0 %v1650
  %3055 = vmatmul.mubr.bf16.gmra.mrb[0].mxu0 %v1649
  %v3056 = vpop.f32.mrb[0].mxu0
  %v3057 = vadd.f32 %v2768, %v3056
  %v3058 = vpop.f32.mrb[0].mxu0
  %v3059 = vpop.f32.mrb[0].mxu0
  %v3060 = vadd.f32 %v2771, %v3059
  %v3061 = vpop.f32.mrb[0].mxu0
  %3062 = vmatprep.mubr.bf16.mxu0 %v1658
  %3063 = vmatmul.mubr.bf16.gmra.mrb[0].mxu0 %v1657
  %v3064 = vpop.f32.mrb[0].mxu0
  %v3065 = vadd.f32 %v2776, %v3064
  %v3066 = vpop.f32.mrb[0].mxu0
  %v3067 = vpop.f32.mrb[0].mxu0
  %v3068 = vadd.f32 %v2779, %v3067
  %v3069 = vpop.f32.mrb[0].mxu0
  %3070 = vmatprep.mubr.bf16.mxu0 %v1666
  %3071 = vmatmul.mubr.bf16.gmra.mrb[0].mxu0 %v1665
  %v3072 = vpop.f32.mrb[0].mxu0
  %v3073 = vadd.f32 %v2784, %v3072
  %v3074 = vpop.f32.mrb[0].mxu0
  %v3075 = vpop.f32.mrb[0].mxu0
  %v3076 = vadd.f32 %v2787, %v3075
  %v3077 = vpop.f32.mrb[0].mxu0
  %3078 = vmatprep.mubr.bf16.mxu0 %v1674
  %3079 = vmatmul.mubr.bf16.gmra.mrb[0].mxu0 %v1673
  %v3080 = vpop.f32.mrb[0].mxu0
  %v3081 = vadd.f32 %v2792, %v3080
  %v3082 = vpop.f32.mrb[0].mxu0
  %v3083 = vpop.f32.mrb[0].mxu0
  %v3084 = vadd.f32 %v2795, %v3083
  %v3085 = vpop.f32.mrb[0].mxu0
  %3086 = vmatprep.mubr.bf16.mxu0 %v1682
  %3087 = vmatmul.mubr.bf16.gmra.mrb[0].mxu0 %v1681
  %v3088 = vpop.f32.mrb[0].mxu0
  %v3089 = vadd.f32 %v2800, %v3088
  %v3090 = vpop.f32.mrb[0].mxu0
  %v3091 = vpop.f32.mrb[0].mxu0
  %v3092 = vadd.f32 %v2803, %v3091
  %v3093 = vpop.f32.mrb[0].mxu0
  %3094 = vmatprep.mubr.bf16.mxu0 %v1690
  %3095 = vmatmul.mubr.bf16.gmra.mrb[0].mxu0 %v1689
  %v3096 = vpop.f32.mrb[0].mxu0
  %v3097 = vadd.f32 %v2808, %v3096
  %v3098 = vpop.f32.mrb[0].mxu0
  %v3099 = vpop.f32.mrb[0].mxu0
  %v3100 = vadd.f32 %v2811, %v3099
  %v3101 = vpop.f32.mrb[0].mxu0
  %3102 = vmatprep.mubr.bf16.mxu0 %v1698
  %3103 = vmatmul.mubr.bf16.gmra.mrb[0].mxu0 %v1697
  %v3104 = vpop.f32.mrb[0].mxu0
  %v3105 = vadd.f32 %v2816, %v3104
  %v3106 = vpop.f32.mrb[0].mxu0
  %v3107 = vpop.f32.mrb[0].mxu0
  %v3108 = vadd.f32 %v2819, %v3107
  %v3109 = vpop.f32.mrb[0].mxu0
  %3110 = vmatprep.mubr.bf16.mxu0 %v1706
  %3111 = vmatmul.mubr.bf16.gmra.mrb[0].mxu0 %v1705
  %v3112 = vpop.f32.mrb[0].mxu0
  %v3113 = vadd.f32 %v2824, %v3112
  %v3114 = vpop.f32.mrb[0].mxu0
  %v3115 = vpop.f32.mrb[0].mxu0
  %v3116 = vadd.f32 %v2827, %v3115
  %v3117 = vpop.f32.mrb[0].mxu0
  %3118 = vmatprep.mubr.bf16.mxu0 %v1714
  %3119 = vmatmul.mubr.bf16.gmra.mrb[0].mxu0 %v1713
  %v3120 = vpop.f32.mrb[0].mxu0
  %v3121 = vadd.f32 %v2832, %v3120
  %v3122 = vpop.f32.mrb[0].mxu0
  %v3123 = vpop.f32.mrb[0].mxu0
  %v3124 = vadd.f32 %v2835, %v3123
  %v3125 = vpop.f32.mrb[0].mxu0
  %3126 = vmatprep.mubr.bf16.mxu0 %v1722
  %3127 = vmatmul.mubr.bf16.gmra.mrb[0].mxu0 %v1721
  %v3128 = vpop.f32.mrb[0].mxu0
  %v3129 = vadd.f32 %v2840, %v3128
  %v3130 = vpop.f32.mrb[0].mxu0
  %v3131 = vpop.f32.mrb[0].mxu0
  %v3132 = vadd.f32 %v2843, %v3131
  %v3133 = vpop.f32.mrb[0].mxu0
  %3134 = vmatprep.mubr.bf16.mxu0 %v1730
  %3135 = vmatmul.mubr.bf16.gmra.mrb[0].mxu0 %v1729
  %v3136 = vpop.f32.mrb[0].mxu0
  %v3137 = vadd.f32 %v2848, %v3136
  %v3138 = vpop.f32.mrb[0].mxu0
  %v3139 = vpop.f32.mrb[0].mxu0
  %v3140 = vadd.f32 %v2851, %v3139
  %v3141 = vpop.f32.mrb[0].mxu0
  %3142 = vmatprep.mubr.bf16.mxu0 %v1738
  %3143 = vmatmul.mubr.bf16.gmra.mrb[0].mxu0 %v1737
  %v3144 = vpop.f32.mrb[0].mxu0
  %v3145 = vadd.f32 %v2856, %v3144
  %v3146 = vpop.f32.mrb[0].mxu0
  %v3147 = vpop.f32.mrb[0].mxu0
  %v3148 = vadd.f32 %v2859, %v3147
  %v3149 = vpop.f32.mrb[0].mxu0
  %3150 = vmatprep.mubr.bf16.mxu0 %v1746
  %3151 = vmatmul.mubr.bf16.gmra.mrb[0].mxu0 %v1745
  %v3152 = vpop.f32.mrb[0].mxu0
  %v3153 = vadd.f32 %v2864, %v3152
  %v3154 = vpop.f32.mrb[0].mxu0
  %v3155 = vpop.f32.mrb[0].mxu0
  %v3156 = vadd.f32 %v2867, %v3155
  %v3157 = vpop.f32.mrb[0].mxu0
  %3158 = vmatprep.mubr.bf16.mxu0 %v1754
  %3159 = vmatmul.mubr.bf16.gmra.mrb[0].mxu0 %v1753
  %v3160 = vpop.f32.mrb[0].mxu0
  %v3161 = vadd.f32 %v2872, %v3160
  %v3162 = vpop.f32.mrb[0].mxu0
  %v3163 = vpop.f32.mrb[0].mxu0
  %v3164 = vadd.f32 %v2875, %v3163
  %v3165 = vpop.f32.mrb[0].mxu0
  %3166 = vmatprep.mubr.bf16.mxu0 %v1762
  %3167 = vmatmul.mubr.bf16.gmra.mrb[0].mxu0 %v1761
  %v3168 = vpop.f32.mrb[0].mxu0
  %v3169 = vadd.f32 %v2880, %v3168
  %v3170 = vpop.f32.mrb[0].mxu0
  %v3171 = vpop.f32.mrb[0].mxu0
  %v3172 = vadd.f32 %v2883, %v3171
  %v3173 = vpop.f32.mrb[0].mxu0
  %3174 = vmatprep.mubr.bf16.mxu0 %v1770
  %3175 = vmatmul.mubr.bf16.gmra.mrb[0].mxu0 %v1769
  %v3176 = vpop.f32.mrb[0].mxu0
  %v3177 = vadd.f32 %v2888, %v3176
  %v3178 = vpop.f32.mrb[0].mxu0
  %v3179 = vpop.f32.mrb[0].mxu0
  %v3180 = vadd.f32 %v2891, %v3179
  %v3181 = vpop.f32.mrb[0].mxu0
  %3182 = vmatprep.mubr.bf16.mxu0 %v1778
  %3183 = vmatmul.mubr.bf16.gmra.mrb[0].mxu0 %v1777
  %v3184 = vpop.f32.mrb[0].mxu0
  %v3185 = vadd.f32 %v2896, %v3184
  %v3186 = vpop.f32.mrb[0].mxu0
  %v3187 = vpop.f32.mrb[0].mxu0
  %v3188 = vadd.f32 %v2899, %v3187
  %v3189 = vpop.f32.mrb[0].mxu0
  %3190 = vmatprep.mubr.bf16.mxu0 %v1786
  %3191 = vmatmul.mubr.bf16.gmra.mrb[0].mxu0 %v1785
  %v3192 = vpop.f32.mrb[0].mxu0
  %v3193 = vadd.f32 %v2904, %v3192
  %v3194 = vpop.f32.mrb[0].mxu0
  %v3195 = vpop.f32.mrb[0].mxu0
  %v3196 = vadd.f32 %v2907, %v3195
  %v3197 = vpop.f32.mrb[0].mxu0
  %3198 = vmatprep.mubr.bf16.mxu0 %v1794
  %3199 = vmatmul.mubr.bf16.gmra.mrb[0].mxu0 %v1793
  %v3200 = vpop.f32.mrb[0].mxu0
  %v3201 = vadd.f32 %v2912, %v3200
  %v3202 = vpop.f32.mrb[0].mxu0
  %v3203 = vpop.f32.mrb[0].mxu0
  %v3204 = vadd.f32 %v2915, %v3203
  %v3205 = vpop.f32.mrb[0].mxu0
  %3206 = vmatprep.mubr.bf16.mxu0 %v1802
  %3207 = vmatmul.mubr.bf16.gmra.mrb[0].mxu0 %v1801
  %v3208 = vpop.f32.mrb[0].mxu0
  %v3209 = vadd.f32 %v2920, %v3208
  %v3210 = vpop.f32.mrb[0].mxu0
  %v3211 = vpop.f32.mrb[0].mxu0
  %v3212 = vadd.f32 %v2923, %v3211
  %v3213 = vpop.f32.mrb[0].mxu0
  %3214 = vmatprep.mubr.bf16.mxu0 %v1810
  %3215 = vmatmul.mubr.bf16.gmra.mrb[0].mxu0 %v1809
  %v3216 = vpop.f32.mrb[0].mxu0
  %v3217 = vadd.f32 %v2928, %v3216
  %v3218 = vpop.f32.mrb[0].mxu0
  %v3219 = vpop.f32.mrb[0].mxu0
  %v3220 = vadd.f32 %v2931, %v3219
  %v3221 = vpop.f32.mrb[0].mxu0
  %3222 = vmatprep.mubr.bf16.mxu0 %v1818
  %3223 = vmatmul.mubr.bf16.gmra.mrb[0].mxu0 %v1817
  %v3224 = vpop.f32.mrb[0].mxu0
  %v3225 = vadd.f32 %v2936, %v3224
  %v3226 = vpop.f32.mrb[0].mxu0
  %v3227 = vpop.f32.mrb[0].mxu0
  %v3228 = vadd.f32 %v2939, %v3227
  %v3229 = vpop.f32.mrb[0].mxu0
  %3230 = vmatprep.mubr.bf16.mxu0 %v1826
  %3231 = vmatmul.mubr.bf16.gmra.mrb[0].mxu0 %v1825
  %v3232 = vpop.f32.mrb[0].mxu0
  %v3233 = vadd.f32 %v2944, %v3232
  %v3234 = vpop.f32.mrb[0].mxu0
  %v3235 = vpop.f32.mrb[0].mxu0
  %v3236 = vadd.f32 %v2947, %v3235
  %v3237 = vpop.f32.mrb[0].mxu0
  %3238 = vmatprep.mubr.bf16.mxu0 %v1834
  %3239 = vmatmul.mubr.bf16.gmra.mrb[0].mxu0 %v1833
  %v3240 = vpop.f32.mrb[0].mxu0
  %v3241 = vadd.f32 %v2952, %v3240
  %v3242 = vpop.f32.mrb[0].mxu0
  %v3243 = vpop.f32.mrb[0].mxu0
  %v3244 = vadd.f32 %v2955, %v3243
  %v3245 = vpop.f32.mrb[0].mxu0
  %3246 = vmatprep.mubr.bf16.mxu0 %v1842
  %3247 = vmatmul.mubr.bf16.gmra.mrb[0].mxu0 %v1841
  %v3248 = vpop.f32.mrb[0].mxu0
  %v3249 = vadd.f32 %v2960, %v3248
  %v3250 = vpop.f32.mrb[0].mxu0
  %v3251 = vpop.f32.mrb[0].mxu0
  %v3252 = vadd.f32 %v2963, %v3251
  %v3253 = vpop.f32.mrb[0].mxu0
  %3254 = vmatprep.mubr.bf16.mxu0 %v1850
  %3255 = vmatmul.mubr.bf16.gmra.mrb[0].mxu0 %v1849
  %v3256 = vpop.f32.mrb[0].mxu0
  %v3257 = vadd.f32 %v2968, %v3256
  %v3258 = vpop.f32.mrb[0].mxu0
  %v3259 = vpop.f32.mrb[0].mxu0
  %v3260 = vadd.f32 %v2971, %v3259
  %v3261 = vpop.f32.mrb[0].mxu0
  %3262 = vmatprep.mubr.bf16.mxu0 %v1858
  %3263 = vmatmul.mubr.bf16.gmra.mrb[0].mxu0 %v1857
  %v3264 = vpop.f32.mrb[0].mxu0
  %v3265 = vadd.f32 %v2976, %v3264
  %v3266 = vpop.f32.mrb[0].mxu0
  %v3267 = vpop.f32.mrb[0].mxu0
  %v3268 = vadd.f32 %v2979, %v3267
  %v3269 = vpop.f32.mrb[0].mxu0
  %3270 = vmatprep.mubr.bf16.mxu0 %v1866
  %3271 = vmatmul.mubr.bf16.gmra.mrb[0].mxu0 %v1865
  %v3272 = vpop.f32.mrb[0].mxu0
  %v3273 = vadd.f32 %v2984, %v3272
  %v3274 = vpop.f32.mrb[0].mxu0
  %v3275 = vpop.f32.mrb[0].mxu0
  %v3276 = vadd.f32 %v2987, %v3275
  %v3277 = vpop.f32.mrb[0].mxu0
  %3278 = vmatprep.mubr.bf16.mxu0 %v1874
  %3279 = vmatmul.mubr.bf16.gmra.mrb[0].mxu0 %v1873
  %v3280 = vpop.f32.mrb[0].mxu0
  %v3281 = vadd.f32 %v2992, %v3280
  %v3282 = vpop.f32.mrb[0].mxu0
  %v3283 = vpop.f32.mrb[0].mxu0
  %v3284 = vadd.f32 %v2995, %v3283
  %v3285 = vpop.f32.mrb[0].mxu0
  %3286 = vmatprep.mubr.bf16.mxu0 %v1882
  %3287 = vmatmul.mubr.bf16.gmra.mrb[0].mxu0 %v1881
  %v3288 = vpop.f32.mrb[0].mxu0
  %v3289 = vadd.f32 %v3000, %v3288
  %v3290 = vpop.f32.mrb[0].mxu0
  %v3291 = vpop.f32.mrb[0].mxu0
  %v3292 = vadd.f32 %v3003, %v3291
  %v3293 = vpop.f32.mrb[0].mxu0
  %3294 = vdwg.mxu0
  %v3295 = vmax.f32 %v3041, 0.0
  %v3296 = vmax.f32 %v3044, 0.0
  %v3297 = vmax.f32 %v3049, 0.0
  %v3298 = vmax.f32 %v3052, 0.0
  %v3299 = vmax.f32 %v3057, 0.0
  %v3300 = vmax.f32 %v3060, 0.0
  %v3301 = vmax.f32 %v3065, 0.0
  %v3302 = vmax.f32 %v3068, 0.0
  %v3303 = vmax.f32 %v3073, 0.0
  %v3304 = vmax.f32 %v3076, 0.0
  %v3305 = vmax.f32 %v3081, 0.0
  %v3306 = vmax.f32 %v3084, 0.0
  %v3307 = vmax.f32 %v3089, 0.0
  %v3308 = vmax.f32 %v3092, 0.0
  %v3309 = vmax.f32 %v3097, 0.0
  %v3310 = vmax.f32 %v3100, 0.0
  %v3311 = vmax.f32 %v3105, 0.0
  %v3312 = vmax.f32 %v3108, 0.0
  %v3313 = vmax.f32 %v3113, 0.0
  %v3314 = vmax.f32 %v3116, 0.0
  %v3315 = vmax.f32 %v3121, 0.0
  %v3316 = vmax.f32 %v3124, 0.0
  %v3317 = vmax.f32 %v3129, 0.0
  %v3318 = vmax.f32 %v3132, 0.0
  %v3319 = vmax.f32 %v3137, 0.0
  %v3320 = vmax.f32 %v3140, 0.0
  %v3321 = vmax.f32 %v3145, 0.0
  %v3322 = vmax.f32 %v3148, 0.0
  %v3323 = vmax.f32 %v3153, 0.0
  %v3324 = vmax.f32 %v3156, 0.0
  %v3325 = vmax.f32 %v3161, 0.0
  %v3326 = vmax.f32 %v3164, 0.0
  %v3327 = vmax.f32 %v3169, 0.0
  %v3328 = vmax.f32 %v3172, 0.0
  %v3329 = vmax.f32 %v3177, 0.0
  %v3330 = vmax.f32 %v3180, 0.0
  %v3331 = vmax.f32 %v3185, 0.0
  %v3332 = vmax.f32 %v3188, 0.0
  %v3333 = vmax.f32 %v3193, 0.0
  %v3334 = vmax.f32 %v3196, 0.0
  %v3335 = vmax.f32 %v3201, 0.0
  %v3336 = vmax.f32 %v3204, 0.0
  %v3337 = vmax.f32 %v3209, 0.0
  %v3338 = vmax.f32 %v3212, 0.0
  %v3339 = vmax.f32 %v3217, 0.0
  %v3340 = vmax.f32 %v3220, 0.0
  %v3341 = vmax.f32 %v3225, 0.0
  %v3342 = vmax.f32 %v3228, 0.0
  %v3343 = vmax.f32 %v3233, 0.0
  %v3344 = vmax.f32 %v3236, 0.0
  %v3345 = vmax.f32 %v3241, 0.0
  %v3346 = vmax.f32 %v3244, 0.0
  %v3347 = vmax.f32 %v3249, 0.0
  %v3348 = vmax.f32 %v3252, 0.0
  %v3349 = vmax.f32 %v3257, 0.0
  %v3350 = vmax.f32 %v3260, 0.0
  %v3351 = vmax.f32 %v3265, 0.0
  %v3352 = vmax.f32 %v3268, 0.0
  %v3353 = vmax.f32 %v3273, 0.0
  %v3354 = vmax.f32 %v3276, 0.0
  %v3355 = vmax.f32 %v3281, 0.0
  %v3356 = vmax.f32 %v3284, 0.0
  %v3357 = vmax.f32 %v3289, 0.0
  %v3358 = vmax.f32 %v3292, 0.0
  %v3359 = vld [vmem:[%s3] sm:$0xff]
  %v3360 = vld [vmem:[%s3 + $0x8] sm:$0xff]
  %v3361 = vld [vmem:[%s3 + $0x10] sm:$0xff]
  %v3362 = vld [vmem:[%s3 + $0x18] sm:$0xff]
  %v3363 = vld [vmem:[%s3 + $0x20] sm:$0xff]
  %v3364 = vld [vmem:[%s3 + $0x28] sm:$0xff]
  %v3365 = vld [vmem:[%s3 + $0x30] sm:$0xff]
  %v3366 = vld [vmem:[%s3 + $0x38] sm:$0xff]
  %v3367 = vld [vmem:[%s3 + $0x40] sm:$0xff]
  %v3368 = vld [vmem:[%s3 + $0x48] sm:$0xff]
  %v3369 = vld [vmem:[%s3 + $0x50] sm:$0xff]
  %v3370 = vld [vmem:[%s3 + $0x58] sm:$0xff]
  %v3371 = vld [vmem:[%s3 + $0x60] sm:$0xff]
  %v3372 = vld [vmem:[%s3 + $0x68] sm:$0xff]
  %v3373 = vld [vmem:[%s3 + $0x70] sm:$0xff]
  %v3374 = vld [vmem:[%s3 + $0x78] sm:$0xff]
  %v3375 = vld [vmem:[%s3 + $0x80] sm:$0xff]
  %v3376 = vld [vmem:[%s3 + $0x88] sm:$0xff]
  %v3377 = vld [vmem:[%s3 + $0x90] sm:$0xff]
  %v3378 = vld [vmem:[%s3 + $0x98] sm:$0xff]
  %v3379 = vld [vmem:[%s3 + $0xa0] sm:$0xff]
  %v3380 = vld [vmem:[%s3 + $0xa8] sm:$0xff]
  %v3381 = vld [vmem:[%s3 + $0xb0] sm:$0xff]
  %v3382 = vld [vmem:[%s3 + $0xb8] sm:$0xff]
  %v3383 = vld [vmem:[%s3 + $0xc0] sm:$0xff]
  %v3384 = vld [vmem:[%s3 + $0xc8] sm:$0xff]
  %v3385 = vld [vmem:[%s3 + $0xd0] sm:$0xff]
  %v3386 = vld [vmem:[%s3 + $0xd8] sm:$0xff]
  %v3387 = vld [vmem:[%s3 + $0xe0] sm:$0xff]
  %v3388 = vld [vmem:[%s3 + $0xe8] sm:$0xff]
  %v3389 = vld [vmem:[%s3 + $0xf0] sm:$0xff]
  %v3390 = vld [vmem:[%s3 + $0xf8] sm:$0xff]
  %v3391 = vld [vmem:[%s3 + $0x100] sm:$0xff]
  %v3392 = vld [vmem:[%s3 + $0x108] sm:$0xff]
  %v3393 = vld [vmem:[%s3 + $0x110] sm:$0xff]
  %v3394 = vld [vmem:[%s3 + $0x118] sm:$0xff]
  %v3395 = vld [vmem:[%s3 + $0x120] sm:$0xff]
  %v3396 = vld [vmem:[%s3 + $0x128] sm:$0xff]
  %v3397 = vld [vmem:[%s3 + $0x130] sm:$0xff]
  %v3398 = vld [vmem:[%s3 + $0x138] sm:$0xff]
  %v3399 = vld [vmem:[%s3 + $0x140] sm:$0xff]
  %v3400 = vld [vmem:[%s3 + $0x148] sm:$0xff]
  %v3401 = vld [vmem:[%s3 + $0x150] sm:$0xff]
  %v3402 = vld [vmem:[%s3 + $0x158] sm:$0xff]
  %v3403 = vld [vmem:[%s3 + $0x160] sm:$0xff]
  %v3404 = vld [vmem:[%s3 + $0x168] sm:$0xff]
  %v3405 = vld [vmem:[%s3 + $0x170] sm:$0xff]
  %v3406 = vld [vmem:[%s3 + $0x178] sm:$0xff]
  %v3407 = vld [vmem:[%s3 + $0x180] sm:$0xff]
  %v3408 = vld [vmem:[%s3 + $0x188] sm:$0xff]
  %v3409 = vld [vmem:[%s3 + $0x190] sm:$0xff]
  %v3410 = vld [vmem:[%s3 + $0x198] sm:$0xff]
  %v3411 = vld [vmem:[%s3 + $0x1a0] sm:$0xff]
  %v3412 = vld [vmem:[%s3 + $0x1a8] sm:$0xff]
  %v3413 = vld [vmem:[%s3 + $0x1b0] sm:$0xff]
  %v3414 = vld [vmem:[%s3 + $0x1b8] sm:$0xff]
  %v3415 = vld [vmem:[%s3 + $0x1c0] sm:$0xff]
  %v3416 = vld [vmem:[%s3 + $0x1c8] sm:$0xff]
  %v3417 = vld [vmem:[%s3 + $0x1d0] sm:$0xff]
  %v3418 = vld [vmem:[%s3 + $0x1d8] sm:$0xff]
  %v3419 = vld [vmem:[%s3 + $0x1e0] sm:$0xff]
  %v3420 = vld [vmem:[%s3 + $0x1e8] sm:$0xff]
  %v3421 = vld [vmem:[%s3 + $0x1f0] sm:$0xff]
  %v3422 = vld [vmem:[%s3 + $0x1f8] sm:$0xff]
  %v3423 = vpack.c.bf16 %v3296, %v3295
  %v3424 = vpack.c.bf16 %v3298, %v3297
  %v3425 = vpack.c.bf16 %v3300, %v3299
  %v3426 = vpack.c.bf16 %v3302, %v3301
  %v3427 = vpack.c.bf16 %v3304, %v3303
  %v3428 = vpack.c.bf16 %v3306, %v3305
  %v3429 = vpack.c.bf16 %v3308, %v3307
  %v3430 = vpack.c.bf16 %v3310, %v3309
  %v3431 = vpack.c.bf16 %v3312, %v3311
  %v3432 = vpack.c.bf16 %v3314, %v3313
  %v3433 = vpack.c.bf16 %v3316, %v3315
  %v3434 = vpack.c.bf16 %v3318, %v3317
  %v3435 = vpack.c.bf16 %v3320, %v3319
  %v3436 = vpack.c.bf16 %v3322, %v3321
  %v3437 = vpack.c.bf16 %v3324, %v3323
  %v3438 = vpack.c.bf16 %v3326, %v3325
  %v3439 = vpack.c.bf16 %v3328, %v3327
  %v3440 = vpack.c.bf16 %v3330, %v3329
  %v3441 = vpack.c.bf16 %v3332, %v3331
  %v3442 = vpack.c.bf16 %v3334, %v3333
  %v3443 = vpack.c.bf16 %v3336, %v3335
  %v3444 = vpack.c.bf16 %v3338, %v3337
  %v3445 = vpack.c.bf16 %v3340, %v3339
  %v3446 = vpack.c.bf16 %v3342, %v3341
  %v3447 = vpack.c.bf16 %v3344, %v3343
  %v3448 = vpack.c.bf16 %v3346, %v3345
  %v3449 = vpack.c.bf16 %v3348, %v3347
  %v3450 = vpack.c.bf16 %v3350, %v3349
  %v3451 = vpack.c.bf16 %v3352, %v3351
  %v3452 = vpack.c.bf16 %v3354, %v3353
  %v3453 = vpack.c.bf16 %v3356, %v3355
  %v3454 = vpack.c.bf16 %v3358, %v3357
  %v3455 = vld [vmem:[%s4] sm:$0xff]
  %v3456 = vld [vmem:[%s4 + $0x8] sm:$0xff]
  %v3457 = vld [vmem:[%s4 + $0x10] sm:$0xff]
  %v3458 = vld [vmem:[%s4 + $0x18] sm:$0xff]
  %v3459 = vld [vmem:[%s4 + $0x20] sm:$0xff]
  %v3460 = vld [vmem:[%s4 + $0x28] sm:$0xff]
  %v3461 = vld [vmem:[%s4 + $0x30] sm:$0xff]
  %v3462 = vld [vmem:[%s4 + $0x38] sm:$0xff]
  %v3463 = vld [vmem:[%s4 + $0x40] sm:$0xff]
  %v3464 = vld [vmem:[%s4 + $0x48] sm:$0xff]
  %v3465 = vld [vmem:[%s4 + $0x50] sm:$0xff]
  %v3466 = vld [vmem:[%s4 + $0x58] sm:$0xff]
  %v3467 = vld [vmem:[%s4 + $0x60] sm:$0xff]
  %v3468 = vld [vmem:[%s4 + $0x68] sm:$0xff]
  %v3469 = vld [vmem:[%s4 + $0x70] sm:$0xff]
  %v3470 = vld [vmem:[%s4 + $0x78] sm:$0xff]
  %v3471 = vld [vmem:[%s4 + $0x80] sm:$0xff]
  %v3472 = vld [vmem:[%s4 + $0x88] sm:$0xff]
  %v3473 = vld [vmem:[%s4 + $0x90] sm:$0xff]
  %v3474 = vld [vmem:[%s4 + $0x98] sm:$0xff]
  %v3475 = vld [vmem:[%s4 + $0xa0] sm:$0xff]
  %v3476 = vld [vmem:[%s4 + $0xa8] sm:$0xff]
  %v3477 = vld [vmem:[%s4 + $0xb0] sm:$0xff]
  %v3478 = vld [vmem:[%s4 + $0xb8] sm:$0xff]
  %v3479 = vld [vmem:[%s4 + $0xc0] sm:$0xff]
  %v3480 = vld [vmem:[%s4 + $0xc8] sm:$0xff]
  %v3481 = vld [vmem:[%s4 + $0xd0] sm:$0xff]
  %v3482 = vld [vmem:[%s4 + $0xd8] sm:$0xff]
  %v3483 = vld [vmem:[%s4 + $0xe0] sm:$0xff]
  %v3484 = vld [vmem:[%s4 + $0xe8] sm:$0xff]
  %v3485 = vld [vmem:[%s4 + $0xf0] sm:$0xff]
  %v3486 = vld [vmem:[%s4 + $0xf8] sm:$0xff]
  %3488 = vset.pattern.permute.xlu0 0
  %3489 = vperm.xlu0 %3488, %v3455
  %v3490 = vpop.permute.xlu0 %3489
  %3493 = vset.pattern.permute.xlu0 0
  %3494 = vperm.xlu0 %3493, %v3456
  %v3495 = vpop.permute.xlu0 %3494
  %3498 = vset.pattern.permute.xlu0 0
  %3499 = vperm.xlu0 %3498, %v3457
  %v3500 = vpop.permute.xlu0 %3499
  %3503 = vset.pattern.permute.xlu0 0
  %3504 = vperm.xlu0 %3503, %v3458
  %v3505 = vpop.permute.xlu0 %3504
  %3508 = vset.pattern.permute.xlu0 0
  %3509 = vperm.xlu0 %3508, %v3459
  %v3510 = vpop.permute.xlu0 %3509
  %3513 = vset.pattern.permute.xlu0 0
  %3514 = vperm.xlu0 %3513, %v3460
  %v3515 = vpop.permute.xlu0 %3514
  %3518 = vset.pattern.permute.xlu0 0
  %3519 = vperm.xlu0 %3518, %v3461
  %v3520 = vpop.permute.xlu0 %3519
  %3523 = vset.pattern.permute.xlu0 0
  %3524 = vperm.xlu0 %3523, %v3462
  %v3525 = vpop.permute.xlu0 %3524
  %3528 = vset.pattern.permute.xlu0 0
  %3529 = vperm.xlu0 %3528, %v3463
  %v3530 = vpop.permute.xlu0 %3529
  %3533 = vset.pattern.permute.xlu0 0
  %3534 = vperm.xlu0 %3533, %v3464
  %v3535 = vpop.permute.xlu0 %3534
  %3538 = vset.pattern.permute.xlu0 0
  %3539 = vperm.xlu0 %3538, %v3465
  %v3540 = vpop.permute.xlu0 %3539
  %3543 = vset.pattern.permute.xlu0 0
  %3544 = vperm.xlu0 %3543, %v3466
  %v3545 = vpop.permute.xlu0 %3544
  %3548 = vset.pattern.permute.xlu0 0
  %3549 = vperm.xlu0 %3548, %v3467
  %v3550 = vpop.permute.xlu0 %3549
  %3553 = vset.pattern.permute.xlu0 0
  %3554 = vperm.xlu0 %3553, %v3468
  %v3555 = vpop.permute.xlu0 %3554
  %3558 = vset.pattern.permute.xlu0 0
  %3559 = vperm.xlu0 %3558, %v3469
  %v3560 = vpop.permute.xlu0 %3559
  %3563 = vset.pattern.permute.xlu0 0
  %3564 = vperm.xlu0 %3563, %v3470
  %v3565 = vpop.permute.xlu0 %3564
  %3568 = vset.pattern.permute.xlu0 0
  %3569 = vperm.xlu0 %3568, %v3471
  %v3570 = vpop.permute.xlu0 %3569
  %3573 = vset.pattern.permute.xlu0 0
  %3574 = vperm.xlu0 %3573, %v3472
  %v3575 = vpop.permute.xlu0 %3574
  %3578 = vset.pattern.permute.xlu0 0
  %3579 = vperm.xlu0 %3578, %v3473
  %v3580 = vpop.permute.xlu0 %3579
  %3583 = vset.pattern.permute.xlu0 0
  %3584 = vperm.xlu0 %3583, %v3474
  %v3585 = vpop.permute.xlu0 %3584
  %3588 = vset.pattern.permute.xlu0 0
  %3589 = vperm.xlu0 %3588, %v3475
  %v3590 = vpop.permute.xlu0 %3589
  %3593 = vset.pattern.permute.xlu0 0
  %3594 = vperm.xlu0 %3593, %v3476
  %v3595 = vpop.permute.xlu0 %3594
  %3598 = vset.pattern.permute.xlu0 0
  %3599 = vperm.xlu0 %3598, %v3477
  %v3600 = vpop.permute.xlu0 %3599
  %3603 = vset.pattern.permute.xlu0 0
  %3604 = vperm.xlu0 %3603, %v3478
  %v3605 = vpop.permute.xlu0 %3604
  %3608 = vset.pattern.permute.xlu0 0
  %3609 = vperm.xlu0 %3608, %v3479
  %v3610 = vpop.permute.xlu0 %3609
  %3613 = vset.pattern.permute.xlu0 0
  %3614 = vperm.xlu0 %3613, %v3480
  %v3615 = vpop.permute.xlu0 %3614
  %3618 = vset.pattern.permute.xlu0 0
  %3619 = vperm.xlu0 %3618, %v3481
  %v3620 = vpop.permute.xlu0 %3619
  %3623 = vset.pattern.permute.xlu0 0
  %3624 = vperm.xlu0 %3623, %v3482
  %v3625 = vpop.permute.xlu0 %3624
  %3628 = vset.pattern.permute.xlu0 0
  %3629 = vperm.xlu0 %3628, %v3483
  %v3630 = vpop.permute.xlu0 %3629
  %3633 = vset.pattern.permute.xlu0 0
  %3634 = vperm.xlu0 %3633, %v3484
  %v3635 = vpop.permute.xlu0 %3634
  %3638 = vset.pattern.permute.xlu0 0
  %3639 = vperm.xlu0 %3638, %v3485
  %v3640 = vpop.permute.xlu0 %3639
  %3643 = vset.pattern.permute.xlu0 0
  %3644 = vperm.xlu0 %3643, %v3486
  %v3645 = vpop.permute.xlu0 %3644
  %v3711 = vunpack.c.l.b16 %v3359
  %v3712 = vunpack.c.h.b16 %v3359
  %v3713 = vunpack.c.l.b16 %v3360
  %v3714 = vunpack.c.h.b16 %v3360
  %v3715 = vunpack.c.l.b16 %v3361
  %v3716 = vunpack.c.h.b16 %v3361
  %v3717 = vunpack.c.l.b16 %v3362
  %v3718 = vunpack.c.h.b16 %v3362
  %v3719 = vunpack.c.l.b16 %v3363
  %v3720 = vunpack.c.h.b16 %v3363
  %v3721 = vunpack.c.l.b16 %v3364
  %v3722 = vunpack.c.h.b16 %v3364
  %v3723 = vunpack.c.l.b16 %v3365
  %v3724 = vunpack.c.h.b16 %v3365
  %v3725 = vunpack.c.l.b16 %v3366
  %v3726 = vunpack.c.h.b16 %v3366
  %v3727 = vunpack.c.l.b16 %v3367
  %v3728 = vunpack.c.h.b16 %v3367
  %v3729 = vunpack.c.l.b16 %v3368
  %v3730 = vunpack.c.h.b16 %v3368
  %v3731 = vunpack.c.l.b16 %v3369
  %v3732 = vunpack.c.h.b16 %v3369
  %v3733 = vunpack.c.l.b16 %v3370
  %v3734 = vunpack.c.h.b16 %v3370
  %v3735 = vunpack.c.l.b16 %v3371
  %v3736 = vunpack.c.h.b16 %v3371
  %v3737 = vunpack.c.l.b16 %v3372
  %v3738 = vunpack.c.h.b16 %v3372
  %v3739 = vunpack.c.l.b16 %v3373
  %v3740 = vunpack.c.h.b16 %v3373
  %v3741 = vunpack.c.l.b16 %v3374
  %v3742 = vunpack.c.h.b16 %v3374
  %v3743 = vunpack.c.l.b16 %v3375
  %v3744 = vunpack.c.h.b16 %v3375
  %v3745 = vunpack.c.l.b16 %v3376
  %v3746 = vunpack.c.h.b16 %v3376
  %v3747 = vunpack.c.l.b16 %v3377
  %v3748 = vunpack.c.h.b16 %v3377
  %v3749 = vunpack.c.l.b16 %v3378
  %v3750 = vunpack.c.h.b16 %v3378
  %v3751 = vunpack.c.l.b16 %v3379
  %v3752 = vunpack.c.h.b16 %v3379
  %v3753 = vunpack.c.l.b16 %v3380
  %v3754 = vunpack.c.h.b16 %v3380
  %v3755 = vunpack.c.l.b16 %v3381
  %v3756 = vunpack.c.h.b16 %v3381
  %v3757 = vunpack.c.l.b16 %v3382
  %v3758 = vunpack.c.h.b16 %v3382
  %v3759 = vunpack.c.l.b16 %v3383
  %v3760 = vunpack.c.h.b16 %v3383
  %v3761 = vunpack.c.l.b16 %v3384
  %v3762 = vunpack.c.h.b16 %v3384
  %v3763 = vunpack.c.l.b16 %v3385
  %v3764 = vunpack.c.h.b16 %v3385
  %v3765 = vunpack.c.l.b16 %v3386
  %v3766 = vunpack.c.h.b16 %v3386
  %v3767 = vunpack.c.l.b16 %v3387
  %v3768 = vunpack.c.h.b16 %v3387
  %v3769 = vunpack.c.l.b16 %v3388
  %v3770 = vunpack.c.h.b16 %v3388
  %v3771 = vunpack.c.l.b16 %v3389
  %v3772 = vunpack.c.h.b16 %v3389
  %v3773 = vunpack.c.l.b16 %v3390
  %v3774 = vunpack.c.h.b16 %v3390
  %v3775 = vunpack.c.l.b16 %v3391
  %v3776 = vunpack.c.h.b16 %v3391
  %v3777 = vunpack.c.l.b16 %v3392
  %v3778 = vunpack.c.h.b16 %v3392
  %v3779 = vunpack.c.l.b16 %v3393
  %v3780 = vunpack.c.h.b16 %v3393
  %v3781 = vunpack.c.l.b16 %v3394
  %v3782 = vunpack.c.h.b16 %v3394
  %v3783 = vunpack.c.l.b16 %v3395
  %v3784 = vunpack.c.h.b16 %v3395
  %v3785 = vunpack.c.l.b16 %v3396
  %v3786 = vunpack.c.h.b16 %v3396
  %v3787 = vunpack.c.l.b16 %v3397
  %v3788 = vunpack.c.h.b16 %v3397
  %v3789 = vunpack.c.l.b16 %v3398
  %v3790 = vunpack.c.h.b16 %v3398
  %v3791 = vunpack.c.l.b16 %v3399
  %v3792 = vunpack.c.h.b16 %v3399
  %v3793 = vunpack.c.l.b16 %v3400
  %v3794 = vunpack.c.h.b16 %v3400
  %v3795 = vunpack.c.l.b16 %v3401
  %v3796 = vunpack.c.h.b16 %v3401
  %v3797 = vunpack.c.l.b16 %v3402
  %v3798 = vunpack.c.h.b16 %v3402
  %v3799 = vunpack.c.l.b16 %v3403
  %v3800 = vunpack.c.h.b16 %v3403
  %v3801 = vunpack.c.l.b16 %v3404
  %v3802 = vunpack.c.h.b16 %v3404
  %v3803 = vunpack.c.l.b16 %v3405
  %v3804 = vunpack.c.h.b16 %v3405
  %v3805 = vunpack.c.l.b16 %v3406
  %v3806 = vunpack.c.h.b16 %v3406
  %v3807 = vunpack.c.l.b16 %v3407
  %v3808 = vunpack.c.h.b16 %v3407
  %v3809 = vunpack.c.l.b16 %v3408
  %v3810 = vunpack.c.h.b16 %v3408
  %v3811 = vunpack.c.l.b16 %v3409
  %v3812 = vunpack.c.h.b16 %v3409
  %v3813 = vunpack.c.l.b16 %v3410
  %v3814 = vunpack.c.h.b16 %v3410
  %v3815 = vunpack.c.l.b16 %v3411
  %v3816 = vunpack.c.h.b16 %v3411
  %v3817 = vunpack.c.l.b16 %v3412
  %v3818 = vunpack.c.h.b16 %v3412
  %v3819 = vunpack.c.l.b16 %v3413
  %v3820 = vunpack.c.h.b16 %v3413
  %v3821 = vunpack.c.l.b16 %v3414
  %v3822 = vunpack.c.h.b16 %v3414
  %v3823 = vunpack.c.l.b16 %v3415
  %v3824 = vunpack.c.h.b16 %v3415
  %v3825 = vunpack.c.l.b16 %v3416
  %v3826 = vunpack.c.h.b16 %v3416
  %v3827 = vunpack.c.l.b16 %v3417
  %v3828 = vunpack.c.h.b16 %v3417
  %v3829 = vunpack.c.l.b16 %v3418
  %v3830 = vunpack.c.h.b16 %v3418
  %v3831 = vunpack.c.l.b16 %v3419
  %v3832 = vunpack.c.h.b16 %v3419
  %v3833 = vunpack.c.l.b16 %v3420
  %v3834 = vunpack.c.h.b16 %v3420
  %v3835 = vunpack.c.l.b16 %v3421
  %v3836 = vunpack.c.h.b16 %v3421
  %v3837 = vunpack.c.l.b16 %v3422
  %v3838 = vunpack.c.h.b16 %v3422
  %v3839 = vpack.c.b16 %v3715, %v3711
  %v3840 = vpack.c.b16 %v3716, %v3712
  %v3841 = vpack.c.b16 %v3717, %v3713
  %v3842 = vpack.c.b16 %v3718, %v3714
  %v3843 = vpack.c.b16 %v3723, %v3719
  %v3844 = vpack.c.b16 %v3724, %v3720
  %v3845 = vpack.c.b16 %v3725, %v3721
  %v3846 = vpack.c.b16 %v3726, %v3722
  %v3847 = vpack.c.b16 %v3731, %v3727
  %v3848 = vpack.c.b16 %v3732, %v3728
  %v3849 = vpack.c.b16 %v3733, %v3729
  %v3850 = vpack.c.b16 %v3734, %v3730
  %v3851 = vpack.c.b16 %v3739, %v3735
  %v3852 = vpack.c.b16 %v3740, %v3736
  %v3853 = vpack.c.b16 %v3741, %v3737
  %v3854 = vpack.c.b16 %v3742, %v3738
  %v3855 = vpack.c.b16 %v3747, %v3743
  %v3856 = vpack.c.b16 %v3748, %v3744
  %v3857 = vpack.c.b16 %v3749, %v3745
  %v3858 = vpack.c.b16 %v3750, %v3746
  %v3859 = vpack.c.b16 %v3755, %v3751
  %v3860 = vpack.c.b16 %v3756, %v3752
  %v3861 = vpack.c.b16 %v3757, %v3753
  %v3862 = vpack.c.b16 %v3758, %v3754
  %v3863 = vpack.c.b16 %v3763, %v3759
  %v3864 = vpack.c.b16 %v3764, %v3760
  %v3865 = vpack.c.b16 %v3765, %v3761
  %v3866 = vpack.c.b16 %v3766, %v3762
  %v3867 = vpack.c.b16 %v3771, %v3767
  %v3868 = vpack.c.b16 %v3772, %v3768
  %v3869 = vpack.c.b16 %v3773, %v3769
  %v3870 = vpack.c.b16 %v3774, %v3770
  %v3871 = vpack.c.b16 %v3779, %v3775
  %v3872 = vpack.c.b16 %v3780, %v3776
  %v3873 = vpack.c.b16 %v3781, %v3777
  %v3874 = vpack.c.b16 %v3782, %v3778
  %v3875 = vpack.c.b16 %v3787, %v3783
  %v3876 = vpack.c.b16 %v3788, %v3784
  %v3877 = vpack.c.b16 %v3789, %v3785
  %v3878 = vpack.c.b16 %v3790, %v3786
  %v3879 = vpack.c.b16 %v3795, %v3791
  %v3880 = vpack.c.b16 %v3796, %v3792
  %v3881 = vpack.c.b16 %v3797, %v3793
  %v3882 = vpack.c.b16 %v3798, %v3794
  %v3883 = vpack.c.b16 %v3803, %v3799
  %v3884 = vpack.c.b16 %v3804, %v3800
  %v3885 = vpack.c.b16 %v3805, %v3801
  %v3886 = vpack.c.b16 %v3806, %v3802
  %v3887 = vpack.c.b16 %v3811, %v3807
  %v3888 = vpack.c.b16 %v3812, %v3808
  %v3889 = vpack.c.b16 %v3813, %v3809
  %v3890 = vpack.c.b16 %v3814, %v3810
  %v3891 = vpack.c.b16 %v3819, %v3815
  %v3892 = vpack.c.b16 %v3820, %v3816
  %v3893 = vpack.c.b16 %v3821, %v3817
  %v3894 = vpack.c.b16 %v3822, %v3818
  %v3895 = vpack.c.b16 %v3827, %v3823
  %v3896 = vpack.c.b16 %v3828, %v3824
  %v3897 = vpack.c.b16 %v3829, %v3825
  %v3898 = vpack.c.b16 %v3830, %v3826
  %v3899 = vpack.c.b16 %v3835, %v3831
  %v3900 = vpack.c.b16 %v3836, %v3832
  %v3901 = vpack.c.b16 %v3837, %v3833
  %v3902 = vpack.c.b16 %v3838, %v3834
  %3967 = vmatprep.subr.bf16.mxu0 0
  %3968 = vmatpush1.bf16.msra.mxu0 %v3423
  %3969 = vmatprep.subr.bf16.mxu0 0
  %3970 = vmatpush1.bf16.msra.mxu0 %v3424
  %3971 = vmatprep.subr.bf16.mxu0 0
  %3972 = vmatpush1.bf16.msra.mxu0 %v3425
  %3973 = vmatprep.subr.bf16.mxu0 0
  %3974 = vmatpush1.bf16.msra.mxu0 %v3426
  %3975 = vmatprep.subr.bf16.mxu0 0
  %3976 = vmatpush1.bf16.msra.mxu0 %v3427
  %3977 = vmatprep.subr.bf16.mxu0 0
  %3978 = vmatpush1.bf16.msra.mxu0 %v3428
  %3979 = vmatprep.subr.bf16.mxu0 0
  %3980 = vmatpush1.bf16.msra.mxu0 %v3429
  %3981 = vmatprep.subr.bf16.mxu0 0
  %3982 = vmatpush1.bf16.msra.mxu0 %v3430
  %3983 = vmatprep.subr.bf16.mxu0 0
  %3984 = vmatpush1.bf16.msra.mxu0 %v3431
  %3985 = vmatprep.subr.bf16.mxu0 0
  %3986 = vmatpush1.bf16.msra.mxu0 %v3432
  %3987 = vmatprep.subr.bf16.mxu0 0
  %3988 = vmatpush1.bf16.msra.mxu0 %v3433
  %3989 = vmatprep.subr.bf16.mxu0 0
  %3990 = vmatpush1.bf16.msra.mxu0 %v3434
  %3991 = vmatprep.subr.bf16.mxu0 0
  %3992 = vmatpush1.bf16.msra.mxu0 %v3435
  %3993 = vmatprep.subr.bf16.mxu0 0
  %3994 = vmatpush1.bf16.msra.mxu0 %v3436
  %3995 = vmatprep.subr.bf16.mxu0 0
  %3996 = vmatpush1.bf16.msra.mxu0 %v3437
  %3997 = vmatprep.subr.bf16.mxu0 0
  %3998 = vmatpush1.bf16.msra.mxu0 %v3438
  %3999 = vmatprep.mubr.bf16.mxu0 %v3840
  %4000 = vmatmul.mubr.bf16.gmra.mrb[0].mxu0 %v3839
  %v4001 = vpop.f32.mrb[0].mxu0
  %v4002 = vadd.f32 %v3490, %v4001
  %v4003 = vpop.f32.mrb[0].mxu0
  %v4004 = vpop.f32.mrb[0].mxu0
  %v4005 = vadd.f32 %v3495, %v4004
  %v4006 = vpop.f32.mrb[0].mxu0
  %4007 = vmatprep.mubr.bf16.mxu0 %v3844
  %4008 = vmatmul.mubr.bf16.gmra.mrb[0].mxu0 %v3843
  %v4009 = vpop.f32.mrb[0].mxu0
  %v4010 = vadd.f32 %v3500, %v4009
  %v4011 = vpop.f32.mrb[0].mxu0
  %v4012 = vpop.f32.mrb[0].mxu0
  %v4013 = vadd.f32 %v3505, %v4012
  %v4014 = vpop.f32.mrb[0].mxu0
  %4015 = vmatprep.mubr.bf16.mxu0 %v3848
  %4016 = vmatmul.mubr.bf16.gmra.mrb[0].mxu0 %v3847
  %v4017 = vpop.f32.mrb[0].mxu0
  %v4018 = vadd.f32 %v3510, %v4017
  %v4019 = vpop.f32.mrb[0].mxu0
  %v4020 = vpop.f32.mrb[0].mxu0
  %v4021 = vadd.f32 %v3515, %v4020
  %v4022 = vpop.f32.mrb[0].mxu0
  %4023 = vmatprep.mubr.bf16.mxu0 %v3852
  %4024 = vmatmul.mubr.bf16.gmra.mrb[0].mxu0 %v3851
  %v4025 = vpop.f32.mrb[0].mxu0
  %v4026 = vadd.f32 %v3520, %v4025
  %v4027 = vpop.f32.mrb[0].mxu0
  %v4028 = vpop.f32.mrb[0].mxu0
  %v4029 = vadd.f32 %v3525, %v4028
  %v4030 = vpop.f32.mrb[0].mxu0
  %4031 = vmatprep.mubr.bf16.mxu0 %v3856
  %4032 = vmatmul.mubr.bf16.gmra.mrb[0].mxu0 %v3855
  %v4033 = vpop.f32.mrb[0].mxu0
  %v4034 = vadd.f32 %v3530, %v4033
  %v4035 = vpop.f32.mrb[0].mxu0
  %v4036 = vpop.f32.mrb[0].mxu0
  %v4037 = vadd.f32 %v3535, %v4036
  %v4038 = vpop.f32.mrb[0].mxu0
  %4039 = vmatprep.mubr.bf16.mxu0 %v3860
  %4040 = vmatmul.mubr.bf16.gmra.mrb[0].mxu0 %v3859
  %v4041 = vpop.f32.mrb[0].mxu0
  %v4042 = vadd.f32 %v3540, %v4041
  %v4043 = vpop.f32.mrb[0].mxu0
  %v4044 = vpop.f32.mrb[0].mxu0
  %v4045 = vadd.f32 %v3545, %v4044
  %v4046 = vpop.f32.mrb[0].mxu0
  %4047 = vmatprep.mubr.bf16.mxu0 %v3864
  %4048 = vmatmul.mubr.bf16.gmra.mrb[0].mxu0 %v3863
  %v4049 = vpop.f32.mrb[0].mxu0
  %v4050 = vadd.f32 %v3550, %v4049
  %v4051 = vpop.f32.mrb[0].mxu0
  %v4052 = vpop.f32.mrb[0].mxu0
  %v4053 = vadd.f32 %v3555, %v4052
  %v4054 = vpop.f32.mrb[0].mxu0
  %4055 = vmatprep.mubr.bf16.mxu0 %v3868
  %4056 = vmatmul.mubr.bf16.gmra.mrb[0].mxu0 %v3867
  %v4057 = vpop.f32.mrb[0].mxu0
  %v4058 = vadd.f32 %v3560, %v4057
  %v4059 = vpop.f32.mrb[0].mxu0
  %v4060 = vpop.f32.mrb[0].mxu0
  %v4061 = vadd.f32 %v3565, %v4060
  %v4062 = vpop.f32.mrb[0].mxu0
  %4063 = vmatprep.mubr.bf16.mxu0 %v3872
  %4064 = vmatmul.mubr.bf16.gmra.mrb[0].mxu0 %v3871
  %v4065 = vpop.f32.mrb[0].mxu0
  %v4066 = vadd.f32 %v3570, %v4065
  %v4067 = vpop.f32.mrb[0].mxu0
  %v4068 = vpop.f32.mrb[0].mxu0
  %v4069 = vadd.f32 %v3575, %v4068
  %v4070 = vpop.f32.mrb[0].mxu0
  %4071 = vmatprep.mubr.bf16.mxu0 %v3876
  %4072 = vmatmul.mubr.bf16.gmra.mrb[0].mxu0 %v3875
  %v4073 = vpop.f32.mrb[0].mxu0
  %v4074 = vadd.f32 %v3580, %v4073
  %v4075 = vpop.f32.mrb[0].mxu0
  %v4076 = vpop.f32.mrb[0].mxu0
  %v4077 = vadd.f32 %v3585, %v4076
  %v4078 = vpop.f32.mrb[0].mxu0
  %4079 = vmatprep.mubr.bf16.mxu0 %v3880
  %4080 = vmatmul.mubr.bf16.gmra.mrb[0].mxu0 %v3879
  %v4081 = vpop.f32.mrb[0].mxu0
  %v4082 = vadd.f32 %v3590, %v4081
  %v4083 = vpop.f32.mrb[0].mxu0
  %v4084 = vpop.f32.mrb[0].mxu0
  %v4085 = vadd.f32 %v3595, %v4084
  %v4086 = vpop.f32.mrb[0].mxu0
  %4087 = vmatprep.mubr.bf16.mxu0 %v3884
  %4088 = vmatmul.mubr.bf16.gmra.mrb[0].mxu0 %v3883
  %v4089 = vpop.f32.mrb[0].mxu0
  %v4090 = vadd.f32 %v3600, %v4089
  %v4091 = vpop.f32.mrb[0].mxu0
  %v4092 = vpop.f32.mrb[0].mxu0
  %v4093 = vadd.f32 %v3605, %v4092
  %v4094 = vpop.f32.mrb[0].mxu0
  %4095 = vmatprep.mubr.bf16.mxu0 %v3888
  %4096 = vmatmul.mubr.bf16.gmra.mrb[0].mxu0 %v3887
  %v4097 = vpop.f32.mrb[0].mxu0
  %v4098 = vadd.f32 %v3610, %v4097
  %v4099 = vpop.f32.mrb[0].mxu0
  %v4100 = vpop.f32.mrb[0].mxu0
  %v4101 = vadd.f32 %v3615, %v4100
  %v4102 = vpop.f32.mrb[0].mxu0
  %4103 = vmatprep.mubr.bf16.mxu0 %v3892
  %4104 = vmatmul.mubr.bf16.gmra.mrb[0].mxu0 %v3891
  %v4105 = vpop.f32.mrb[0].mxu0
  %v4106 = vadd.f32 %v3620, %v4105
  %v4107 = vpop.f32.mrb[0].mxu0
  %v4108 = vpop.f32.mrb[0].mxu0
  %v4109 = vadd.f32 %v3625, %v4108
  %v4110 = vpop.f32.mrb[0].mxu0
  %4111 = vmatprep.mubr.bf16.mxu0 %v3896
  %4112 = vmatmul.mubr.bf16.gmra.mrb[0].mxu0 %v3895
  %v4113 = vpop.f32.mrb[0].mxu0
  %v4114 = vadd.f32 %v3630, %v4113
  %v4115 = vpop.f32.mrb[0].mxu0
  %v4116 = vpop.f32.mrb[0].mxu0
  %v4117 = vadd.f32 %v3635, %v4116
  %v4118 = vpop.f32.mrb[0].mxu0
  %4119 = vmatprep.mubr.bf16.mxu0 %v3900
  %4120 = vmatmul.mubr.bf16.gmra.mrb[0].mxu0 %v3899
  %v4121 = vpop.f32.mrb[0].mxu0
  %v4122 = vadd.f32 %v3640, %v4121
  %v4123 = vpop.f32.mrb[0].mxu0
  %v4124 = vpop.f32.mrb[0].mxu0
  %v4125 = vadd.f32 %v3645, %v4124
  %v4126 = vpop.f32.mrb[0].mxu0
  %4127 = vdwg.mxu0
  %4128 = vmatprep.subr.bf16.mxu0 0
  %4129 = vmatpush1.bf16.msra.mxu0 %v3439
  %4130 = vmatprep.subr.bf16.mxu0 0
  %4131 = vmatpush1.bf16.msra.mxu0 %v3440
  %4132 = vmatprep.subr.bf16.mxu0 0
  %4133 = vmatpush1.bf16.msra.mxu0 %v3441
  %4134 = vmatprep.subr.bf16.mxu0 0
  %4135 = vmatpush1.bf16.msra.mxu0 %v3442
  %4136 = vmatprep.subr.bf16.mxu0 0
  %4137 = vmatpush1.bf16.msra.mxu0 %v3443
  %4138 = vmatprep.subr.bf16.mxu0 0
  %4139 = vmatpush1.bf16.msra.mxu0 %v3444
  %4140 = vmatprep.subr.bf16.mxu0 0
  %4141 = vmatpush1.bf16.msra.mxu0 %v3445
  %4142 = vmatprep.subr.bf16.mxu0 0
  %4143 = vmatpush1.bf16.msra.mxu0 %v3446
  %4144 = vmatprep.subr.bf16.mxu0 0
  %4145 = vmatpush1.bf16.msra.mxu0 %v3447
  %4146 = vmatprep.subr.bf16.mxu0 0
  %4147 = vmatpush1.bf16.msra.mxu0 %v3448
  %4148 = vmatprep.subr.bf16.mxu0 0
  %4149 = vmatpush1.bf16.msra.mxu0 %v3449
  %4150 = vmatprep.subr.bf16.mxu0 0
  %4151 = vmatpush1.bf16.msra.mxu0 %v3450
  %4152 = vmatprep.subr.bf16.mxu0 0
  %4153 = vmatpush1.bf16.msra.mxu0 %v3451
  %4154 = vmatprep.subr.bf16.mxu0 0
  %4155 = vmatpush1.bf16.msra.mxu0 %v3452
  %4156 = vmatprep.subr.bf16.mxu0 0
  %4157 = vmatpush1.bf16.msra.mxu0 %v3453
  %4158 = vmatprep.subr.bf16.mxu0 0
  %4159 = vmatpush1.bf16.msra.mxu0 %v3454
  %4160 = vmatprep.mubr.bf16.mxu0 %v3842
  %4161 = vmatmul.mubr.bf16.gmra.mrb[0].mxu0 %v3841
  %v4162 = vpop.f32.mrb[0].mxu0
  %v4163 = vadd.f32 %v4002, %v4162
  %v4164 = vpop.f32.mrb[0].mxu0
  %v4165 = vpop.f32.mrb[0].mxu0
  %v4166 = vadd.f32 %v4005, %v4165
  %v4167 = vpop.f32.mrb[0].mxu0
  %4168 = vmatprep.mubr.bf16.mxu0 %v3846
  %4169 = vmatmul.mubr.bf16.gmra.mrb[0].mxu0 %v3845
  %v4170 = vpop.f32.mrb[0].mxu0
  %v4171 = vadd.f32 %v4010, %v4170
  %v4172 = vpop.f32.mrb[0].mxu0
  %v4173 = vpop.f32.mrb[0].mxu0
  %v4174 = vadd.f32 %v4013, %v4173
  %v4175 = vpop.f32.mrb[0].mxu0
  %4176 = vmatprep.mubr.bf16.mxu0 %v3850
  %4177 = vmatmul.mubr.bf16.gmra.mrb[0].mxu0 %v3849
  %v4178 = vpop.f32.mrb[0].mxu0
  %v4179 = vadd.f32 %v4018, %v4178
  %v4180 = vpop.f32.mrb[0].mxu0
  %v4181 = vpop.f32.mrb[0].mxu0
  %v4182 = vadd.f32 %v4021, %v4181
  %v4183 = vpop.f32.mrb[0].mxu0
  %4184 = vmatprep.mubr.bf16.mxu0 %v3854
  %4185 = vmatmul.mubr.bf16.gmra.mrb[0].mxu0 %v3853
  %v4186 = vpop.f32.mrb[0].mxu0
  %v4187 = vadd.f32 %v4026, %v4186
  %v4188 = vpop.f32.mrb[0].mxu0
  %v4189 = vpop.f32.mrb[0].mxu0
  %v4190 = vadd.f32 %v4029, %v4189
  %v4191 = vpop.f32.mrb[0].mxu0
  %4192 = vmatprep.mubr.bf16.mxu0 %v3858
  %4193 = vmatmul.mubr.bf16.gmra.mrb[0].mxu0 %v3857
  %v4194 = vpop.f32.mrb[0].mxu0
  %v4195 = vadd.f32 %v4034, %v4194
  %v4196 = vpop.f32.mrb[0].mxu0
  %v4197 = vpop.f32.mrb[0].mxu0
  %v4198 = vadd.f32 %v4037, %v4197
  %v4199 = vpop.f32.mrb[0].mxu0
  %4200 = vmatprep.mubr.bf16.mxu0 %v3862
  %4201 = vmatmul.mubr.bf16.gmra.mrb[0].mxu0 %v3861
  %v4202 = vpop.f32.mrb[0].mxu0
  %v4203 = vadd.f32 %v4042, %v4202
  %v4204 = vpop.f32.mrb[0].mxu0
  %v4205 = vpop.f32.mrb[0].mxu0
  %v4206 = vadd.f32 %v4045, %v4205
  %v4207 = vpop.f32.mrb[0].mxu0
  %4208 = vmatprep.mubr.bf16.mxu0 %v3866
  %4209 = vmatmul.mubr.bf16.gmra.mrb[0].mxu0 %v3865
  %v4210 = vpop.f32.mrb[0].mxu0
  %v4211 = vadd.f32 %v4050, %v4210
  %v4212 = vpop.f32.mrb[0].mxu0
  %v4213 = vpop.f32.mrb[0].mxu0
  %v4214 = vadd.f32 %v4053, %v4213
  %v4215 = vpop.f32.mrb[0].mxu0
  %4216 = vmatprep.mubr.bf16.mxu0 %v3870
  %4217 = vmatmul.mubr.bf16.gmra.mrb[0].mxu0 %v3869
  %v4218 = vpop.f32.mrb[0].mxu0
  %v4219 = vadd.f32 %v4058, %v4218
  %v4220 = vpop.f32.mrb[0].mxu0
  %v4221 = vpop.f32.mrb[0].mxu0
  %v4222 = vadd.f32 %v4061, %v4221
  %v4223 = vpop.f32.mrb[0].mxu0
  %4224 = vmatprep.mubr.bf16.mxu0 %v3874
  %4225 = vmatmul.mubr.bf16.gmra.mrb[0].mxu0 %v3873
  %v4226 = vpop.f32.mrb[0].mxu0
  %v4227 = vadd.f32 %v4066, %v4226
  %v4228 = vpop.f32.mrb[0].mxu0
  %v4229 = vpop.f32.mrb[0].mxu0
  %v4230 = vadd.f32 %v4069, %v4229
  %v4231 = vpop.f32.mrb[0].mxu0
  %4232 = vmatprep.mubr.bf16.mxu0 %v3878
  %4233 = vmatmul.mubr.bf16.gmra.mrb[0].mxu0 %v3877
  %v4234 = vpop.f32.mrb[0].mxu0
  %v4235 = vadd.f32 %v4074, %v4234
  %v4236 = vpop.f32.mrb[0].mxu0
  %v4237 = vpop.f32.mrb[0].mxu0
  %v4238 = vadd.f32 %v4077, %v4237
  %v4239 = vpop.f32.mrb[0].mxu0
  %4240 = vmatprep.mubr.bf16.mxu0 %v3882
  %4241 = vmatmul.mubr.bf16.gmra.mrb[0].mxu0 %v3881
  %v4242 = vpop.f32.mrb[0].mxu0
  %v4243 = vadd.f32 %v4082, %v4242
  %v4244 = vpop.f32.mrb[0].mxu0
  %v4245 = vpop.f32.mrb[0].mxu0
  %v4246 = vadd.f32 %v4085, %v4245
  %v4247 = vpop.f32.mrb[0].mxu0
  %4248 = vmatprep.mubr.bf16.mxu0 %v3886
  %4249 = vmatmul.mubr.bf16.gmra.mrb[0].mxu0 %v3885
  %v4250 = vpop.f32.mrb[0].mxu0
  %v4251 = vadd.f32 %v4090, %v4250
  %v4252 = vpop.f32.mrb[0].mxu0
  %v4253 = vpop.f32.mrb[0].mxu0
  %v4254 = vadd.f32 %v4093, %v4253
  %v4255 = vpop.f32.mrb[0].mxu0
  %4256 = vmatprep.mubr.bf16.mxu0 %v3890
  %4257 = vmatmul.mubr.bf16.gmra.mrb[0].mxu0 %v3889
  %v4258 = vpop.f32.mrb[0].mxu0
  %v4259 = vadd.f32 %v4098, %v4258
  %v4260 = vpop.f32.mrb[0].mxu0
  %v4261 = vpop.f32.mrb[0].mxu0
  %v4262 = vadd.f32 %v4101, %v4261
  %v4263 = vpop.f32.mrb[0].mxu0
  %4264 = vmatprep.mubr.bf16.mxu0 %v3894
  %4265 = vmatmul.mubr.bf16.gmra.mrb[0].mxu0 %v3893
  %v4266 = vpop.f32.mrb[0].mxu0
  %v4267 = vadd.f32 %v4106, %v4266
  %v4268 = vpop.f32.mrb[0].mxu0
  %v4269 = vpop.f32.mrb[0].mxu0
  %v4270 = vadd.f32 %v4109, %v4269
  %v4271 = vpop.f32.mrb[0].mxu0
  %4272 = vmatprep.mubr.bf16.mxu0 %v3898
  %4273 = vmatmul.mubr.bf16.gmra.mrb[0].mxu0 %v3897
  %v4274 = vpop.f32.mrb[0].mxu0
  %v4275 = vadd.f32 %v4114, %v4274
  %v4276 = vpop.f32.mrb[0].mxu0
  %v4277 = vpop.f32.mrb[0].mxu0
  %v4278 = vadd.f32 %v4117, %v4277
  %v4279 = vpop.f32.mrb[0].mxu0
  %4280 = vmatprep.mubr.bf16.mxu0 %v3902
  %4281 = vmatmul.mubr.bf16.gmra.mrb[0].mxu0 %v3901
  %v4282 = vpop.f32.mrb[0].mxu0
  %v4283 = vadd.f32 %v4122, %v4282
  %v4284 = vpop.f32.mrb[0].mxu0
  %v4285 = vpop.f32.mrb[0].mxu0
  %v4286 = vadd.f32 %v4125, %v4285
  %v4287 = vpop.f32.mrb[0].mxu0
  %4288 = vdwg.mxu0
  %v4289 = vmax.f32 %v4163, 0.0
  %v4290 = vmax.f32 %v4166, 0.0
  %v4291 = vmax.f32 %v4171, 0.0
  %v4292 = vmax.f32 %v4174, 0.0
  %v4293 = vmax.f32 %v4179, 0.0
  %v4294 = vmax.f32 %v4182, 0.0
  %v4295 = vmax.f32 %v4187, 0.0
  %v4296 = vmax.f32 %v4190, 0.0
  %v4297 = vmax.f32 %v4195, 0.0
  %v4298 = vmax.f32 %v4198, 0.0
  %v4299 = vmax.f32 %v4203, 0.0
  %v4300 = vmax.f32 %v4206, 0.0
  %v4301 = vmax.f32 %v4211, 0.0
  %v4302 = vmax.f32 %v4214, 0.0
  %v4303 = vmax.f32 %v4219, 0.0
  %v4304 = vmax.f32 %v4222, 0.0
  %v4305 = vmax.f32 %v4227, 0.0
  %v4306 = vmax.f32 %v4230, 0.0
  %v4307 = vmax.f32 %v4235, 0.0
  %v4308 = vmax.f32 %v4238, 0.0
  %v4309 = vmax.f32 %v4243, 0.0
  %v4310 = vmax.f32 %v4246, 0.0
  %v4311 = vmax.f32 %v4251, 0.0
  %v4312 = vmax.f32 %v4254, 0.0
  %v4313 = vmax.f32 %v4259, 0.0
  %v4314 = vmax.f32 %v4262, 0.0
  %v4315 = vmax.f32 %v4267, 0.0
  %v4316 = vmax.f32 %v4270, 0.0
  %v4317 = vmax.f32 %v4275, 0.0
  %v4318 = vmax.f32 %v4278, 0.0
  %v4319 = vmax.f32 %v4283, 0.0
  %v4320 = vmax.f32 %v4286, 0.0
  %v4321 = vld [vmem:[%s5] sm:$0xff]
  %v4322 = vld [vmem:[%s5 + $0x8] sm:$0x11]
  %v4323 = vpack.c.bf16 %v4290, %v4289
  %v4324 = vpack.c.bf16 %v4292, %v4291
  %v4325 = vpack.c.bf16 %v4294, %v4293
  %v4326 = vpack.c.bf16 %v4296, %v4295
  %v4327 = vpack.c.bf16 %v4298, %v4297
  %v4328 = vpack.c.bf16 %v4300, %v4299
  %v4329 = vpack.c.bf16 %v4302, %v4301
  %v4330 = vpack.c.bf16 %v4304, %v4303
  %v4331 = vpack.c.bf16 %v4306, %v4305
  %v4332 = vpack.c.bf16 %v4308, %v4307
  %v4333 = vpack.c.bf16 %v4310, %v4309
  %v4334 = vpack.c.bf16 %v4312, %v4311
  %v4335 = vpack.c.bf16 %v4314, %v4313
  %v4336 = vpack.c.bf16 %v4316, %v4315
  %v4337 = vpack.c.bf16 %v4318, %v4317
  %v4338 = vpack.c.bf16 %v4320, %v4319
  %v4339 = vld [vmem:[%s6] sm:$0xff]
  %v4340 = vld [vmem:[%s6 + $0x8] sm:$0x1]
  %4342 = vset.pattern.permute.xlu0 0
  %4343 = vperm.xlu0 %4342, %v4339
  %v4344 = vpop.permute.xlu0 %4343
  %4347 = vset.pattern.permute.xlu0 0
  %4348 = vperm.xlu0 %4347, %v4340
  %v4349 = vpop.permute.xlu0 %4348
  %v4353 = vunpack.c.l.b16 %v4321
  %v4354 = vunpack.c.h.b16 %v4321
  %v4355 = vunpack.c.l.b16 %v4322
  %v4356 = vunpack.c.h.b16 %v4322
  %v4357 = vpack.c.b16 %v4355, %v4353
  %v4358 = vpack.c.b16 %v4356, %v4354
  %4361 = vmatprep.subr.bf16.mxu0 0
  %4362 = vmatpush1.bf16.msra.mxu0 %v4323
  %4363 = vmatprep.subr.bf16.mxu0 0
  %4364 = vmatpush1.bf16.msra.mxu0 %v4324
  %4365 = vmatprep.subr.bf16.mxu0 0
  %4366 = vmatpush1.bf16.msra.mxu0 %v4325
  %4367 = vmatprep.subr.bf16.mxu0 0
  %4368 = vmatpush1.bf16.msra.mxu0 %v4326
  %4369 = vmatprep.subr.bf16.mxu0 0
  %4370 = vmatpush1.bf16.msra.mxu0 %v4327
  %4371 = vmatprep.subr.bf16.mxu0 0
  %4372 = vmatpush1.bf16.msra.mxu0 %v4328
  %4373 = vmatprep.subr.bf16.mxu0 0
  %4374 = vmatpush1.bf16.msra.mxu0 %v4329
  %4375 = vmatprep.subr.bf16.mxu0 0
  %4376 = vmatpush1.bf16.msra.mxu0 %v4330
  %4377 = vmatprep.subr.bf16.mxu0 0
  %4378 = vmatpush1.bf16.msra.mxu0 %v4331
  %4379 = vmatprep.subr.bf16.mxu0 0
  %4380 = vmatpush1.bf16.msra.mxu0 %v4332
  %4381 = vmatprep.subr.bf16.mxu0 0
  %4382 = vmatpush1.bf16.msra.mxu0 %v4333
  %4383 = vmatprep.subr.bf16.mxu0 0
  %4384 = vmatpush1.bf16.msra.mxu0 %v4334
  %4385 = vmatprep.subr.bf16.mxu0 0
  %4386 = vmatpush1.bf16.msra.mxu0 %v4335
  %4387 = vmatprep.subr.bf16.mxu0 0
  %4388 = vmatpush1.bf16.msra.mxu0 %v4336
  %4389 = vmatprep.subr.bf16.mxu0 0
  %4390 = vmatpush1.bf16.msra.mxu0 %v4337
  %4391 = vmatprep.subr.bf16.mxu0 0
  %4392 = vmatpush1.bf16.msra.mxu0 %v4338
  %4393 = vmatprep.mubr.bf16.mxu0 %v4358
  %4394 = vmatmul.mubr.bf16.gmra.mrb[0].mxu0 %v4357
  %v4395 = vpop.f32.mrb[0].mxu0
  %v4396 = vadd.f32 %v4344, %v4395
  %v4397 = vpop.f32.mrb[0].mxu0
  %v4398 = vpop.f32.mrb[0].mxu0
  %v4399 = vadd.f32 %v4349, %v4398
  %v4400 = vpop.f32.mrb[0].mxu0
  %4401 = vdwg.mxu0
  %vm4402 = vcmask 48128
  %4403 = vst.msk [vmem:[%s7] sm:$0xff] %vm4402, %v4396
  %vm4404 = vcmask 40960
  %4405 = vst.msk [vmem:[%s7 + $0x8] sm:$0x1] %vm4404, %v4399
  // Predicated region
  $region30: #{transform_forward.4} parent=0 // pred_check
    _
  $region31: #{transform_forward.4} parent=0 // pred_check_branch
    %4407 = sbr.rel (0) target = $region33
  $region32: #{transform_forward.4} parent=0 // pred_region
    _
  $region33: #{transform_forward.4} parent=0 // pred_fallthru
    _
  // Predicated region
  $region34: #{transform_forward.4} parent=0 // pred_check
    _
  $region35: #{transform_forward.4} parent=0 // pred_check_branch
    %4409 = sbr.rel (0) target = $region37
  $region36: #{transform_forward.4} parent=0 // pred_region
    _
  $region37: #{transform_forward.4} parent=0 // pred_fallthru
    _

// kernel: transform_forward.3
$region0: #{transform_forward.3}
  #allocation0 [shape = 'u32[]', space=smem, size = 0x4, offset = 0x4, fixed_abs, tag = 'smem constant byte address 0x4 - core index']
  #allocation1 [shape = 'u32[144,128]{1,0:T(1,128)}', space=vmem, size = 0x12000, scoped, tag = 'internal scratch']
  %s0 = inlined_call_operand.vmem [shape: f32[2,5,3,384], index: 0, kind: input, shape index: {}]
  %s1 = inlined_call_operand.vmem [shape: bf16[64,3], index: 1, kind: input, shape index: {}]
  %s2 = inlined_call_operand.vmem [shape: f32[64,1], index: 2, kind: input, shape index: {}]
  %s3 = inlined_call_operand.vmem [shape: bf16[128,64], index: 3, kind: input, shape index: {}]
  %s4 = inlined_call_operand.vmem [shape: f32[128,1], index: 4, kind: input, shape index: {}]
  %s5 = inlined_call_operand.vmem [shape: bf16[1024,128], index: 5, kind: input, shape index: {}]
  %s6 = inlined_call_operand.vmem [shape: f32[1024,1], index: 6, kind: input, shape index: {}]
  %s7 = inlined_call_operand.vmem [shape: f32[2,1024,3], index: 7, kind: output, shape index: {}]
  %s8 = sld [smem:[#allocation0]]
  $region65: #{transform_forward.3} parent=0
    _
  %s10 = ssub.s32 1, %s8
  %s11 = scalar_select 0, %s10, %s8
  loop: start=0, step=1, limit=12
  $region2: #{transform_forward.3} parent=0 // loop_pre_header
    _
  $region3: #{transform_forward.3} parent=0 // loop_header
    %s13 = sphi 0, %s17
    %p14 = scmp.ge.s32.totalorder %s13, 12
    %s20 = sphi 0, %s32
    %s21 = sphi 0, %s28
    %s22 = sphi 0, %s20
    %s23 = sphi 0, %s21
    %s24 = sphi 0, %s22
    %s25 = sphi 0, %s23
    %s37 = sphi 0, %s39
    %s40 = sphi 0, %s37
    %s41 = sphi 0, %s40
    %s57 = sphi 0, %s41
    %s61 = sphi 0, %s61
    %s63 = sphi 0, %s61
    %s64 = sphi 0, %s63
    %s78 = sphi 0, %s64
    %s82 = sphi 0, %s82
    %s84 = sphi 0, %s82
    %s85 = sphi 0, %s84
    %s99 = sphi 0, %s85
    %s103 = sphi 0, %s103
    %s105 = sphi 0, %s103
    %s106 = sphi 0, %s105
    %s120 = sphi 0, %s106
    %s124 = sphi 0, %s124
    %s126 = sphi 0, %s124
    %s127 = sphi 0, %s126
    %s141 = sphi 0, %s127
    %s145 = sphi 0, %s145
    %s147 = sphi 0, %s145
    %s148 = sphi 0, %s147
    %s162 = sphi 0, %s148
    %s166 = sphi 0, %s166
    %s168 = sphi 0, %s166
    %s169 = sphi 0, %s168
    %s183 = sphi 0, %s169
    %s189 = sphi 0, %s191
    %s192 = sphi 0, %s189
    %s193 = sphi 0, %s192
    %s209 = sphi 0, %s193
  $region4: #{transform_forward.3} parent=0 // loop_header_branch
    %16 = sbr.rel (%p14) target = $region8
  $region5: #{transform_forward.3} parent=0 // loop_body
    %s18 = ssub.s32 %s13, 1
    %s19 = ssub.s32 %s13, 2
    %s26 = sadd.s32 1, %s21
    %p27 = scmp.ge.s32.totalorder %s26, 5
    %s28 = scalar_select %p27, 0, %s26
    %s29 = sadd.s32 1, %s20
    %s30 = scalar_select %p27, %s29, %s20
    %p31 = scmp.ge.s32.totalorder %s30, 2
    %s32 = scalar_select %p31, 0, %s30
    %s33 = ssub.s32 %s20, %s32
    %s34 = ssub.s32 %s21, %s28
    %s35 = sor.u32 %s33, %s34
    %p36 = scmp.eq.s32.totalorder %s35, 0
    %s38 = sadd.s32 %s37, 1
    %s39 = scalar_select %p36, %s37, %s38
    %p42 = pneg %p36
    %p43 = scmp.eq.s32.totalorder %s13, 9
    %p44 = por %p42, %p43
    %p45 = scmp.ne.s32.totalorder %s37, %s40
    %p46 = scmp.eq.s32.totalorder %s13, 0
    %p47 = por %p45, %p46
    %p48 = scmp.ne.s32.totalorder %s37, %s40
    %p49 = scmp.eq.s32.totalorder %s18, 9
    %p50 = por %p48, %p49
    %p51 = scmp.ne.s32.totalorder %s40, %s41
    %p52 = scmp.eq.s32.totalorder %s18, 0
    %p53 = por %p51, %p52
    %p54 = scmp.ne.s32.totalorder %s40, %s41
    %p55 = scmp.eq.s32.totalorder %s19, 9
    %p56 = por %p54, %p55
    %p58 = scmp.ne.s32.totalorder %s41, %s57
    %p59 = scmp.eq.s32.totalorder %s19, 0
    %p60 = por %p58, %p59
    %s62 = sadd.s32 %s61, 1
    %p65 = scmp.eq.s32.totalorder %s13, 9
    %p66 = scmp.ne.s32.totalorder %s61, %s63
    %p67 = scmp.eq.s32.totalorder %s13, 0
    %p68 = por %p66, %p67
    %p69 = scmp.ne.s32.totalorder %s61, %s63
    %p70 = scmp.eq.s32.totalorder %s18, 9
    %p71 = por %p69, %p70
    %p72 = scmp.ne.s32.totalorder %s63, %s64
    %p73 = scmp.eq.s32.totalorder %s18, 0
    %p74 = por %p72, %p73
    %p75 = scmp.ne.s32.totalorder %s63, %s64
    %p76 = scmp.eq.s32.totalorder %s19, 9
    %p77 = por %p75, %p76
    %p79 = scmp.ne.s32.totalorder %s64, %s78
    %p80 = scmp.eq.s32.totalorder %s19, 0
    %p81 = por %p79, %p80
    %s83 = sadd.s32 %s82, 1
    %p86 = scmp.eq.s32.totalorder %s13, 9
    %p87 = scmp.ne.s32.totalorder %s82, %s84
    %p88 = scmp.eq.s32.totalorder %s13, 0
    %p89 = por %p87, %p88
    %p90 = scmp.ne.s32.totalorder %s82, %s84
    %p91 = scmp.eq.s32.totalorder %s18, 9
    %p92 = por %p90, %p91
    %p93 = scmp.ne.s32.totalorder %s84, %s85
    %p94 = scmp.eq.s32.totalorder %s18, 0
    %p95 = por %p93, %p94
    %p96 = scmp.ne.s32.totalorder %s84, %s85
    %p97 = scmp.eq.s32.totalorder %s19, 9
    %p98 = por %p96, %p97
    %p100 = scmp.ne.s32.totalorder %s85, %s99
    %p101 = scmp.eq.s32.totalorder %s19, 0
    %p102 = por %p100, %p101
    %s104 = sadd.s32 %s103, 1
    %p107 = scmp.eq.s32.totalorder %s13, 9
    %p108 = scmp.ne.s32.totalorder %s103, %s105
    %p109 = scmp.eq.s32.totalorder %s13, 0
    %p110 = por %p108, %p109
    %p111 = scmp.ne.s32.totalorder %s103, %s105
    %p112 = scmp.eq.s32.totalorder %s18, 9
    %p113 = por %p111, %p112
    %p114 = scmp.ne.s32.totalorder %s105, %s106
    %p115 = scmp.eq.s32.totalorder %s18, 0
    %p116 = por %p114, %p115
    %p117 = scmp.ne.s32.totalorder %s105, %s106
    %p118 = scmp.eq.s32.totalorder %s19, 9
    %p119 = por %p117, %p118
    %p121 = scmp.ne.s32.totalorder %s106, %s120
    %p122 = scmp.eq.s32.totalorder %s19, 0
    %p123 = por %p121, %p122
    %s125 = sadd.s32 %s124, 1
    %p128 = scmp.eq.s32.totalorder %s13, 9
    %p129 = scmp.ne.s32.totalorder %s124, %s126
    %p130 = scmp.eq.s32.totalorder %s13, 0
    %p131 = por %p129, %p130
    %p132 = scmp.ne.s32.totalorder %s124, %s126
    %p133 = scmp.eq.s32.totalorder %s18, 9
    %p134 = por %p132, %p133
    %p135 = scmp.ne.s32.totalorder %s126, %s127
    %p136 = scmp.eq.s32.totalorder %s18, 0
    %p137 = por %p135, %p136
    %p138 = scmp.ne.s32.totalorder %s126, %s127
    %p139 = scmp.eq.s32.totalorder %s19, 9
    %p140 = por %p138, %p139
    %p142 = scmp.ne.s32.totalorder %s127, %s141
    %p143 = scmp.eq.s32.totalorder %s19, 0
    %p144 = por %p142, %p143
    %s146 = sadd.s32 %s145, 1
    %p149 = scmp.eq.s32.totalorder %s13, 9
    %p150 = scmp.ne.s32.totalorder %s145, %s147
    %p151 = scmp.eq.s32.totalorder %s13, 0
    %p152 = por %p150, %p151
    %p153 = scmp.ne.s32.totalorder %s145, %s147
    %p154 = scmp.eq.s32.totalorder %s18, 9
    %p155 = por %p153, %p154
    %p156 = scmp.ne.s32.totalorder %s147, %s148
    %p157 = scmp.eq.s32.totalorder %s18, 0
    %p158 = por %p156, %p157
    %p159 = scmp.ne.s32.totalorder %s147, %s148
    %p160 = scmp.eq.s32.totalorder %s19, 9
    %p161 = por %p159, %p160
    %p163 = scmp.ne.s32.totalorder %s148, %s162
    %p164 = scmp.eq.s32.totalorder %s19, 0
    %p165 = por %p163, %p164
    %s167 = sadd.s32 %s166, 1
    %p170 = scmp.eq.s32.totalorder %s13, 9
    %p171 = scmp.ne.s32.totalorder %s166, %s168
    %p172 = scmp.eq.s32.totalorder %s13, 0
    %p173 = por %p171, %p172
    %p174 = scmp.ne.s32.totalorder %s166, %s168
    %p175 = scmp.eq.s32.totalorder %s18, 9
    %p176 = por %p174, %p175
    %p177 = scmp.ne.s32.totalorder %s168, %s169
    %p178 = scmp.eq.s32.totalorder %s18, 0
    %p179 = por %p177, %p178
    %p180 = scmp.ne.s32.totalorder %s168, %s169
    %p181 = scmp.eq.s32.totalorder %s19, 9
    %p182 = por %p180, %p181
    %p184 = scmp.ne.s32.totalorder %s169, %s183
    %p185 = scmp.eq.s32.totalorder %s19, 0
    %p186 = por %p184, %p185
    %s187 = ssub.s32 %s20, %s32
    %p188 = scmp.eq.s32.totalorder %s187, 0
    %s190 = sadd.s32 %s189, 1
    %s191 = scalar_select %p188, %s189, %s190
    %p194 = pneg %p188
    %p195 = scmp.eq.s32.totalorder %s13, 9
    %p196 = por %p194, %p195
    %p197 = scmp.ne.s32.totalorder %s189, %s192
    %p198 = scmp.eq.s32.totalorder %s13, 0
    %p199 = por %p197, %p198
    %p200 = scmp.ne.s32.totalorder %s189, %s192
    %p201 = scmp.eq.s32.totalorder %s18, 9
    %p202 = por %p200, %p201
    %p203 = scmp.ne.s32.totalorder %s192, %s193
    %p204 = scmp.eq.s32.totalorder %s18, 0
    %p205 = por %p203, %p204
    %p206 = scmp.ne.s32.totalorder %s192, %s193
    %p207 = scmp.eq.s32.totalorder %s19, 9
    %p208 = por %p206, %p207
    %p210 = scmp.ne.s32.totalorder %s193, %s209
    %p211 = scmp.eq.s32.totalorder %s19, 0
    %p212 = por %p210, %p211
    %p213 = scmp.le.s32.totalorder 1, %s13
    %p214 = scmp.lt.s32.totalorder %s13, 11
    %p215 = pnand %p213, %p214
    %p216 = pneg %p215
    // Predicated region
    $region9: #{transform_forward.3} parent=5 // pred_check
      _
    $region10: #{transform_forward.3} parent=5 // pred_check_branch
      %218 = sbr.rel (%p215) target = $region12
    $region11: #{transform_forward.3} parent=5 // pred_region
      %s219 = ssub.s32 %s13, 1
      // Predicated region
      $region13: #{transform_forward.3} parent=11 // pred_check
        %p220 = pneg %p74
      $region14: #{transform_forward.3} parent=11 // pred_check_branch
        %222 = sbr.rel (%p220) target = $region16
      $region15: #{transform_forward.3} parent=11 // pred_region
        _
      $region16: #{transform_forward.3} parent=11 // pred_fallthru
        _
      // Predicated region
      $region17: #{transform_forward.3} parent=11 // pred_check
        %p223 = pneg %p95
      $region18: #{transform_forward.3} parent=11 // pred_check_branch
        %225 = sbr.rel (%p223) target = $region20
      $region19: #{transform_forward.3} parent=11 // pred_region
        _
      $region20: #{transform_forward.3} parent=11 // pred_fallthru
        _
      // Predicated region
      $region21: #{transform_forward.3} parent=11 // pred_check
        %p226 = pneg %p116
      $region22: #{transform_forward.3} parent=11 // pred_check_branch
        %228 = sbr.rel (%p226) target = $region24
      $region23: #{transform_forward.3} parent=11 // pred_region
        _
      $region24: #{transform_forward.3} parent=11 // pred_fallthru
        _
      // Predicated region
      $region25: #{transform_forward.3} parent=11 // pred_check
        %p229 = pneg %p137
      $region26: #{transform_forward.3} parent=11 // pred_check_branch
        %231 = sbr.rel (%p229) target = $region28
      $region27: #{transform_forward.3} parent=11 // pred_region
        _
      $region28: #{transform_forward.3} parent=11 // pred_fallthru
        _
      // Predicated region
      $region29: #{transform_forward.3} parent=11 // pred_check
        %p232 = pneg %p158
      $region30: #{transform_forward.3} parent=11 // pred_check_branch
        %234 = sbr.rel (%p232) target = $region32
      $region31: #{transform_forward.3} parent=11 // pred_region
        _
      $region32: #{transform_forward.3} parent=11 // pred_fallthru
        _
      // Predicated region
      $region33: #{transform_forward.3} parent=11 // pred_check
        %p235 = pneg %p179
      $region34: #{transform_forward.3} parent=11 // pred_check_branch
        %237 = sbr.rel (%p235) target = $region36
      $region35: #{transform_forward.3} parent=11 // pred_region
        _
      $region36: #{transform_forward.3} parent=11 // pred_fallthru
        _
    $region12: #{transform_forward.3} parent=5 // pred_fallthru
      _
    %p238 = scmp.lt.s32.totalorder %s13, 10
    // Predicated region
    $region37: #{transform_forward.3} parent=5 // pred_check
      %p239 = pneg %p238
    $region38: #{transform_forward.3} parent=5 // pred_check_branch
      %241 = sbr.rel (%p239) target = $region40
    $region39: #{transform_forward.3} parent=5 // pred_region
      // Predicated region
      $region41: #{transform_forward.3} parent=39 // pred_check
        %p242 = pneg %p47
      $region42: #{transform_forward.3} parent=39 // pred_check_branch
        %244 = sbr.rel (%p242) target = $region44
      $region43: #{transform_forward.3} parent=39 // pred_region
        %p245 = scmp.lt.s32.totalorder %s20, 1
        %s246 = scalar_select %p245, %s20, 1
        %p247 = scmp.lt.s32.totalorder %s21, 4
        %s248 = scalar_select %p247, %s21, 4
        %s249 = smul.addr %s248, 3
        %s250 = smul.addr %s246, 15
        %s251 = sadd.s32 %s249, %s250
        %s252 = smul.addr %s251, 4
        %s253 = scalar_lea.vmem %s0, %s252
      $region44: #{transform_forward.3} parent=39 // pred_fallthru
        _
    $region40: #{transform_forward.3} parent=5 // pred_fallthru
      _
    %p254 = scmp.le.s32.totalorder 1, %s13
    %p255 = scmp.lt.s32.totalorder %s13, 11
    %p256 = pnand %p254, %p255
    %p257 = pneg %p256
    // Predicated region
    $region45: #{transform_forward.3} parent=5 // pred_check
      _
    $region46: #{transform_forward.3} parent=5 // pred_check_branch
      %259 = sbr.rel (%p256) target = $region48
    $region47: #{transform_forward.3} parent=5 // pred_region
      %s260 = ssub.s32 %s13, 1
      %p261 = scmp.lt.s32.totalorder %s22, 1
      %s262 = scalar_select %p261, %s22, 1
      %p263 = scmp.lt.s32.totalorder %s23, 4
      %s264 = scalar_select %p263, %s23, 4
      %s265 = smul.addr %s264, 3
      %s266 = smul.addr %s262, 15
      %s267 = sadd.s32 %s265, %s266
      %s268 = smul.addr %s267, 4
      %s269 = scalar_lea.vmem %s0, %s268
      %p270 = pneg %p53
      %p271 = pneg %p50
      %p272 = pneg %p74
      %p273 = pneg %p71
      %p274 = pneg %p95
      %p275 = pneg %p92
      %p276 = pneg %p116
      %p277 = pneg %p113
      %p278 = pneg %p137
      %p279 = pneg %p134
      %p280 = pneg %p158
      %p281 = pneg %p155
      %p282 = pneg %p179
      %p283 = pneg %p176
      %p284 = pneg %p205
      %p285 = pneg %p202
      %p286 = scmp.lt.s32.totalorder %s22, 1
      %s287 = scalar_select %p286, %s22, 1
      %s288 = smul.addr %s287, 128
      %s289 = smul.addr %s288, 8
      %s290 = scalar_lea.vmem %s7, %s289
      %p291 = scmp.lt.s32.totalorder %s22, 1
      %s292 = scalar_select %p291, %s22, 1
      %p293 = scmp.lt.s32.totalorder %s23, 4
      %s294 = scalar_select %p293, %s23, 4
      %s295 = smul.addr %s294, 3
      %s296 = smul.addr %s292, 15
      %s297 = sadd.s32 %s295, %s296
      %s298 = smul.addr %s297, 4
      %s299 = scalar_lea.vmem %s0, %s298
      %p300 = scmp.lt.s32.totalorder %s22, 1
      %s301 = scalar_select %p300, %s22, 1
      %s302 = smul.addr %s301, 128
      %s303 = smul.addr %s302, 8
      %s304 = scalar_lea.vmem %s7, %s303
      %v306 = vld [vmem:[%s299] sm:$0x77]
      %v307 = vld [vmem:[%s299 + $0x8] sm:$0x7]
      %v309 = vcombine.high %v306, %v306
      %v311 = vpack.c.bf16 %v306, %v306
      %v312 = vpack.c.bf16 %v309, %v309
      %v313 = vpack.c.bf16 %v307, %v307
      %v314 = vld [vmem:[%s1] sm:$0xf]
      %v315 = vld [vmem:[%s1 + $0x4] sm:$0xf]
      %v316 = vld [vmem:[%s1 + $0x8] sm:$0xf]
      %v317 = vld [vmem:[%s1 + $0xc] sm:$0xf]
      %v318 = vld [vmem:[%s1 + $0x10] sm:$0xf]
      %v319 = vld [vmem:[%s1 + $0x14] sm:$0xf]
      %v320 = vld [vmem:[%s1 + $0x18] sm:$0xf]
      %v321 = vld [vmem:[%s1 + $0x1c] sm:$0xf]
      %v322 = vld [vmem:[%s2] sm:$0xff]
      %v323 = vld [vmem:[%s2 + $0x8] sm:$0xff]
      %v324 = vld [vmem:[%s2 + $0x10] sm:$0xff]
      %v325 = vld [vmem:[%s2 + $0x18] sm:$0xff]
      %v326 = vld [vmem:[%s2 + $0x20] sm:$0xff]
      %v327 = vld [vmem:[%s2 + $0x28] sm:$0xff]
      %v328 = vld [vmem:[%s2 + $0x30] sm:$0xff]
      %v329 = vld [vmem:[%s2 + $0x38] sm:$0xff]
      %331 = vset.pattern.permute.xlu0 0
      %332 = vperm.xlu0 %331, %v322
      %v333 = vpop.permute.xlu0 %332
      %336 = vset.pattern.permute.xlu0 0
      %337 = vperm.xlu0 %336, %v323
      %v338 = vpop.permute.xlu0 %337
      %341 = vset.pattern.permute.xlu0 0
      %342 = vperm.xlu0 %341, %v324
      %v343 = vpop.permute.xlu0 %342
      %346 = vset.pattern.permute.xlu0 0
      %347 = vperm.xlu0 %346, %v325
      %v348 = vpop.permute.xlu0 %347
      %351 = vset.pattern.permute.xlu0 0
      %352 = vperm.xlu0 %351, %v326
      %v353 = vpop.permute.xlu0 %352
      %356 = vset.pattern.permute.xlu0 0
      %357 = vperm.xlu0 %356, %v327
      %v358 = vpop.permute.xlu0 %357
      %361 = vset.pattern.permute.xlu0 0
      %362 = vperm.xlu0 %361, %v328
      %v363 = vpop.permute.xlu0 %362
      %366 = vset.pattern.permute.xlu0 0
      %367 = vperm.xlu0 %366, %v329
      %v368 = vpop.permute.xlu0 %367
      %v378 = vunpack.c.l.b16 %v314
      %v379 = vunpack.c.l.b16 %v315
      %v380 = vunpack.c.l.b16 %v316
      %v381 = vunpack.c.l.b16 %v317
      %v382 = vunpack.c.l.b16 %v318
      %v383 = vunpack.c.l.b16 %v319
      %v384 = vunpack.c.l.b16 %v320
      %v385 = vunpack.c.l.b16 %v321
      %v386 = vpack.c.b16 %v379, %v378
      %v387 = vpack.c.b16 %v381, %v380
      %v388 = vpack.c.b16 %v383, %v382
      %v389 = vpack.c.b16 %v385, %v384
      %vm390 = vcmask 23552
      %v392 = vsel %vm390, %v386, 0
      %v395 = vsel %vm390, %v387, 0
      %v398 = vsel %vm390, %v388, 0
      %v401 = vsel %vm390, %v389, 0
      %vm403 = vcmask 1040384
      %vm404 = vcmask 1041408
      %v405 = vsel %vm403, 4294967295, 65535
      %v406 = vsel %vm404, %v405, 0
      %v408 = vand.u32 %v311, %v406
      %v411 = vand.u32 %v312, %v406
      %v414 = vand.u32 %v313, %v406
      %416 = vmatprep.subr.bf16.mxu0 %v411
      %417 = vmatpush1.bf16.msra.mxu0 %v408
      %418 = vmatprep.subr.bf16.mxu0 0
      %419 = vmatpush1.bf16.msra.mxu0 0
      %420 = vmatprep.subr.bf16.mxu0 0
      %421 = vmatpush1.bf16.msra.mxu0 0
      %422 = vmatprep.subr.bf16.mxu0 0
      %423 = vmatpush1.bf16.msra.mxu0 0
      %424 = vmatprep.subr.bf16.mxu0 0
      %425 = vmatpush1.bf16.msra.mxu0 0
      %426 = vmatprep.subr.bf16.mxu0 0
      %427 = vmatpush1.bf16.msra.mxu0 0
      %428 = vmatprep.subr.bf16.mxu0 0
      %429 = vmatpush1.bf16.msra.mxu0 0
      %430 = vmatprep.subr.bf16.mxu0 0
      %431 = vmatpush1.bf16.msra.mxu0 0
      %432 = vmatprep.subr.bf16.mxu0 0
      %433 = vmatpush1.bf16.msra.mxu0 0
      %434 = vmatprep.subr.bf16.mxu0 0
      %435 = vmatpush1.bf16.msra.mxu0 0
      %436 = vmatprep.subr.bf16.mxu0 0
      %437 = vmatpush1.bf16.msra.mxu0 0
      %438 = vmatprep.subr.bf16.mxu0 0
      %439 = vmatpush1.bf16.msra.mxu0 0
      %440 = vmatprep.subr.bf16.mxu0 0
      %441 = vmatpush1.bf16.msra.mxu0 0
      %442 = vmatprep.subr.bf16.mxu0 0
      %443 = vmatpush1.bf16.msra.mxu0 0
      %444 = vmatprep.subr.bf16.mxu0 0
      %445 = vmatpush1.bf16.msra.mxu0 0
      %446 = vmatprep.subr.bf16.mxu0 0
      %447 = vmatpush1.bf16.msra.mxu0 0
      %448 = vmatprep.mubr.bf16.mxu0 0
      %449 = vmatmul.mubr.bf16.gmra.mrb[0].mxu0 %v392
      %v450 = vpop.f32.mrb[0].mxu0
      %v451 = vadd.f32 %v333, %v450
      %v452 = vpop.f32.mrb[0].mxu0
      %v453 = vadd.f32 %v333, %v452
      %v454 = vpop.f32.mrb[0].mxu0
      %v455 = vadd.f32 %v338, %v454
      %v456 = vpop.f32.mrb[0].mxu0
      %v457 = vadd.f32 %v338, %v456
      %458 = vmatprep.mubr.bf16.mxu0 0
      %459 = vmatmul.mubr.bf16.gmra.mrb[0].mxu0 %v395
      %v460 = vpop.f32.mrb[0].mxu0
      %v461 = vadd.f32 %v343, %v460
      %v462 = vpop.f32.mrb[0].mxu0
      %v463 = vadd.f32 %v343, %v462
      %v464 = vpop.f32.mrb[0].mxu0
      %v465 = vadd.f32 %v348, %v464
      %v466 = vpop.f32.mrb[0].mxu0
      %v467 = vadd.f32 %v348, %v466
      %468 = vmatprep.mubr.bf16.mxu0 0
      %469 = vmatmul.mubr.bf16.gmra.mrb[0].mxu0 %v398
      %v470 = vpop.f32.mrb[0].mxu0
      %v471 = vadd.f32 %v353, %v470
      %v472 = vpop.f32.mrb[0].mxu0
      %v473 = vadd.f32 %v353, %v472
      %v474 = vpop.f32.mrb[0].mxu0
      %v475 = vadd.f32 %v358, %v474
      %v476 = vpop.f32.mrb[0].mxu0
      %v477 = vadd.f32 %v358, %v476
      %478 = vmatprep.mubr.bf16.mxu0 0
      %479 = vmatmul.mubr.bf16.gmra.mrb[0].mxu0 %v401
      %v480 = vpop.f32.mrb[0].mxu0
      %v481 = vadd.f32 %v363, %v480
      %v482 = vpop.f32.mrb[0].mxu0
      %v483 = vadd.f32 %v363, %v482
      %v484 = vpop.f32.mrb[0].mxu0
      %v485 = vadd.f32 %v368, %v484
      %v486 = vpop.f32.mrb[0].mxu0
      %v487 = vadd.f32 %v368, %v486
      %488 = vdwg.mxu0
      %489 = vmatprep.subr.bf16.mxu0 0
      %490 = vmatpush1.bf16.msra.mxu0 %v414
      %491 = vmatprep.subr.bf16.mxu0 0
      %492 = vmatpush1.bf16.msra.mxu0 0
      %493 = vmatprep.subr.bf16.mxu0 0
      %494 = vmatpush1.bf16.msra.mxu0 0
      %495 = vmatprep.subr.bf16.mxu0 0
      %496 = vmatpush1.bf16.msra.mxu0 0
      %497 = vmatprep.subr.bf16.mxu0 0
      %498 = vmatpush1.bf16.msra.mxu0 0
      %499 = vmatprep.subr.bf16.mxu0 0
      %500 = vmatpush1.bf16.msra.mxu0 0
      %501 = vmatprep.subr.bf16.mxu0 0
      %502 = vmatpush1.bf16.msra.mxu0 0
      %503 = vmatprep.subr.bf16.mxu0 0
      %504 = vmatpush1.bf16.msra.mxu0 0
      %505 = vmatprep.subr.bf16.mxu0 0
      %506 = vmatpush1.bf16.msra.mxu0 0
      %507 = vmatprep.subr.bf16.mxu0 0
      %508 = vmatpush1.bf16.msra.mxu0 0
      %509 = vmatprep.subr.bf16.mxu0 0
      %510 = vmatpush1.bf16.msra.mxu0 0
      %511 = vmatprep.subr.bf16.mxu0 0
      %512 = vmatpush1.bf16.msra.mxu0 0
      %513 = vmatprep.subr.bf16.mxu0 0
      %514 = vmatpush1.bf16.msra.mxu0 0
      %515 = vmatprep.subr.bf16.mxu0 0
      %516 = vmatpush1.bf16.msra.mxu0 0
      %517 = vmatprep.subr.bf16.mxu0 0
      %518 = vmatpush1.bf16.msra.mxu0 0
      %519 = vmatprep.subr.bf16.mxu0 0
      %520 = vmatpush1.bf16.msra.mxu0 0
      %521 = vmatprep.mubr.bf16.mxu0 0
      %522 = vmatmul.mubr.bf16.gmra.mrb[0].mxu0 %v392
      %v523 = vpop.f32.mrb[0].mxu0
      %v524 = vadd.f32 %v333, %v523
      %v525 = vpop.f32.mrb[0].mxu0
      %v526 = vpop.f32.mrb[0].mxu0
      %v527 = vadd.f32 %v338, %v526
      %v528 = vpop.f32.mrb[0].mxu0
      %529 = vmatprep.mubr.bf16.mxu0 0
      %530 = vmatmul.mubr.bf16.gmra.mrb[0].mxu0 %v395
      %v531 = vpop.f32.mrb[0].mxu0
      %v532 = vadd.f32 %v343, %v531
      %v533 = vpop.f32.mrb[0].mxu0
      %v534 = vpop.f32.mrb[0].mxu0
      %v535 = vadd.f32 %v348, %v534
      %v536 = vpop.f32.mrb[0].mxu0
      %537 = vmatprep.mubr.bf16.mxu0 0
      %538 = vmatmul.mubr.bf16.gmra.mrb[0].mxu0 %v398
      %v539 = vpop.f32.mrb[0].mxu0
      %v540 = vadd.f32 %v353, %v539
      %v541 = vpop.f32.mrb[0].mxu0
      %v542 = vpop.f32.mrb[0].mxu0
      %v543 = vadd.f32 %v358, %v542
      %v544 = vpop.f32.mrb[0].mxu0
      %545 = vmatprep.mubr.bf16.mxu0 0
      %546 = vmatmul.mubr.bf16.gmra.mrb[0].mxu0 %v401
      %v547 = vpop.f32.mrb[0].mxu0
      %v548 = vadd.f32 %v363, %v547
      %v549 = vpop.f32.mrb[0].mxu0
      %v550 = vpop.f32.mrb[0].mxu0
      %v551 = vadd.f32 %v368, %v550
      %v552 = vpop.f32.mrb[0].mxu0
      %553 = vdwg.mxu0
      %v554 = vmax.f32 %v451, 0.0
      %v555 = vmax.f32 %v453, 0.0
      %v556 = vmax.f32 %v524, 0.0
      %v557 = vmax.f32 %v455, 0.0
      %v558 = vmax.f32 %v457, 0.0
      %v559 = vmax.f32 %v527, 0.0
      %v560 = vmax.f32 %v461, 0.0
      %v561 = vmax.f32 %v463, 0.0
      %v562 = vmax.f32 %v532, 0.0
      %v563 = vmax.f32 %v465, 0.0
      %v564 = vmax.f32 %v467, 0.0
      %v565 = vmax.f32 %v535, 0.0
      %v566 = vmax.f32 %v471, 0.0
      %v567 = vmax.f32 %v473, 0.0
      %v568 = vmax.f32 %v540, 0.0
      %v569 = vmax.f32 %v475, 0.0
      %v570 = vmax.f32 %v477, 0.0
      %v571 = vmax.f32 %v543, 0.0
      %v572 = vmax.f32 %v481, 0.0
      %v573 = vmax.f32 %v483, 0.0
      %v574 = vmax.f32 %v548, 0.0
      %v575 = vmax.f32 %v485, 0.0
      %v576 = vmax.f32 %v487, 0.0
      %v577 = vmax.f32 %v551, 0.0
      %v578 = vld [vmem:[%s3] sm:$0xf]
      %v579 = vld [vmem:[%s3 + $0x4] sm:$0xf]
      %v580 = vld [vmem:[%s3 + $0x8] sm:$0xf]
      %v581 = vld [vmem:[%s3 + $0xc] sm:$0xf]
      %v582 = vld [vmem:[%s3 + $0x10] sm:$0xf]
      %v583 = vld [vmem:[%s3 + $0x14] sm:$0xf]
      %v584 = vld [vmem:[%s3 + $0x18] sm:$0xf]
      %v585 = vld [vmem:[%s3 + $0x1c] sm:$0xf]
      %v586 = vld [vmem:[%s3 + $0x20] sm:$0xf]
      %v587 = vld [vmem:[%s3 + $0x24] sm:$0xf]
      %v588 = vld [vmem:[%s3 + $0x28] sm:$0xf]
      %v589 = vld [vmem:[%s3 + $0x2c] sm:$0xf]
      %v590 = vld [vmem:[%s3 + $0x30] sm:$0xf]
      %v591 = vld [vmem:[%s3 + $0x34] sm:$0xf]
      %v592 = vld [vmem:[%s3 + $0x38] sm:$0xf]
      %v593 = vld [vmem:[%s3 + $0x3c] sm:$0xf]
      %v594 = vpack.c.bf16 %v557, %v554
      %v595 = vpack.c.bf16 %v558, %v555
      %v596 = vpack.c.bf16 %v559, %v556
      %v597 = vpack.c.bf16 %v563, %v560
      %v598 = vpack.c.bf16 %v564, %v561
      %v599 = vpack.c.bf16 %v565, %v562
      %v600 = vpack.c.bf16 %v569, %v566
      %v601 = vpack.c.bf16 %v570, %v567
      %v602 = vpack.c.bf16 %v571, %v568
      %v603 = vpack.c.bf16 %v575, %v572
      %v604 = vpack.c.bf16 %v576, %v573
      %v605 = vpack.c.bf16 %v577, %v574
      %v606 = vld [vmem:[%s4] sm:$0xff]
      %v607 = vld [vmem:[%s4 + $0x8] sm:$0xff]
      %v608 = vld [vmem:[%s4 + $0x10] sm:$0xff]
      %v609 = vld [vmem:[%s4 + $0x18] sm:$0xff]
      %v610 = vld [vmem:[%s4 + $0x20] sm:$0xff]
      %v611 = vld [vmem:[%s4 + $0x28] sm:$0xff]
      %v612 = vld [vmem:[%s4 + $0x30] sm:$0xff]
      %v613 = vld [vmem:[%s4 + $0x38] sm:$0xff]
      %v614 = vld [vmem:[%s4 + $0x40] sm:$0xff]
      %v615 = vld [vmem:[%s4 + $0x48] sm:$0xff]
      %v616 = vld [vmem:[%s4 + $0x50] sm:$0xff]
      %v617 = vld [vmem:[%s4 + $0x58] sm:$0xff]
      %v618 = vld [vmem:[%s4 + $0x60] sm:$0xff]
      %v619 = vld [vmem:[%s4 + $0x68] sm:$0xff]
      %v620 = vld [vmem:[%s4 + $0x70] sm:$0xff]
      %v621 = vld [vmem:[%s4 + $0x78] sm:$0xff]
      %623 = vset.pattern.permute.xlu0 0
      %624 = vperm.xlu0 %623, %v606
      %v625 = vpop.permute.xlu0 %624
      %628 = vset.pattern.permute.xlu0 0
      %629 = vperm.xlu0 %628, %v607
      %v630 = vpop.permute.xlu0 %629
      %633 = vset.pattern.permute.xlu0 0
      %634 = vperm.xlu0 %633, %v608
      %v635 = vpop.permute.xlu0 %634
      %638 = vset.pattern.permute.xlu0 0
      %639 = vperm.xlu0 %638, %v609
      %v640 = vpop.permute.xlu0 %639
      %643 = vset.pattern.permute.xlu0 0
      %644 = vperm.xlu0 %643, %v610
      %v645 = vpop.permute.xlu0 %644
      %648 = vset.pattern.permute.xlu0 0
      %649 = vperm.xlu0 %648, %v611
      %v650 = vpop.permute.xlu0 %649
      %653 = vset.pattern.permute.xlu0 0
      %654 = vperm.xlu0 %653, %v612
      %v655 = vpop.permute.xlu0 %654
      %658 = vset.pattern.permute.xlu0 0
      %659 = vperm.xlu0 %658, %v613
      %v660 = vpop.permute.xlu0 %659
      %663 = vset.pattern.permute.xlu0 0
      %664 = vperm.xlu0 %663, %v614
      %v665 = vpop.permute.xlu0 %664
      %668 = vset.pattern.permute.xlu0 0
      %669 = vperm.xlu0 %668, %v615
      %v670 = vpop.permute.xlu0 %669
      %673 = vset.pattern.permute.xlu0 0
      %674 = vperm.xlu0 %673, %v616
      %v675 = vpop.permute.xlu0 %674
      %678 = vset.pattern.permute.xlu0 0
      %679 = vperm.xlu0 %678, %v617
      %v680 = vpop.permute.xlu0 %679
      %683 = vset.pattern.permute.xlu0 0
      %684 = vperm.xlu0 %683, %v618
      %v685 = vpop.permute.xlu0 %684
      %688 = vset.pattern.permute.xlu0 0
      %689 = vperm.xlu0 %688, %v619
      %v690 = vpop.permute.xlu0 %689
      %693 = vset.pattern.permute.xlu0 0
      %694 = vperm.xlu0 %693, %v620
      %v695 = vpop.permute.xlu0 %694
      %698 = vset.pattern.permute.xlu0 0
      %699 = vperm.xlu0 %698, %v621
      %v700 = vpop.permute.xlu0 %699
      %v718 = vunpack.c.l.b16 %v578
      %v719 = vunpack.c.l.b16 %v579
      %v720 = vunpack.c.l.b16 %v580
      %v721 = vunpack.c.l.b16 %v581
      %v722 = vunpack.c.l.b16 %v582
      %v723 = vunpack.c.l.b16 %v583
      %v724 = vunpack.c.l.b16 %v584
      %v725 = vunpack.c.l.b16 %v585
      %v726 = vunpack.c.l.b16 %v586
      %v727 = vunpack.c.l.b16 %v587
      %v728 = vunpack.c.l.b16 %v588
      %v729 = vunpack.c.l.b16 %v589
      %v730 = vunpack.c.l.b16 %v590
      %v731 = vunpack.c.l.b16 %v591
      %v732 = vunpack.c.l.b16 %v592
      %v733 = vunpack.c.l.b16 %v593
      %v734 = vpack.c.b16 %v719, %v718
      %v735 = vpack.c.b16 %v721, %v720
      %v736 = vpack.c.b16 %v723, %v722
      %v737 = vpack.c.b16 %v725, %v724
      %v738 = vpack.c.b16 %v727, %v726
      %v739 = vpack.c.b16 %v729, %v728
      %v740 = vpack.c.b16 %v731, %v730
      %v741 = vpack.c.b16 %v733, %v732
      %vm742 = vcmask 523264
      %v744 = vsel %vm742, %v734, 0
      %v747 = vsel %vm742, %v735, 0
      %v750 = vsel %vm742, %v736, 0
      %v753 = vsel %vm742, %v737, 0
      %v756 = vsel %vm742, %v738, 0
      %v759 = vsel %vm742, %v739, 0
      %v762 = vsel %vm742, %v740, 0
      %v765 = vsel %vm742, %v741, 0
      %767 = vmatprep.subr.bf16.mxu0 %v595
      %768 = vmatpush1.bf16.msra.mxu0 %v594
      %769 = vmatprep.subr.bf16.mxu0 %v598
      %770 = vmatpush1.bf16.msra.mxu0 %v597
      %771 = vmatprep.subr.bf16.mxu0 %v601
      %772 = vmatpush1.bf16.msra.mxu0 %v600
      %773 = vmatprep.subr.bf16.mxu0 %v604
      %774 = vmatpush1.bf16.msra.mxu0 %v603
      %775 = vmatprep.subr.bf16.mxu0 0
      %776 = vmatpush1.bf16.msra.mxu0 0
      %777 = vmatprep.subr.bf16.mxu0 0
      %778 = vmatpush1.bf16.msra.mxu0 0
      %779 = vmatprep.subr.bf16.mxu0 0
      %780 = vmatpush1.bf16.msra.mxu0 0
      %781 = vmatprep.subr.bf16.mxu0 0
      %782 = vmatpush1.bf16.msra.mxu0 0
      %783 = vmatprep.subr.bf16.mxu0 0
      %784 = vmatpush1.bf16.msra.mxu0 0
      %785 = vmatprep.subr.bf16.mxu0 0
      %786 = vmatpush1.bf16.msra.mxu0 0
      %787 = vmatprep.subr.bf16.mxu0 0
      %788 = vmatpush1.bf16.msra.mxu0 0
      %789 = vmatprep.subr.bf16.mxu0 0
      %790 = vmatpush1.bf16.msra.mxu0 0
      %791 = vmatprep.subr.bf16.mxu0 0
      %792 = vmatpush1.bf16.msra.mxu0 0
      %793 = vmatprep.subr.bf16.mxu0 0
      %794 = vmatpush1.bf16.msra.mxu0 0
      %795 = vmatprep.subr.bf16.mxu0 0
      %796 = vmatpush1.bf16.msra.mxu0 0
      %797 = vmatprep.subr.bf16.mxu0 0
      %798 = vmatpush1.bf16.msra.mxu0 0
      %799 = vmatprep.mubr.bf16.mxu0 0
      %800 = vmatmul.mubr.bf16.gmra.mrb[0].mxu0 %v744
      %v801 = vpop.f32.mrb[0].mxu0
      %v802 = vadd.f32 %v625, %v801
      %v803 = vpop.f32.mrb[0].mxu0
      %v804 = vadd.f32 %v625, %v803
      %v805 = vpop.f32.mrb[0].mxu0
      %v806 = vadd.f32 %v630, %v805
      %v807 = vpop.f32.mrb[0].mxu0
      %v808 = vadd.f32 %v630, %v807
      %809 = vmatprep.mubr.bf16.mxu0 0
      %810 = vmatmul.mubr.bf16.gmra.mrb[0].mxu0 %v747
      %v811 = vpop.f32.mrb[0].mxu0
      %v812 = vadd.f32 %v635, %v811
      %v813 = vpop.f32.mrb[0].mxu0
      %v814 = vadd.f32 %v635, %v813
      %v815 = vpop.f32.mrb[0].mxu0
      %v816 = vadd.f32 %v640, %v815
      %v817 = vpop.f32.mrb[0].mxu0
      %v818 = vadd.f32 %v640, %v817
      %819 = vmatprep.mubr.bf16.mxu0 0
      %820 = vmatmul.mubr.bf16.gmra.mrb[0].mxu0 %v750
      %v821 = vpop.f32.mrb[0].mxu0
      %v822 = vadd.f32 %v645, %v821
      %v823 = vpop.f32.mrb[0].mxu0
      %v824 = vadd.f32 %v645, %v823
      %v825 = vpop.f32.mrb[0].mxu0
      %v826 = vadd.f32 %v650, %v825
      %v827 = vpop.f32.mrb[0].mxu0
      %v828 = vadd.f32 %v650, %v827
      %829 = vmatprep.mubr.bf16.mxu0 0
      %830 = vmatmul.mubr.bf16.gmra.mrb[0].mxu0 %v753
      %v831 = vpop.f32.mrb[0].mxu0
      %v832 = vadd.f32 %v655, %v831
      %v833 = vpop.f32.mrb[0].mxu0
      %v834 = vadd.f32 %v655, %v833
      %v835 = vpop.f32.mrb[0].mxu0
      %v836 = vadd.f32 %v660, %v835
      %v837 = vpop.f32.mrb[0].mxu0
      %v838 = vadd.f32 %v660, %v837
      %839 = vmatprep.mubr.bf16.mxu0 0
      %840 = vmatmul.mubr.bf16.gmra.mrb[0].mxu0 %v756
      %v841 = vpop.f32.mrb[0].mxu0
      %v842 = vadd.f32 %v665, %v841
      %v843 = vpop.f32.mrb[0].mxu0
      %v844 = vadd.f32 %v665, %v843
      %v845 = vpop.f32.mrb[0].mxu0
      %v846 = vadd.f32 %v670, %v845
      %v847 = vpop.f32.mrb[0].mxu0
      %v848 = vadd.f32 %v670, %v847
      %849 = vmatprep.mubr.bf16.mxu0 0
      %850 = vmatmul.mubr.bf16.gmra.mrb[0].mxu0 %v759
      %v851 = vpop.f32.mrb[0].mxu0
      %v852 = vadd.f32 %v675, %v851
      %v853 = vpop.f32.mrb[0].mxu0
      %v854 = vadd.f32 %v675, %v853
      %v855 = vpop.f32.mrb[0].mxu0
      %v856 = vadd.f32 %v680, %v855
      %v857 = vpop.f32.mrb[0].mxu0
      %v858 = vadd.f32 %v680, %v857
      %859 = vmatprep.mubr.bf16.mxu0 0
      %860 = vmatmul.mubr.bf16.gmra.mrb[0].mxu0 %v762
      %v861 = vpop.f32.mrb[0].mxu0
      %v862 = vadd.f32 %v685, %v861
      %v863 = vpop.f32.mrb[0].mxu0
      %v864 = vadd.f32 %v685, %v863
      %v865 = vpop.f32.mrb[0].mxu0
      %v866 = vadd.f32 %v690, %v865
      %v867 = vpop.f32.mrb[0].mxu0
      %v868 = vadd.f32 %v690, %v867
      %869 = vmatprep.mubr.bf16.mxu0 0
      %870 = vmatmul.mubr.bf16.gmra.mrb[0].mxu0 %v765
      %v871 = vpop.f32.mrb[0].mxu0
      %v872 = vadd.f32 %v695, %v871
      %v873 = vpop.f32.mrb[0].mxu0
      %v874 = vadd.f32 %v695, %v873
      %v875 = vpop.f32.mrb[0].mxu0
      %v876 = vadd.f32 %v700, %v875
      %v877 = vpop.f32.mrb[0].mxu0
      %v878 = vadd.f32 %v700, %v877
      %879 = vdwg.mxu0
      %880 = vmatprep.subr.bf16.mxu0 0
      %881 = vmatpush1.bf16.msra.mxu0 %v596
      %882 = vmatprep.subr.bf16.mxu0 0
      %883 = vmatpush1.bf16.msra.mxu0 %v599
      %884 = vmatprep.subr.bf16.mxu0 0
      %885 = vmatpush1.bf16.msra.mxu0 %v602
      %886 = vmatprep.subr.bf16.mxu0 0
      %887 = vmatpush1.bf16.msra.mxu0 %v605
      %888 = vmatprep.subr.bf16.mxu0 0
      %889 = vmatpush1.bf16.msra.mxu0 0
      %890 = vmatprep.subr.bf16.mxu0 0
      %891 = vmatpush1.bf16.msra.mxu0 0
      %892 = vmatprep.subr.bf16.mxu0 0
      %893 = vmatpush1.bf16.msra.mxu0 0
      %894 = vmatprep.subr.bf16.mxu0 0
      %895 = vmatpush1.bf16.msra.mxu0 0
      %896 = vmatprep.subr.bf16.mxu0 0
      %897 = vmatpush1.bf16.msra.mxu0 0
      %898 = vmatprep.subr.bf16.mxu0 0
      %899 = vmatpush1.bf16.msra.mxu0 0
      %900 = vmatprep.subr.bf16.mxu0 0
      %901 = vmatpush1.bf16.msra.mxu0 0
      %902 = vmatprep.subr.bf16.mxu0 0
      %903 = vmatpush1.bf16.msra.mxu0 0
      %904 = vmatprep.subr.bf16.mxu0 0
      %905 = vmatpush1.bf16.msra.mxu0 0
      %906 = vmatprep.subr.bf16.mxu0 0
      %907 = vmatpush1.bf16.msra.mxu0 0
      %908 = vmatprep.subr.bf16.mxu0 0
      %909 = vmatpush1.bf16.msra.mxu0 0
      %910 = vmatprep.subr.bf16.mxu0 0
      %911 = vmatpush1.bf16.msra.mxu0 0
      %912 = vmatprep.mubr.bf16.mxu0 0
      %913 = vmatmul.mubr.bf16.gmra.mrb[0].mxu0 %v744
      %v914 = vpop.f32.mrb[0].mxu0
      %v915 = vadd.f32 %v625, %v914
      %v916 = vpop.f32.mrb[0].mxu0
      %v917 = vpop.f32.mrb[0].mxu0
      %v918 = vadd.f32 %v630, %v917
      %v919 = vpop.f32.mrb[0].mxu0
      %920 = vmatprep.mubr.bf16.mxu0 0
      %921 = vmatmul.mubr.bf16.gmra.mrb[0].mxu0 %v747
      %v922 = vpop.f32.mrb[0].mxu0
      %v923 = vadd.f32 %v635, %v922
      %v924 = vpop.f32.mrb[0].mxu0
      %v925 = vpop.f32.mrb[0].mxu0
      %v926 = vadd.f32 %v640, %v925
      %v927 = vpop.f32.mrb[0].mxu0
      %928 = vmatprep.mubr.bf16.mxu0 0
      %929 = vmatmul.mubr.bf16.gmra.mrb[0].mxu0 %v750
      %v930 = vpop.f32.mrb[0].mxu0
      %v931 = vadd.f32 %v645, %v930
      %v932 = vpop.f32.mrb[0].mxu0
      %v933 = vpop.f32.mrb[0].mxu0
      %v934 = vadd.f32 %v650, %v933
      %v935 = vpop.f32.mrb[0].mxu0
      %936 = vmatprep.mubr.bf16.mxu0 0
      %937 = vmatmul.mubr.bf16.gmra.mrb[0].mxu0 %v753
      %v938 = vpop.f32.mrb[0].mxu0
      %v939 = vadd.f32 %v655, %v938
      %v940 = vpop.f32.mrb[0].mxu0
      %v941 = vpop.f32.mrb[0].mxu0
      %v942 = vadd.f32 %v660, %v941
      %v943 = vpop.f32.mrb[0].mxu0
      %944 = vmatprep.mubr.bf16.mxu0 0
      %945 = vmatmul.mubr.bf16.gmra.mrb[0].mxu0 %v756
      %v946 = vpop.f32.mrb[0].mxu0
      %v947 = vadd.f32 %v665, %v946
      %v948 = vpop.f32.mrb[0].mxu0
      %v949 = vpop.f32.mrb[0].mxu0
      %v950 = vadd.f32 %v670, %v949
      %v951 = vpop.f32.mrb[0].mxu0
      %952 = vmatprep.mubr.bf16.mxu0 0
      %953 = vmatmul.mubr.bf16.gmra.mrb[0].mxu0 %v759
      %v954 = vpop.f32.mrb[0].mxu0
      %v955 = vadd.f32 %v675, %v954
      %v956 = vpop.f32.mrb[0].mxu0
      %v957 = vpop.f32.mrb[0].mxu0
      %v958 = vadd.f32 %v680, %v957
      %v959 = vpop.f32.mrb[0].mxu0
      %960 = vmatprep.mubr.bf16.mxu0 0
      %961 = vmatmul.mubr.bf16.gmra.mrb[0].mxu0 %v762
      %v962 = vpop.f32.mrb[0].mxu0
      %v963 = vadd.f32 %v685, %v962
      %v964 = vpop.f32.mrb[0].mxu0
      %v965 = vpop.f32.mrb[0].mxu0
      %v966 = vadd.f32 %v690, %v965
      %v967 = vpop.f32.mrb[0].mxu0
      %968 = vmatprep.mubr.bf16.mxu0 0
      %969 = vmatmul.mubr.bf16.gmra.mrb[0].mxu0 %v765
      %v970 = vpop.f32.mrb[0].mxu0
      %v971 = vadd.f32 %v695, %v970
      %v972 = vpop.f32.mrb[0].mxu0
      %v973 = vpop.f32.mrb[0].mxu0
      %v974 = vadd.f32 %v700, %v973
      %v975 = vpop.f32.mrb[0].mxu0
      %976 = vdwg.mxu0
      %v977 = vmax.f32 %v802, 0.0
      %v978 = vmax.f32 %v804, 0.0
      %v979 = vmax.f32 %v915, 0.0
      %v980 = vmax.f32 %v806, 0.0
      %v981 = vmax.f32 %v808, 0.0
      %v982 = vmax.f32 %v918, 0.0
      %v983 = vmax.f32 %v812, 0.0
      %v984 = vmax.f32 %v814, 0.0
      %v985 = vmax.f32 %v923, 0.0
      %v986 = vmax.f32 %v816, 0.0
      %v987 = vmax.f32 %v818, 0.0
      %v988 = vmax.f32 %v926, 0.0
      %v989 = vmax.f32 %v822, 0.0
      %v990 = vmax.f32 %v824, 0.0
      %v991 = vmax.f32 %v931, 0.0
      %v992 = vmax.f32 %v826, 0.0
      %v993 = vmax.f32 %v828, 0.0
      %v994 = vmax.f32 %v934, 0.0
      %v995 = vmax.f32 %v832, 0.0
      %v996 = vmax.f32 %v834, 0.0
      %v997 = vmax.f32 %v939, 0.0
      %v998 = vmax.f32 %v836, 0.0
      %v999 = vmax.f32 %v838, 0.0
      %v1000 = vmax.f32 %v942, 0.0
      %v1001 = vmax.f32 %v842, 0.0
      %v1002 = vmax.f32 %v844, 0.0
      %v1003 = vmax.f32 %v947, 0.0
      %v1004 = vmax.f32 %v846, 0.0
      %v1005 = vmax.f32 %v848, 0.0
      %v1006 = vmax.f32 %v950, 0.0
      %v1007 = vmax.f32 %v852, 0.0
      %v1008 = vmax.f32 %v854, 0.0
      %v1009 = vmax.f32 %v955, 0.0
      %v1010 = vmax.f32 %v856, 0.0
      %v1011 = vmax.f32 %v858, 0.0
      %v1012 = vmax.f32 %v958, 0.0
      %v1013 = vmax.f32 %v862, 0.0
      %v1014 = vmax.f32 %v864, 0.0
      %v1015 = vmax.f32 %v963, 0.0
      %v1016 = vmax.f32 %v866, 0.0
      %v1017 = vmax.f32 %v868, 0.0
      %v1018 = vmax.f32 %v966, 0.0
      %v1019 = vmax.f32 %v872, 0.0
      %v1020 = vmax.f32 %v874, 0.0
      %v1021 = vmax.f32 %v971, 0.0
      %v1022 = vmax.f32 %v876, 0.0
      %v1023 = vmax.f32 %v878, 0.0
      %v1024 = vmax.f32 %v974, 0.0
      %v1025 = vld [vmem:[%s5] sm:$0xf]
      %v1026 = vld [vmem:[%s5 + $0x4] sm:$0xf]
      %v1027 = vld [vmem:[%s5 + $0x8] sm:$0xf]
      %v1028 = vld [vmem:[%s5 + $0xc] sm:$0xf]
      %v1029 = vld [vmem:[%s5 + $0x10] sm:$0xf]
      %v1030 = vld [vmem:[%s5 + $0x14] sm:$0xf]
      %v1031 = vld [vmem:[%s5 + $0x18] sm:$0xf]
      %v1032 = vld [vmem:[%s5 + $0x1c] sm:$0xf]
      %v1033 = vld [vmem:[%s5 + $0x20] sm:$0xf]
      %v1034 = vld [vmem:[%s5 + $0x24] sm:$0xf]
      %v1035 = vld [vmem:[%s5 + $0x28] sm:$0xf]
      %v1036 = vld [vmem:[%s5 + $0x2c] sm:$0xf]
      %v1037 = vld [vmem:[%s5 + $0x30] sm:$0xf]
      %v1038 = vld [vmem:[%s5 + $0x34] sm:$0xf]
      %v1039 = vld [vmem:[%s5 + $0x38] sm:$0xf]
      %v1040 = vld [vmem:[%s5 + $0x3c] sm:$0xf]
      %v1041 = vld [vmem:[%s5 + $0x40] sm:$0xf]
      %v1042 = vld [vmem:[%s5 + $0x44] sm:$0xf]
      %v1043 = vld [vmem:[%s5 + $0x48] sm:$0xf]
      %v1044 = vld [vmem:[%s5 + $0x4c] sm:$0xf]
      %v1045 = vld [vmem:[%s5 + $0x50] sm:$0xf]
      %v1046 = vld [vmem:[%s5 + $0x54] sm:$0xf]
      %v1047 = vld [vmem:[%s5 + $0x58] sm:$0xf]
      %v1048 = vld [vmem:[%s5 + $0x5c] sm:$0xf]
      %v1049 = vld [vmem:[%s5 + $0x60] sm:$0xf]
      %v1050 = vld [vmem:[%s5 + $0x64] sm:$0xf]
      %v1051 = vld [vmem:[%s5 + $0x68] sm:$0xf]
      %v1052 = vld [vmem:[%s5 + $0x6c] sm:$0xf]
      %v1053 = vld [vmem:[%s5 + $0x70] sm:$0xf]
      %v1054 = vld [vmem:[%s5 + $0x74] sm:$0xf]
      %v1055 = vld [vmem:[%s5 + $0x78] sm:$0xf]
      %v1056 = vld [vmem:[%s5 + $0x7c] sm:$0xf]
      %v1057 = vld [vmem:[%s5 + $0x80] sm:$0xf]
      %v1058 = vld [vmem:[%s5 + $0x84] sm:$0xf]
      %v1059 = vld [vmem:[%s5 + $0x88] sm:$0xf]
      %v1060 = vld [vmem:[%s5 + $0x8c] sm:$0xf]
      %v1061 = vld [vmem:[%s5 + $0x90] sm:$0xf]
      %v1062 = vld [vmem:[%s5 + $0x94] sm:$0xf]
      %v1063 = vld [vmem:[%s5 + $0x98] sm:$0xf]
      %v1064 = vld [vmem:[%s5 + $0x9c] sm:$0xf]
      %v1065 = vld [vmem:[%s5 + $0xa0] sm:$0xf]
      %v1066 = vld [vmem:[%s5 + $0xa4] sm:$0xf]
      %v1067 = vld [vmem:[%s5 + $0xa8] sm:$0xf]
      %v1068 = vld [vmem:[%s5 + $0xac] sm:$0xf]
      %v1069 = vld [vmem:[%s5 + $0xb0] sm:$0xf]
      %v1070 = vld [vmem:[%s5 + $0xb4] sm:$0xf]
      %v1071 = vld [vmem:[%s5 + $0xb8] sm:$0xf]
      %v1072 = vld [vmem:[%s5 + $0xbc] sm:$0xf]
      %v1073 = vld [vmem:[%s5 + $0xc0] sm:$0xf]
      %v1074 = vld [vmem:[%s5 + $0xc4] sm:$0xf]
      %v1075 = vld [vmem:[%s5 + $0xc8] sm:$0xf]
      %v1076 = vld [vmem:[%s5 + $0xcc] sm:$0xf]
      %v1077 = vld [vmem:[%s5 + $0xd0] sm:$0xf]
      %v1078 = vld [vmem:[%s5 + $0xd4] sm:$0xf]
      %v1079 = vld [vmem:[%s5 + $0xd8] sm:$0xf]
      %v1080 = vld [vmem:[%s5 + $0xdc] sm:$0xf]
      %v1081 = vld [vmem:[%s5 + $0xe0] sm:$0xf]
      %v1082 = vld [vmem:[%s5 + $0xe4] sm:$0xf]
      %v1083 = vld [vmem:[%s5 + $0xe8] sm:$0xf]
      %v1084 = vld [vmem:[%s5 + $0xec] sm:$0xf]
      %v1085 = vld [vmem:[%s5 + $0xf0] sm:$0xf]
      %v1086 = vld [vmem:[%s5 + $0xf4] sm:$0xf]
      %v1087 = vld [vmem:[%s5 + $0xf8] sm:$0xf]
      %v1088 = vld [vmem:[%s5 + $0xfc] sm:$0xf]
      %v1089 = vld [vmem:[%s5 + $0x100] sm:$0xf]
      %v1090 = vld [vmem:[%s5 + $0x104] sm:$0xf]
      %v1091 = vld [vmem:[%s5 + $0x108] sm:$0xf]
      %v1092 = vld [vmem:[%s5 + $0x10c] sm:$0xf]
      %v1093 = vld [vmem:[%s5 + $0x110] sm:$0xf]
      %v1094 = vld [vmem:[%s5 + $0x114] sm:$0xf]
      %v1095 = vld [vmem:[%s5 + $0x118] sm:$0xf]
      %v1096 = vld [vmem:[%s5 + $0x11c] sm:$0xf]
      %v1097 = vld [vmem:[%s5 + $0x120] sm:$0xf]
      %v1098 = vld [vmem:[%s5 + $0x124] sm:$0xf]
      %v1099 = vld [vmem:[%s5 + $0x128] sm:$0xf]
      %v1100 = vld [vmem:[%s5 + $0x12c] sm:$0xf]
      %v1101 = vld [vmem:[%s5 + $0x130] sm:$0xf]
      %v1102 = vld [vmem:[%s5 + $0x134] sm:$0xf]
      %v1103 = vld [vmem:[%s5 + $0x138] sm:$0xf]
      %v1104 = vld [vmem:[%s5 + $0x13c] sm:$0xf]
      %v1105 = vld [vmem:[%s5 + $0x140] sm:$0xf]
      %v1106 = vld [vmem:[%s5 + $0x144] sm:$0xf]
      %v1107 = vld [vmem:[%s5 + $0x148] sm:$0xf]
      %v1108 = vld [vmem:[%s5 + $0x14c] sm:$0xf]
      %v1109 = vld [vmem:[%s5 + $0x150] sm:$0xf]
      %v1110 = vld [vmem:[%s5 + $0x154] sm:$0xf]
      %v1111 = vld [vmem:[%s5 + $0x158] sm:$0xf]
      %v1112 = vld [vmem:[%s5 + $0x15c] sm:$0xf]
      %v1113 = vld [vmem:[%s5 + $0x160] sm:$0xf]
      %v1114 = vld [vmem:[%s5 + $0x164] sm:$0xf]
      %v1115 = vld [vmem:[%s5 + $0x168] sm:$0xf]
      %v1116 = vld [vmem:[%s5 + $0x16c] sm:$0xf]
      %v1117 = vld [vmem:[%s5 + $0x170] sm:$0xf]
      %v1118 = vld [vmem:[%s5 + $0x174] sm:$0xf]
      %v1119 = vld [vmem:[%s5 + $0x178] sm:$0xf]
      %v1120 = vld [vmem:[%s5 + $0x17c] sm:$0xf]
      %v1121 = vld [vmem:[%s5 + $0x180] sm:$0xf]
      %v1122 = vld [vmem:[%s5 + $0x184] sm:$0xf]
      %v1123 = vld [vmem:[%s5 + $0x188] sm:$0xf]
      %v1124 = vld [vmem:[%s5 + $0x18c] sm:$0xf]
      %v1125 = vld [vmem:[%s5 + $0x190] sm:$0xf]
      %v1126 = vld [vmem:[%s5 + $0x194] sm:$0xf]
      %v1127 = vld [vmem:[%s5 + $0x198] sm:$0xf]
      %v1128 = vld [vmem:[%s5 + $0x19c] sm:$0xf]
      %v1129 = vld [vmem:[%s5 + $0x1a0] sm:$0xf]
      %v1130 = vld [vmem:[%s5 + $0x1a4] sm:$0xf]
      %v1131 = vld [vmem:[%s5 + $0x1a8] sm:$0xf]
      %v1132 = vld [vmem:[%s5 + $0x1ac] sm:$0xf]
      %v1133 = vld [vmem:[%s5 + $0x1b0] sm:$0xf]
      %v1134 = vld [vmem:[%s5 + $0x1b4] sm:$0xf]
      %v1135 = vld [vmem:[%s5 + $0x1b8] sm:$0xf]
      %v1136 = vld [vmem:[%s5 + $0x1bc] sm:$0xf]
      %v1137 = vld [vmem:[%s5 + $0x1c0] sm:$0xf]
      %v1138 = vld [vmem:[%s5 + $0x1c4] sm:$0xf]
      %v1139 = vld [vmem:[%s5 + $0x1c8] sm:$0xf]
      %v1140 = vld [vmem:[%s5 + $0x1cc] sm:$0xf]
      %v1141 = vld [vmem:[%s5 + $0x1d0] sm:$0xf]
      %v1142 = vld [vmem:[%s5 + $0x1d4] sm:$0xf]
      %v1143 = vld [vmem:[%s5 + $0x1d8] sm:$0xf]
      %v1144 = vld [vmem:[%s5 + $0x1dc] sm:$0xf]
      %v1145 = vld [vmem:[%s5 + $0x1e0] sm:$0xf]
      %v1146 = vld [vmem:[%s5 + $0x1e4] sm:$0xf]
      %v1147 = vld [vmem:[%s5 + $0x1e8] sm:$0xf]
      %v1148 = vld [vmem:[%s5 + $0x1ec] sm:$0xf]
      %v1149 = vld [vmem:[%s5 + $0x1f0] sm:$0xf]
      %v1150 = vld [vmem:[%s5 + $0x1f4] sm:$0xf]
      %v1151 = vld [vmem:[%s5 + $0x1f8] sm:$0xf]
      %v1152 = vld [vmem:[%s5 + $0x1fc] sm:$0xf]
      %v1153 = vpack.c.bf16 %v980, %v977
      %v1154 = vpack.c.bf16 %v981, %v978
      %v1155 = vpack.c.bf16 %v982, %v979
      %v1156 = vpack.c.bf16 %v986, %v983
      %v1157 = vpack.c.bf16 %v987, %v984
      %v1158 = vpack.c.bf16 %v988, %v985
      %v1159 = vpack.c.bf16 %v992, %v989
      %v1160 = vpack.c.bf16 %v993, %v990
      %v1161 = vpack.c.bf16 %v994, %v991
      %v1162 = vpack.c.bf16 %v998, %v995
      %v1163 = vpack.c.bf16 %v999, %v996
      %v1164 = vpack.c.bf16 %v1000, %v997
      %v1165 = vpack.c.bf16 %v1004, %v1001
      %v1166 = vpack.c.bf16 %v1005, %v1002
      %v1167 = vpack.c.bf16 %v1006, %v1003
      %v1168 = vpack.c.bf16 %v1010, %v1007
      %v1169 = vpack.c.bf16 %v1011, %v1008
      %v1170 = vpack.c.bf16 %v1012, %v1009
      %v1171 = vpack.c.bf16 %v1016, %v1013
      %v1172 = vpack.c.bf16 %v1017, %v1014
      %v1173 = vpack.c.bf16 %v1018, %v1015
      %v1174 = vpack.c.bf16 %v1022, %v1019
      %v1175 = vpack.c.bf16 %v1023, %v1020
      %v1176 = vpack.c.bf16 %v1024, %v1021
      %v1177 = vld [vmem:[%s6] sm:$0xff]
      %v1178 = vld [vmem:[%s6 + $0x8] sm:$0xff]
      %v1179 = vld [vmem:[%s6 + $0x10] sm:$0xff]
      %v1180 = vld [vmem:[%s6 + $0x18] sm:$0xff]
      %v1181 = vld [vmem:[%s6 + $0x20] sm:$0xff]
      %v1182 = vld [vmem:[%s6 + $0x28] sm:$0xff]
      %v1183 = vld [vmem:[%s6 + $0x30] sm:$0xff]
      %v1184 = vld [vmem:[%s6 + $0x38] sm:$0xff]
      %v1185 = vld [vmem:[%s6 + $0x40] sm:$0xff]
      %v1186 = vld [vmem:[%s6 + $0x48] sm:$0xff]
      %v1187 = vld [vmem:[%s6 + $0x50] sm:$0xff]
      %v1188 = vld [vmem:[%s6 + $0x58] sm:$0xff]
      %v1189 = vld [vmem:[%s6 + $0x60] sm:$0xff]
      %v1190 = vld [vmem:[%s6 + $0x68] sm:$0xff]
      %v1191 = vld [vmem:[%s6 + $0x70] sm:$0xff]
      %v1192 = vld [vmem:[%s6 + $0x78] sm:$0xff]
      %v1193 = vld [vmem:[%s6 + $0x80] sm:$0xff]
      %v1194 = vld [vmem:[%s6 + $0x88] sm:$0xff]
      %v1195 = vld [vmem:[%s6 + $0x90] sm:$0xff]
      %v1196 = vld [vmem:[%s6 + $0x98] sm:$0xff]
      %v1197 = vld [vmem:[%s6 + $0xa0] sm:$0xff]
      %v1198 = vld [vmem:[%s6 + $0xa8] sm:$0xff]
      %v1199 = vld [vmem:[%s6 + $0xb0] sm:$0xff]
      %v1200 = vld [vmem:[%s6 + $0xb8] sm:$0xff]
      %v1201 = vld [vmem:[%s6 + $0xc0] sm:$0xff]
      %v1202 = vld [vmem:[%s6 + $0xc8] sm:$0xff]
      %v1203 = vld [vmem:[%s6 + $0xd0] sm:$0xff]
      %v1204 = vld [vmem:[%s6 + $0xd8] sm:$0xff]
      %v1205 = vld [vmem:[%s6 + $0xe0] sm:$0xff]
      %v1206 = vld [vmem:[%s6 + $0xe8] sm:$0xff]
      %v1207 = vld [vmem:[%s6 + $0xf0] sm:$0xff]
      %v1208 = vld [vmem:[%s6 + $0xf8] sm:$0xff]
      %v1209 = vld [vmem:[%s6 + $0x100] sm:$0xff]
      %v1210 = vld [vmem:[%s6 + $0x108] sm:$0xff]
      %v1211 = vld [vmem:[%s6 + $0x110] sm:$0xff]
      %v1212 = vld [vmem:[%s6 + $0x118] sm:$0xff]
      %v1213 = vld [vmem:[%s6 + $0x120] sm:$0xff]
      %v1214 = vld [vmem:[%s6 + $0x128] sm:$0xff]
      %v1215 = vld [vmem:[%s6 + $0x130] sm:$0xff]
      %v1216 = vld [vmem:[%s6 + $0x138] sm:$0xff]
      %v1217 = vld [vmem:[%s6 + $0x140] sm:$0xff]
      %v1218 = vld [vmem:[%s6 + $0x148] sm:$0xff]
      %v1219 = vld [vmem:[%s6 + $0x150] sm:$0xff]
      %v1220 = vld [vmem:[%s6 + $0x158] sm:$0xff]
      %v1221 = vld [vmem:[%s6 + $0x160] sm:$0xff]
      %v1222 = vld [vmem:[%s6 + $0x168] sm:$0xff]
      %v1223 = vld [vmem:[%s6 + $0x170] sm:$0xff]
      %v1224 = vld [vmem:[%s6 + $0x178] sm:$0xff]
      %v1225 = vld [vmem:[%s6 + $0x180] sm:$0xff]
      %v1226 = vld [vmem:[%s6 + $0x188] sm:$0xff]
      %v1227 = vld [vmem:[%s6 + $0x190] sm:$0xff]
      %v1228 = vld [vmem:[%s6 + $0x198] sm:$0xff]
      %v1229 = vld [vmem:[%s6 + $0x1a0] sm:$0xff]
      %v1230 = vld [vmem:[%s6 + $0x1a8] sm:$0xff]
      %v1231 = vld [vmem:[%s6 + $0x1b0] sm:$0xff]
      %v1232 = vld [vmem:[%s6 + $0x1b8] sm:$0xff]
      %v1233 = vld [vmem:[%s6 + $0x1c0] sm:$0xff]
      %v1234 = vld [vmem:[%s6 + $0x1c8] sm:$0xff]
      %v1235 = vld [vmem:[%s6 + $0x1d0] sm:$0xff]
      %v1236 = vld [vmem:[%s6 + $0x1d8] sm:$0xff]
      %v1237 = vld [vmem:[%s6 + $0x1e0] sm:$0xff]
      %v1238 = vld [vmem:[%s6 + $0x1e8] sm:$0xff]
      %v1239 = vld [vmem:[%s6 + $0x1f0] sm:$0xff]
      %v1240 = vld [vmem:[%s6 + $0x1f8] sm:$0xff]
      %v1241 = vld [vmem:[%s6 + $0x200] sm:$0xff]
      %v1242 = vld [vmem:[%s6 + $0x208] sm:$0xff]
      %v1243 = vld [vmem:[%s6 + $0x210] sm:$0xff]
      %v1244 = vld [vmem:[%s6 + $0x218] sm:$0xff]
      %v1245 = vld [vmem:[%s6 + $0x220] sm:$0xff]
      %v1246 = vld [vmem:[%s6 + $0x228] sm:$0xff]
      %v1247 = vld [vmem:[%s6 + $0x230] sm:$0xff]
      %v1248 = vld [vmem:[%s6 + $0x238] sm:$0xff]
      %v1249 = vld [vmem:[%s6 + $0x240] sm:$0xff]
      %v1250 = vld [vmem:[%s6 + $0x248] sm:$0xff]
      %v1251 = vld [vmem:[%s6 + $0x250] sm:$0xff]
      %v1252 = vld [vmem:[%s6 + $0x258] sm:$0xff]
      %v1253 = vld [vmem:[%s6 + $0x260] sm:$0xff]
      %v1254 = vld [vmem:[%s6 + $0x268] sm:$0xff]
      %v1255 = vld [vmem:[%s6 + $0x270] sm:$0xff]
      %v1256 = vld [vmem:[%s6 + $0x278] sm:$0xff]
      %v1257 = vld [vmem:[%s6 + $0x280] sm:$0xff]
      %v1258 = vld [vmem:[%s6 + $0x288] sm:$0xff]
      %v1259 = vld [vmem:[%s6 + $0x290] sm:$0xff]
      %v1260 = vld [vmem:[%s6 + $0x298] sm:$0xff]
      %v1261 = vld [vmem:[%s6 + $0x2a0] sm:$0xff]
      %v1262 = vld [vmem:[%s6 + $0x2a8] sm:$0xff]
      %v1263 = vld [vmem:[%s6 + $0x2b0] sm:$0xff]
      %v1264 = vld [vmem:[%s6 + $0x2b8] sm:$0xff]
      %v1265 = vld [vmem:[%s6 + $0x2c0] sm:$0xff]
      %v1266 = vld [vmem:[%s6 + $0x2c8] sm:$0xff]
      %v1267 = vld [vmem:[%s6 + $0x2d0] sm:$0xff]
      %v1268 = vld [vmem:[%s6 + $0x2d8] sm:$0xff]
      %v1269 = vld [vmem:[%s6 + $0x2e0] sm:$0xff]
      %v1270 = vld [vmem:[%s6 + $0x2e8] sm:$0xff]
      %v1271 = vld [vmem:[%s6 + $0x2f0] sm:$0xff]
      %v1272 = vld [vmem:[%s6 + $0x2f8] sm:$0xff]
      %v1273 = vld [vmem:[%s6 + $0x300] sm:$0xff]
      %v1274 = vld [vmem:[%s6 + $0x308] sm:$0xff]
      %v1275 = vld [vmem:[%s6 + $0x310] sm:$0xff]
      %v1276 = vld [vmem:[%s6 + $0x318] sm:$0xff]
      %v1277 = vld [vmem:[%s6 + $0x320] sm:$0xff]
      %v1278 = vld [vmem:[%s6 + $0x328] sm:$0xff]
      %v1279 = vld [vmem:[%s6 + $0x330] sm:$0xff]
      %v1280 = vld [vmem:[%s6 + $0x338] sm:$0xff]
      %v1281 = vld [vmem:[%s6 + $0x340] sm:$0xff]
      %v1282 = vld [vmem:[%s6 + $0x348] sm:$0xff]
      %v1283 = vld [vmem:[%s6 + $0x350] sm:$0xff]
      %v1284 = vld [vmem:[%s6 + $0x358] sm:$0xff]
      %v1285 = vld [vmem:[%s6 + $0x360] sm:$0xff]
      %v1286 = vld [vmem:[%s6 + $0x368] sm:$0xff]
      %v1287 = vld [vmem:[%s6 + $0x370] sm:$0xff]
      %v1288 = vld [vmem:[%s6 + $0x378] sm:$0xff]
      %v1289 = vld [vmem:[%s6 + $0x380] sm:$0xff]
      %v1290 = vld [vmem:[%s6 + $0x388] sm:$0xff]
      %v1291 = vld [vmem:[%s6 + $0x390] sm:$0xff]
      %v1292 = vld [vmem:[%s6 + $0x398] sm:$0xff]
      %v1293 = vld [vmem:[%s6 + $0x3a0] sm:$0xff]
      %v1294 = vld [vmem:[%s6 + $0x3a8] sm:$0xff]
      %v1295 = vld [vmem:[%s6 + $0x3b0] sm:$0xff]
      %v1296 = vld [vmem:[%s6 + $0x3b8] sm:$0xff]
      %v1297 = vld [vmem:[%s6 + $0x3c0] sm:$0xff]
      %v1298 = vld [vmem:[%s6 + $0x3c8] sm:$0xff]
      %v1299 = vld [vmem:[%s6 + $0x3d0] sm:$0xff]
      %v1300 = vld [vmem:[%s6 + $0x3d8] sm:$0xff]
      %v1301 = vld [vmem:[%s6 + $0x3e0] sm:$0xff]
      %v1302 = vld [vmem:[%s6 + $0x3e8] sm:$0xff]
      %v1303 = vld [vmem:[%s6 + $0x3f0] sm:$0xff]
      %v1304 = vld [vmem:[%s6 + $0x3f8] sm:$0xff]
      %1306 = vset.pattern.permute.xlu0 0
      %1307 = vperm.xlu0 %1306, %v1177
      %v1308 = vpop.permute.xlu0 %1307
      %1311 = vset.pattern.permute.xlu0 0
      %1312 = vperm.xlu0 %1311, %v1178
      %v1313 = vpop.permute.xlu0 %1312
      %1316 = vset.pattern.permute.xlu0 0
      %1317 = vperm.xlu0 %1316, %v1179
      %v1318 = vpop.permute.xlu0 %1317
      %1321 = vset.pattern.permute.xlu0 0
      %1322 = vperm.xlu0 %1321, %v1180
      %v1323 = vpop.permute.xlu0 %1322
      %1326 = vset.pattern.permute.xlu0 0
      %1327 = vperm.xlu0 %1326, %v1181
      %v1328 = vpop.permute.xlu0 %1327
      %1331 = vset.pattern.permute.xlu0 0
      %1332 = vperm.xlu0 %1331, %v1182
      %v1333 = vpop.permute.xlu0 %1332
      %1336 = vset.pattern.permute.xlu0 0
      %1337 = vperm.xlu0 %1336, %v1183
      %v1338 = vpop.permute.xlu0 %1337
      %1341 = vset.pattern.permute.xlu0 0
      %1342 = vperm.xlu0 %1341, %v1184
      %v1343 = vpop.permute.xlu0 %1342
      %1346 = vset.pattern.permute.xlu0 0
      %1347 = vperm.xlu0 %1346, %v1185
      %v1348 = vpop.permute.xlu0 %1347
      %1351 = vset.pattern.permute.xlu0 0
      %1352 = vperm.xlu0 %1351, %v1186
      %v1353 = vpop.permute.xlu0 %1352
      %1356 = vset.pattern.permute.xlu0 0
      %1357 = vperm.xlu0 %1356, %v1187
      %v1358 = vpop.permute.xlu0 %1357
      %1361 = vset.pattern.permute.xlu0 0
      %1362 = vperm.xlu0 %1361, %v1188
      %v1363 = vpop.permute.xlu0 %1362
      %1366 = vset.pattern.permute.xlu0 0
      %1367 = vperm.xlu0 %1366, %v1189
      %v1368 = vpop.permute.xlu0 %1367
      %1371 = vset.pattern.permute.xlu0 0
      %1372 = vperm.xlu0 %1371, %v1190
      %v1373 = vpop.permute.xlu0 %1372
      %1376 = vset.pattern.permute.xlu0 0
      %1377 = vperm.xlu0 %1376, %v1191
      %v1378 = vpop.permute.xlu0 %1377
      %1381 = vset.pattern.permute.xlu0 0
      %1382 = vperm.xlu0 %1381, %v1192
      %v1383 = vpop.permute.xlu0 %1382
      %1386 = vset.pattern.permute.xlu0 0
      %1387 = vperm.xlu0 %1386, %v1193
      %v1388 = vpop.permute.xlu0 %1387
      %1391 = vset.pattern.permute.xlu0 0
      %1392 = vperm.xlu0 %1391, %v1194
      %v1393 = vpop.permute.xlu0 %1392
      %1396 = vset.pattern.permute.xlu0 0
      %1397 = vperm.xlu0 %1396, %v1195
      %v1398 = vpop.permute.xlu0 %1397
      %1401 = vset.pattern.permute.xlu0 0
      %1402 = vperm.xlu0 %1401, %v1196
      %v1403 = vpop.permute.xlu0 %1402
      %1406 = vset.pattern.permute.xlu0 0
      %1407 = vperm.xlu0 %1406, %v1197
      %v1408 = vpop.permute.xlu0 %1407
      %1411 = vset.pattern.permute.xlu0 0
      %1412 = vperm.xlu0 %1411, %v1198
      %v1413 = vpop.permute.xlu0 %1412
      %1416 = vset.pattern.permute.xlu0 0
      %1417 = vperm.xlu0 %1416, %v1199
      %v1418 = vpop.permute.xlu0 %1417
      %1421 = vset.pattern.permute.xlu0 0
      %1422 = vperm.xlu0 %1421, %v1200
      %v1423 = vpop.permute.xlu0 %1422
      %1426 = vset.pattern.permute.xlu0 0
      %1427 = vperm.xlu0 %1426, %v1201
      %v1428 = vpop.permute.xlu0 %1427
      %1431 = vset.pattern.permute.xlu0 0
      %1432 = vperm.xlu0 %1431, %v1202
      %v1433 = vpop.permute.xlu0 %1432
      %1436 = vset.pattern.permute.xlu0 0
      %1437 = vperm.xlu0 %1436, %v1203
      %v1438 = vpop.permute.xlu0 %1437
      %1441 = vset.pattern.permute.xlu0 0
      %1442 = vperm.xlu0 %1441, %v1204
      %v1443 = vpop.permute.xlu0 %1442
      %1446 = vset.pattern.permute.xlu0 0
      %1447 = vperm.xlu0 %1446, %v1205
      %v1448 = vpop.permute.xlu0 %1447
      %1451 = vset.pattern.permute.xlu0 0
      %1452 = vperm.xlu0 %1451, %v1206
      %v1453 = vpop.permute.xlu0 %1452
      %1456 = vset.pattern.permute.xlu0 0
      %1457 = vperm.xlu0 %1456, %v1207
      %v1458 = vpop.permute.xlu0 %1457
      %1461 = vset.pattern.permute.xlu0 0
      %1462 = vperm.xlu0 %1461, %v1208
      %v1463 = vpop.permute.xlu0 %1462
      %1466 = vset.pattern.permute.xlu0 0
      %1467 = vperm.xlu0 %1466, %v1209
      %v1468 = vpop.permute.xlu0 %1467
      %1471 = vset.pattern.permute.xlu0 0
      %1472 = vperm.xlu0 %1471, %v1210
      %v1473 = vpop.permute.xlu0 %1472
      %1476 = vset.pattern.permute.xlu0 0
      %1477 = vperm.xlu0 %1476, %v1211
      %v1478 = vpop.permute.xlu0 %1477
      %1481 = vset.pattern.permute.xlu0 0
      %1482 = vperm.xlu0 %1481, %v1212
      %v1483 = vpop.permute.xlu0 %1482
      %1486 = vset.pattern.permute.xlu0 0
      %1487 = vperm.xlu0 %1486, %v1213
      %v1488 = vpop.permute.xlu0 %1487
      %1491 = vset.pattern.permute.xlu0 0
      %1492 = vperm.xlu0 %1491, %v1214
      %v1493 = vpop.permute.xlu0 %1492
      %1496 = vset.pattern.permute.xlu0 0
      %1497 = vperm.xlu0 %1496, %v1215
      %v1498 = vpop.permute.xlu0 %1497
      %1501 = vset.pattern.permute.xlu0 0
      %1502 = vperm.xlu0 %1501, %v1216
      %v1503 = vpop.permute.xlu0 %1502
      %1506 = vset.pattern.permute.xlu0 0
      %1507 = vperm.xlu0 %1506, %v1217
      %v1508 = vpop.permute.xlu0 %1507
      %1511 = vset.pattern.permute.xlu0 0
      %1512 = vperm.xlu0 %1511, %v1218
      %v1513 = vpop.permute.xlu0 %1512
      %1516 = vset.pattern.permute.xlu0 0
      %1517 = vperm.xlu0 %1516, %v1219
      %v1518 = vpop.permute.xlu0 %1517
      %1521 = vset.pattern.permute.xlu0 0
      %1522 = vperm.xlu0 %1521, %v1220
      %v1523 = vpop.permute.xlu0 %1522
      %1526 = vset.pattern.permute.xlu0 0
      %1527 = vperm.xlu0 %1526, %v1221
      %v1528 = vpop.permute.xlu0 %1527
      %1531 = vset.pattern.permute.xlu0 0
      %1532 = vperm.xlu0 %1531, %v1222
      %v1533 = vpop.permute.xlu0 %1532
      %1536 = vset.pattern.permute.xlu0 0
      %1537 = vperm.xlu0 %1536, %v1223
      %v1538 = vpop.permute.xlu0 %1537
      %1541 = vset.pattern.permute.xlu0 0
      %1542 = vperm.xlu0 %1541, %v1224
      %v1543 = vpop.permute.xlu0 %1542
      %1546 = vset.pattern.permute.xlu0 0
      %1547 = vperm.xlu0 %1546, %v1225
      %v1548 = vpop.permute.xlu0 %1547
      %1551 = vset.pattern.permute.xlu0 0
      %1552 = vperm.xlu0 %1551, %v1226
      %v1553 = vpop.permute.xlu0 %1552
      %1556 = vset.pattern.permute.xlu0 0
      %1557 = vperm.xlu0 %1556, %v1227
      %v1558 = vpop.permute.xlu0 %1557
      %1561 = vset.pattern.permute.xlu0 0
      %1562 = vperm.xlu0 %1561, %v1228
      %v1563 = vpop.permute.xlu0 %1562
      %1566 = vset.pattern.permute.xlu0 0
      %1567 = vperm.xlu0 %1566, %v1229
      %v1568 = vpop.permute.xlu0 %1567
      %1571 = vset.pattern.permute.xlu0 0
      %1572 = vperm.xlu0 %1571, %v1230
      %v1573 = vpop.permute.xlu0 %1572
      %1576 = vset.pattern.permute.xlu0 0
      %1577 = vperm.xlu0 %1576, %v1231
      %v1578 = vpop.permute.xlu0 %1577
      %1581 = vset.pattern.permute.xlu0 0
      %1582 = vperm.xlu0 %1581, %v1232
      %v1583 = vpop.permute.xlu0 %1582
      %1586 = vset.pattern.permute.xlu0 0
      %1587 = vperm.xlu0 %1586, %v1233
      %v1588 = vpop.permute.xlu0 %1587
      %1591 = vset.pattern.permute.xlu0 0
      %1592 = vperm.xlu0 %1591, %v1234
      %v1593 = vpop.permute.xlu0 %1592
      %1596 = vset.pattern.permute.xlu0 0
      %1597 = vperm.xlu0 %1596, %v1235
      %v1598 = vpop.permute.xlu0 %1597
      %1601 = vset.pattern.permute.xlu0 0
      %1602 = vperm.xlu0 %1601, %v1236
      %v1603 = vpop.permute.xlu0 %1602
      %1606 = vset.pattern.permute.xlu0 0
      %1607 = vperm.xlu0 %1606, %v1237
      %v1608 = vpop.permute.xlu0 %1607
      %1611 = vset.pattern.permute.xlu0 0
      %1612 = vperm.xlu0 %1611, %v1238
      %v1613 = vpop.permute.xlu0 %1612
      %1616 = vset.pattern.permute.xlu0 0
      %1617 = vperm.xlu0 %1616, %v1239
      %v1618 = vpop.permute.xlu0 %1617
      %1621 = vset.pattern.permute.xlu0 0
      %1622 = vperm.xlu0 %1621, %v1240
      %v1623 = vpop.permute.xlu0 %1622
      %1626 = vset.pattern.permute.xlu0 0
      %1627 = vperm.xlu0 %1626, %v1241
      %v1628 = vpop.permute.xlu0 %1627
      %1631 = vset.pattern.permute.xlu0 0
      %1632 = vperm.xlu0 %1631, %v1242
      %v1633 = vpop.permute.xlu0 %1632
      %1636 = vset.pattern.permute.xlu0 0
      %1637 = vperm.xlu0 %1636, %v1243
      %v1638 = vpop.permute.xlu0 %1637
      %1641 = vset.pattern.permute.xlu0 0
      %1642 = vperm.xlu0 %1641, %v1244
      %v1643 = vpop.permute.xlu0 %1642
      %1646 = vset.pattern.permute.xlu0 0
      %1647 = vperm.xlu0 %1646, %v1245
      %v1648 = vpop.permute.xlu0 %1647
      %1651 = vset.pattern.permute.xlu0 0
      %1652 = vperm.xlu0 %1651, %v1246
      %v1653 = vpop.permute.xlu0 %1652
      %1656 = vset.pattern.permute.xlu0 0
      %1657 = vperm.xlu0 %1656, %v1247
      %v1658 = vpop.permute.xlu0 %1657
      %1661 = vset.pattern.permute.xlu0 0
      %1662 = vperm.xlu0 %1661, %v1248
      %v1663 = vpop.permute.xlu0 %1662
      %1666 = vset.pattern.permute.xlu0 0
      %1667 = vperm.xlu0 %1666, %v1249
      %v1668 = vpop.permute.xlu0 %1667
      %1671 = vset.pattern.permute.xlu0 0
      %1672 = vperm.xlu0 %1671, %v1250
      %v1673 = vpop.permute.xlu0 %1672
      %1676 = vset.pattern.permute.xlu0 0
      %1677 = vperm.xlu0 %1676, %v1251
      %v1678 = vpop.permute.xlu0 %1677
      %1681 = vset.pattern.permute.xlu0 0
      %1682 = vperm.xlu0 %1681, %v1252
      %v1683 = vpop.permute.xlu0 %1682
      %1686 = vset.pattern.permute.xlu0 0
      %1687 = vperm.xlu0 %1686, %v1253
      %v1688 = vpop.permute.xlu0 %1687
      %1691 = vset.pattern.permute.xlu0 0
      %1692 = vperm.xlu0 %1691, %v1254
      %v1693 = vpop.permute.xlu0 %1692
      %1696 = vset.pattern.permute.xlu0 0
      %1697 = vperm.xlu0 %1696, %v1255
      %v1698 = vpop.permute.xlu0 %1697
      %1701 = vset.pattern.permute.xlu0 0
      %1702 = vperm.xlu0 %1701, %v1256
      %v1703 = vpop.permute.xlu0 %1702
      %1706 = vset.pattern.permute.xlu0 0
      %1707 = vperm.xlu0 %1706, %v1257
      %v1708 = vpop.permute.xlu0 %1707
      %1711 = vset.pattern.permute.xlu0 0
      %1712 = vperm.xlu0 %1711, %v1258
      %v1713 = vpop.permute.xlu0 %1712
      %1716 = vset.pattern.permute.xlu0 0
      %1717 = vperm.xlu0 %1716, %v1259
      %v1718 = vpop.permute.xlu0 %1717
      %1721 = vset.pattern.permute.xlu0 0
      %1722 = vperm.xlu0 %1721, %v1260
      %v1723 = vpop.permute.xlu0 %1722
      %1726 = vset.pattern.permute.xlu0 0
      %1727 = vperm.xlu0 %1726, %v1261
      %v1728 = vpop.permute.xlu0 %1727
      %1731 = vset.pattern.permute.xlu0 0
      %1732 = vperm.xlu0 %1731, %v1262
      %v1733 = vpop.permute.xlu0 %1732
      %1736 = vset.pattern.permute.xlu0 0
      %1737 = vperm.xlu0 %1736, %v1263
      %v1738 = vpop.permute.xlu0 %1737
      %1741 = vset.pattern.permute.xlu0 0
      %1742 = vperm.xlu0 %1741, %v1264
      %v1743 = vpop.permute.xlu0 %1742
      %1746 = vset.pattern.permute.xlu0 0
      %1747 = vperm.xlu0 %1746, %v1265
      %v1748 = vpop.permute.xlu0 %1747
      %1751 = vset.pattern.permute.xlu0 0
      %1752 = vperm.xlu0 %1751, %v1266
      %v1753 = vpop.permute.xlu0 %1752
      %1756 = vset.pattern.permute.xlu0 0
      %1757 = vperm.xlu0 %1756, %v1267
      %v1758 = vpop.permute.xlu0 %1757
      %1761 = vset.pattern.permute.xlu0 0
      %1762 = vperm.xlu0 %1761, %v1268
      %v1763 = vpop.permute.xlu0 %1762
      %1766 = vset.pattern.permute.xlu0 0
      %1767 = vperm.xlu0 %1766, %v1269
      %v1768 = vpop.permute.xlu0 %1767
      %1771 = vset.pattern.permute.xlu0 0
      %1772 = vperm.xlu0 %1771, %v1270
      %v1773 = vpop.permute.xlu0 %1772
      %1776 = vset.pattern.permute.xlu0 0
      %1777 = vperm.xlu0 %1776, %v1271
      %v1778 = vpop.permute.xlu0 %1777
      %1781 = vset.pattern.permute.xlu0 0
      %1782 = vperm.xlu0 %1781, %v1272
      %v1783 = vpop.permute.xlu0 %1782
      %1786 = vset.pattern.permute.xlu0 0
      %1787 = vperm.xlu0 %1786, %v1273
      %v1788 = vpop.permute.xlu0 %1787
      %1791 = vset.pattern.permute.xlu0 0
      %1792 = vperm.xlu0 %1791, %v1274
      %v1793 = vpop.permute.xlu0 %1792
      %1796 = vset.pattern.permute.xlu0 0
      %1797 = vperm.xlu0 %1796, %v1275
      %v1798 = vpop.permute.xlu0 %1797
      %1801 = vset.pattern.permute.xlu0 0
      %1802 = vperm.xlu0 %1801, %v1276
      %v1803 = vpop.permute.xlu0 %1802
      %1806 = vset.pattern.permute.xlu0 0
      %1807 = vperm.xlu0 %1806, %v1277
      %v1808 = vpop.permute.xlu0 %1807
      %1811 = vset.pattern.permute.xlu0 0
      %1812 = vperm.xlu0 %1811, %v1278
      %v1813 = vpop.permute.xlu0 %1812
      %1816 = vset.pattern.permute.xlu0 0
      %1817 = vperm.xlu0 %1816, %v1279
      %v1818 = vpop.permute.xlu0 %1817
      %1821 = vset.pattern.permute.xlu0 0
      %1822 = vperm.xlu0 %1821, %v1280
      %v1823 = vpop.permute.xlu0 %1822
      %1826 = vset.pattern.permute.xlu0 0
      %1827 = vperm.xlu0 %1826, %v1281
      %v1828 = vpop.permute.xlu0 %1827
      %1831 = vset.pattern.permute.xlu0 0
      %1832 = vperm.xlu0 %1831, %v1282
      %v1833 = vpop.permute.xlu0 %1832
      %1836 = vset.pattern.permute.xlu0 0
      %1837 = vperm.xlu0 %1836, %v1283
      %v1838 = vpop.permute.xlu0 %1837
      %1841 = vset.pattern.permute.xlu0 0
      %1842 = vperm.xlu0 %1841, %v1284
      %v1843 = vpop.permute.xlu0 %1842
      %1846 = vset.pattern.permute.xlu0 0
      %1847 = vperm.xlu0 %1846, %v1285
      %v1848 = vpop.permute.xlu0 %1847
      %1851 = vset.pattern.permute.xlu0 0
      %1852 = vperm.xlu0 %1851, %v1286
      %v1853 = vpop.permute.xlu0 %1852
      %1856 = vset.pattern.permute.xlu0 0
      %1857 = vperm.xlu0 %1856, %v1287
      %v1858 = vpop.permute.xlu0 %1857
      %1861 = vset.pattern.permute.xlu0 0
      %1862 = vperm.xlu0 %1861, %v1288
      %v1863 = vpop.permute.xlu0 %1862
      %1866 = vset.pattern.permute.xlu0 0
      %1867 = vperm.xlu0 %1866, %v1289
      %v1868 = vpop.permute.xlu0 %1867
      %1871 = vset.pattern.permute.xlu0 0
      %1872 = vperm.xlu0 %1871, %v1290
      %v1873 = vpop.permute.xlu0 %1872
      %1876 = vset.pattern.permute.xlu0 0
      %1877 = vperm.xlu0 %1876, %v1291
      %v1878 = vpop.permute.xlu0 %1877
      %1881 = vset.pattern.permute.xlu0 0
      %1882 = vperm.xlu0 %1881, %v1292
      %v1883 = vpop.permute.xlu0 %1882
      %1886 = vset.pattern.permute.xlu0 0
      %1887 = vperm.xlu0 %1886, %v1293
      %v1888 = vpop.permute.xlu0 %1887
      %1891 = vset.pattern.permute.xlu0 0
      %1892 = vperm.xlu0 %1891, %v1294
      %v1893 = vpop.permute.xlu0 %1892
      %1896 = vset.pattern.permute.xlu0 0
      %1897 = vperm.xlu0 %1896, %v1295
      %v1898 = vpop.permute.xlu0 %1897
      %1901 = vset.pattern.permute.xlu0 0
      %1902 = vperm.xlu0 %1901, %v1296
      %v1903 = vpop.permute.xlu0 %1902
      %1906 = vset.pattern.permute.xlu0 0
      %1907 = vperm.xlu0 %1906, %v1297
      %v1908 = vpop.permute.xlu0 %1907
      %1911 = vset.pattern.permute.xlu0 0
      %1912 = vperm.xlu0 %1911, %v1298
      %v1913 = vpop.permute.xlu0 %1912
      %1916 = vset.pattern.permute.xlu0 0
      %1917 = vperm.xlu0 %1916, %v1299
      %v1918 = vpop.permute.xlu0 %1917
      %1921 = vset.pattern.permute.xlu0 0
      %1922 = vperm.xlu0 %1921, %v1300
      %v1923 = vpop.permute.xlu0 %1922
      %1926 = vset.pattern.permute.xlu0 0
      %1927 = vperm.xlu0 %1926, %v1301
      %v1928 = vpop.permute.xlu0 %1927
      %1931 = vset.pattern.permute.xlu0 0
      %1932 = vperm.xlu0 %1931, %v1302
      %v1933 = vpop.permute.xlu0 %1932
      %1936 = vset.pattern.permute.xlu0 0
      %1937 = vperm.xlu0 %1936, %v1303
      %v1938 = vpop.permute.xlu0 %1937
      %1941 = vset.pattern.permute.xlu0 0
      %1942 = vperm.xlu0 %1941, %v1304
      %v1943 = vpop.permute.xlu0 %1942
      %v2073 = vunpack.c.l.b16 %v1025
      %v2074 = vunpack.c.l.b16 %v1026
      %v2075 = vunpack.c.l.b16 %v1027
      %v2076 = vunpack.c.l.b16 %v1028
      %v2077 = vunpack.c.l.b16 %v1029
      %v2078 = vunpack.c.l.b16 %v1030
      %v2079 = vunpack.c.l.b16 %v1031
      %v2080 = vunpack.c.l.b16 %v1032
      %v2081 = vunpack.c.l.b16 %v1033
      %v2082 = vunpack.c.l.b16 %v1034
      %v2083 = vunpack.c.l.b16 %v1035
      %v2084 = vunpack.c.l.b16 %v1036
      %v2085 = vunpack.c.l.b16 %v1037
      %v2086 = vunpack.c.l.b16 %v1038
      %v2087 = vunpack.c.l.b16 %v1039
      %v2088 = vunpack.c.l.b16 %v1040
      %v2089 = vunpack.c.l.b16 %v1041
      %v2090 = vunpack.c.l.b16 %v1042
      %v2091 = vunpack.c.l.b16 %v1043
      %v2092 = vunpack.c.l.b16 %v1044
      %v2093 = vunpack.c.l.b16 %v1045
      %v2094 = vunpack.c.l.b16 %v1046
      %v2095 = vunpack.c.l.b16 %v1047
      %v2096 = vunpack.c.l.b16 %v1048
      %v2097 = vunpack.c.l.b16 %v1049
      %v2098 = vunpack.c.l.b16 %v1050
      %v2099 = vunpack.c.l.b16 %v1051
      %v2100 = vunpack.c.l.b16 %v1052
      %v2101 = vunpack.c.l.b16 %v1053
      %v2102 = vunpack.c.l.b16 %v1054
      %v2103 = vunpack.c.l.b16 %v1055
      %v2104 = vunpack.c.l.b16 %v1056
      %v2105 = vunpack.c.l.b16 %v1057
      %v2106 = vunpack.c.l.b16 %v1058
      %v2107 = vunpack.c.l.b16 %v1059
      %v2108 = vunpack.c.l.b16 %v1060
      %v2109 = vunpack.c.l.b16 %v1061
      %v2110 = vunpack.c.l.b16 %v1062
      %v2111 = vunpack.c.l.b16 %v1063
      %v2112 = vunpack.c.l.b16 %v1064
      %v2113 = vunpack.c.l.b16 %v1065
      %v2114 = vunpack.c.l.b16 %v1066
      %v2115 = vunpack.c.l.b16 %v1067
      %v2116 = vunpack.c.l.b16 %v1068
      %v2117 = vunpack.c.l.b16 %v1069
      %v2118 = vunpack.c.l.b16 %v1070
      %v2119 = vunpack.c.l.b16 %v1071
      %v2120 = vunpack.c.l.b16 %v1072
      %v2121 = vunpack.c.l.b16 %v1073
      %v2122 = vunpack.c.l.b16 %v1074
      %v2123 = vunpack.c.l.b16 %v1075
      %v2124 = vunpack.c.l.b16 %v1076
      %v2125 = vunpack.c.l.b16 %v1077
      %v2126 = vunpack.c.l.b16 %v1078
      %v2127 = vunpack.c.l.b16 %v1079
      %v2128 = vunpack.c.l.b16 %v1080
      %v2129 = vunpack.c.l.b16 %v1081
      %v2130 = vunpack.c.l.b16 %v1082
      %v2131 = vunpack.c.l.b16 %v1083
      %v2132 = vunpack.c.l.b16 %v1084
      %v2133 = vunpack.c.l.b16 %v1085
      %v2134 = vunpack.c.l.b16 %v1086
      %v2135 = vunpack.c.l.b16 %v1087
      %v2136 = vunpack.c.l.b16 %v1088
      %v2137 = vunpack.c.l.b16 %v1089
      %v2138 = vunpack.c.l.b16 %v1090
      %v2139 = vunpack.c.l.b16 %v1091
      %v2140 = vunpack.c.l.b16 %v1092
      %v2141 = vunpack.c.l.b16 %v1093
      %v2142 = vunpack.c.l.b16 %v1094
      %v2143 = vunpack.c.l.b16 %v1095
      %v2144 = vunpack.c.l.b16 %v1096
      %v2145 = vunpack.c.l.b16 %v1097
      %v2146 = vunpack.c.l.b16 %v1098
      %v2147 = vunpack.c.l.b16 %v1099
      %v2148 = vunpack.c.l.b16 %v1100
      %v2149 = vunpack.c.l.b16 %v1101
      %v2150 = vunpack.c.l.b16 %v1102
      %v2151 = vunpack.c.l.b16 %v1103
      %v2152 = vunpack.c.l.b16 %v1104
      %v2153 = vunpack.c.l.b16 %v1105
      %v2154 = vunpack.c.l.b16 %v1106
      %v2155 = vunpack.c.l.b16 %v1107
      %v2156 = vunpack.c.l.b16 %v1108
      %v2157 = vunpack.c.l.b16 %v1109
      %v2158 = vunpack.c.l.b16 %v1110
      %v2159 = vunpack.c.l.b16 %v1111
      %v2160 = vunpack.c.l.b16 %v1112
      %v2161 = vunpack.c.l.b16 %v1113
      %v2162 = vunpack.c.l.b16 %v1114
      %v2163 = vunpack.c.l.b16 %v1115
      %v2164 = vunpack.c.l.b16 %v1116
      %v2165 = vunpack.c.l.b16 %v1117
      %v2166 = vunpack.c.l.b16 %v1118
      %v2167 = vunpack.c.l.b16 %v1119
      %v2168 = vunpack.c.l.b16 %v1120
      %v2169 = vunpack.c.l.b16 %v1121
      %v2170 = vunpack.c.l.b16 %v1122
      %v2171 = vunpack.c.l.b16 %v1123
      %v2172 = vunpack.c.l.b16 %v1124
      %v2173 = vunpack.c.l.b16 %v1125
      %v2174 = vunpack.c.l.b16 %v1126
      %v2175 = vunpack.c.l.b16 %v1127
      %v2176 = vunpack.c.l.b16 %v1128
      %v2177 = vunpack.c.l.b16 %v1129
      %v2178 = vunpack.c.l.b16 %v1130
      %v2179 = vunpack.c.l.b16 %v1131
      %v2180 = vunpack.c.l.b16 %v1132
      %v2181 = vunpack.c.l.b16 %v1133
      %v2182 = vunpack.c.l.b16 %v1134
      %v2183 = vunpack.c.l.b16 %v1135
      %v2184 = vunpack.c.l.b16 %v1136
      %v2185 = vunpack.c.l.b16 %v1137
      %v2186 = vunpack.c.l.b16 %v1138
      %v2187 = vunpack.c.l.b16 %v1139
      %v2188 = vunpack.c.l.b16 %v1140
      %v2189 = vunpack.c.l.b16 %v1141
      %v2190 = vunpack.c.l.b16 %v1142
      %v2191 = vunpack.c.l.b16 %v1143
      %v2192 = vunpack.c.l.b16 %v1144
      %v2193 = vunpack.c.l.b16 %v1145
      %v2194 = vunpack.c.l.b16 %v1146
      %v2195 = vunpack.c.l.b16 %v1147
      %v2196 = vunpack.c.l.b16 %v1148
      %v2197 = vunpack.c.l.b16 %v1149
      %v2198 = vunpack.c.l.b16 %v1150
      %v2199 = vunpack.c.l.b16 %v1151
      %v2200 = vunpack.c.l.b16 %v1152
      %v2201 = vpack.c.b16 %v2074, %v2073
      %v2202 = vpack.c.b16 %v2076, %v2075
      %v2203 = vpack.c.b16 %v2078, %v2077
      %v2204 = vpack.c.b16 %v2080, %v2079
      %v2205 = vpack.c.b16 %v2082, %v2081
      %v2206 = vpack.c.b16 %v2084, %v2083
      %v2207 = vpack.c.b16 %v2086, %v2085
      %v2208 = vpack.c.b16 %v2088, %v2087
      %v2209 = vpack.c.b16 %v2090, %v2089
      %v2210 = vpack.c.b16 %v2092, %v2091
      %v2211 = vpack.c.b16 %v2094, %v2093
      %v2212 = vpack.c.b16 %v2096, %v2095
      %v2213 = vpack.c.b16 %v2098, %v2097
      %v2214 = vpack.c.b16 %v2100, %v2099
      %v2215 = vpack.c.b16 %v2102, %v2101
      %v2216 = vpack.c.b16 %v2104, %v2103
      %v2217 = vpack.c.b16 %v2106, %v2105
      %v2218 = vpack.c.b16 %v2108, %v2107
      %v2219 = vpack.c.b16 %v2110, %v2109
      %v2220 = vpack.c.b16 %v2112, %v2111
      %v2221 = vpack.c.b16 %v2114, %v2113
      %v2222 = vpack.c.b16 %v2116, %v2115
      %v2223 = vpack.c.b16 %v2118, %v2117
      %v2224 = vpack.c.b16 %v2120, %v2119
      %v2225 = vpack.c.b16 %v2122, %v2121
      %v2226 = vpack.c.b16 %v2124, %v2123
      %v2227 = vpack.c.b16 %v2126, %v2125
      %v2228 = vpack.c.b16 %v2128, %v2127
      %v2229 = vpack.c.b16 %v2130, %v2129
      %v2230 = vpack.c.b16 %v2132, %v2131
      %v2231 = vpack.c.b16 %v2134, %v2133
      %v2232 = vpack.c.b16 %v2136, %v2135
      %v2233 = vpack.c.b16 %v2138, %v2137
      %v2234 = vpack.c.b16 %v2140, %v2139
      %v2235 = vpack.c.b16 %v2142, %v2141
      %v2236 = vpack.c.b16 %v2144, %v2143
      %v2237 = vpack.c.b16 %v2146, %v2145
      %v2238 = vpack.c.b16 %v2148, %v2147
      %v2239 = vpack.c.b16 %v2150, %v2149
      %v2240 = vpack.c.b16 %v2152, %v2151
      %v2241 = vpack.c.b16 %v2154, %v2153
      %v2242 = vpack.c.b16 %v2156, %v2155
      %v2243 = vpack.c.b16 %v2158, %v2157
      %v2244 = vpack.c.b16 %v2160, %v2159
      %v2245 = vpack.c.b16 %v2162, %v2161
      %v2246 = vpack.c.b16 %v2164, %v2163
      %v2247 = vpack.c.b16 %v2166, %v2165
      %v2248 = vpack.c.b16 %v2168, %v2167
      %v2249 = vpack.c.b16 %v2170, %v2169
      %v2250 = vpack.c.b16 %v2172, %v2171
      %v2251 = vpack.c.b16 %v2174, %v2173
      %v2252 = vpack.c.b16 %v2176, %v2175
      %v2253 = vpack.c.b16 %v2178, %v2177
      %v2254 = vpack.c.b16 %v2180, %v2179
      %v2255 = vpack.c.b16 %v2182, %v2181
      %v2256 = vpack.c.b16 %v2184, %v2183
      %v2257 = vpack.c.b16 %v2186, %v2185
      %v2258 = vpack.c.b16 %v2188, %v2187
      %v2259 = vpack.c.b16 %v2190, %v2189
      %v2260 = vpack.c.b16 %v2192, %v2191
      %v2261 = vpack.c.b16 %v2194, %v2193
      %v2262 = vpack.c.b16 %v2196, %v2195
      %v2263 = vpack.c.b16 %v2198, %v2197
      %v2264 = vpack.c.b16 %v2200, %v2199
      %2329 = vmatprep.subr.bf16.mxu0 %v1154
      %2330 = vmatpush1.bf16.msra.mxu0 %v1153
      %2331 = vmatprep.subr.bf16.mxu0 %v1157
      %2332 = vmatpush1.bf16.msra.mxu0 %v1156
      %2333 = vmatprep.subr.bf16.mxu0 %v1160
      %2334 = vmatpush1.bf16.msra.mxu0 %v1159
      %2335 = vmatprep.subr.bf16.mxu0 %v1163
      %2336 = vmatpush1.bf16.msra.mxu0 %v1162
      %2337 = vmatprep.subr.bf16.mxu0 %v1166
      %2338 = vmatpush1.bf16.msra.mxu0 %v1165
      %2339 = vmatprep.subr.bf16.mxu0 %v1169
      %2340 = vmatpush1.bf16.msra.mxu0 %v1168
      %2341 = vmatprep.subr.bf16.mxu0 %v1172
      %2342 = vmatpush1.bf16.msra.mxu0 %v1171
      %2343 = vmatprep.subr.bf16.mxu0 %v1175
      %2344 = vmatpush1.bf16.msra.mxu0 %v1174
      %2345 = vmatprep.subr.bf16.mxu0 0
      %2346 = vmatpush1.bf16.msra.mxu0 0
      %2347 = vmatprep.subr.bf16.mxu0 0
      %2348 = vmatpush1.bf16.msra.mxu0 0
      %2349 = vmatprep.subr.bf16.mxu0 0
      %2350 = vmatpush1.bf16.msra.mxu0 0
      %2351 = vmatprep.subr.bf16.mxu0 0
      %2352 = vmatpush1.bf16.msra.mxu0 0
      %2353 = vmatprep.subr.bf16.mxu0 0
      %2354 = vmatpush1.bf16.msra.mxu0 0
      %2355 = vmatprep.subr.bf16.mxu0 0
      %2356 = vmatpush1.bf16.msra.mxu0 0
      %2357 = vmatprep.subr.bf16.mxu0 0
      %2358 = vmatpush1.bf16.msra.mxu0 0
      %2359 = vmatprep.subr.bf16.mxu0 0
      %2360 = vmatpush1.bf16.msra.mxu0 0
      %2361 = vmatprep.mubr.bf16.mxu0 0
      %2362 = vmatmul.mubr.bf16.gmra.mrb[0].mxu0 %v2201
      %v2363 = vpop.f32.mrb[0].mxu0
      %v2364 = vadd.f32 %v1308, %v2363
      %v2365 = vpop.f32.mrb[0].mxu0
      %v2366 = vadd.f32 %v1308, %v2365
      %v2367 = vpop.f32.mrb[0].mxu0
      %v2368 = vadd.f32 %v1313, %v2367
      %v2369 = vpop.f32.mrb[0].mxu0
      %v2370 = vadd.f32 %v1313, %v2369
      %2371 = vmatprep.mubr.bf16.mxu0 0
      %2372 = vmatmul.mubr.bf16.gmra.mrb[0].mxu0 %v2202
      %v2373 = vpop.f32.mrb[0].mxu0
      %v2374 = vadd.f32 %v1318, %v2373
      %v2375 = vpop.f32.mrb[0].mxu0
      %v2376 = vadd.f32 %v1318, %v2375
      %v2377 = vpop.f32.mrb[0].mxu0
      %v2378 = vadd.f32 %v1323, %v2377
      %v2379 = vpop.f32.mrb[0].mxu0
      %v2380 = vadd.f32 %v1323, %v2379
      %2381 = vmatprep.mubr.bf16.mxu0 0
      %2382 = vmatmul.mubr.bf16.gmra.mrb[0].mxu0 %v2203
      %v2383 = vpop.f32.mrb[0].mxu0
      %v2384 = vadd.f32 %v1328, %v2383
      %v2385 = vpop.f32.mrb[0].mxu0
      %v2386 = vadd.f32 %v1328, %v2385
      %v2387 = vpop.f32.mrb[0].mxu0
      %v2388 = vadd.f32 %v1333, %v2387
      %v2389 = vpop.f32.mrb[0].mxu0
      %v2390 = vadd.f32 %v1333, %v2389
      %2391 = vmatprep.mubr.bf16.mxu0 0
      %2392 = vmatmul.mubr.bf16.gmra.mrb[0].mxu0 %v2204
      %v2393 = vpop.f32.mrb[0].mxu0
      %v2394 = vadd.f32 %v1338, %v2393
      %v2395 = vpop.f32.mrb[0].mxu0
      %v2396 = vadd.f32 %v1338, %v2395
      %v2397 = vpop.f32.mrb[0].mxu0
      %v2398 = vadd.f32 %v1343, %v2397
      %v2399 = vpop.f32.mrb[0].mxu0
      %v2400 = vadd.f32 %v1343, %v2399
      %2401 = vmatprep.mubr.bf16.mxu0 0
      %2402 = vmatmul.mubr.bf16.gmra.mrb[0].mxu0 %v2205
      %v2403 = vpop.f32.mrb[0].mxu0
      %v2404 = vadd.f32 %v1348, %v2403
      %v2405 = vpop.f32.mrb[0].mxu0
      %v2406 = vadd.f32 %v1348, %v2405
      %v2407 = vpop.f32.mrb[0].mxu0
      %v2408 = vadd.f32 %v1353, %v2407
      %v2409 = vpop.f32.mrb[0].mxu0
      %v2410 = vadd.f32 %v1353, %v2409
      %2411 = vmatprep.mubr.bf16.mxu0 0
      %2412 = vmatmul.mubr.bf16.gmra.mrb[0].mxu0 %v2206
      %v2413 = vpop.f32.mrb[0].mxu0
      %v2414 = vadd.f32 %v1358, %v2413
      %v2415 = vpop.f32.mrb[0].mxu0
      %v2416 = vadd.f32 %v1358, %v2415
      %v2417 = vpop.f32.mrb[0].mxu0
      %v2418 = vadd.f32 %v1363, %v2417
      %v2419 = vpop.f32.mrb[0].mxu0
      %v2420 = vadd.f32 %v1363, %v2419
      %2421 = vmatprep.mubr.bf16.mxu0 0
      %2422 = vmatmul.mubr.bf16.gmra.mrb[0].mxu0 %v2207
      %v2423 = vpop.f32.mrb[0].mxu0
      %v2424 = vadd.f32 %v1368, %v2423
      %v2425 = vpop.f32.mrb[0].mxu0
      %v2426 = vadd.f32 %v1368, %v2425
      %v2427 = vpop.f32.mrb[0].mxu0
      %v2428 = vadd.f32 %v1373, %v2427
      %v2429 = vpop.f32.mrb[0].mxu0
      %v2430 = vadd.f32 %v1373, %v2429
      %2431 = vmatprep.mubr.bf16.mxu0 0
      %2432 = vmatmul.mubr.bf16.gmra.mrb[0].mxu0 %v2208
      %v2433 = vpop.f32.mrb[0].mxu0
      %v2434 = vadd.f32 %v1378, %v2433
      %v2435 = vpop.f32.mrb[0].mxu0
      %v2436 = vadd.f32 %v1378, %v2435
      %v2437 = vpop.f32.mrb[0].mxu0
      %v2438 = vadd.f32 %v1383, %v2437
      %v2439 = vpop.f32.mrb[0].mxu0
      %v2440 = vadd.f32 %v1383, %v2439
      %2441 = vmatprep.mubr.bf16.mxu0 0
      %2442 = vmatmul.mubr.bf16.gmra.mrb[0].mxu0 %v2209
      %v2443 = vpop.f32.mrb[0].mxu0
      %v2444 = vadd.f32 %v1388, %v2443
      %v2445 = vpop.f32.mrb[0].mxu0
      %v2446 = vadd.f32 %v1388, %v2445
      %v2447 = vpop.f32.mrb[0].mxu0
      %v2448 = vadd.f32 %v1393, %v2447
      %v2449 = vpop.f32.mrb[0].mxu0
      %v2450 = vadd.f32 %v1393, %v2449
      %2451 = vmatprep.mubr.bf16.mxu0 0
      %2452 = vmatmul.mubr.bf16.gmra.mrb[0].mxu0 %v2210
      %v2453 = vpop.f32.mrb[0].mxu0
      %v2454 = vadd.f32 %v1398, %v2453
      %v2455 = vpop.f32.mrb[0].mxu0
      %v2456 = vadd.f32 %v1398, %v2455
      %v2457 = vpop.f32.mrb[0].mxu0
      %v2458 = vadd.f32 %v1403, %v2457
      %v2459 = vpop.f32.mrb[0].mxu0
      %v2460 = vadd.f32 %v1403, %v2459
      %2461 = vmatprep.mubr.bf16.mxu0 0
      %2462 = vmatmul.mubr.bf16.gmra.mrb[0].mxu0 %v2211
      %v2463 = vpop.f32.mrb[0].mxu0
      %v2464 = vadd.f32 %v1408, %v2463
      %v2465 = vpop.f32.mrb[0].mxu0
      %v2466 = vadd.f32 %v1408, %v2465
      %v2467 = vpop.f32.mrb[0].mxu0
      %v2468 = vadd.f32 %v1413, %v2467
      %v2469 = vpop.f32.mrb[0].mxu0
      %v2470 = vadd.f32 %v1413, %v2469
      %2471 = vmatprep.mubr.bf16.mxu0 0
      %2472 = vmatmul.mubr.bf16.gmra.mrb[0].mxu0 %v2212
      %v2473 = vpop.f32.mrb[0].mxu0
      %v2474 = vadd.f32 %v1418, %v2473
      %v2475 = vpop.f32.mrb[0].mxu0
      %v2476 = vadd.f32 %v1418, %v2475
      %v2477 = vpop.f32.mrb[0].mxu0
      %v2478 = vadd.f32 %v1423, %v2477
      %v2479 = vpop.f32.mrb[0].mxu0
      %v2480 = vadd.f32 %v1423, %v2479
      %2481 = vmatprep.mubr.bf16.mxu0 0
      %2482 = vmatmul.mubr.bf16.gmra.mrb[0].mxu0 %v2213
      %v2483 = vpop.f32.mrb[0].mxu0
      %v2484 = vadd.f32 %v1428, %v2483
      %v2485 = vpop.f32.mrb[0].mxu0
      %v2486 = vadd.f32 %v1428, %v2485
      %v2487 = vpop.f32.mrb[0].mxu0
      %v2488 = vadd.f32 %v1433, %v2487
      %v2489 = vpop.f32.mrb[0].mxu0
      %v2490 = vadd.f32 %v1433, %v2489
      %2491 = vmatprep.mubr.bf16.mxu0 0
      %2492 = vmatmul.mubr.bf16.gmra.mrb[0].mxu0 %v2214
      %v2493 = vpop.f32.mrb[0].mxu0
      %v2494 = vadd.f32 %v1438, %v2493
      %v2495 = vpop.f32.mrb[0].mxu0
      %v2496 = vadd.f32 %v1438, %v2495
      %v2497 = vpop.f32.mrb[0].mxu0
      %v2498 = vadd.f32 %v1443, %v2497
      %v2499 = vpop.f32.mrb[0].mxu0
      %v2500 = vadd.f32 %v1443, %v2499
      %2501 = vmatprep.mubr.bf16.mxu0 0
      %2502 = vmatmul.mubr.bf16.gmra.mrb[0].mxu0 %v2215
      %v2503 = vpop.f32.mrb[0].mxu0
      %v2504 = vadd.f32 %v1448, %v2503
      %v2505 = vpop.f32.mrb[0].mxu0
      %v2506 = vadd.f32 %v1448, %v2505
      %v2507 = vpop.f32.mrb[0].mxu0
      %v2508 = vadd.f32 %v1453, %v2507
      %v2509 = vpop.f32.mrb[0].mxu0
      %v2510 = vadd.f32 %v1453, %v2509
      %2511 = vmatprep.mubr.bf16.mxu0 0
      %2512 = vmatmul.mubr.bf16.gmra.mrb[0].mxu0 %v2216
      %v2513 = vpop.f32.mrb[0].mxu0
      %v2514 = vadd.f32 %v1458, %v2513
      %v2515 = vpop.f32.mrb[0].mxu0
      %v2516 = vadd.f32 %v1458, %v2515
      %v2517 = vpop.f32.mrb[0].mxu0
      %v2518 = vadd.f32 %v1463, %v2517
      %v2519 = vpop.f32.mrb[0].mxu0
      %v2520 = vadd.f32 %v1463, %v2519
      %2521 = vmatprep.mubr.bf16.mxu0 0
      %2522 = vmatmul.mubr.bf16.gmra.mrb[0].mxu0 %v2217
      %v2523 = vpop.f32.mrb[0].mxu0
      %v2524 = vadd.f32 %v1468, %v2523
      %v2525 = vpop.f32.mrb[0].mxu0
      %v2526 = vadd.f32 %v1468, %v2525
      %v2527 = vpop.f32.mrb[0].mxu0
      %v2528 = vadd.f32 %v1473, %v2527
      %v2529 = vpop.f32.mrb[0].mxu0
      %v2530 = vadd.f32 %v1473, %v2529
      %2531 = vmatprep.mubr.bf16.mxu0 0
      %2532 = vmatmul.mubr.bf16.gmra.mrb[0].mxu0 %v2218
      %v2533 = vpop.f32.mrb[0].mxu0
      %v2534 = vadd.f32 %v1478, %v2533
      %v2535 = vpop.f32.mrb[0].mxu0
      %v2536 = vadd.f32 %v1478, %v2535
      %v2537 = vpop.f32.mrb[0].mxu0
      %v2538 = vadd.f32 %v1483, %v2537
      %v2539 = vpop.f32.mrb[0].mxu0
      %v2540 = vadd.f32 %v1483, %v2539
      %2541 = vmatprep.mubr.bf16.mxu0 0
      %2542 = vmatmul.mubr.bf16.gmra.mrb[0].mxu0 %v2219
      %v2543 = vpop.f32.mrb[0].mxu0
      %v2544 = vadd.f32 %v1488, %v2543
      %v2545 = vpop.f32.mrb[0].mxu0
      %v2546 = vadd.f32 %v1488, %v2545
      %v2547 = vpop.f32.mrb[0].mxu0
      %v2548 = vadd.f32 %v1493, %v2547
      %v2549 = vpop.f32.mrb[0].mxu0
      %v2550 = vadd.f32 %v1493, %v2549
      %2551 = vmatprep.mubr.bf16.mxu0 0
      %2552 = vmatmul.mubr.bf16.gmra.mrb[0].mxu0 %v2220
      %v2553 = vpop.f32.mrb[0].mxu0
      %v2554 = vadd.f32 %v1498, %v2553
      %v2555 = vpop.f32.mrb[0].mxu0
      %v2556 = vadd.f32 %v1498, %v2555
      %v2557 = vpop.f32.mrb[0].mxu0
      %v2558 = vadd.f32 %v1503, %v2557
      %v2559 = vpop.f32.mrb[0].mxu0
      %v2560 = vadd.f32 %v1503, %v2559
      %2561 = vmatprep.mubr.bf16.mxu0 0
      %2562 = vmatmul.mubr.bf16.gmra.mrb[0].mxu0 %v2221
      %v2563 = vpop.f32.mrb[0].mxu0
      %v2564 = vadd.f32 %v1508, %v2563
      %v2565 = vpop.f32.mrb[0].mxu0
      %v2566 = vadd.f32 %v1508, %v2565
      %v2567 = vpop.f32.mrb[0].mxu0
      %v2568 = vadd.f32 %v1513, %v2567
      %v2569 = vpop.f32.mrb[0].mxu0
      %v2570 = vadd.f32 %v1513, %v2569
      %2571 = vmatprep.mubr.bf16.mxu0 0
      %2572 = vmatmul.mubr.bf16.gmra.mrb[0].mxu0 %v2222
      %v2573 = vpop.f32.mrb[0].mxu0
      %v2574 = vadd.f32 %v1518, %v2573
      %v2575 = vpop.f32.mrb[0].mxu0
      %v2576 = vadd.f32 %v1518, %v2575
      %v2577 = vpop.f32.mrb[0].mxu0
      %v2578 = vadd.f32 %v1523, %v2577
      %v2579 = vpop.f32.mrb[0].mxu0
      %v2580 = vadd.f32 %v1523, %v2579
      %2581 = vmatprep.mubr.bf16.mxu0 0
      %2582 = vmatmul.mubr.bf16.gmra.mrb[0].mxu0 %v2223
      %v2583 = vpop.f32.mrb[0].mxu0
      %v2584 = vadd.f32 %v1528, %v2583
      %v2585 = vpop.f32.mrb[0].mxu0
      %v2586 = vadd.f32 %v1528, %v2585
      %v2587 = vpop.f32.mrb[0].mxu0
      %v2588 = vadd.f32 %v1533, %v2587
      %v2589 = vpop.f32.mrb[0].mxu0
      %v2590 = vadd.f32 %v1533, %v2589
      %2591 = vmatprep.mubr.bf16.mxu0 0
      %2592 = vmatmul.mubr.bf16.gmra.mrb[0].mxu0 %v2224
      %v2593 = vpop.f32.mrb[0].mxu0
      %v2594 = vadd.f32 %v1538, %v2593
      %v2595 = vpop.f32.mrb[0].mxu0
      %v2596 = vadd.f32 %v1538, %v2595
      %v2597 = vpop.f32.mrb[0].mxu0
      %v2598 = vadd.f32 %v1543, %v2597
      %v2599 = vpop.f32.mrb[0].mxu0
      %v2600 = vadd.f32 %v1543, %v2599
      %2601 = vmatprep.mubr.bf16.mxu0 0
      %2602 = vmatmul.mubr.bf16.gmra.mrb[0].mxu0 %v2225
      %v2603 = vpop.f32.mrb[0].mxu0
      %v2604 = vadd.f32 %v1548, %v2603
      %v2605 = vpop.f32.mrb[0].mxu0
      %v2606 = vadd.f32 %v1548, %v2605
      %v2607 = vpop.f32.mrb[0].mxu0
      %v2608 = vadd.f32 %v1553, %v2607
      %v2609 = vpop.f32.mrb[0].mxu0
      %v2610 = vadd.f32 %v1553, %v2609
      %2611 = vmatprep.mubr.bf16.mxu0 0
      %2612 = vmatmul.mubr.bf16.gmra.mrb[0].mxu0 %v2226
      %v2613 = vpop.f32.mrb[0].mxu0
      %v2614 = vadd.f32 %v1558, %v2613
      %v2615 = vpop.f32.mrb[0].mxu0
      %v2616 = vadd.f32 %v1558, %v2615
      %v2617 = vpop.f32.mrb[0].mxu0
      %v2618 = vadd.f32 %v1563, %v2617
      %v2619 = vpop.f32.mrb[0].mxu0
      %v2620 = vadd.f32 %v1563, %v2619
      %2621 = vmatprep.mubr.bf16.mxu0 0
      %2622 = vmatmul.mubr.bf16.gmra.mrb[0].mxu0 %v2227
      %v2623 = vpop.f32.mrb[0].mxu0
      %v2624 = vadd.f32 %v1568, %v2623
      %v2625 = vpop.f32.mrb[0].mxu0
      %v2626 = vadd.f32 %v1568, %v2625
      %v2627 = vpop.f32.mrb[0].mxu0
      %v2628 = vadd.f32 %v1573, %v2627
      %v2629 = vpop.f32.mrb[0].mxu0
      %v2630 = vadd.f32 %v1573, %v2629
      %2631 = vmatprep.mubr.bf16.mxu0 0
      %2632 = vmatmul.mubr.bf16.gmra.mrb[0].mxu0 %v2228
      %v2633 = vpop.f32.mrb[0].mxu0
      %v2634 = vadd.f32 %v1578, %v2633
      %v2635 = vpop.f32.mrb[0].mxu0
      %v2636 = vadd.f32 %v1578, %v2635
      %v2637 = vpop.f32.mrb[0].mxu0
      %v2638 = vadd.f32 %v1583, %v2637
      %v2639 = vpop.f32.mrb[0].mxu0
      %v2640 = vadd.f32 %v1583, %v2639
      %2641 = vmatprep.mubr.bf16.mxu0 0
      %2642 = vmatmul.mubr.bf16.gmra.mrb[0].mxu0 %v2229
      %v2643 = vpop.f32.mrb[0].mxu0
      %v2644 = vadd.f32 %v1588, %v2643
      %v2645 = vpop.f32.mrb[0].mxu0
      %v2646 = vadd.f32 %v1588, %v2645
      %v2647 = vpop.f32.mrb[0].mxu0
      %v2648 = vadd.f32 %v1593, %v2647
      %v2649 = vpop.f32.mrb[0].mxu0
      %v2650 = vadd.f32 %v1593, %v2649
      %2651 = vmatprep.mubr.bf16.mxu0 0
      %2652 = vmatmul.mubr.bf16.gmra.mrb[0].mxu0 %v2230
      %v2653 = vpop.f32.mrb[0].mxu0
      %v2654 = vadd.f32 %v1598, %v2653
      %v2655 = vpop.f32.mrb[0].mxu0
      %v2656 = vadd.f32 %v1598, %v2655
      %v2657 = vpop.f32.mrb[0].mxu0
      %v2658 = vadd.f32 %v1603, %v2657
      %v2659 = vpop.f32.mrb[0].mxu0
      %v2660 = vadd.f32 %v1603, %v2659
      %2661 = vmatprep.mubr.bf16.mxu0 0
      %2662 = vmatmul.mubr.bf16.gmra.mrb[0].mxu0 %v2231
      %v2663 = vpop.f32.mrb[0].mxu0
      %v2664 = vadd.f32 %v1608, %v2663
      %v2665 = vpop.f32.mrb[0].mxu0
      %v2666 = vadd.f32 %v1608, %v2665
      %v2667 = vpop.f32.mrb[0].mxu0
      %v2668 = vadd.f32 %v1613, %v2667
      %v2669 = vpop.f32.mrb[0].mxu0
      %v2670 = vadd.f32 %v1613, %v2669
      %2671 = vmatprep.mubr.bf16.mxu0 0
      %2672 = vmatmul.mubr.bf16.gmra.mrb[0].mxu0 %v2232
      %v2673 = vpop.f32.mrb[0].mxu0
      %v2674 = vadd.f32 %v1618, %v2673
      %v2675 = vpop.f32.mrb[0].mxu0
      %v2676 = vadd.f32 %v1618, %v2675
      %v2677 = vpop.f32.mrb[0].mxu0
      %v2678 = vadd.f32 %v1623, %v2677
      %v2679 = vpop.f32.mrb[0].mxu0
      %v2680 = vadd.f32 %v1623, %v2679
      %2681 = vmatprep.mubr.bf16.mxu0 0
      %2682 = vmatmul.mubr.bf16.gmra.mrb[0].mxu0 %v2233
      %v2683 = vpop.f32.mrb[0].mxu0
      %v2684 = vadd.f32 %v1628, %v2683
      %v2685 = vpop.f32.mrb[0].mxu0
      %v2686 = vadd.f32 %v1628, %v2685
      %v2687 = vpop.f32.mrb[0].mxu0
      %v2688 = vadd.f32 %v1633, %v2687
      %v2689 = vpop.f32.mrb[0].mxu0
      %v2690 = vadd.f32 %v1633, %v2689
      %2691 = vmatprep.mubr.bf16.mxu0 0
      %2692 = vmatmul.mubr.bf16.gmra.mrb[0].mxu0 %v2234
      %v2693 = vpop.f32.mrb[0].mxu0
      %v2694 = vadd.f32 %v1638, %v2693
      %v2695 = vpop.f32.mrb[0].mxu0
      %v2696 = vadd.f32 %v1638, %v2695
      %v2697 = vpop.f32.mrb[0].mxu0
      %v2698 = vadd.f32 %v1643, %v2697
      %v2699 = vpop.f32.mrb[0].mxu0
      %v2700 = vadd.f32 %v1643, %v2699
      %2701 = vmatprep.mubr.bf16.mxu0 0
      %2702 = vmatmul.mubr.bf16.gmra.mrb[0].mxu0 %v2235
      %v2703 = vpop.f32.mrb[0].mxu0
      %v2704 = vadd.f32 %v1648, %v2703
      %v2705 = vpop.f32.mrb[0].mxu0
      %v2706 = vadd.f32 %v1648, %v2705
      %v2707 = vpop.f32.mrb[0].mxu0
      %v2708 = vadd.f32 %v1653, %v2707
      %v2709 = vpop.f32.mrb[0].mxu0
      %v2710 = vadd.f32 %v1653, %v2709
      %2711 = vmatprep.mubr.bf16.mxu0 0
      %2712 = vmatmul.mubr.bf16.gmra.mrb[0].mxu0 %v2236
      %v2713 = vpop.f32.mrb[0].mxu0
      %v2714 = vadd.f32 %v1658, %v2713
      %v2715 = vpop.f32.mrb[0].mxu0
      %v2716 = vadd.f32 %v1658, %v2715
      %v2717 = vpop.f32.mrb[0].mxu0
      %v2718 = vadd.f32 %v1663, %v2717
      %v2719 = vpop.f32.mrb[0].mxu0
      %v2720 = vadd.f32 %v1663, %v2719
      %2721 = vmatprep.mubr.bf16.mxu0 0
      %2722 = vmatmul.mubr.bf16.gmra.mrb[0].mxu0 %v2237
      %v2723 = vpop.f32.mrb[0].mxu0
      %v2724 = vadd.f32 %v1668, %v2723
      %v2725 = vpop.f32.mrb[0].mxu0
      %v2726 = vadd.f32 %v1668, %v2725
      %v2727 = vpop.f32.mrb[0].mxu0
      %v2728 = vadd.f32 %v1673, %v2727
      %v2729 = vpop.f32.mrb[0].mxu0
      %v2730 = vadd.f32 %v1673, %v2729
      %2731 = vmatprep.mubr.bf16.mxu0 0
      %2732 = vmatmul.mubr.bf16.gmra.mrb[0].mxu0 %v2238
      %v2733 = vpop.f32.mrb[0].mxu0
      %v2734 = vadd.f32 %v1678, %v2733
      %v2735 = vpop.f32.mrb[0].mxu0
      %v2736 = vadd.f32 %v1678, %v2735
      %v2737 = vpop.f32.mrb[0].mxu0
      %v2738 = vadd.f32 %v1683, %v2737
      %v2739 = vpop.f32.mrb[0].mxu0
      %v2740 = vadd.f32 %v1683, %v2739
      %2741 = vmatprep.mubr.bf16.mxu0 0
      %2742 = vmatmul.mubr.bf16.gmra.mrb[0].mxu0 %v2239
      %v2743 = vpop.f32.mrb[0].mxu0
      %v2744 = vadd.f32 %v1688, %v2743
      %v2745 = vpop.f32.mrb[0].mxu0
      %v2746 = vadd.f32 %v1688, %v2745
      %v2747 = vpop.f32.mrb[0].mxu0
      %v2748 = vadd.f32 %v1693, %v2747
      %v2749 = vpop.f32.mrb[0].mxu0
      %v2750 = vadd.f32 %v1693, %v2749
      %2751 = vmatprep.mubr.bf16.mxu0 0
      %2752 = vmatmul.mubr.bf16.gmra.mrb[0].mxu0 %v2240
      %v2753 = vpop.f32.mrb[0].mxu0
      %v2754 = vadd.f32 %v1698, %v2753
      %v2755 = vpop.f32.mrb[0].mxu0
      %v2756 = vadd.f32 %v1698, %v2755
      %v2757 = vpop.f32.mrb[0].mxu0
      %v2758 = vadd.f32 %v1703, %v2757
      %v2759 = vpop.f32.mrb[0].mxu0
      %v2760 = vadd.f32 %v1703, %v2759
      %2761 = vmatprep.mubr.bf16.mxu0 0
      %2762 = vmatmul.mubr.bf16.gmra.mrb[0].mxu0 %v2241
      %v2763 = vpop.f32.mrb[0].mxu0
      %v2764 = vadd.f32 %v1708, %v2763
      %v2765 = vpop.f32.mrb[0].mxu0
      %v2766 = vadd.f32 %v1708, %v2765
      %v2767 = vpop.f32.mrb[0].mxu0
      %v2768 = vadd.f32 %v1713, %v2767
      %v2769 = vpop.f32.mrb[0].mxu0
      %v2770 = vadd.f32 %v1713, %v2769
      %2771 = vmatprep.mubr.bf16.mxu0 0
      %2772 = vmatmul.mubr.bf16.gmra.mrb[0].mxu0 %v2242
      %v2773 = vpop.f32.mrb[0].mxu0
      %v2774 = vadd.f32 %v1718, %v2773
      %v2775 = vpop.f32.mrb[0].mxu0
      %v2776 = vadd.f32 %v1718, %v2775
      %v2777 = vpop.f32.mrb[0].mxu0
      %v2778 = vadd.f32 %v1723, %v2777
      %v2779 = vpop.f32.mrb[0].mxu0
      %v2780 = vadd.f32 %v1723, %v2779
      %2781 = vmatprep.mubr.bf16.mxu0 0
      %2782 = vmatmul.mubr.bf16.gmra.mrb[0].mxu0 %v2243
      %v2783 = vpop.f32.mrb[0].mxu0
      %v2784 = vadd.f32 %v1728, %v2783
      %v2785 = vpop.f32.mrb[0].mxu0
      %v2786 = vadd.f32 %v1728, %v2785
      %v2787 = vpop.f32.mrb[0].mxu0
      %v2788 = vadd.f32 %v1733, %v2787
      %v2789 = vpop.f32.mrb[0].mxu0
      %v2790 = vadd.f32 %v1733, %v2789
      %2791 = vmatprep.mubr.bf16.mxu0 0
      %2792 = vmatmul.mubr.bf16.gmra.mrb[0].mxu0 %v2244
      %v2793 = vpop.f32.mrb[0].mxu0
      %v2794 = vadd.f32 %v1738, %v2793
      %v2795 = vpop.f32.mrb[0].mxu0
      %v2796 = vadd.f32 %v1738, %v2795
      %v2797 = vpop.f32.mrb[0].mxu0
      %v2798 = vadd.f32 %v1743, %v2797
      %v2799 = vpop.f32.mrb[0].mxu0
      %v2800 = vadd.f32 %v1743, %v2799
      %2801 = vmatprep.mubr.bf16.mxu0 0
      %2802 = vmatmul.mubr.bf16.gmra.mrb[0].mxu0 %v2245
      %v2803 = vpop.f32.mrb[0].mxu0
      %v2804 = vadd.f32 %v1748, %v2803
      %v2805 = vpop.f32.mrb[0].mxu0
      %v2806 = vadd.f32 %v1748, %v2805
      %v2807 = vpop.f32.mrb[0].mxu0
      %v2808 = vadd.f32 %v1753, %v2807
      %v2809 = vpop.f32.mrb[0].mxu0
      %v2810 = vadd.f32 %v1753, %v2809
      %2811 = vmatprep.mubr.bf16.mxu0 0
      %2812 = vmatmul.mubr.bf16.gmra.mrb[0].mxu0 %v2246
      %v2813 = vpop.f32.mrb[0].mxu0
      %v2814 = vadd.f32 %v1758, %v2813
      %v2815 = vpop.f32.mrb[0].mxu0
      %v2816 = vadd.f32 %v1758, %v2815
      %v2817 = vpop.f32.mrb[0].mxu0
      %v2818 = vadd.f32 %v1763, %v2817
      %v2819 = vpop.f32.mrb[0].mxu0
      %v2820 = vadd.f32 %v1763, %v2819
      %2821 = vmatprep.mubr.bf16.mxu0 0
      %2822 = vmatmul.mubr.bf16.gmra.mrb[0].mxu0 %v2247
      %v2823 = vpop.f32.mrb[0].mxu0
      %v2824 = vadd.f32 %v1768, %v2823
      %v2825 = vpop.f32.mrb[0].mxu0
      %v2826 = vadd.f32 %v1768, %v2825
      %v2827 = vpop.f32.mrb[0].mxu0
      %v2828 = vadd.f32 %v1773, %v2827
      %v2829 = vpop.f32.mrb[0].mxu0
      %v2830 = vadd.f32 %v1773, %v2829
      %2831 = vmatprep.mubr.bf16.mxu0 0
      %2832 = vmatmul.mubr.bf16.gmra.mrb[0].mxu0 %v2248
      %v2833 = vpop.f32.mrb[0].mxu0
      %v2834 = vadd.f32 %v1778, %v2833
      %v2835 = vpop.f32.mrb[0].mxu0
      %v2836 = vadd.f32 %v1778, %v2835
      %v2837 = vpop.f32.mrb[0].mxu0
      %v2838 = vadd.f32 %v1783, %v2837
      %v2839 = vpop.f32.mrb[0].mxu0
      %v2840 = vadd.f32 %v1783, %v2839
      %2841 = vmatprep.mubr.bf16.mxu0 0
      %2842 = vmatmul.mubr.bf16.gmra.mrb[0].mxu0 %v2249
      %v2843 = vpop.f32.mrb[0].mxu0
      %v2844 = vadd.f32 %v1788, %v2843
      %v2845 = vpop.f32.mrb[0].mxu0
      %v2846 = vadd.f32 %v1788, %v2845
      %v2847 = vpop.f32.mrb[0].mxu0
      %v2848 = vadd.f32 %v1793, %v2847
      %v2849 = vpop.f32.mrb[0].mxu0
      %v2850 = vadd.f32 %v1793, %v2849
      %2851 = vmatprep.mubr.bf16.mxu0 0
      %2852 = vmatmul.mubr.bf16.gmra.mrb[0].mxu0 %v2250
      %v2853 = vpop.f32.mrb[0].mxu0
      %v2854 = vadd.f32 %v1798, %v2853
      %v2855 = vpop.f32.mrb[0].mxu0
      %v2856 = vadd.f32 %v1798, %v2855
      %v2857 = vpop.f32.mrb[0].mxu0
      %v2858 = vadd.f32 %v1803, %v2857
      %v2859 = vpop.f32.mrb[0].mxu0
      %v2860 = vadd.f32 %v1803, %v2859
      %2861 = vmatprep.mubr.bf16.mxu0 0
      %2862 = vmatmul.mubr.bf16.gmra.mrb[0].mxu0 %v2251
      %v2863 = vpop.f32.mrb[0].mxu0
      %v2864 = vadd.f32 %v1808, %v2863
      %v2865 = vpop.f32.mrb[0].mxu0
      %v2866 = vadd.f32 %v1808, %v2865
      %v2867 = vpop.f32.mrb[0].mxu0
      %v2868 = vadd.f32 %v1813, %v2867
      %v2869 = vpop.f32.mrb[0].mxu0
      %v2870 = vadd.f32 %v1813, %v2869
      %2871 = vmatprep.mubr.bf16.mxu0 0
      %2872 = vmatmul.mubr.bf16.gmra.mrb[0].mxu0 %v2252
      %v2873 = vpop.f32.mrb[0].mxu0
      %v2874 = vadd.f32 %v1818, %v2873
      %v2875 = vpop.f32.mrb[0].mxu0
      %v2876 = vadd.f32 %v1818, %v2875
      %v2877 = vpop.f32.mrb[0].mxu0
      %v2878 = vadd.f32 %v1823, %v2877
      %v2879 = vpop.f32.mrb[0].mxu0
      %v2880 = vadd.f32 %v1823, %v2879
      %2881 = vmatprep.mubr.bf16.mxu0 0
      %2882 = vmatmul.mubr.bf16.gmra.mrb[0].mxu0 %v2253
      %v2883 = vpop.f32.mrb[0].mxu0
      %v2884 = vadd.f32 %v1828, %v2883
      %v2885 = vpop.f32.mrb[0].mxu0
      %v2886 = vadd.f32 %v1828, %v2885
      %v2887 = vpop.f32.mrb[0].mxu0
      %v2888 = vadd.f32 %v1833, %v2887
      %v2889 = vpop.f32.mrb[0].mxu0
      %v2890 = vadd.f32 %v1833, %v2889
      %2891 = vmatprep.mubr.bf16.mxu0 0
      %2892 = vmatmul.mubr.bf16.gmra.mrb[0].mxu0 %v2254
      %v2893 = vpop.f32.mrb[0].mxu0
      %v2894 = vadd.f32 %v1838, %v2893
      %v2895 = vpop.f32.mrb[0].mxu0
      %v2896 = vadd.f32 %v1838, %v2895
      %v2897 = vpop.f32.mrb[0].mxu0
      %v2898 = vadd.f32 %v1843, %v2897
      %v2899 = vpop.f32.mrb[0].mxu0
      %v2900 = vadd.f32 %v1843, %v2899
      %2901 = vmatprep.mubr.bf16.mxu0 0
      %2902 = vmatmul.mubr.bf16.gmra.mrb[0].mxu0 %v2255
      %v2903 = vpop.f32.mrb[0].mxu0
      %v2904 = vadd.f32 %v1848, %v2903
      %v2905 = vpop.f32.mrb[0].mxu0
      %v2906 = vadd.f32 %v1848, %v2905
      %v2907 = vpop.f32.mrb[0].mxu0
      %v2908 = vadd.f32 %v1853, %v2907
      %v2909 = vpop.f32.mrb[0].mxu0
      %v2910 = vadd.f32 %v1853, %v2909
      %2911 = vmatprep.mubr.bf16.mxu0 0
      %2912 = vmatmul.mubr.bf16.gmra.mrb[0].mxu0 %v2256
      %v2913 = vpop.f32.mrb[0].mxu0
      %v2914 = vadd.f32 %v1858, %v2913
      %v2915 = vpop.f32.mrb[0].mxu0
      %v2916 = vadd.f32 %v1858, %v2915
      %v2917 = vpop.f32.mrb[0].mxu0
      %v2918 = vadd.f32 %v1863, %v2917
      %v2919 = vpop.f32.mrb[0].mxu0
      %v2920 = vadd.f32 %v1863, %v2919
      %2921 = vmatprep.mubr.bf16.mxu0 0
      %2922 = vmatmul.mubr.bf16.gmra.mrb[0].mxu0 %v2257
      %v2923 = vpop.f32.mrb[0].mxu0
      %v2924 = vadd.f32 %v1868, %v2923
      %v2925 = vpop.f32.mrb[0].mxu0
      %v2926 = vadd.f32 %v1868, %v2925
      %v2927 = vpop.f32.mrb[0].mxu0
      %v2928 = vadd.f32 %v1873, %v2927
      %v2929 = vpop.f32.mrb[0].mxu0
      %v2930 = vadd.f32 %v1873, %v2929
      %2931 = vmatprep.mubr.bf16.mxu0 0
      %2932 = vmatmul.mubr.bf16.gmra.mrb[0].mxu0 %v2258
      %v2933 = vpop.f32.mrb[0].mxu0
      %v2934 = vadd.f32 %v1878, %v2933
      %v2935 = vpop.f32.mrb[0].mxu0
      %v2936 = vadd.f32 %v1878, %v2935
      %v2937 = vpop.f32.mrb[0].mxu0
      %v2938 = vadd.f32 %v1883, %v2937
      %v2939 = vpop.f32.mrb[0].mxu0
      %v2940 = vadd.f32 %v1883, %v2939
      %2941 = vmatprep.mubr.bf16.mxu0 0
      %2942 = vmatmul.mubr.bf16.gmra.mrb[0].mxu0 %v2259
      %v2943 = vpop.f32.mrb[0].mxu0
      %v2944 = vadd.f32 %v1888, %v2943
      %v2945 = vpop.f32.mrb[0].mxu0
      %v2946 = vadd.f32 %v1888, %v2945
      %v2947 = vpop.f32.mrb[0].mxu0
      %v2948 = vadd.f32 %v1893, %v2947
      %v2949 = vpop.f32.mrb[0].mxu0
      %v2950 = vadd.f32 %v1893, %v2949
      %2951 = vmatprep.mubr.bf16.mxu0 0
      %2952 = vmatmul.mubr.bf16.gmra.mrb[0].mxu0 %v2260
      %v2953 = vpop.f32.mrb[0].mxu0
      %v2954 = vadd.f32 %v1898, %v2953
      %v2955 = vpop.f32.mrb[0].mxu0
      %v2956 = vadd.f32 %v1898, %v2955
      %v2957 = vpop.f32.mrb[0].mxu0
      %v2958 = vadd.f32 %v1903, %v2957
      %v2959 = vpop.f32.mrb[0].mxu0
      %v2960 = vadd.f32 %v1903, %v2959
      %2961 = vmatprep.mubr.bf16.mxu0 0
      %2962 = vmatmul.mubr.bf16.gmra.mrb[0].mxu0 %v2261
      %v2963 = vpop.f32.mrb[0].mxu0
      %v2964 = vadd.f32 %v1908, %v2963
      %v2965 = vpop.f32.mrb[0].mxu0
      %v2966 = vadd.f32 %v1908, %v2965
      %v2967 = vpop.f32.mrb[0].mxu0
      %v2968 = vadd.f32 %v1913, %v2967
      %v2969 = vpop.f32.mrb[0].mxu0
      %v2970 = vadd.f32 %v1913, %v2969
      %2971 = vmatprep.mubr.bf16.mxu0 0
      %2972 = vmatmul.mubr.bf16.gmra.mrb[0].mxu0 %v2262
      %v2973 = vpop.f32.mrb[0].mxu0
      %v2974 = vadd.f32 %v1918, %v2973
      %v2975 = vpop.f32.mrb[0].mxu0
      %v2976 = vadd.f32 %v1918, %v2975
      %v2977 = vpop.f32.mrb[0].mxu0
      %v2978 = vadd.f32 %v1923, %v2977
      %v2979 = vpop.f32.mrb[0].mxu0
      %v2980 = vadd.f32 %v1923, %v2979
      %2981 = vmatprep.mubr.bf16.mxu0 0
      %2982 = vmatmul.mubr.bf16.gmra.mrb[0].mxu0 %v2263
      %v2983 = vpop.f32.mrb[0].mxu0
      %v2984 = vadd.f32 %v1928, %v2983
      %v2985 = vpop.f32.mrb[0].mxu0
      %v2986 = vadd.f32 %v1928, %v2985
      %v2987 = vpop.f32.mrb[0].mxu0
      %v2988 = vadd.f32 %v1933, %v2987
      %v2989 = vpop.f32.mrb[0].mxu0
      %v2990 = vadd.f32 %v1933, %v2989
      %2991 = vmatprep.mubr.bf16.mxu0 0
      %2992 = vmatmul.mubr.bf16.gmra.mrb[0].mxu0 %v2264
      %v2993 = vpop.f32.mrb[0].mxu0
      %v2994 = vadd.f32 %v1938, %v2993
      %v2995 = vpop.f32.mrb[0].mxu0
      %v2996 = vadd.f32 %v1938, %v2995
      %v2997 = vpop.f32.mrb[0].mxu0
      %v2998 = vadd.f32 %v1943, %v2997
      %v2999 = vpop.f32.mrb[0].mxu0
      %v3000 = vadd.f32 %v1943, %v2999
      %3001 = vdwg.mxu0
      %3002 = vmatprep.subr.bf16.mxu0 0
      %3003 = vmatpush1.bf16.msra.mxu0 %v1155
      %3004 = vmatprep.subr.bf16.mxu0 0
      %3005 = vmatpush1.bf16.msra.mxu0 %v1158
      %3006 = vmatprep.subr.bf16.mxu0 0
      %3007 = vmatpush1.bf16.msra.mxu0 %v1161
      %3008 = vmatprep.subr.bf16.mxu0 0
      %3009 = vmatpush1.bf16.msra.mxu0 %v1164
      %3010 = vmatprep.subr.bf16.mxu0 0
      %3011 = vmatpush1.bf16.msra.mxu0 %v1167
      %3012 = vmatprep.subr.bf16.mxu0 0
      %3013 = vmatpush1.bf16.msra.mxu0 %v1170
      %3014 = vmatprep.subr.bf16.mxu0 0
      %3015 = vmatpush1.bf16.msra.mxu0 %v1173
      %3016 = vmatprep.subr.bf16.mxu0 0
      %3017 = vmatpush1.bf16.msra.mxu0 %v1176
      %3018 = vmatprep.subr.bf16.mxu0 0
      %3019 = vmatpush1.bf16.msra.mxu0 0
      %3020 = vmatprep.subr.bf16.mxu0 0
      %3021 = vmatpush1.bf16.msra.mxu0 0
      %3022 = vmatprep.subr.bf16.mxu0 0
      %3023 = vmatpush1.bf16.msra.mxu0 0
      %3024 = vmatprep.subr.bf16.mxu0 0
      %3025 = vmatpush1.bf16.msra.mxu0 0
      %3026 = vmatprep.subr.bf16.mxu0 0
      %3027 = vmatpush1.bf16.msra.mxu0 0
      %3028 = vmatprep.subr.bf16.mxu0 0
      %3029 = vmatpush1.bf16.msra.mxu0 0
      %3030 = vmatprep.subr.bf16.mxu0 0
      %3031 = vmatpush1.bf16.msra.mxu0 0
      %3032 = vmatprep.subr.bf16.mxu0 0
      %3033 = vmatpush1.bf16.msra.mxu0 0
      %3034 = vmatprep.mubr.bf16.mxu0 0
      %3035 = vmatmul.mubr.bf16.gmra.mrb[0].mxu0 %v2201
      %v3036 = vpop.f32.mrb[0].mxu0
      %v3037 = vadd.f32 %v1308, %v3036
      %v3038 = vpop.f32.mrb[0].mxu0
      %v3039 = vpop.f32.mrb[0].mxu0
      %v3040 = vadd.f32 %v1313, %v3039
      %v3041 = vpop.f32.mrb[0].mxu0
      %3042 = vmatprep.mubr.bf16.mxu0 0
      %3043 = vmatmul.mubr.bf16.gmra.mrb[0].mxu0 %v2202
      %v3044 = vpop.f32.mrb[0].mxu0
      %v3045 = vadd.f32 %v1318, %v3044
      %v3046 = vpop.f32.mrb[0].mxu0
      %v3047 = vpop.f32.mrb[0].mxu0
      %v3048 = vadd.f32 %v1323, %v3047
      %v3049 = vpop.f32.mrb[0].mxu0
      %3050 = vmatprep.mubr.bf16.mxu0 0
      %3051 = vmatmul.mubr.bf16.gmra.mrb[0].mxu0 %v2203
      %v3052 = vpop.f32.mrb[0].mxu0
      %v3053 = vadd.f32 %v1328, %v3052
      %v3054 = vpop.f32.mrb[0].mxu0
      %v3055 = vpop.f32.mrb[0].mxu0
      %v3056 = vadd.f32 %v1333, %v3055
      %v3057 = vpop.f32.mrb[0].mxu0
      %3058 = vmatprep.mubr.bf16.mxu0 0
      %3059 = vmatmul.mubr.bf16.gmra.mrb[0].mxu0 %v2204
      %v3060 = vpop.f32.mrb[0].mxu0
      %v3061 = vadd.f32 %v1338, %v3060
      %v3062 = vpop.f32.mrb[0].mxu0
      %v3063 = vpop.f32.mrb[0].mxu0
      %v3064 = vadd.f32 %v1343, %v3063
      %v3065 = vpop.f32.mrb[0].mxu0
      %3066 = vmatprep.mubr.bf16.mxu0 0
      %3067 = vmatmul.mubr.bf16.gmra.mrb[0].mxu0 %v2205
      %v3068 = vpop.f32.mrb[0].mxu0
      %v3069 = vadd.f32 %v1348, %v3068
      %v3070 = vpop.f32.mrb[0].mxu0
      %v3071 = vpop.f32.mrb[0].mxu0
      %v3072 = vadd.f32 %v1353, %v3071
      %v3073 = vpop.f32.mrb[0].mxu0
      %3074 = vmatprep.mubr.bf16.mxu0 0
      %3075 = vmatmul.mubr.bf16.gmra.mrb[0].mxu0 %v2206
      %v3076 = vpop.f32.mrb[0].mxu0
      %v3077 = vadd.f32 %v1358, %v3076
      %v3078 = vpop.f32.mrb[0].mxu0
      %v3079 = vpop.f32.mrb[0].mxu0
      %v3080 = vadd.f32 %v1363, %v3079
      %v3081 = vpop.f32.mrb[0].mxu0
      %3082 = vmatprep.mubr.bf16.mxu0 0
      %3083 = vmatmul.mubr.bf16.gmra.mrb[0].mxu0 %v2207
      %v3084 = vpop.f32.mrb[0].mxu0
      %v3085 = vadd.f32 %v1368, %v3084
      %v3086 = vpop.f32.mrb[0].mxu0
      %v3087 = vpop.f32.mrb[0].mxu0
      %v3088 = vadd.f32 %v1373, %v3087
      %v3089 = vpop.f32.mrb[0].mxu0
      %3090 = vmatprep.mubr.bf16.mxu0 0
      %3091 = vmatmul.mubr.bf16.gmra.mrb[0].mxu0 %v2208
      %v3092 = vpop.f32.mrb[0].mxu0
      %v3093 = vadd.f32 %v1378, %v3092
      %v3094 = vpop.f32.mrb[0].mxu0
      %v3095 = vpop.f32.mrb[0].mxu0
      %v3096 = vadd.f32 %v1383, %v3095
      %v3097 = vpop.f32.mrb[0].mxu0
      %3098 = vmatprep.mubr.bf16.mxu0 0
      %3099 = vmatmul.mubr.bf16.gmra.mrb[0].mxu0 %v2209
      %v3100 = vpop.f32.mrb[0].mxu0
      %v3101 = vadd.f32 %v1388, %v3100
      %v3102 = vpop.f32.mrb[0].mxu0
      %v3103 = vpop.f32.mrb[0].mxu0
      %v3104 = vadd.f32 %v1393, %v3103
      %v3105 = vpop.f32.mrb[0].mxu0
      %3106 = vmatprep.mubr.bf16.mxu0 0
      %3107 = vmatmul.mubr.bf16.gmra.mrb[0].mxu0 %v2210
      %v3108 = vpop.f32.mrb[0].mxu0
      %v3109 = vadd.f32 %v1398, %v3108
      %v3110 = vpop.f32.mrb[0].mxu0
      %v3111 = vpop.f32.mrb[0].mxu0
      %v3112 = vadd.f32 %v1403, %v3111
      %v3113 = vpop.f32.mrb[0].mxu0
      %3114 = vmatprep.mubr.bf16.mxu0 0
      %3115 = vmatmul.mubr.bf16.gmra.mrb[0].mxu0 %v2211
      %v3116 = vpop.f32.mrb[0].mxu0
      %v3117 = vadd.f32 %v1408, %v3116
      %v3118 = vpop.f32.mrb[0].mxu0
      %v3119 = vpop.f32.mrb[0].mxu0
      %v3120 = vadd.f32 %v1413, %v3119
      %v3121 = vpop.f32.mrb[0].mxu0
      %3122 = vmatprep.mubr.bf16.mxu0 0
      %3123 = vmatmul.mubr.bf16.gmra.mrb[0].mxu0 %v2212
      %v3124 = vpop.f32.mrb[0].mxu0
      %v3125 = vadd.f32 %v1418, %v3124
      %v3126 = vpop.f32.mrb[0].mxu0
      %v3127 = vpop.f32.mrb[0].mxu0
      %v3128 = vadd.f32 %v1423, %v3127
      %v3129 = vpop.f32.mrb[0].mxu0
      %3130 = vmatprep.mubr.bf16.mxu0 0
      %3131 = vmatmul.mubr.bf16.gmra.mrb[0].mxu0 %v2213
      %v3132 = vpop.f32.mrb[0].mxu0
      %v3133 = vadd.f32 %v1428, %v3132
      %v3134 = vpop.f32.mrb[0].mxu0
      %v3135 = vpop.f32.mrb[0].mxu0
      %v3136 = vadd.f32 %v1433, %v3135
      %v3137 = vpop.f32.mrb[0].mxu0
      %3138 = vmatprep.mubr.bf16.mxu0 0
      %3139 = vmatmul.mubr.bf16.gmra.mrb[0].mxu0 %v2214
      %v3140 = vpop.f32.mrb[0].mxu0
      %v3141 = vadd.f32 %v1438, %v3140
      %v3142 = vpop.f32.mrb[0].mxu0
      %v3143 = vpop.f32.mrb[0].mxu0
      %v3144 = vadd.f32 %v1443, %v3143
      %v3145 = vpop.f32.mrb[0].mxu0
      %3146 = vmatprep.mubr.bf16.mxu0 0
      %3147 = vmatmul.mubr.bf16.gmra.mrb[0].mxu0 %v2215
      %v3148 = vpop.f32.mrb[0].mxu0
      %v3149 = vadd.f32 %v1448, %v3148
      %v3150 = vpop.f32.mrb[0].mxu0
      %v3151 = vpop.f32.mrb[0].mxu0
      %v3152 = vadd.f32 %v1453, %v3151
      %v3153 = vpop.f32.mrb[0].mxu0
      %3154 = vmatprep.mubr.bf16.mxu0 0
      %3155 = vmatmul.mubr.bf16.gmra.mrb[0].mxu0 %v2216
      %v3156 = vpop.f32.mrb[0].mxu0
      %v3157 = vadd.f32 %v1458, %v3156
      %v3158 = vpop.f32.mrb[0].mxu0
      %v3159 = vpop.f32.mrb[0].mxu0
      %v3160 = vadd.f32 %v1463, %v3159
      %v3161 = vpop.f32.mrb[0].mxu0
      %3162 = vmatprep.mubr.bf16.mxu0 0
      %3163 = vmatmul.mubr.bf16.gmra.mrb[0].mxu0 %v2217
      %v3164 = vpop.f32.mrb[0].mxu0
      %v3165 = vadd.f32 %v1468, %v3164
      %v3166 = vpop.f32.mrb[0].mxu0
      %v3167 = vpop.f32.mrb[0].mxu0
      %v3168 = vadd.f32 %v1473, %v3167
      %v3169 = vpop.f32.mrb[0].mxu0
      %3170 = vmatprep.mubr.bf16.mxu0 0
      %3171 = vmatmul.mubr.bf16.gmra.mrb[0].mxu0 %v2218
      %v3172 = vpop.f32.mrb[0].mxu0
      %v3173 = vadd.f32 %v1478, %v3172
      %v3174 = vpop.f32.mrb[0].mxu0
      %v3175 = vpop.f32.mrb[0].mxu0
      %v3176 = vadd.f32 %v1483, %v3175
      %v3177 = vpop.f32.mrb[0].mxu0
      %3178 = vmatprep.mubr.bf16.mxu0 0
      %3179 = vmatmul.mubr.bf16.gmra.mrb[0].mxu0 %v2219
      %v3180 = vpop.f32.mrb[0].mxu0
      %v3181 = vadd.f32 %v1488, %v3180
      %v3182 = vpop.f32.mrb[0].mxu0
      %v3183 = vpop.f32.mrb[0].mxu0
      %v3184 = vadd.f32 %v1493, %v3183
      %v3185 = vpop.f32.mrb[0].mxu0
      %3186 = vmatprep.mubr.bf16.mxu0 0
      %3187 = vmatmul.mubr.bf16.gmra.mrb[0].mxu0 %v2220
      %v3188 = vpop.f32.mrb[0].mxu0
      %v3189 = vadd.f32 %v1498, %v3188
      %v3190 = vpop.f32.mrb[0].mxu0
      %v3191 = vpop.f32.mrb[0].mxu0
      %v3192 = vadd.f32 %v1503, %v3191
      %v3193 = vpop.f32.mrb[0].mxu0
      %3194 = vmatprep.mubr.bf16.mxu0 0
      %3195 = vmatmul.mubr.bf16.gmra.mrb[0].mxu0 %v2221
      %v3196 = vpop.f32.mrb[0].mxu0
      %v3197 = vadd.f32 %v1508, %v3196
      %v3198 = vpop.f32.mrb[0].mxu0
      %v3199 = vpop.f32.mrb[0].mxu0
      %v3200 = vadd.f32 %v1513, %v3199
      %v3201 = vpop.f32.mrb[0].mxu0
      %3202 = vmatprep.mubr.bf16.mxu0 0
      %3203 = vmatmul.mubr.bf16.gmra.mrb[0].mxu0 %v2222
      %v3204 = vpop.f32.mrb[0].mxu0
      %v3205 = vadd.f32 %v1518, %v3204
      %v3206 = vpop.f32.mrb[0].mxu0
      %v3207 = vpop.f32.mrb[0].mxu0
      %v3208 = vadd.f32 %v1523, %v3207
      %v3209 = vpop.f32.mrb[0].mxu0
      %3210 = vmatprep.mubr.bf16.mxu0 0
      %3211 = vmatmul.mubr.bf16.gmra.mrb[0].mxu0 %v2223
      %v3212 = vpop.f32.mrb[0].mxu0
      %v3213 = vadd.f32 %v1528, %v3212
      %v3214 = vpop.f32.mrb[0].mxu0
      %v3215 = vpop.f32.mrb[0].mxu0
      %v3216 = vadd.f32 %v1533, %v3215
      %v3217 = vpop.f32.mrb[0].mxu0
      %3218 = vmatprep.mubr.bf16.mxu0 0
      %3219 = vmatmul.mubr.bf16.gmra.mrb[0].mxu0 %v2224
      %v3220 = vpop.f32.mrb[0].mxu0
      %v3221 = vadd.f32 %v1538, %v3220
      %v3222 = vpop.f32.mrb[0].mxu0
      %v3223 = vpop.f32.mrb[0].mxu0
      %v3224 = vadd.f32 %v1543, %v3223
      %v3225 = vpop.f32.mrb[0].mxu0
      %3226 = vmatprep.mubr.bf16.mxu0 0
      %3227 = vmatmul.mubr.bf16.gmra.mrb[0].mxu0 %v2225
      %v3228 = vpop.f32.mrb[0].mxu0
      %v3229 = vadd.f32 %v1548, %v3228
      %v3230 = vpop.f32.mrb[0].mxu0
      %v3231 = vpop.f32.mrb[0].mxu0
      %v3232 = vadd.f32 %v1553, %v3231
      %v3233 = vpop.f32.mrb[0].mxu0
      %3234 = vmatprep.mubr.bf16.mxu0 0
      %3235 = vmatmul.mubr.bf16.gmra.mrb[0].mxu0 %v2226
      %v3236 = vpop.f32.mrb[0].mxu0
      %v3237 = vadd.f32 %v1558, %v3236
      %v3238 = vpop.f32.mrb[0].mxu0
      %v3239 = vpop.f32.mrb[0].mxu0
      %v3240 = vadd.f32 %v1563, %v3239
      %v3241 = vpop.f32.mrb[0].mxu0
      %3242 = vmatprep.mubr.bf16.mxu0 0
      %3243 = vmatmul.mubr.bf16.gmra.mrb[0].mxu0 %v2227
      %v3244 = vpop.f32.mrb[0].mxu0
      %v3245 = vadd.f32 %v1568, %v3244
      %v3246 = vpop.f32.mrb[0].mxu0
      %v3247 = vpop.f32.mrb[0].mxu0
      %v3248 = vadd.f32 %v1573, %v3247
      %v3249 = vpop.f32.mrb[0].mxu0
      %3250 = vmatprep.mubr.bf16.mxu0 0
      %3251 = vmatmul.mubr.bf16.gmra.mrb[0].mxu0 %v2228
      %v3252 = vpop.f32.mrb[0].mxu0
      %v3253 = vadd.f32 %v1578, %v3252
      %v3254 = vpop.f32.mrb[0].mxu0
      %v3255 = vpop.f32.mrb[0].mxu0
      %v3256 = vadd.f32 %v1583, %v3255
      %v3257 = vpop.f32.mrb[0].mxu0
      %3258 = vmatprep.mubr.bf16.mxu0 0
      %3259 = vmatmul.mubr.bf16.gmra.mrb[0].mxu0 %v2229
      %v3260 = vpop.f32.mrb[0].mxu0
      %v3261 = vadd.f32 %v1588, %v3260
      %v3262 = vpop.f32.mrb[0].mxu0
      %v3263 = vpop.f32.mrb[0].mxu0
      %v3264 = vadd.f32 %v1593, %v3263
      %v3265 = vpop.f32.mrb[0].mxu0
      %3266 = vmatprep.mubr.bf16.mxu0 0
      %3267 = vmatmul.mubr.bf16.gmra.mrb[0].mxu0 %v2230
      %v3268 = vpop.f32.mrb[0].mxu0
      %v3269 = vadd.f32 %v1598, %v3268
      %v3270 = vpop.f32.mrb[0].mxu0
      %v3271 = vpop.f32.mrb[0].mxu0
      %v3272 = vadd.f32 %v1603, %v3271
      %v3273 = vpop.f32.mrb[0].mxu0
      %3274 = vmatprep.mubr.bf16.mxu0 0
      %3275 = vmatmul.mubr.bf16.gmra.mrb[0].mxu0 %v2231
      %v3276 = vpop.f32.mrb[0].mxu0
      %v3277 = vadd.f32 %v1608, %v3276
      %v3278 = vpop.f32.mrb[0].mxu0
      %v3279 = vpop.f32.mrb[0].mxu0
      %v3280 = vadd.f32 %v1613, %v3279
      %v3281 = vpop.f32.mrb[0].mxu0
      %3282 = vmatprep.mubr.bf16.mxu0 0
      %3283 = vmatmul.mubr.bf16.gmra.mrb[0].mxu0 %v2232
      %v3284 = vpop.f32.mrb[0].mxu0
      %v3285 = vadd.f32 %v1618, %v3284
      %v3286 = vpop.f32.mrb[0].mxu0
      %v3287 = vpop.f32.mrb[0].mxu0
      %v3288 = vadd.f32 %v1623, %v3287
      %v3289 = vpop.f32.mrb[0].mxu0
      %3290 = vmatprep.mubr.bf16.mxu0 0
      %3291 = vmatmul.mubr.bf16.gmra.mrb[0].mxu0 %v2233
      %v3292 = vpop.f32.mrb[0].mxu0
      %v3293 = vadd.f32 %v1628, %v3292
      %v3294 = vpop.f32.mrb[0].mxu0
      %v3295 = vpop.f32.mrb[0].mxu0
      %v3296 = vadd.f32 %v1633, %v3295
      %v3297 = vpop.f32.mrb[0].mxu0
      %3298 = vmatprep.mubr.bf16.mxu0 0
      %3299 = vmatmul.mubr.bf16.gmra.mrb[0].mxu0 %v2234
      %v3300 = vpop.f32.mrb[0].mxu0
      %v3301 = vadd.f32 %v1638, %v3300
      %v3302 = vpop.f32.mrb[0].mxu0
      %v3303 = vpop.f32.mrb[0].mxu0
      %v3304 = vadd.f32 %v1643, %v3303
      %v3305 = vpop.f32.mrb[0].mxu0
      %3306 = vmatprep.mubr.bf16.mxu0 0
      %3307 = vmatmul.mubr.bf16.gmra.mrb[0].mxu0 %v2235
      %v3308 = vpop.f32.mrb[0].mxu0
      %v3309 = vadd.f32 %v1648, %v3308
      %v3310 = vpop.f32.mrb[0].mxu0
      %v3311 = vpop.f32.mrb[0].mxu0
      %v3312 = vadd.f32 %v1653, %v3311
      %v3313 = vpop.f32.mrb[0].mxu0
      %3314 = vmatprep.mubr.bf16.mxu0 0
      %3315 = vmatmul.mubr.bf16.gmra.mrb[0].mxu0 %v2236
      %v3316 = vpop.f32.mrb[0].mxu0
      %v3317 = vadd.f32 %v1658, %v3316
      %v3318 = vpop.f32.mrb[0].mxu0
      %v3319 = vpop.f32.mrb[0].mxu0
      %v3320 = vadd.f32 %v1663, %v3319
      %v3321 = vpop.f32.mrb[0].mxu0
      %3322 = vmatprep.mubr.bf16.mxu0 0
      %3323 = vmatmul.mubr.bf16.gmra.mrb[0].mxu0 %v2237
      %v3324 = vpop.f32.mrb[0].mxu0
      %v3325 = vadd.f32 %v1668, %v3324
      %v3326 = vpop.f32.mrb[0].mxu0
      %v3327 = vpop.f32.mrb[0].mxu0
      %v3328 = vadd.f32 %v1673, %v3327
      %v3329 = vpop.f32.mrb[0].mxu0
      %3330 = vmatprep.mubr.bf16.mxu0 0
      %3331 = vmatmul.mubr.bf16.gmra.mrb[0].mxu0 %v2238
      %v3332 = vpop.f32.mrb[0].mxu0
      %v3333 = vadd.f32 %v1678, %v3332
      %v3334 = vpop.f32.mrb[0].mxu0
      %v3335 = vpop.f32.mrb[0].mxu0
      %v3336 = vadd.f32 %v1683, %v3335
      %v3337 = vpop.f32.mrb[0].mxu0
      %3338 = vmatprep.mubr.bf16.mxu0 0
      %3339 = vmatmul.mubr.bf16.gmra.mrb[0].mxu0 %v2239
      %v3340 = vpop.f32.mrb[0].mxu0
      %v3341 = vadd.f32 %v1688, %v3340
      %v3342 = vpop.f32.mrb[0].mxu0
      %v3343 = vpop.f32.mrb[0].mxu0
      %v3344 = vadd.f32 %v1693, %v3343
      %v3345 = vpop.f32.mrb[0].mxu0
      %3346 = vmatprep.mubr.bf16.mxu0 0
      %3347 = vmatmul.mubr.bf16.gmra.mrb[0].mxu0 %v2240
      %v3348 = vpop.f32.mrb[0].mxu0
      %v3349 = vadd.f32 %v1698, %v3348
      %v3350 = vpop.f32.mrb[0].mxu0
      %v3351 = vpop.f32.mrb[0].mxu0
      %v3352 = vadd.f32 %v1703, %v3351
      %v3353 = vpop.f32.mrb[0].mxu0
      %3354 = vmatprep.mubr.bf16.mxu0 0
      %3355 = vmatmul.mubr.bf16.gmra.mrb[0].mxu0 %v2241
      %v3356 = vpop.f32.mrb[0].mxu0
      %v3357 = vadd.f32 %v1708, %v3356
      %v3358 = vpop.f32.mrb[0].mxu0
      %v3359 = vpop.f32.mrb[0].mxu0
      %v3360 = vadd.f32 %v1713, %v3359
      %v3361 = vpop.f32.mrb[0].mxu0
      %3362 = vmatprep.mubr.bf16.mxu0 0
      %3363 = vmatmul.mubr.bf16.gmra.mrb[0].mxu0 %v2242
      %v3364 = vpop.f32.mrb[0].mxu0
      %v3365 = vadd.f32 %v1718, %v3364
      %v3366 = vpop.f32.mrb[0].mxu0
      %v3367 = vpop.f32.mrb[0].mxu0
      %v3368 = vadd.f32 %v1723, %v3367
      %v3369 = vpop.f32.mrb[0].mxu0
      %3370 = vmatprep.mubr.bf16.mxu0 0
      %3371 = vmatmul.mubr.bf16.gmra.mrb[0].mxu0 %v2243
      %v3372 = vpop.f32.mrb[0].mxu0
      %v3373 = vadd.f32 %v1728, %v3372
      %v3374 = vpop.f32.mrb[0].mxu0
      %v3375 = vpop.f32.mrb[0].mxu0
      %v3376 = vadd.f32 %v1733, %v3375
      %v3377 = vpop.f32.mrb[0].mxu0
      %3378 = vmatprep.mubr.bf16.mxu0 0
      %3379 = vmatmul.mubr.bf16.gmra.mrb[0].mxu0 %v2244
      %v3380 = vpop.f32.mrb[0].mxu0
      %v3381 = vadd.f32 %v1738, %v3380
      %v3382 = vpop.f32.mrb[0].mxu0
      %v3383 = vpop.f32.mrb[0].mxu0
      %v3384 = vadd.f32 %v1743, %v3383
      %v3385 = vpop.f32.mrb[0].mxu0
      %3386 = vmatprep.mubr.bf16.mxu0 0
      %3387 = vmatmul.mubr.bf16.gmra.mrb[0].mxu0 %v2245
      %v3388 = vpop.f32.mrb[0].mxu0
      %v3389 = vadd.f32 %v1748, %v3388
      %v3390 = vpop.f32.mrb[0].mxu0
      %v3391 = vpop.f32.mrb[0].mxu0
      %v3392 = vadd.f32 %v1753, %v3391
      %v3393 = vpop.f32.mrb[0].mxu0
      %3394 = vmatprep.mubr.bf16.mxu0 0
      %3395 = vmatmul.mubr.bf16.gmra.mrb[0].mxu0 %v2246
      %v3396 = vpop.f32.mrb[0].mxu0
      %v3397 = vadd.f32 %v1758, %v3396
      %v3398 = vpop.f32.mrb[0].mxu0
      %v3399 = vpop.f32.mrb[0].mxu0
      %v3400 = vadd.f32 %v1763, %v3399
      %v3401 = vpop.f32.mrb[0].mxu0
      %3402 = vmatprep.mubr.bf16.mxu0 0
      %3403 = vmatmul.mubr.bf16.gmra.mrb[0].mxu0 %v2247
      %v3404 = vpop.f32.mrb[0].mxu0
      %v3405 = vadd.f32 %v1768, %v3404
      %v3406 = vpop.f32.mrb[0].mxu0
      %v3407 = vpop.f32.mrb[0].mxu0
      %v3408 = vadd.f32 %v1773, %v3407
      %v3409 = vpop.f32.mrb[0].mxu0
      %3410 = vmatprep.mubr.bf16.mxu0 0
      %3411 = vmatmul.mubr.bf16.gmra.mrb[0].mxu0 %v2248
      %v3412 = vpop.f32.mrb[0].mxu0
      %v3413 = vadd.f32 %v1778, %v3412
      %v3414 = vpop.f32.mrb[0].mxu0
      %v3415 = vpop.f32.mrb[0].mxu0
      %v3416 = vadd.f32 %v1783, %v3415
      %v3417 = vpop.f32.mrb[0].mxu0
      %3418 = vmatprep.mubr.bf16.mxu0 0
      %3419 = vmatmul.mubr.bf16.gmra.mrb[0].mxu0 %v2249
      %v3420 = vpop.f32.mrb[0].mxu0
      %v3421 = vadd.f32 %v1788, %v3420
      %v3422 = vpop.f32.mrb[0].mxu0
      %v3423 = vpop.f32.mrb[0].mxu0
      %v3424 = vadd.f32 %v1793, %v3423
      %v3425 = vpop.f32.mrb[0].mxu0
      %3426 = vmatprep.mubr.bf16.mxu0 0
      %3427 = vmatmul.mubr.bf16.gmra.mrb[0].mxu0 %v2250
      %v3428 = vpop.f32.mrb[0].mxu0
      %v3429 = vadd.f32 %v1798, %v3428
      %v3430 = vpop.f32.mrb[0].mxu0
      %v3431 = vpop.f32.mrb[0].mxu0
      %v3432 = vadd.f32 %v1803, %v3431
      %v3433 = vpop.f32.mrb[0].mxu0
      %3434 = vmatprep.mubr.bf16.mxu0 0
      %3435 = vmatmul.mubr.bf16.gmra.mrb[0].mxu0 %v2251
      %v3436 = vpop.f32.mrb[0].mxu0
      %v3437 = vadd.f32 %v1808, %v3436
      %v3438 = vpop.f32.mrb[0].mxu0
      %v3439 = vpop.f32.mrb[0].mxu0
      %v3440 = vadd.f32 %v1813, %v3439
      %v3441 = vpop.f32.mrb[0].mxu0
      %3442 = vmatprep.mubr.bf16.mxu0 0
      %3443 = vmatmul.mubr.bf16.gmra.mrb[0].mxu0 %v2252
      %v3444 = vpop.f32.mrb[0].mxu0
      %v3445 = vadd.f32 %v1818, %v3444
      %v3446 = vpop.f32.mrb[0].mxu0
      %v3447 = vpop.f32.mrb[0].mxu0
      %v3448 = vadd.f32 %v1823, %v3447
      %v3449 = vpop.f32.mrb[0].mxu0
      %3450 = vmatprep.mubr.bf16.mxu0 0
      %3451 = vmatmul.mubr.bf16.gmra.mrb[0].mxu0 %v2253
      %v3452 = vpop.f32.mrb[0].mxu0
      %v3453 = vadd.f32 %v1828, %v3452
      %v3454 = vpop.f32.mrb[0].mxu0
      %v3455 = vpop.f32.mrb[0].mxu0
      %v3456 = vadd.f32 %v1833, %v3455
      %v3457 = vpop.f32.mrb[0].mxu0
      %3458 = vmatprep.mubr.bf16.mxu0 0
      %3459 = vmatmul.mubr.bf16.gmra.mrb[0].mxu0 %v2254
      %v3460 = vpop.f32.mrb[0].mxu0
      %v3461 = vadd.f32 %v1838, %v3460
      %v3462 = vpop.f32.mrb[0].mxu0
      %v3463 = vpop.f32.mrb[0].mxu0
      %v3464 = vadd.f32 %v1843, %v3463
      %v3465 = vpop.f32.mrb[0].mxu0
      %3466 = vmatprep.mubr.bf16.mxu0 0
      %3467 = vmatmul.mubr.bf16.gmra.mrb[0].mxu0 %v2255
      %v3468 = vpop.f32.mrb[0].mxu0
      %v3469 = vadd.f32 %v1848, %v3468
      %v3470 = vpop.f32.mrb[0].mxu0
      %v3471 = vpop.f32.mrb[0].mxu0
      %v3472 = vadd.f32 %v1853, %v3471
      %v3473 = vpop.f32.mrb[0].mxu0
      %3474 = vmatprep.mubr.bf16.mxu0 0
      %3475 = vmatmul.mubr.bf16.gmra.mrb[0].mxu0 %v2256
      %v3476 = vpop.f32.mrb[0].mxu0
      %v3477 = vadd.f32 %v1858, %v3476
      %v3478 = vpop.f32.mrb[0].mxu0
      %v3479 = vpop.f32.mrb[0].mxu0
      %v3480 = vadd.f32 %v1863, %v3479
      %v3481 = vpop.f32.mrb[0].mxu0
      %3482 = vmatprep.mubr.bf16.mxu0 0
      %3483 = vmatmul.mubr.bf16.gmra.mrb[0].mxu0 %v2257
      %v3484 = vpop.f32.mrb[0].mxu0
      %v3485 = vadd.f32 %v1868, %v3484
      %v3486 = vpop.f32.mrb[0].mxu0
      %v3487 = vpop.f32.mrb[0].mxu0
      %v3488 = vadd.f32 %v1873, %v3487
      %v3489 = vpop.f32.mrb[0].mxu0
      %3490 = vmatprep.mubr.bf16.mxu0 0
      %3491 = vmatmul.mubr.bf16.gmra.mrb[0].mxu0 %v2258
      %v3492 = vpop.f32.mrb[0].mxu0
      %v3493 = vadd.f32 %v1878, %v3492
      %v3494 = vpop.f32.mrb[0].mxu0
      %v3495 = vpop.f32.mrb[0].mxu0
      %v3496 = vadd.f32 %v1883, %v3495
      %v3497 = vpop.f32.mrb[0].mxu0
      %3498 = vmatprep.mubr.bf16.mxu0 0
      %3499 = vmatmul.mubr.bf16.gmra.mrb[0].mxu0 %v2259
      %v3500 = vpop.f32.mrb[0].mxu0
      %v3501 = vadd.f32 %v1888, %v3500
      %v3502 = vpop.f32.mrb[0].mxu0
      %v3503 = vpop.f32.mrb[0].mxu0
      %v3504 = vadd.f32 %v1893, %v3503
      %v3505 = vpop.f32.mrb[0].mxu0
      %3506 = vmatprep.mubr.bf16.mxu0 0
      %3507 = vmatmul.mubr.bf16.gmra.mrb[0].mxu0 %v2260
      %v3508 = vpop.f32.mrb[0].mxu0
      %v3509 = vadd.f32 %v1898, %v3508
      %v3510 = vpop.f32.mrb[0].mxu0
      %v3511 = vpop.f32.mrb[0].mxu0
      %v3512 = vadd.f32 %v1903, %v3511
      %v3513 = vpop.f32.mrb[0].mxu0
      %3514 = vmatprep.mubr.bf16.mxu0 0
      %3515 = vmatmul.mubr.bf16.gmra.mrb[0].mxu0 %v2261
      %v3516 = vpop.f32.mrb[0].mxu0
      %v3517 = vadd.f32 %v1908, %v3516
      %v3518 = vpop.f32.mrb[0].mxu0
      %v3519 = vpop.f32.mrb[0].mxu0
      %v3520 = vadd.f32 %v1913, %v3519
      %v3521 = vpop.f32.mrb[0].mxu0
      %3522 = vmatprep.mubr.bf16.mxu0 0
      %3523 = vmatmul.mubr.bf16.gmra.mrb[0].mxu0 %v2262
      %v3524 = vpop.f32.mrb[0].mxu0
      %v3525 = vadd.f32 %v1918, %v3524
      %v3526 = vpop.f32.mrb[0].mxu0
      %v3527 = vpop.f32.mrb[0].mxu0
      %v3528 = vadd.f32 %v1923, %v3527
      %v3529 = vpop.f32.mrb[0].mxu0
      %3530 = vmatprep.mubr.bf16.mxu0 0
      %3531 = vmatmul.mubr.bf16.gmra.mrb[0].mxu0 %v2263
      %v3532 = vpop.f32.mrb[0].mxu0
      %v3533 = vadd.f32 %v1928, %v3532
      %v3534 = vpop.f32.mrb[0].mxu0
      %v3535 = vpop.f32.mrb[0].mxu0
      %v3536 = vadd.f32 %v1933, %v3535
      %v3537 = vpop.f32.mrb[0].mxu0
      %3538 = vmatprep.mubr.bf16.mxu0 0
      %3539 = vmatmul.mubr.bf16.gmra.mrb[0].mxu0 %v2264
      %v3540 = vpop.f32.mrb[0].mxu0
      %v3541 = vadd.f32 %v1938, %v3540
      %v3542 = vpop.f32.mrb[0].mxu0
      %v3543 = vpop.f32.mrb[0].mxu0
      %v3544 = vadd.f32 %v1943, %v3543
      %v3545 = vpop.f32.mrb[0].mxu0
      %3546 = vdwg.mxu0
      %v3547 = vmax.f32 %v2364, 0.0
      %v3548 = vmax.f32 %v2366, 0.0
      %v3549 = vmax.f32 %v3037, 0.0
      %v3550 = vmax.f32 %v2368, 0.0
      %v3551 = vmax.f32 %v2370, 0.0
      %v3552 = vmax.f32 %v3040, 0.0
      %v3553 = vmax.f32 %v2374, 0.0
      %v3554 = vmax.f32 %v2376, 0.0
      %v3555 = vmax.f32 %v3045, 0.0
      %v3556 = vmax.f32 %v2378, 0.0
      %v3557 = vmax.f32 %v2380, 0.0
      %v3558 = vmax.f32 %v3048, 0.0
      %v3559 = vmax.f32 %v2384, 0.0
      %v3560 = vmax.f32 %v2386, 0.0
      %v3561 = vmax.f32 %v3053, 0.0
      %v3562 = vmax.f32 %v2388, 0.0
      %v3563 = vmax.f32 %v2390, 0.0
      %v3564 = vmax.f32 %v3056, 0.0
      %v3565 = vmax.f32 %v2394, 0.0
      %v3566 = vmax.f32 %v2396, 0.0
      %v3567 = vmax.f32 %v3061, 0.0
      %v3568 = vmax.f32 %v2398, 0.0
      %v3569 = vmax.f32 %v2400, 0.0
      %v3570 = vmax.f32 %v3064, 0.0
      %v3571 = vmax.f32 %v2404, 0.0
      %v3572 = vmax.f32 %v2406, 0.0
      %v3573 = vmax.f32 %v3069, 0.0
      %v3574 = vmax.f32 %v2408, 0.0
      %v3575 = vmax.f32 %v2410, 0.0
      %v3576 = vmax.f32 %v3072, 0.0
      %v3577 = vmax.f32 %v2414, 0.0
      %v3578 = vmax.f32 %v2416, 0.0
      %v3579 = vmax.f32 %v3077, 0.0
      %v3580 = vmax.f32 %v2418, 0.0
      %v3581 = vmax.f32 %v2420, 0.0
      %v3582 = vmax.f32 %v3080, 0.0
      %v3583 = vmax.f32 %v2424, 0.0
      %v3584 = vmax.f32 %v2426, 0.0
      %v3585 = vmax.f32 %v3085, 0.0
      %v3586 = vmax.f32 %v2428, 0.0
      %v3587 = vmax.f32 %v2430, 0.0
      %v3588 = vmax.f32 %v3088, 0.0
      %v3589 = vmax.f32 %v2434, 0.0
      %v3590 = vmax.f32 %v2436, 0.0
      %v3591 = vmax.f32 %v3093, 0.0
      %v3592 = vmax.f32 %v2438, 0.0
      %v3593 = vmax.f32 %v2440, 0.0
      %v3594 = vmax.f32 %v3096, 0.0
      %v3595 = vmax.f32 %v2444, 0.0
      %v3596 = vmax.f32 %v2446, 0.0
      %v3597 = vmax.f32 %v3101, 0.0
      %v3598 = vmax.f32 %v2448, 0.0
      %v3599 = vmax.f32 %v2450, 0.0
      %v3600 = vmax.f32 %v3104, 0.0
      %v3601 = vmax.f32 %v2454, 0.0
      %v3602 = vmax.f32 %v2456, 0.0
      %v3603 = vmax.f32 %v3109, 0.0
      %v3604 = vmax.f32 %v2458, 0.0
      %v3605 = vmax.f32 %v2460, 0.0
      %v3606 = vmax.f32 %v3112, 0.0
      %v3607 = vmax.f32 %v2464, 0.0
      %v3608 = vmax.f32 %v2466, 0.0
      %v3609 = vmax.f32 %v3117, 0.0
      %v3610 = vmax.f32 %v2468, 0.0
      %v3611 = vmax.f32 %v2470, 0.0
      %v3612 = vmax.f32 %v3120, 0.0
      %v3613 = vmax.f32 %v2474, 0.0
      %v3614 = vmax.f32 %v2476, 0.0
      %v3615 = vmax.f32 %v3125, 0.0
      %v3616 = vmax.f32 %v2478, 0.0
      %v3617 = vmax.f32 %v2480, 0.0
      %v3618 = vmax.f32 %v3128, 0.0
      %v3619 = vmax.f32 %v2484, 0.0
      %v3620 = vmax.f32 %v2486, 0.0
      %v3621 = vmax.f32 %v3133, 0.0
      %v3622 = vmax.f32 %v2488, 0.0
      %v3623 = vmax.f32 %v2490, 0.0
      %v3624 = vmax.f32 %v3136, 0.0
      %v3625 = vmax.f32 %v2494, 0.0
      %v3626 = vmax.f32 %v2496, 0.0
      %v3627 = vmax.f32 %v3141, 0.0
      %v3628 = vmax.f32 %v2498, 0.0
      %v3629 = vmax.f32 %v2500, 0.0
      %v3630 = vmax.f32 %v3144, 0.0
      %v3631 = vmax.f32 %v2504, 0.0
      %v3632 = vmax.f32 %v2506, 0.0
      %v3633 = vmax.f32 %v3149, 0.0
      %v3634 = vmax.f32 %v2508, 0.0
      %v3635 = vmax.f32 %v2510, 0.0
      %v3636 = vmax.f32 %v3152, 0.0
      %v3637 = vmax.f32 %v2514, 0.0
      %v3638 = vmax.f32 %v2516, 0.0
      %v3639 = vmax.f32 %v3157, 0.0
      %v3640 = vmax.f32 %v2518, 0.0
      %v3641 = vmax.f32 %v2520, 0.0
      %v3642 = vmax.f32 %v3160, 0.0
      %v3643 = vmax.f32 %v2524, 0.0
      %v3644 = vmax.f32 %v2526, 0.0
      %v3645 = vmax.f32 %v3165, 0.0
      %v3646 = vmax.f32 %v2528, 0.0
      %v3647 = vmax.f32 %v2530, 0.0
      %v3648 = vmax.f32 %v3168, 0.0
      %v3649 = vmax.f32 %v2534, 0.0
      %v3650 = vmax.f32 %v2536, 0.0
      %v3651 = vmax.f32 %v3173, 0.0
      %v3652 = vmax.f32 %v2538, 0.0
      %v3653 = vmax.f32 %v2540, 0.0
      %v3654 = vmax.f32 %v3176, 0.0
      %v3655 = vmax.f32 %v2544, 0.0
      %v3656 = vmax.f32 %v2546, 0.0
      %v3657 = vmax.f32 %v3181, 0.0
      %v3658 = vmax.f32 %v2548, 0.0
      %v3659 = vmax.f32 %v2550, 0.0
      %v3660 = vmax.f32 %v3184, 0.0
      %v3661 = vmax.f32 %v2554, 0.0
      %v3662 = vmax.f32 %v2556, 0.0
      %v3663 = vmax.f32 %v3189, 0.0
      %v3664 = vmax.f32 %v2558, 0.0
      %v3665 = vmax.f32 %v2560, 0.0
      %v3666 = vmax.f32 %v3192, 0.0
      %v3667 = vmax.f32 %v2564, 0.0
      %v3668 = vmax.f32 %v2566, 0.0
      %v3669 = vmax.f32 %v3197, 0.0
      %v3670 = vmax.f32 %v2568, 0.0
      %v3671 = vmax.f32 %v2570, 0.0
      %v3672 = vmax.f32 %v3200, 0.0
      %v3673 = vmax.f32 %v2574, 0.0
      %v3674 = vmax.f32 %v2576, 0.0
      %v3675 = vmax.f32 %v3205, 0.0
      %v3676 = vmax.f32 %v2578, 0.0
      %v3677 = vmax.f32 %v2580, 0.0
      %v3678 = vmax.f32 %v3208, 0.0
      %v3679 = vmax.f32 %v2584, 0.0
      %v3680 = vmax.f32 %v2586, 0.0
      %v3681 = vmax.f32 %v3213, 0.0
      %v3682 = vmax.f32 %v2588, 0.0
      %v3683 = vmax.f32 %v2590, 0.0
      %v3684 = vmax.f32 %v3216, 0.0
      %v3685 = vmax.f32 %v2594, 0.0
      %v3686 = vmax.f32 %v2596, 0.0
      %v3687 = vmax.f32 %v3221, 0.0
      %v3688 = vmax.f32 %v2598, 0.0
      %v3689 = vmax.f32 %v2600, 0.0
      %v3690 = vmax.f32 %v3224, 0.0
      %v3691 = vmax.f32 %v2604, 0.0
      %v3692 = vmax.f32 %v2606, 0.0
      %v3693 = vmax.f32 %v3229, 0.0
      %v3694 = vmax.f32 %v2608, 0.0
      %v3695 = vmax.f32 %v2610, 0.0
      %v3696 = vmax.f32 %v3232, 0.0
      %v3697 = vmax.f32 %v2614, 0.0
      %v3698 = vmax.f32 %v2616, 0.0
      %v3699 = vmax.f32 %v3237, 0.0
      %v3700 = vmax.f32 %v2618, 0.0
      %v3701 = vmax.f32 %v2620, 0.0
      %v3702 = vmax.f32 %v3240, 0.0
      %v3703 = vmax.f32 %v2624, 0.0
      %v3704 = vmax.f32 %v2626, 0.0
      %v3705 = vmax.f32 %v3245, 0.0
      %v3706 = vmax.f32 %v2628, 0.0
      %v3707 = vmax.f32 %v2630, 0.0
      %v3708 = vmax.f32 %v3248, 0.0
      %v3709 = vmax.f32 %v2634, 0.0
      %v3710 = vmax.f32 %v2636, 0.0
      %v3711 = vmax.f32 %v3253, 0.0
      %v3712 = vmax.f32 %v2638, 0.0
      %v3713 = vmax.f32 %v2640, 0.0
      %v3714 = vmax.f32 %v3256, 0.0
      %v3715 = vmax.f32 %v2644, 0.0
      %v3716 = vmax.f32 %v2646, 0.0
      %v3717 = vmax.f32 %v3261, 0.0
      %v3718 = vmax.f32 %v2648, 0.0
      %v3719 = vmax.f32 %v2650, 0.0
      %v3720 = vmax.f32 %v3264, 0.0
      %v3721 = vmax.f32 %v2654, 0.0
      %v3722 = vmax.f32 %v2656, 0.0
      %v3723 = vmax.f32 %v3269, 0.0
      %v3724 = vmax.f32 %v2658, 0.0
      %v3725 = vmax.f32 %v2660, 0.0
      %v3726 = vmax.f32 %v3272, 0.0
      %v3727 = vmax.f32 %v2664, 0.0
      %v3728 = vmax.f32 %v2666, 0.0
      %v3729 = vmax.f32 %v3277, 0.0
      %v3730 = vmax.f32 %v2668, 0.0
      %v3731 = vmax.f32 %v2670, 0.0
      %v3732 = vmax.f32 %v3280, 0.0
      %v3733 = vmax.f32 %v2674, 0.0
      %v3734 = vmax.f32 %v2676, 0.0
      %v3735 = vmax.f32 %v3285, 0.0
      %v3736 = vmax.f32 %v2678, 0.0
      %v3737 = vmax.f32 %v2680, 0.0
      %v3738 = vmax.f32 %v3288, 0.0
      %v3739 = vmax.f32 %v2684, 0.0
      %v3740 = vmax.f32 %v2686, 0.0
      %v3741 = vmax.f32 %v3293, 0.0
      %v3742 = vmax.f32 %v2688, 0.0
      %v3743 = vmax.f32 %v2690, 0.0
      %v3744 = vmax.f32 %v3296, 0.0
      %v3745 = vmax.f32 %v2694, 0.0
      %v3746 = vmax.f32 %v2696, 0.0
      %v3747 = vmax.f32 %v3301, 0.0
      %v3748 = vmax.f32 %v2698, 0.0
      %v3749 = vmax.f32 %v2700, 0.0
      %v3750 = vmax.f32 %v3304, 0.0
      %v3751 = vmax.f32 %v2704, 0.0
      %v3752 = vmax.f32 %v2706, 0.0
      %v3753 = vmax.f32 %v3309, 0.0
      %v3754 = vmax.f32 %v2708, 0.0
      %v3755 = vmax.f32 %v2710, 0.0
      %v3756 = vmax.f32 %v3312, 0.0
      %v3757 = vmax.f32 %v2714, 0.0
      %v3758 = vmax.f32 %v2716, 0.0
      %v3759 = vmax.f32 %v3317, 0.0
      %v3760 = vmax.f32 %v2718, 0.0
      %v3761 = vmax.f32 %v2720, 0.0
      %v3762 = vmax.f32 %v3320, 0.0
      %v3763 = vmax.f32 %v2724, 0.0
      %v3764 = vmax.f32 %v2726, 0.0
      %v3765 = vmax.f32 %v3325, 0.0
      %v3766 = vmax.f32 %v2728, 0.0
      %v3767 = vmax.f32 %v2730, 0.0
      %v3768 = vmax.f32 %v3328, 0.0
      %v3769 = vmax.f32 %v2734, 0.0
      %v3770 = vmax.f32 %v2736, 0.0
      %v3771 = vmax.f32 %v3333, 0.0
      %v3772 = vmax.f32 %v2738, 0.0
      %v3773 = vmax.f32 %v2740, 0.0
      %v3774 = vmax.f32 %v3336, 0.0
      %v3775 = vmax.f32 %v2744, 0.0
      %v3776 = vmax.f32 %v2746, 0.0
      %v3777 = vmax.f32 %v3341, 0.0
      %v3778 = vmax.f32 %v2748, 0.0
      %v3779 = vmax.f32 %v2750, 0.0
      %v3780 = vmax.f32 %v3344, 0.0
      %v3781 = vmax.f32 %v2754, 0.0
      %v3782 = vmax.f32 %v2756, 0.0
      %v3783 = vmax.f32 %v3349, 0.0
      %v3784 = vmax.f32 %v2758, 0.0
      %v3785 = vmax.f32 %v2760, 0.0
      %v3786 = vmax.f32 %v3352, 0.0
      %v3787 = vmax.f32 %v2764, 0.0
      %v3788 = vmax.f32 %v2766, 0.0
      %v3789 = vmax.f32 %v3357, 0.0
      %v3790 = vmax.f32 %v2768, 0.0
      %v3791 = vmax.f32 %v2770, 0.0
      %v3792 = vmax.f32 %v3360, 0.0
      %v3793 = vmax.f32 %v2774, 0.0
      %v3794 = vmax.f32 %v2776, 0.0
      %v3795 = vmax.f32 %v3365, 0.0
      %v3796 = vmax.f32 %v2778, 0.0
      %v3797 = vmax.f32 %v2780, 0.0
      %v3798 = vmax.f32 %v3368, 0.0
      %v3799 = vmax.f32 %v2784, 0.0
      %v3800 = vmax.f32 %v2786, 0.0
      %v3801 = vmax.f32 %v3373, 0.0
      %v3802 = vmax.f32 %v2788, 0.0
      %v3803 = vmax.f32 %v2790, 0.0
      %v3804 = vmax.f32 %v3376, 0.0
      %v3805 = vmax.f32 %v2794, 0.0
      %v3806 = vmax.f32 %v2796, 0.0
      %v3807 = vmax.f32 %v3381, 0.0
      %v3808 = vmax.f32 %v2798, 0.0
      %v3809 = vmax.f32 %v2800, 0.0
      %v3810 = vmax.f32 %v3384, 0.0
      %v3811 = vmax.f32 %v2804, 0.0
      %v3812 = vmax.f32 %v2806, 0.0
      %v3813 = vmax.f32 %v3389, 0.0
      %v3814 = vmax.f32 %v2808, 0.0
      %v3815 = vmax.f32 %v2810, 0.0
      %v3816 = vmax.f32 %v3392, 0.0
      %v3817 = vmax.f32 %v2814, 0.0
      %v3818 = vmax.f32 %v2816, 0.0
      %v3819 = vmax.f32 %v3397, 0.0
      %v3820 = vmax.f32 %v2818, 0.0
      %v3821 = vmax.f32 %v2820, 0.0
      %v3822 = vmax.f32 %v3400, 0.0
      %v3823 = vmax.f32 %v2824, 0.0
      %v3824 = vmax.f32 %v2826, 0.0
      %v3825 = vmax.f32 %v3405, 0.0
      %v3826 = vmax.f32 %v2828, 0.0
      %v3827 = vmax.f32 %v2830, 0.0
      %v3828 = vmax.f32 %v3408, 0.0
      %v3829 = vmax.f32 %v2834, 0.0
      %v3830 = vmax.f32 %v2836, 0.0
      %v3831 = vmax.f32 %v3413, 0.0
      %v3832 = vmax.f32 %v2838, 0.0
      %v3833 = vmax.f32 %v2840, 0.0
      %v3834 = vmax.f32 %v3416, 0.0
      %v3835 = vmax.f32 %v2844, 0.0
      %v3836 = vmax.f32 %v2846, 0.0
      %v3837 = vmax.f32 %v3421, 0.0
      %v3838 = vmax.f32 %v2848, 0.0
      %v3839 = vmax.f32 %v2850, 0.0
      %v3840 = vmax.f32 %v3424, 0.0
      %v3841 = vmax.f32 %v2854, 0.0
      %v3842 = vmax.f32 %v2856, 0.0
      %v3843 = vmax.f32 %v3429, 0.0
      %v3844 = vmax.f32 %v2858, 0.0
      %v3845 = vmax.f32 %v2860, 0.0
      %v3846 = vmax.f32 %v3432, 0.0
      %v3847 = vmax.f32 %v2864, 0.0
      %v3848 = vmax.f32 %v2866, 0.0
      %v3849 = vmax.f32 %v3437, 0.0
      %v3850 = vmax.f32 %v2868, 0.0
      %v3851 = vmax.f32 %v2870, 0.0
      %v3852 = vmax.f32 %v3440, 0.0
      %v3853 = vmax.f32 %v2874, 0.0
      %v3854 = vmax.f32 %v2876, 0.0
      %v3855 = vmax.f32 %v3445, 0.0
      %v3856 = vmax.f32 %v2878, 0.0
      %v3857 = vmax.f32 %v2880, 0.0
      %v3858 = vmax.f32 %v3448, 0.0
      %v3859 = vmax.f32 %v2884, 0.0
      %v3860 = vmax.f32 %v2886, 0.0
      %v3861 = vmax.f32 %v3453, 0.0
      %v3862 = vmax.f32 %v2888, 0.0
      %v3863 = vmax.f32 %v2890, 0.0
      %v3864 = vmax.f32 %v3456, 0.0
      %v3865 = vmax.f32 %v2894, 0.0
      %v3866 = vmax.f32 %v2896, 0.0
      %v3867 = vmax.f32 %v3461, 0.0
      %v3868 = vmax.f32 %v2898, 0.0
      %v3869 = vmax.f32 %v2900, 0.0
      %v3870 = vmax.f32 %v3464, 0.0
      %v3871 = vmax.f32 %v2904, 0.0
      %v3872 = vmax.f32 %v2906, 0.0
      %v3873 = vmax.f32 %v3469, 0.0
      %v3874 = vmax.f32 %v2908, 0.0
      %v3875 = vmax.f32 %v2910, 0.0
      %v3876 = vmax.f32 %v3472, 0.0
      %v3877 = vmax.f32 %v2914, 0.0
      %v3878 = vmax.f32 %v2916, 0.0
      %v3879 = vmax.f32 %v3477, 0.0
      %v3880 = vmax.f32 %v2918, 0.0
      %v3881 = vmax.f32 %v2920, 0.0
      %v3882 = vmax.f32 %v3480, 0.0
      %v3883 = vmax.f32 %v2924, 0.0
      %v3884 = vmax.f32 %v2926, 0.0
      %v3885 = vmax.f32 %v3485, 0.0
      %v3886 = vmax.f32 %v2928, 0.0
      %v3887 = vmax.f32 %v2930, 0.0
      %v3888 = vmax.f32 %v3488, 0.0
      %v3889 = vmax.f32 %v2934, 0.0
      %v3890 = vmax.f32 %v2936, 0.0
      %v3891 = vmax.f32 %v3493, 0.0
      %v3892 = vmax.f32 %v2938, 0.0
      %v3893 = vmax.f32 %v2940, 0.0
      %v3894 = vmax.f32 %v3496, 0.0
      %v3895 = vmax.f32 %v2944, 0.0
      %v3896 = vmax.f32 %v2946, 0.0
      %v3897 = vmax.f32 %v3501, 0.0
      %v3898 = vmax.f32 %v2948, 0.0
      %v3899 = vmax.f32 %v2950, 0.0
      %v3900 = vmax.f32 %v3504, 0.0
      %v3901 = vmax.f32 %v2954, 0.0
      %v3902 = vmax.f32 %v2956, 0.0
      %v3903 = vmax.f32 %v3509, 0.0
      %v3904 = vmax.f32 %v2958, 0.0
      %v3905 = vmax.f32 %v2960, 0.0
      %v3906 = vmax.f32 %v3512, 0.0
      %v3907 = vmax.f32 %v2964, 0.0
      %v3908 = vmax.f32 %v2966, 0.0
      %v3909 = vmax.f32 %v3517, 0.0
      %v3910 = vmax.f32 %v2968, 0.0
      %v3911 = vmax.f32 %v2970, 0.0
      %v3912 = vmax.f32 %v3520, 0.0
      %v3913 = vmax.f32 %v2974, 0.0
      %v3914 = vmax.f32 %v2976, 0.0
      %v3915 = vmax.f32 %v3525, 0.0
      %v3916 = vmax.f32 %v2978, 0.0
      %v3917 = vmax.f32 %v2980, 0.0
      %v3918 = vmax.f32 %v3528, 0.0
      %v3919 = vmax.f32 %v2984, 0.0
      %v3920 = vmax.f32 %v2986, 0.0
      %v3921 = vmax.f32 %v3533, 0.0
      %v3922 = vmax.f32 %v2988, 0.0
      %v3923 = vmax.f32 %v2990, 0.0
      %v3924 = vmax.f32 %v3536, 0.0
      %v3925 = vmax.f32 %v2994, 0.0
      %v3926 = vmax.f32 %v2996, 0.0
      %v3927 = vmax.f32 %v3541, 0.0
      %v3928 = vmax.f32 %v2998, 0.0
      %v3929 = vmax.f32 %v3000, 0.0
      %v3930 = vmax.f32 %v3544, 0.0
      %p3931 = scmp.eq.s32.totalorder %s23, 0
      // Predicated region
      $region49: #{transform_forward.3} parent=47 // pred_check
        %p3932 = pneg %p3931
      $region50: #{transform_forward.3} parent=47 // pred_check_branch
        %3934 = sbr.rel (%p3932) target = $region52
      $region51: #{transform_forward.3} parent=47 // pred_region
        %3935 = vst.msk [vmem:[%s304] sm:$0xff] %vm390, -inf
        %3936 = vst.msk [vmem:[%s304 + $0x8] sm:$0xff] %vm390, -inf
        %3937 = vst.msk [vmem:[%s304 + $0x10] sm:$0xff] %vm390, -inf
        %3938 = vst.msk [vmem:[%s304 + $0x18] sm:$0xff] %vm390, -inf
        %3939 = vst.msk [vmem:[%s304 + $0x20] sm:$0xff] %vm390, -inf
        %3940 = vst.msk [vmem:[%s304 + $0x28] sm:$0xff] %vm390, -inf
        %3941 = vst.msk [vmem:[%s304 + $0x30] sm:$0xff] %vm390, -inf
        %3942 = vst.msk [vmem:[%s304 + $0x38] sm:$0xff] %vm390, -inf
        %3943 = vst.msk [vmem:[%s304 + $0x40] sm:$0xff] %vm390, -inf
        %3944 = vst.msk [vmem:[%s304 + $0x48] sm:$0xff] %vm390, -inf
        %3945 = vst.msk [vmem:[%s304 + $0x50] sm:$0xff] %vm390, -inf
        %3946 = vst.msk [vmem:[%s304 + $0x58] sm:$0xff] %vm390, -inf
        %3947 = vst.msk [vmem:[%s304 + $0x60] sm:$0xff] %vm390, -inf
        %3948 = vst.msk [vmem:[%s304 + $0x68] sm:$0xff] %vm390, -inf
        %3949 = vst.msk [vmem:[%s304 + $0x70] sm:$0xff] %vm390, -inf
        %3950 = vst.msk [vmem:[%s304 + $0x78] sm:$0xff] %vm390, -inf
        %3951 = vst.msk [vmem:[%s304 + $0x80] sm:$0xff] %vm390, -inf
        %3952 = vst.msk [vmem:[%s304 + $0x88] sm:$0xff] %vm390, -inf
        %3953 = vst.msk [vmem:[%s304 + $0x90] sm:$0xff] %vm390, -inf
        %3954 = vst.msk [vmem:[%s304 + $0x98] sm:$0xff] %vm390, -inf
        %3955 = vst.msk [vmem:[%s304 + $0xa0] sm:$0xff] %vm390, -inf
        %3956 = vst.msk [vmem:[%s304 + $0xa8] sm:$0xff] %vm390, -inf
        %3957 = vst.msk [vmem:[%s304 + $0xb0] sm:$0xff] %vm390, -inf
        %3958 = vst.msk [vmem:[%s304 + $0xb8] sm:$0xff] %vm390, -inf
        %3959 = vst.msk [vmem:[%s304 + $0xc0] sm:$0xff] %vm390, -inf
        %3960 = vst.msk [vmem:[%s304 + $0xc8] sm:$0xff] %vm390, -inf
        %3961 = vst.msk [vmem:[%s304 + $0xd0] sm:$0xff] %vm390, -inf
        %3962 = vst.msk [vmem:[%s304 + $0xd8] sm:$0xff] %vm390, -inf
        %3963 = vst.msk [vmem:[%s304 + $0xe0] sm:$0xff] %vm390, -inf
        %3964 = vst.msk [vmem:[%s304 + $0xe8] sm:$0xff] %vm390, -inf
        %3965 = vst.msk [vmem:[%s304 + $0xf0] sm:$0xff] %vm390, -inf
        %3966 = vst.msk [vmem:[%s304 + $0xf8] sm:$0xff] %vm390, -inf
        %3967 = vst.msk [vmem:[%s304 + $0x100] sm:$0xff] %vm390, -inf
        %3968 = vst.msk [vmem:[%s304 + $0x108] sm:$0xff] %vm390, -inf
        %3969 = vst.msk [vmem:[%s304 + $0x110] sm:$0xff] %vm390, -inf
        %3970 = vst.msk [vmem:[%s304 + $0x118] sm:$0xff] %vm390, -inf
        %3971 = vst.msk [vmem:[%s304 + $0x120] sm:$0xff] %vm390, -inf
        %3972 = vst.msk [vmem:[%s304 + $0x128] sm:$0xff] %vm390, -inf
        %3973 = vst.msk [vmem:[%s304 + $0x130] sm:$0xff] %vm390, -inf
        %3974 = vst.msk [vmem:[%s304 + $0x138] sm:$0xff] %vm390, -inf
        %3975 = vst.msk [vmem:[%s304 + $0x140] sm:$0xff] %vm390, -inf
        %3976 = vst.msk [vmem:[%s304 + $0x148] sm:$0xff] %vm390, -inf
        %3977 = vst.msk [vmem:[%s304 + $0x150] sm:$0xff] %vm390, -inf
        %3978 = vst.msk [vmem:[%s304 + $0x158] sm:$0xff] %vm390, -inf
        %3979 = vst.msk [vmem:[%s304 + $0x160] sm:$0xff] %vm390, -inf
        %3980 = vst.msk [vmem:[%s304 + $0x168] sm:$0xff] %vm390, -inf
        %3981 = vst.msk [vmem:[%s304 + $0x170] sm:$0xff] %vm390, -inf
        %3982 = vst.msk [vmem:[%s304 + $0x178] sm:$0xff] %vm390, -inf
        %3983 = vst.msk [vmem:[%s304 + $0x180] sm:$0xff] %vm390, -inf
        %3984 = vst.msk [vmem:[%s304 + $0x188] sm:$0xff] %vm390, -inf
        %3985 = vst.msk [vmem:[%s304 + $0x190] sm:$0xff] %vm390, -inf
        %3986 = vst.msk [vmem:[%s304 + $0x198] sm:$0xff] %vm390, -inf
        %3987 = vst.msk [vmem:[%s304 + $0x1a0] sm:$0xff] %vm390, -inf
        %3988 = vst.msk [vmem:[%s304 + $0x1a8] sm:$0xff] %vm390, -inf
        %3989 = vst.msk [vmem:[%s304 + $0x1b0] sm:$0xff] %vm390, -inf
        %3990 = vst.msk [vmem:[%s304 + $0x1b8] sm:$0xff] %vm390, -inf
        %3991 = vst.msk [vmem:[%s304 + $0x1c0] sm:$0xff] %vm390, -inf
        %3992 = vst.msk [vmem:[%s304 + $0x1c8] sm:$0xff] %vm390, -inf
        %3993 = vst.msk [vmem:[%s304 + $0x1d0] sm:$0xff] %vm390, -inf
        %3994 = vst.msk [vmem:[%s304 + $0x1d8] sm:$0xff] %vm390, -inf
        %3995 = vst.msk [vmem:[%s304 + $0x1e0] sm:$0xff] %vm390, -inf
        %3996 = vst.msk [vmem:[%s304 + $0x1e8] sm:$0xff] %vm390, -inf
        %3997 = vst.msk [vmem:[%s304 + $0x1f0] sm:$0xff] %vm390, -inf
        %3998 = vst.msk [vmem:[%s304 + $0x1f8] sm:$0xff] %vm390, -inf
        %3999 = vst.msk [vmem:[%s304 + $0x200] sm:$0xff] %vm390, -inf
        %4000 = vst.msk [vmem:[%s304 + $0x208] sm:$0xff] %vm390, -inf
        %4001 = vst.msk [vmem:[%s304 + $0x210] sm:$0xff] %vm390, -inf
        %4002 = vst.msk [vmem:[%s304 + $0x218] sm:$0xff] %vm390, -inf
        %4003 = vst.msk [vmem:[%s304 + $0x220] sm:$0xff] %vm390, -inf
        %4004 = vst.msk [vmem:[%s304 + $0x228] sm:$0xff] %vm390, -inf
        %4005 = vst.msk [vmem:[%s304 + $0x230] sm:$0xff] %vm390, -inf
        %4006 = vst.msk [vmem:[%s304 + $0x238] sm:$0xff] %vm390, -inf
        %4007 = vst.msk [vmem:[%s304 + $0x240] sm:$0xff] %vm390, -inf
        %4008 = vst.msk [vmem:[%s304 + $0x248] sm:$0xff] %vm390, -inf
        %4009 = vst.msk [vmem:[%s304 + $0x250] sm:$0xff] %vm390, -inf
        %4010 = vst.msk [vmem:[%s304 + $0x258] sm:$0xff] %vm390, -inf
        %4011 = vst.msk [vmem:[%s304 + $0x260] sm:$0xff] %vm390, -inf
        %4012 = vst.msk [vmem:[%s304 + $0x268] sm:$0xff] %vm390, -inf
        %4013 = vst.msk [vmem:[%s304 + $0x270] sm:$0xff] %vm390, -inf
        %4014 = vst.msk [vmem:[%s304 + $0x278] sm:$0xff] %vm390, -inf
        %4015 = vst.msk [vmem:[%s304 + $0x280] sm:$0xff] %vm390, -inf
        %4016 = vst.msk [vmem:[%s304 + $0x288] sm:$0xff] %vm390, -inf
        %4017 = vst.msk [vmem:[%s304 + $0x290] sm:$0xff] %vm390, -inf
        %4018 = vst.msk [vmem:[%s304 + $0x298] sm:$0xff] %vm390, -inf
        %4019 = vst.msk [vmem:[%s304 + $0x2a0] sm:$0xff] %vm390, -inf
        %4020 = vst.msk [vmem:[%s304 + $0x2a8] sm:$0xff] %vm390, -inf
        %4021 = vst.msk [vmem:[%s304 + $0x2b0] sm:$0xff] %vm390, -inf
        %4022 = vst.msk [vmem:[%s304 + $0x2b8] sm:$0xff] %vm390, -inf
        %4023 = vst.msk [vmem:[%s304 + $0x2c0] sm:$0xff] %vm390, -inf
        %4024 = vst.msk [vmem:[%s304 + $0x2c8] sm:$0xff] %vm390, -inf
        %4025 = vst.msk [vmem:[%s304 + $0x2d0] sm:$0xff] %vm390, -inf
        %4026 = vst.msk [vmem:[%s304 + $0x2d8] sm:$0xff] %vm390, -inf
        %4027 = vst.msk [vmem:[%s304 + $0x2e0] sm:$0xff] %vm390, -inf
        %4028 = vst.msk [vmem:[%s304 + $0x2e8] sm:$0xff] %vm390, -inf
        %4029 = vst.msk [vmem:[%s304 + $0x2f0] sm:$0xff] %vm390, -inf
        %4030 = vst.msk [vmem:[%s304 + $0x2f8] sm:$0xff] %vm390, -inf
        %4031 = vst.msk [vmem:[%s304 + $0x300] sm:$0xff] %vm390, -inf
        %4032 = vst.msk [vmem:[%s304 + $0x308] sm:$0xff] %vm390, -inf
        %4033 = vst.msk [vmem:[%s304 + $0x310] sm:$0xff] %vm390, -inf
        %4034 = vst.msk [vmem:[%s304 + $0x318] sm:$0xff] %vm390, -inf
        %4035 = vst.msk [vmem:[%s304 + $0x320] sm:$0xff] %vm390, -inf
        %4036 = vst.msk [vmem:[%s304 + $0x328] sm:$0xff] %vm390, -inf
        %4037 = vst.msk [vmem:[%s304 + $0x330] sm:$0xff] %vm390, -inf
        %4038 = vst.msk [vmem:[%s304 + $0x338] sm:$0xff] %vm390, -inf
        %4039 = vst.msk [vmem:[%s304 + $0x340] sm:$0xff] %vm390, -inf
        %4040 = vst.msk [vmem:[%s304 + $0x348] sm:$0xff] %vm390, -inf
        %4041 = vst.msk [vmem:[%s304 + $0x350] sm:$0xff] %vm390, -inf
        %4042 = vst.msk [vmem:[%s304 + $0x358] sm:$0xff] %vm390, -inf
        %4043 = vst.msk [vmem:[%s304 + $0x360] sm:$0xff] %vm390, -inf
        %4044 = vst.msk [vmem:[%s304 + $0x368] sm:$0xff] %vm390, -inf
        %4045 = vst.msk [vmem:[%s304 + $0x370] sm:$0xff] %vm390, -inf
        %4046 = vst.msk [vmem:[%s304 + $0x378] sm:$0xff] %vm390, -inf
        %4047 = vst.msk [vmem:[%s304 + $0x380] sm:$0xff] %vm390, -inf
        %4048 = vst.msk [vmem:[%s304 + $0x388] sm:$0xff] %vm390, -inf
        %4049 = vst.msk [vmem:[%s304 + $0x390] sm:$0xff] %vm390, -inf
        %4050 = vst.msk [vmem:[%s304 + $0x398] sm:$0xff] %vm390, -inf
        %4051 = vst.msk [vmem:[%s304 + $0x3a0] sm:$0xff] %vm390, -inf
        %4052 = vst.msk [vmem:[%s304 + $0x3a8] sm:$0xff] %vm390, -inf
        %4053 = vst.msk [vmem:[%s304 + $0x3b0] sm:$0xff] %vm390, -inf
        %4054 = vst.msk [vmem:[%s304 + $0x3b8] sm:$0xff] %vm390, -inf
        %4055 = vst.msk [vmem:[%s304 + $0x3c0] sm:$0xff] %vm390, -inf
        %4056 = vst.msk [vmem:[%s304 + $0x3c8] sm:$0xff] %vm390, -inf
        %4057 = vst.msk [vmem:[%s304 + $0x3d0] sm:$0xff] %vm390, -inf
        %4058 = vst.msk [vmem:[%s304 + $0x3d8] sm:$0xff] %vm390, -inf
        %4059 = vst.msk [vmem:[%s304 + $0x3e0] sm:$0xff] %vm390, -inf
        %4060 = vst.msk [vmem:[%s304 + $0x3e8] sm:$0xff] %vm390, -inf
        %4061 = vst.msk [vmem:[%s304 + $0x3f0] sm:$0xff] %vm390, -inf
        %4062 = vst.msk [vmem:[%s304 + $0x3f8] sm:$0xff] %vm390, -inf
      $region52: #{transform_forward.3} parent=47 // pred_fallthru
        _
      %4063 = vmax.xlane.f32.xlu0 %v3547
      %v4064 = vpop.xlane.xlu0 %4063
      %4065 = vmax.xlane.f32.xlu0 %v3550
      %v4066 = vpop.xlane.xlu0 %4065
      %4067 = vmax.xlane.f32.xlu0 %v3553
      %v4068 = vpop.xlane.xlu0 %4067
      %4069 = vmax.xlane.f32.xlu0 %v3556
      %v4070 = vpop.xlane.xlu0 %4069
      %4071 = vmax.xlane.f32.xlu0 %v3559
      %v4072 = vpop.xlane.xlu0 %4071
      %4073 = vmax.xlane.f32.xlu0 %v3562
      %v4074 = vpop.xlane.xlu0 %4073
      %4075 = vmax.xlane.f32.xlu0 %v3565
      %v4076 = vpop.xlane.xlu0 %4075
      %4077 = vmax.xlane.f32.xlu0 %v3568
      %v4078 = vpop.xlane.xlu0 %4077
      %4079 = vmax.xlane.f32.xlu0 %v3571
      %v4080 = vpop.xlane.xlu0 %4079
      %4081 = vmax.xlane.f32.xlu0 %v3574
      %v4082 = vpop.xlane.xlu0 %4081
      %4083 = vmax.xlane.f32.xlu0 %v3577
      %v4084 = vpop.xlane.xlu0 %4083
      %4085 = vmax.xlane.f32.xlu0 %v3580
      %v4086 = vpop.xlane.xlu0 %4085
      %4087 = vmax.xlane.f32.xlu0 %v3583
      %v4088 = vpop.xlane.xlu0 %4087
      %4089 = vmax.xlane.f32.xlu0 %v3586
      %v4090 = vpop.xlane.xlu0 %4089
      %4091 = vmax.xlane.f32.xlu0 %v3589
      %v4092 = vpop.xlane.xlu0 %4091
      %4093 = vmax.xlane.f32.xlu0 %v3592
      %v4094 = vpop.xlane.xlu0 %4093
      %4095 = vmax.xlane.f32.xlu0 %v3595
      %v4096 = vpop.xlane.xlu0 %4095
      %4097 = vmax.xlane.f32.xlu0 %v3598
      %v4098 = vpop.xlane.xlu0 %4097
      %4099 = vmax.xlane.f32.xlu0 %v3601
      %v4100 = vpop.xlane.xlu0 %4099
      %4101 = vmax.xlane.f32.xlu0 %v3604
      %v4102 = vpop.xlane.xlu0 %4101
      %4103 = vmax.xlane.f32.xlu0 %v3607
      %v4104 = vpop.xlane.xlu0 %4103
      %4105 = vmax.xlane.f32.xlu0 %v3610
      %v4106 = vpop.xlane.xlu0 %4105
      %4107 = vmax.xlane.f32.xlu0 %v3613
      %v4108 = vpop.xlane.xlu0 %4107
      %4109 = vmax.xlane.f32.xlu0 %v3616
      %v4110 = vpop.xlane.xlu0 %4109
      %4111 = vmax.xlane.f32.xlu0 %v3619
      %v4112 = vpop.xlane.xlu0 %4111
      %4113 = vmax.xlane.f32.xlu0 %v3622
      %v4114 = vpop.xlane.xlu0 %4113
      %4115 = vmax.xlane.f32.xlu0 %v3625
      %v4116 = vpop.xlane.xlu0 %4115
      %4117 = vmax.xlane.f32.xlu0 %v3628
      %v4118 = vpop.xlane.xlu0 %4117
      %4119 = vmax.xlane.f32.xlu0 %v3631
      %v4120 = vpop.xlane.xlu0 %4119
      %4121 = vmax.xlane.f32.xlu0 %v3634
      %v4122 = vpop.xlane.xlu0 %4121
      %4123 = vmax.xlane.f32.xlu0 %v3637
      %v4124 = vpop.xlane.xlu0 %4123
      %4125 = vmax.xlane.f32.xlu0 %v3640
      %v4126 = vpop.xlane.xlu0 %4125
      %4127 = vmax.xlane.f32.xlu0 %v3643
      %v4128 = vpop.xlane.xlu0 %4127
      %4129 = vmax.xlane.f32.xlu0 %v3646
      %v4130 = vpop.xlane.xlu0 %4129
      %4131 = vmax.xlane.f32.xlu0 %v3649
      %v4132 = vpop.xlane.xlu0 %4131
      %4133 = vmax.xlane.f32.xlu0 %v3652
      %v4134 = vpop.xlane.xlu0 %4133
      %4135 = vmax.xlane.f32.xlu0 %v3655
      %v4136 = vpop.xlane.xlu0 %4135
      %4137 = vmax.xlane.f32.xlu0 %v3658
      %v4138 = vpop.xlane.xlu0 %4137
      %4139 = vmax.xlane.f32.xlu0 %v3661
      %v4140 = vpop.xlane.xlu0 %4139
      %4141 = vmax.xlane.f32.xlu0 %v3664
      %v4142 = vpop.xlane.xlu0 %4141
      %4143 = vmax.xlane.f32.xlu0 %v3667
      %v4144 = vpop.xlane.xlu0 %4143
      %4145 = vmax.xlane.f32.xlu0 %v3670
      %v4146 = vpop.xlane.xlu0 %4145
      %4147 = vmax.xlane.f32.xlu0 %v3673
      %v4148 = vpop.xlane.xlu0 %4147
      %4149 = vmax.xlane.f32.xlu0 %v3676
      %v4150 = vpop.xlane.xlu0 %4149
      %4151 = vmax.xlane.f32.xlu0 %v3679
      %v4152 = vpop.xlane.xlu0 %4151
      %4153 = vmax.xlane.f32.xlu0 %v3682
      %v4154 = vpop.xlane.xlu0 %4153
      %4155 = vmax.xlane.f32.xlu0 %v3685
      %v4156 = vpop.xlane.xlu0 %4155
      %4157 = vmax.xlane.f32.xlu0 %v3688
      %v4158 = vpop.xlane.xlu0 %4157
      %4159 = vmax.xlane.f32.xlu0 %v3691
      %v4160 = vpop.xlane.xlu0 %4159
      %4161 = vmax.xlane.f32.xlu0 %v3694
      %v4162 = vpop.xlane.xlu0 %4161
      %4163 = vmax.xlane.f32.xlu0 %v3697
      %v4164 = vpop.xlane.xlu0 %4163
      %4165 = vmax.xlane.f32.xlu0 %v3700
      %v4166 = vpop.xlane.xlu0 %4165
      %4167 = vmax.xlane.f32.xlu0 %v3703
      %v4168 = vpop.xlane.xlu0 %4167
      %4169 = vmax.xlane.f32.xlu0 %v3706
      %v4170 = vpop.xlane.xlu0 %4169
      %4171 = vmax.xlane.f32.xlu0 %v3709
      %v4172 = vpop.xlane.xlu0 %4171
      %4173 = vmax.xlane.f32.xlu0 %v3712
      %v4174 = vpop.xlane.xlu0 %4173
      %4175 = vmax.xlane.f32.xlu0 %v3715
      %v4176 = vpop.xlane.xlu0 %4175
      %4177 = vmax.xlane.f32.xlu0 %v3718
      %v4178 = vpop.xlane.xlu0 %4177
      %4179 = vmax.xlane.f32.xlu0 %v3721
      %v4180 = vpop.xlane.xlu0 %4179
      %4181 = vmax.xlane.f32.xlu0 %v3724
      %v4182 = vpop.xlane.xlu0 %4181
      %4183 = vmax.xlane.f32.xlu0 %v3727
      %v4184 = vpop.xlane.xlu0 %4183
      %4185 = vmax.xlane.f32.xlu0 %v3730
      %v4186 = vpop.xlane.xlu0 %4185
      %4187 = vmax.xlane.f32.xlu0 %v3733
      %v4188 = vpop.xlane.xlu0 %4187
      %4189 = vmax.xlane.f32.xlu0 %v3736
      %v4190 = vpop.xlane.xlu0 %4189
      %4191 = vmax.xlane.f32.xlu0 %v3739
      %v4192 = vpop.xlane.xlu0 %4191
      %4193 = vmax.xlane.f32.xlu0 %v3742
      %v4194 = vpop.xlane.xlu0 %4193
      %4195 = vmax.xlane.f32.xlu0 %v3745
      %v4196 = vpop.xlane.xlu0 %4195
      %4197 = vmax.xlane.f32.xlu0 %v3748
      %v4198 = vpop.xlane.xlu0 %4197
      %4199 = vmax.xlane.f32.xlu0 %v3751
      %v4200 = vpop.xlane.xlu0 %4199
      %4201 = vmax.xlane.f32.xlu0 %v3754
      %v4202 = vpop.xlane.xlu0 %4201
      %4203 = vmax.xlane.f32.xlu0 %v3757
      %v4204 = vpop.xlane.xlu0 %4203
      %4205 = vmax.xlane.f32.xlu0 %v3760
      %v4206 = vpop.xlane.xlu0 %4205
      %4207 = vmax.xlane.f32.xlu0 %v3763
      %v4208 = vpop.xlane.xlu0 %4207
      %4209 = vmax.xlane.f32.xlu0 %v3766
      %v4210 = vpop.xlane.xlu0 %4209
      %4211 = vmax.xlane.f32.xlu0 %v3769
      %v4212 = vpop.xlane.xlu0 %4211
      %4213 = vmax.xlane.f32.xlu0 %v3772
      %v4214 = vpop.xlane.xlu0 %4213
      %4215 = vmax.xlane.f32.xlu0 %v3775
      %v4216 = vpop.xlane.xlu0 %4215
      %4217 = vmax.xlane.f32.xlu0 %v3778
      %v4218 = vpop.xlane.xlu0 %4217
      %4219 = vmax.xlane.f32.xlu0 %v3781
      %v4220 = vpop.xlane.xlu0 %4219
      %4221 = vmax.xlane.f32.xlu0 %v3784
      %v4222 = vpop.xlane.xlu0 %4221
      %4223 = vmax.xlane.f32.xlu0 %v3787
      %v4224 = vpop.xlane.xlu0 %4223
      %4225 = vmax.xlane.f32.xlu0 %v3790
      %v4226 = vpop.xlane.xlu0 %4225
      %4227 = vmax.xlane.f32.xlu0 %v3793
      %v4228 = vpop.xlane.xlu0 %4227
      %4229 = vmax.xlane.f32.xlu0 %v3796
      %v4230 = vpop.xlane.xlu0 %4229
      %4231 = vmax.xlane.f32.xlu0 %v3799
      %v4232 = vpop.xlane.xlu0 %4231
      %4233 = vmax.xlane.f32.xlu0 %v3802
      %v4234 = vpop.xlane.xlu0 %4233
      %4235 = vmax.xlane.f32.xlu0 %v3805
      %v4236 = vpop.xlane.xlu0 %4235
      %4237 = vmax.xlane.f32.xlu0 %v3808
      %v4238 = vpop.xlane.xlu0 %4237
      %4239 = vmax.xlane.f32.xlu0 %v3811
      %v4240 = vpop.xlane.xlu0 %4239
      %4241 = vmax.xlane.f32.xlu0 %v3814
      %v4242 = vpop.xlane.xlu0 %4241
      %4243 = vmax.xlane.f32.xlu0 %v3817
      %v4244 = vpop.xlane.xlu0 %4243
      %4245 = vmax.xlane.f32.xlu0 %v3820
      %v4246 = vpop.xlane.xlu0 %4245
      %4247 = vmax.xlane.f32.xlu0 %v3823
      %v4248 = vpop.xlane.xlu0 %4247
      %4249 = vmax.xlane.f32.xlu0 %v3826
      %v4250 = vpop.xlane.xlu0 %4249
      %4251 = vmax.xlane.f32.xlu0 %v3829
      %v4252 = vpop.xlane.xlu0 %4251
      %4253 = vmax.xlane.f32.xlu0 %v3832
      %v4254 = vpop.xlane.xlu0 %4253
      %4255 = vmax.xlane.f32.xlu0 %v3835
      %v4256 = vpop.xlane.xlu0 %4255
      %4257 = vmax.xlane.f32.xlu0 %v3838
      %v4258 = vpop.xlane.xlu0 %4257
      %4259 = vmax.xlane.f32.xlu0 %v3841
      %v4260 = vpop.xlane.xlu0 %4259
      %4261 = vmax.xlane.f32.xlu0 %v3844
      %v4262 = vpop.xlane.xlu0 %4261
      %4263 = vmax.xlane.f32.xlu0 %v3847
      %v4264 = vpop.xlane.xlu0 %4263
      %4265 = vmax.xlane.f32.xlu0 %v3850
      %v4266 = vpop.xlane.xlu0 %4265
      %4267 = vmax.xlane.f32.xlu0 %v3853
      %v4268 = vpop.xlane.xlu0 %4267
      %4269 = vmax.xlane.f32.xlu0 %v3856
      %v4270 = vpop.xlane.xlu0 %4269
      %4271 = vmax.xlane.f32.xlu0 %v3859
      %v4272 = vpop.xlane.xlu0 %4271
      %4273 = vmax.xlane.f32.xlu0 %v3862
      %v4274 = vpop.xlane.xlu0 %4273
      %4275 = vmax.xlane.f32.xlu0 %v3865
      %v4276 = vpop.xlane.xlu0 %4275
      %4277 = vmax.xlane.f32.xlu0 %v3868
      %v4278 = vpop.xlane.xlu0 %4277
      %4279 = vmax.xlane.f32.xlu0 %v3871
      %v4280 = vpop.xlane.xlu0 %4279
      %4281 = vmax.xlane.f32.xlu0 %v3874
      %v4282 = vpop.xlane.xlu0 %4281
      %4283 = vmax.xlane.f32.xlu0 %v3877
      %v4284 = vpop.xlane.xlu0 %4283
      %4285 = vmax.xlane.f32.xlu0 %v3880
      %v4286 = vpop.xlane.xlu0 %4285
      %4287 = vmax.xlane.f32.xlu0 %v3883
      %v4288 = vpop.xlane.xlu0 %4287
      %4289 = vmax.xlane.f32.xlu0 %v3886
      %v4290 = vpop.xlane.xlu0 %4289
      %4291 = vmax.xlane.f32.xlu0 %v3889
      %v4292 = vpop.xlane.xlu0 %4291
      %4293 = vmax.xlane.f32.xlu0 %v3892
      %v4294 = vpop.xlane.xlu0 %4293
      %4295 = vmax.xlane.f32.xlu0 %v3895
      %v4296 = vpop.xlane.xlu0 %4295
      %4297 = vmax.xlane.f32.xlu0 %v3898
      %v4298 = vpop.xlane.xlu0 %4297
      %4299 = vmax.xlane.f32.xlu0 %v3901
      %v4300 = vpop.xlane.xlu0 %4299
      %4301 = vmax.xlane.f32.xlu0 %v3904
      %v4302 = vpop.xlane.xlu0 %4301
      %4303 = vmax.xlane.f32.xlu0 %v3907
      %v4304 = vpop.xlane.xlu0 %4303
      %4305 = vmax.xlane.f32.xlu0 %v3910
      %v4306 = vpop.xlane.xlu0 %4305
      %4307 = vmax.xlane.f32.xlu0 %v3913
      %v4308 = vpop.xlane.xlu0 %4307
      %4309 = vmax.xlane.f32.xlu0 %v3916
      %v4310 = vpop.xlane.xlu0 %4309
      %4311 = vmax.xlane.f32.xlu0 %v3919
      %v4312 = vpop.xlane.xlu0 %4311
      %4313 = vmax.xlane.f32.xlu0 %v3922
      %v4314 = vpop.xlane.xlu0 %4313
      %4315 = vmax.xlane.f32.xlu0 %v3925
      %v4316 = vpop.xlane.xlu0 %4315
      %4317 = vmax.xlane.f32.xlu0 %v3928
      %v4318 = vpop.xlane.xlu0 %4317
      %v4319 = vld [vmem:[%s304] sm:$0xff]
      %v4320 = vld [vmem:[%s304 + $0x8] sm:$0xff]
      %v4321 = vld [vmem:[%s304 + $0x10] sm:$0xff]
      %v4322 = vld [vmem:[%s304 + $0x18] sm:$0xff]
      %v4323 = vld [vmem:[%s304 + $0x20] sm:$0xff]
      %v4324 = vld [vmem:[%s304 + $0x28] sm:$0xff]
      %v4325 = vld [vmem:[%s304 + $0x30] sm:$0xff]
      %v4326 = vld [vmem:[%s304 + $0x38] sm:$0xff]
      %v4327 = vld [vmem:[%s304 + $0x40] sm:$0xff]
      %v4328 = vld [vmem:[%s304 + $0x48] sm:$0xff]
      %v4329 = vld [vmem:[%s304 + $0x50] sm:$0xff]
      %v4330 = vld [vmem:[%s304 + $0x58] sm:$0xff]
      %v4331 = vld [vmem:[%s304 + $0x60] sm:$0xff]
      %v4332 = vld [vmem:[%s304 + $0x68] sm:$0xff]
      %v4333 = vld [vmem:[%s304 + $0x70] sm:$0xff]
      %v4334 = vld [vmem:[%s304 + $0x78] sm:$0xff]
      %v4335 = vld [vmem:[%s304 + $0x80] sm:$0xff]
      %v4336 = vld [vmem:[%s304 + $0x88] sm:$0xff]
      %v4337 = vld [vmem:[%s304 + $0x90] sm:$0xff]
      %v4338 = vld [vmem:[%s304 + $0x98] sm:$0xff]
      %v4339 = vld [vmem:[%s304 + $0xa0] sm:$0xff]
      %v4340 = vld [vmem:[%s304 + $0xa8] sm:$0xff]
      %v4341 = vld [vmem:[%s304 + $0xb0] sm:$0xff]
      %v4342 = vld [vmem:[%s304 + $0xb8] sm:$0xff]
      %v4343 = vld [vmem:[%s304 + $0xc0] sm:$0xff]
      %v4344 = vld [vmem:[%s304 + $0xc8] sm:$0xff]
      %v4345 = vld [vmem:[%s304 + $0xd0] sm:$0xff]
      %v4346 = vld [vmem:[%s304 + $0xd8] sm:$0xff]
      %v4347 = vld [vmem:[%s304 + $0xe0] sm:$0xff]
      %v4348 = vld [vmem:[%s304 + $0xe8] sm:$0xff]
      %v4349 = vld [vmem:[%s304 + $0xf0] sm:$0xff]
      %v4350 = vld [vmem:[%s304 + $0xf8] sm:$0xff]
      %v4351 = vld [vmem:[%s304 + $0x100] sm:$0xff]
      %v4352 = vld [vmem:[%s304 + $0x108] sm:$0xff]
      %v4353 = vld [vmem:[%s304 + $0x110] sm:$0xff]
      %v4354 = vld [vmem:[%s304 + $0x118] sm:$0xff]
      %v4355 = vld [vmem:[%s304 + $0x120] sm:$0xff]
      %v4356 = vld [vmem:[%s304 + $0x128] sm:$0xff]
      %v4357 = vld [vmem:[%s304 + $0x130] sm:$0xff]
      %v4358 = vld [vmem:[%s304 + $0x138] sm:$0xff]
      %v4359 = vld [vmem:[%s304 + $0x140] sm:$0xff]
      %v4360 = vld [vmem:[%s304 + $0x148] sm:$0xff]
      %v4361 = vld [vmem:[%s304 + $0x150] sm:$0xff]
      %v4362 = vld [vmem:[%s304 + $0x158] sm:$0xff]
      %v4363 = vld [vmem:[%s304 + $0x160] sm:$0xff]
      %v4364 = vld [vmem:[%s304 + $0x168] sm:$0xff]
      %v4365 = vld [vmem:[%s304 + $0x170] sm:$0xff]
      %v4366 = vld [vmem:[%s304 + $0x178] sm:$0xff]
      %v4367 = vld [vmem:[%s304 + $0x180] sm:$0xff]
      %v4368 = vld [vmem:[%s304 + $0x188] sm:$0xff]
      %v4369 = vld [vmem:[%s304 + $0x190] sm:$0xff]
      %v4370 = vld [vmem:[%s304 + $0x198] sm:$0xff]
      %v4371 = vld [vmem:[%s304 + $0x1a0] sm:$0xff]
      %v4372 = vld [vmem:[%s304 + $0x1a8] sm:$0xff]
      %v4373 = vld [vmem:[%s304 + $0x1b0] sm:$0xff]
      %v4374 = vld [vmem:[%s304 + $0x1b8] sm:$0xff]
      %v4375 = vld [vmem:[%s304 + $0x1c0] sm:$0xff]
      %v4376 = vld [vmem:[%s304 + $0x1c8] sm:$0xff]
      %v4377 = vld [vmem:[%s304 + $0x1d0] sm:$0xff]
      %v4378 = vld [vmem:[%s304 + $0x1d8] sm:$0xff]
      %v4379 = vld [vmem:[%s304 + $0x1e0] sm:$0xff]
      %v4380 = vld [vmem:[%s304 + $0x1e8] sm:$0xff]
      %v4381 = vld [vmem:[%s304 + $0x1f0] sm:$0xff]
      %v4382 = vld [vmem:[%s304 + $0x1f8] sm:$0xff]
      %v4383 = vld [vmem:[%s304 + $0x200] sm:$0xff]
      %v4384 = vld [vmem:[%s304 + $0x208] sm:$0xff]
      %v4385 = vld [vmem:[%s304 + $0x210] sm:$0xff]
      %v4386 = vld [vmem:[%s304 + $0x218] sm:$0xff]
      %v4387 = vld [vmem:[%s304 + $0x220] sm:$0xff]
      %v4388 = vld [vmem:[%s304 + $0x228] sm:$0xff]
      %v4389 = vld [vmem:[%s304 + $0x230] sm:$0xff]
      %v4390 = vld [vmem:[%s304 + $0x238] sm:$0xff]
      %v4391 = vld [vmem:[%s304 + $0x240] sm:$0xff]
      %v4392 = vld [vmem:[%s304 + $0x248] sm:$0xff]
      %v4393 = vld [vmem:[%s304 + $0x250] sm:$0xff]
      %v4394 = vld [vmem:[%s304 + $0x258] sm:$0xff]
      %v4395 = vld [vmem:[%s304 + $0x260] sm:$0xff]
      %v4396 = vld [vmem:[%s304 + $0x268] sm:$0xff]
      %v4397 = vld [vmem:[%s304 + $0x270] sm:$0xff]
      %v4398 = vld [vmem:[%s304 + $0x278] sm:$0xff]
      %v4399 = vld [vmem:[%s304 + $0x280] sm:$0xff]
      %v4400 = vld [vmem:[%s304 + $0x288] sm:$0xff]
      %v4401 = vld [vmem:[%s304 + $0x290] sm:$0xff]
      %v4402 = vld [vmem:[%s304 + $0x298] sm:$0xff]
      %v4403 = vld [vmem:[%s304 + $0x2a0] sm:$0xff]
      %v4404 = vld [vmem:[%s304 + $0x2a8] sm:$0xff]
      %v4405 = vld [vmem:[%s304 + $0x2b0] sm:$0xff]
      %v4406 = vld [vmem:[%s304 + $0x2b8] sm:$0xff]
      %v4407 = vld [vmem:[%s304 + $0x2c0] sm:$0xff]
      %v4408 = vld [vmem:[%s304 + $0x2c8] sm:$0xff]
      %v4409 = vld [vmem:[%s304 + $0x2d0] sm:$0xff]
      %v4410 = vld [vmem:[%s304 + $0x2d8] sm:$0xff]
      %v4411 = vld [vmem:[%s304 + $0x2e0] sm:$0xff]
      %v4412 = vld [vmem:[%s304 + $0x2e8] sm:$0xff]
      %v4413 = vld [vmem:[%s304 + $0x2f0] sm:$0xff]
      %v4414 = vld [vmem:[%s304 + $0x2f8] sm:$0xff]
      %v4415 = vld [vmem:[%s304 + $0x300] sm:$0xff]
      %v4416 = vld [vmem:[%s304 + $0x308] sm:$0xff]
      %v4417 = vld [vmem:[%s304 + $0x310] sm:$0xff]
      %v4418 = vld [vmem:[%s304 + $0x318] sm:$0xff]
      %v4419 = vld [vmem:[%s304 + $0x320] sm:$0xff]
      %v4420 = vld [vmem:[%s304 + $0x328] sm:$0xff]
      %v4421 = vld [vmem:[%s304 + $0x330] sm:$0xff]
      %v4422 = vld [vmem:[%s304 + $0x338] sm:$0xff]
      %v4423 = vld [vmem:[%s304 + $0x340] sm:$0xff]
      %v4424 = vld [vmem:[%s304 + $0x348] sm:$0xff]
      %v4425 = vld [vmem:[%s304 + $0x350] sm:$0xff]
      %v4426 = vld [vmem:[%s304 + $0x358] sm:$0xff]
      %v4427 = vld [vmem:[%s304 + $0x360] sm:$0xff]
      %v4428 = vld [vmem:[%s304 + $0x368] sm:$0xff]
      %v4429 = vld [vmem:[%s304 + $0x370] sm:$0xff]
      %v4430 = vld [vmem:[%s304 + $0x378] sm:$0xff]
      %v4431 = vld [vmem:[%s304 + $0x380] sm:$0xff]
      %v4432 = vld [vmem:[%s304 + $0x388] sm:$0xff]
      %v4433 = vld [vmem:[%s304 + $0x390] sm:$0xff]
      %v4434 = vld [vmem:[%s304 + $0x398] sm:$0xff]
      %v4435 = vld [vmem:[%s304 + $0x3a0] sm:$0xff]
      %v4436 = vld [vmem:[%s304 + $0x3a8] sm:$0xff]
      %v4437 = vld [vmem:[%s304 + $0x3b0] sm:$0xff]
      %v4438 = vld [vmem:[%s304 + $0x3b8] sm:$0xff]
      %v4439 = vld [vmem:[%s304 + $0x3c0] sm:$0xff]
      %v4440 = vld [vmem:[%s304 + $0x3c8] sm:$0xff]
      %v4441 = vld [vmem:[%s304 + $0x3d0] sm:$0xff]
      %v4442 = vld [vmem:[%s304 + $0x3d8] sm:$0xff]
      %v4443 = vld [vmem:[%s304 + $0x3e0] sm:$0xff]
      %v4444 = vld [vmem:[%s304 + $0x3e8] sm:$0xff]
      %v4445 = vld [vmem:[%s304 + $0x3f0] sm:$0xff]
      %v4446 = vld [vmem:[%s304 + $0x3f8] sm:$0xff]
      %v4447 = vmax.f32 %v4319, %v4064
      %v4448 = vmax.f32 %v4320, %v4066
      %v4449 = vmax.f32 %v4321, %v4068
      %v4450 = vmax.f32 %v4322, %v4070
      %v4451 = vmax.f32 %v4323, %v4072
      %v4452 = vmax.f32 %v4324, %v4074
      %v4453 = vmax.f32 %v4325, %v4076
      %v4454 = vmax.f32 %v4326, %v4078
      %v4455 = vmax.f32 %v4327, %v4080
      %v4456 = vmax.f32 %v4328, %v4082
      %v4457 = vmax.f32 %v4329, %v4084
      %v4458 = vmax.f32 %v4330, %v4086
      %v4459 = vmax.f32 %v4331, %v4088
      %v4460 = vmax.f32 %v4332, %v4090
      %v4461 = vmax.f32 %v4333, %v4092
      %v4462 = vmax.f32 %v4334, %v4094
      %v4463 = vmax.f32 %v4335, %v4096
      %v4464 = vmax.f32 %v4336, %v4098
      %v4465 = vmax.f32 %v4337, %v4100
      %v4466 = vmax.f32 %v4338, %v4102
      %v4467 = vmax.f32 %v4339, %v4104
      %v4468 = vmax.f32 %v4340, %v4106
      %v4469 = vmax.f32 %v4341, %v4108
      %v4470 = vmax.f32 %v4342, %v4110
      %v4471 = vmax.f32 %v4343, %v4112
      %v4472 = vmax.f32 %v4344, %v4114
      %v4473 = vmax.f32 %v4345, %v4116
      %v4474 = vmax.f32 %v4346, %v4118
      %v4475 = vmax.f32 %v4347, %v4120
      %v4476 = vmax.f32 %v4348, %v4122
      %v4477 = vmax.f32 %v4349, %v4124
      %v4478 = vmax.f32 %v4350, %v4126
      %v4479 = vmax.f32 %v4351, %v4128
      %v4480 = vmax.f32 %v4352, %v4130
      %v4481 = vmax.f32 %v4353, %v4132
      %v4482 = vmax.f32 %v4354, %v4134
      %v4483 = vmax.f32 %v4355, %v4136
      %v4484 = vmax.f32 %v4356, %v4138
      %v4485 = vmax.f32 %v4357, %v4140
      %v4486 = vmax.f32 %v4358, %v4142
      %v4487 = vmax.f32 %v4359, %v4144
      %v4488 = vmax.f32 %v4360, %v4146
      %v4489 = vmax.f32 %v4361, %v4148
      %v4490 = vmax.f32 %v4362, %v4150
      %v4491 = vmax.f32 %v4363, %v4152
      %v4492 = vmax.f32 %v4364, %v4154
      %v4493 = vmax.f32 %v4365, %v4156
      %v4494 = vmax.f32 %v4366, %v4158
      %v4495 = vmax.f32 %v4367, %v4160
      %v4496 = vmax.f32 %v4368, %v4162
      %v4497 = vmax.f32 %v4369, %v4164
      %v4498 = vmax.f32 %v4370, %v4166
      %v4499 = vmax.f32 %v4371, %v4168
      %v4500 = vmax.f32 %v4372, %v4170
      %v4501 = vmax.f32 %v4373, %v4172
      %v4502 = vmax.f32 %v4374, %v4174
      %v4503 = vmax.f32 %v4375, %v4176
      %v4504 = vmax.f32 %v4376, %v4178
      %v4505 = vmax.f32 %v4377, %v4180
      %v4506 = vmax.f32 %v4378, %v4182
      %v4507 = vmax.f32 %v4379, %v4184
      %v4508 = vmax.f32 %v4380, %v4186
      %v4509 = vmax.f32 %v4381, %v4188
      %v4510 = vmax.f32 %v4382, %v4190
      %v4511 = vmax.f32 %v4383, %v4192
      %v4512 = vmax.f32 %v4384, %v4194
      %v4513 = vmax.f32 %v4385, %v4196
      %v4514 = vmax.f32 %v4386, %v4198
      %v4515 = vmax.f32 %v4387, %v4200
      %v4516 = vmax.f32 %v4388, %v4202
      %v4517 = vmax.f32 %v4389, %v4204
      %v4518 = vmax.f32 %v4390, %v4206
      %v4519 = vmax.f32 %v4391, %v4208
      %v4520 = vmax.f32 %v4392, %v4210
      %v4521 = vmax.f32 %v4393, %v4212
      %v4522 = vmax.f32 %v4394, %v4214
      %v4523 = vmax.f32 %v4395, %v4216
      %v4524 = vmax.f32 %v4396, %v4218
      %v4525 = vmax.f32 %v4397, %v4220
      %v4526 = vmax.f32 %v4398, %v4222
      %v4527 = vmax.f32 %v4399, %v4224
      %v4528 = vmax.f32 %v4400, %v4226
      %v4529 = vmax.f32 %v4401, %v4228
      %v4530 = vmax.f32 %v4402, %v4230
      %v4531 = vmax.f32 %v4403, %v4232
      %v4532 = vmax.f32 %v4404, %v4234
      %v4533 = vmax.f32 %v4405, %v4236
      %v4534 = vmax.f32 %v4406, %v4238
      %v4535 = vmax.f32 %v4407, %v4240
      %v4536 = vmax.f32 %v4408, %v4242
      %v4537 = vmax.f32 %v4409, %v4244
      %v4538 = vmax.f32 %v4410, %v4246
      %v4539 = vmax.f32 %v4411, %v4248
      %v4540 = vmax.f32 %v4412, %v4250
      %v4541 = vmax.f32 %v4413, %v4252
      %v4542 = vmax.f32 %v4414, %v4254
      %v4543 = vmax.f32 %v4415, %v4256
      %v4544 = vmax.f32 %v4416, %v4258
      %v4545 = vmax.f32 %v4417, %v4260
      %v4546 = vmax.f32 %v4418, %v4262
      %v4547 = vmax.f32 %v4419, %v4264
      %v4548 = vmax.f32 %v4420, %v4266
      %v4549 = vmax.f32 %v4421, %v4268
      %v4550 = vmax.f32 %v4422, %v4270
      %v4551 = vmax.f32 %v4423, %v4272
      %v4552 = vmax.f32 %v4424, %v4274
      %v4553 = vmax.f32 %v4425, %v4276
      %v4554 = vmax.f32 %v4426, %v4278
      %v4555 = vmax.f32 %v4427, %v4280
      %v4556 = vmax.f32 %v4428, %v4282
      %v4557 = vmax.f32 %v4429, %v4284
      %v4558 = vmax.f32 %v4430, %v4286
      %v4559 = vmax.f32 %v4431, %v4288
      %v4560 = vmax.f32 %v4432, %v4290
      %v4561 = vmax.f32 %v4433, %v4292
      %v4562 = vmax.f32 %v4434, %v4294
      %v4563 = vmax.f32 %v4435, %v4296
      %v4564 = vmax.f32 %v4436, %v4298
      %v4565 = vmax.f32 %v4437, %v4300
      %v4566 = vmax.f32 %v4438, %v4302
      %v4567 = vmax.f32 %v4439, %v4304
      %v4568 = vmax.f32 %v4440, %v4306
      %v4569 = vmax.f32 %v4441, %v4308
      %v4570 = vmax.f32 %v4442, %v4310
      %v4571 = vmax.f32 %v4443, %v4312
      %v4572 = vmax.f32 %v4444, %v4314
      %v4573 = vmax.f32 %v4445, %v4316
      %v4574 = vmax.f32 %v4446, %v4318
      %vm4575 = vcmask 7168
      %4576 = vst.msk [vmem:[%s304] sm:$0xff] %vm4575, %v4447
      %4577 = vst.msk [vmem:[%s304 + $0x8] sm:$0xff] %vm4575, %v4448
      %4578 = vst.msk [vmem:[%s304 + $0x10] sm:$0xff] %vm4575, %v4449
      %4579 = vst.msk [vmem:[%s304 + $0x18] sm:$0xff] %vm4575, %v4450
      %4580 = vst.msk [vmem:[%s304 + $0x20] sm:$0xff] %vm4575, %v4451
      %4581 = vst.msk [vmem:[%s304 + $0x28] sm:$0xff] %vm4575, %v4452
      %4582 = vst.msk [vmem:[%s304 + $0x30] sm:$0xff] %vm4575, %v4453
      %4583 = vst.msk [vmem:[%s304 + $0x38] sm:$0xff] %vm4575, %v4454
      %4584 = vst.msk [vmem:[%s304 + $0x40] sm:$0xff] %vm4575, %v4455
      %4585 = vst.msk [vmem:[%s304 + $0x48] sm:$0xff] %vm4575, %v4456
      %4586 = vst.msk [vmem:[%s304 + $0x50] sm:$0xff] %vm4575, %v4457
      %4587 = vst.msk [vmem:[%s304 + $0x58] sm:$0xff] %vm4575, %v4458
      %4588 = vst.msk [vmem:[%s304 + $0x60] sm:$0xff] %vm4575, %v4459
      %4589 = vst.msk [vmem:[%s304 + $0x68] sm:$0xff] %vm4575, %v4460
      %4590 = vst.msk [vmem:[%s304 + $0x70] sm:$0xff] %vm4575, %v4461
      %4591 = vst.msk [vmem:[%s304 + $0x78] sm:$0xff] %vm4575, %v4462
      %4592 = vst.msk [vmem:[%s304 + $0x80] sm:$0xff] %vm4575, %v4463
      %4593 = vst.msk [vmem:[%s304 + $0x88] sm:$0xff] %vm4575, %v4464
      %4594 = vst.msk [vmem:[%s304 + $0x90] sm:$0xff] %vm4575, %v4465
      %4595 = vst.msk [vmem:[%s304 + $0x98] sm:$0xff] %vm4575, %v4466
      %4596 = vst.msk [vmem:[%s304 + $0xa0] sm:$0xff] %vm4575, %v4467
      %4597 = vst.msk [vmem:[%s304 + $0xa8] sm:$0xff] %vm4575, %v4468
      %4598 = vst.msk [vmem:[%s304 + $0xb0] sm:$0xff] %vm4575, %v4469
      %4599 = vst.msk [vmem:[%s304 + $0xb8] sm:$0xff] %vm4575, %v4470
      %4600 = vst.msk [vmem:[%s304 + $0xc0] sm:$0xff] %vm4575, %v4471
      %4601 = vst.msk [vmem:[%s304 + $0xc8] sm:$0xff] %vm4575, %v4472
      %4602 = vst.msk [vmem:[%s304 + $0xd0] sm:$0xff] %vm4575, %v4473
      %4603 = vst.msk [vmem:[%s304 + $0xd8] sm:$0xff] %vm4575, %v4474
      %4604 = vst.msk [vmem:[%s304 + $0xe0] sm:$0xff] %vm4575, %v4475
      %4605 = vst.msk [vmem:[%s304 + $0xe8] sm:$0xff] %vm4575, %v4476
      %4606 = vst.msk [vmem:[%s304 + $0xf0] sm:$0xff] %vm4575, %v4477
      %4607 = vst.msk [vmem:[%s304 + $0xf8] sm:$0xff] %vm4575, %v4478
      %4608 = vst.msk [vmem:[%s304 + $0x100] sm:$0xff] %vm4575, %v4479
      %4609 = vst.msk [vmem:[%s304 + $0x108] sm:$0xff] %vm4575, %v4480
      %4610 = vst.msk [vmem:[%s304 + $0x110] sm:$0xff] %vm4575, %v4481
      %4611 = vst.msk [vmem:[%s304 + $0x118] sm:$0xff] %vm4575, %v4482
      %4612 = vst.msk [vmem:[%s304 + $0x120] sm:$0xff] %vm4575, %v4483
      %4613 = vst.msk [vmem:[%s304 + $0x128] sm:$0xff] %vm4575, %v4484
      %4614 = vst.msk [vmem:[%s304 + $0x130] sm:$0xff] %vm4575, %v4485
      %4615 = vst.msk [vmem:[%s304 + $0x138] sm:$0xff] %vm4575, %v4486
      %4616 = vst.msk [vmem:[%s304 + $0x140] sm:$0xff] %vm4575, %v4487
      %4617 = vst.msk [vmem:[%s304 + $0x148] sm:$0xff] %vm4575, %v4488
      %4618 = vst.msk [vmem:[%s304 + $0x150] sm:$0xff] %vm4575, %v4489
      %4619 = vst.msk [vmem:[%s304 + $0x158] sm:$0xff] %vm4575, %v4490
      %4620 = vst.msk [vmem:[%s304 + $0x160] sm:$0xff] %vm4575, %v4491
      %4621 = vst.msk [vmem:[%s304 + $0x168] sm:$0xff] %vm4575, %v4492
      %4622 = vst.msk [vmem:[%s304 + $0x170] sm:$0xff] %vm4575, %v4493
      %4623 = vst.msk [vmem:[%s304 + $0x178] sm:$0xff] %vm4575, %v4494
      %4624 = vst.msk [vmem:[%s304 + $0x180] sm:$0xff] %vm4575, %v4495
      %4625 = vst.msk [vmem:[%s304 + $0x188] sm:$0xff] %vm4575, %v4496
      %4626 = vst.msk [vmem:[%s304 + $0x190] sm:$0xff] %vm4575, %v4497
      %4627 = vst.msk [vmem:[%s304 + $0x198] sm:$0xff] %vm4575, %v4498
      %4628 = vst.msk [vmem:[%s304 + $0x1a0] sm:$0xff] %vm4575, %v4499
      %4629 = vst.msk [vmem:[%s304 + $0x1a8] sm:$0xff] %vm4575, %v4500
      %4630 = vst.msk [vmem:[%s304 + $0x1b0] sm:$0xff] %vm4575, %v4501
      %4631 = vst.msk [vmem:[%s304 + $0x1b8] sm:$0xff] %vm4575, %v4502
      %4632 = vst.msk [vmem:[%s304 + $0x1c0] sm:$0xff] %vm4575, %v4503
      %4633 = vst.msk [vmem:[%s304 + $0x1c8] sm:$0xff] %vm4575, %v4504
      %4634 = vst.msk [vmem:[%s304 + $0x1d0] sm:$0xff] %vm4575, %v4505
      %4635 = vst.msk [vmem:[%s304 + $0x1d8] sm:$0xff] %vm4575, %v4506
      %4636 = vst.msk [vmem:[%s304 + $0x1e0] sm:$0xff] %vm4575, %v4507
      %4637 = vst.msk [vmem:[%s304 + $0x1e8] sm:$0xff] %vm4575, %v4508
      %4638 = vst.msk [vmem:[%s304 + $0x1f0] sm:$0xff] %vm4575, %v4509
      %4639 = vst.msk [vmem:[%s304 + $0x1f8] sm:$0xff] %vm4575, %v4510
      %4640 = vst.msk [vmem:[%s304 + $0x200] sm:$0xff] %vm4575, %v4511
      %4641 = vst.msk [vmem:[%s304 + $0x208] sm:$0xff] %vm4575, %v4512
      %4642 = vst.msk [vmem:[%s304 + $0x210] sm:$0xff] %vm4575, %v4513
      %4643 = vst.msk [vmem:[%s304 + $0x218] sm:$0xff] %vm4575, %v4514
      %4644 = vst.msk [vmem:[%s304 + $0x220] sm:$0xff] %vm4575, %v4515
      %4645 = vst.msk [vmem:[%s304 + $0x228] sm:$0xff] %vm4575, %v4516
      %4646 = vst.msk [vmem:[%s304 + $0x230] sm:$0xff] %vm4575, %v4517
      %4647 = vst.msk [vmem:[%s304 + $0x238] sm:$0xff] %vm4575, %v4518
      %4648 = vst.msk [vmem:[%s304 + $0x240] sm:$0xff] %vm4575, %v4519
      %4649 = vst.msk [vmem:[%s304 + $0x248] sm:$0xff] %vm4575, %v4520
      %4650 = vst.msk [vmem:[%s304 + $0x250] sm:$0xff] %vm4575, %v4521
      %4651 = vst.msk [vmem:[%s304 + $0x258] sm:$0xff] %vm4575, %v4522
      %4652 = vst.msk [vmem:[%s304 + $0x260] sm:$0xff] %vm4575, %v4523
      %4653 = vst.msk [vmem:[%s304 + $0x268] sm:$0xff] %vm4575, %v4524
      %4654 = vst.msk [vmem:[%s304 + $0x270] sm:$0xff] %vm4575, %v4525
      %4655 = vst.msk [vmem:[%s304 + $0x278] sm:$0xff] %vm4575, %v4526
      %4656 = vst.msk [vmem:[%s304 + $0x280] sm:$0xff] %vm4575, %v4527
      %4657 = vst.msk [vmem:[%s304 + $0x288] sm:$0xff] %vm4575, %v4528
      %4658 = vst.msk [vmem:[%s304 + $0x290] sm:$0xff] %vm4575, %v4529
      %4659 = vst.msk [vmem:[%s304 + $0x298] sm:$0xff] %vm4575, %v4530
      %4660 = vst.msk [vmem:[%s304 + $0x2a0] sm:$0xff] %vm4575, %v4531
      %4661 = vst.msk [vmem:[%s304 + $0x2a8] sm:$0xff] %vm4575, %v4532
      %4662 = vst.msk [vmem:[%s304 + $0x2b0] sm:$0xff] %vm4575, %v4533
      %4663 = vst.msk [vmem:[%s304 + $0x2b8] sm:$0xff] %vm4575, %v4534
      %4664 = vst.msk [vmem:[%s304 + $0x2c0] sm:$0xff] %vm4575, %v4535
      %4665 = vst.msk [vmem:[%s304 + $0x2c8] sm:$0xff] %vm4575, %v4536
      %4666 = vst.msk [vmem:[%s304 + $0x2d0] sm:$0xff] %vm4575, %v4537
      %4667 = vst.msk [vmem:[%s304 + $0x2d8] sm:$0xff] %vm4575, %v4538
      %4668 = vst.msk [vmem:[%s304 + $0x2e0] sm:$0xff] %vm4575, %v4539
      %4669 = vst.msk [vmem:[%s304 + $0x2e8] sm:$0xff] %vm4575, %v4540
      %4670 = vst.msk [vmem:[%s304 + $0x2f0] sm:$0xff] %vm4575, %v4541
      %4671 = vst.msk [vmem:[%s304 + $0x2f8] sm:$0xff] %vm4575, %v4542
      %4672 = vst.msk [vmem:[%s304 + $0x300] sm:$0xff] %vm4575, %v4543
      %4673 = vst.msk [vmem:[%s304 + $0x308] sm:$0xff] %vm4575, %v4544
      %4674 = vst.msk [vmem:[%s304 + $0x310] sm:$0xff] %vm4575, %v4545
      %4675 = vst.msk [vmem:[%s304 + $0x318] sm:$0xff] %vm4575, %v4546
      %4676 = vst.msk [vmem:[%s304 + $0x320] sm:$0xff] %vm4575, %v4547
      %4677 = vst.msk [vmem:[%s304 + $0x328] sm:$0xff] %vm4575, %v4548
      %4678 = vst.msk [vmem:[%s304 + $0x330] sm:$0xff] %vm4575, %v4549
      %4679 = vst.msk [vmem:[%s304 + $0x338] sm:$0xff] %vm4575, %v4550
      %4680 = vst.msk [vmem:[%s304 + $0x340] sm:$0xff] %vm4575, %v4551
      %4681 = vst.msk [vmem:[%s304 + $0x348] sm:$0xff] %vm4575, %v4552
      %4682 = vst.msk [vmem:[%s304 + $0x350] sm:$0xff] %vm4575, %v4553
      %4683 = vst.msk [vmem:[%s304 + $0x358] sm:$0xff] %vm4575, %v4554
      %4684 = vst.msk [vmem:[%s304 + $0x360] sm:$0xff] %vm4575, %v4555
      %4685 = vst.msk [vmem:[%s304 + $0x368] sm:$0xff] %vm4575, %v4556
      %4686 = vst.msk [vmem:[%s304 + $0x370] sm:$0xff] %vm4575, %v4557
      %4687 = vst.msk [vmem:[%s304 + $0x378] sm:$0xff] %vm4575, %v4558
      %4688 = vst.msk [vmem:[%s304 + $0x380] sm:$0xff] %vm4575, %v4559
      %4689 = vst.msk [vmem:[%s304 + $0x388] sm:$0xff] %vm4575, %v4560
      %4690 = vst.msk [vmem:[%s304 + $0x390] sm:$0xff] %vm4575, %v4561
      %4691 = vst.msk [vmem:[%s304 + $0x398] sm:$0xff] %vm4575, %v4562
      %4692 = vst.msk [vmem:[%s304 + $0x3a0] sm:$0xff] %vm4575, %v4563
      %4693 = vst.msk [vmem:[%s304 + $0x3a8] sm:$0xff] %vm4575, %v4564
      %4694 = vst.msk [vmem:[%s304 + $0x3b0] sm:$0xff] %vm4575, %v4565
      %4695 = vst.msk [vmem:[%s304 + $0x3b8] sm:$0xff] %vm4575, %v4566
      %4696 = vst.msk [vmem:[%s304 + $0x3c0] sm:$0xff] %vm4575, %v4567
      %4697 = vst.msk [vmem:[%s304 + $0x3c8] sm:$0xff] %vm4575, %v4568
      %4698 = vst.msk [vmem:[%s304 + $0x3d0] sm:$0xff] %vm4575, %v4569
      %4699 = vst.msk [vmem:[%s304 + $0x3d8] sm:$0xff] %vm4575, %v4570
      %4700 = vst.msk [vmem:[%s304 + $0x3e0] sm:$0xff] %vm4575, %v4571
      %4701 = vst.msk [vmem:[%s304 + $0x3e8] sm:$0xff] %vm4575, %v4572
      %4702 = vst.msk [vmem:[%s304 + $0x3f0] sm:$0xff] %vm4575, %v4573
      %4703 = vst.msk [vmem:[%s304 + $0x3f8] sm:$0xff] %vm4575, %v4574
      %4704 = vmax.xlane.f32.xlu0 %v3548
      %v4705 = vpop.xlane.xlu0 %4704
      %4706 = vmax.xlane.f32.xlu0 %v3551
      %v4707 = vpop.xlane.xlu0 %4706
      %4708 = vmax.xlane.f32.xlu0 %v3554
      %v4709 = vpop.xlane.xlu0 %4708
      %4710 = vmax.xlane.f32.xlu0 %v3557
      %v4711 = vpop.xlane.xlu0 %4710
      %4712 = vmax.xlane.f32.xlu0 %v3560
      %v4713 = vpop.xlane.xlu0 %4712
      %4714 = vmax.xlane.f32.xlu0 %v3563
      %v4715 = vpop.xlane.xlu0 %4714
      %4716 = vmax.xlane.f32.xlu0 %v3566
      %v4717 = vpop.xlane.xlu0 %4716
      %4718 = vmax.xlane.f32.xlu0 %v3569
      %v4719 = vpop.xlane.xlu0 %4718
      %4720 = vmax.xlane.f32.xlu0 %v3572
      %v4721 = vpop.xlane.xlu0 %4720
      %4722 = vmax.xlane.f32.xlu0 %v3575
      %v4723 = vpop.xlane.xlu0 %4722
      %4724 = vmax.xlane.f32.xlu0 %v3578
      %v4725 = vpop.xlane.xlu0 %4724
      %4726 = vmax.xlane.f32.xlu0 %v3581
      %v4727 = vpop.xlane.xlu0 %4726
      %4728 = vmax.xlane.f32.xlu0 %v3584
      %v4729 = vpop.xlane.xlu0 %4728
      %4730 = vmax.xlane.f32.xlu0 %v3587
      %v4731 = vpop.xlane.xlu0 %4730
      %4732 = vmax.xlane.f32.xlu0 %v3590
      %v4733 = vpop.xlane.xlu0 %4732
      %4734 = vmax.xlane.f32.xlu0 %v3593
      %v4735 = vpop.xlane.xlu0 %4734
      %4736 = vmax.xlane.f32.xlu0 %v3596
      %v4737 = vpop.xlane.xlu0 %4736
      %4738 = vmax.xlane.f32.xlu0 %v3599
      %v4739 = vpop.xlane.xlu0 %4738
      %4740 = vmax.xlane.f32.xlu0 %v3602
      %v4741 = vpop.xlane.xlu0 %4740
      %4742 = vmax.xlane.f32.xlu0 %v3605
      %v4743 = vpop.xlane.xlu0 %4742
      %4744 = vmax.xlane.f32.xlu0 %v3608
      %v4745 = vpop.xlane.xlu0 %4744
      %4746 = vmax.xlane.f32.xlu0 %v3611
      %v4747 = vpop.xlane.xlu0 %4746
      %4748 = vmax.xlane.f32.xlu0 %v3614
      %v4749 = vpop.xlane.xlu0 %4748
      %4750 = vmax.xlane.f32.xlu0 %v3617
      %v4751 = vpop.xlane.xlu0 %4750
      %4752 = vmax.xlane.f32.xlu0 %v3620
      %v4753 = vpop.xlane.xlu0 %4752
      %4754 = vmax.xlane.f32.xlu0 %v3623
      %v4755 = vpop.xlane.xlu0 %4754
      %4756 = vmax.xlane.f32.xlu0 %v3626
      %v4757 = vpop.xlane.xlu0 %4756
      %4758 = vmax.xlane.f32.xlu0 %v3629
      %v4759 = vpop.xlane.xlu0 %4758
      %4760 = vmax.xlane.f32.xlu0 %v3632
      %v4761 = vpop.xlane.xlu0 %4760
      %4762 = vmax.xlane.f32.xlu0 %v3635
      %v4763 = vpop.xlane.xlu0 %4762
      %4764 = vmax.xlane.f32.xlu0 %v3638
      %v4765 = vpop.xlane.xlu0 %4764
      %4766 = vmax.xlane.f32.xlu0 %v3641
      %v4767 = vpop.xlane.xlu0 %4766
      %4768 = vmax.xlane.f32.xlu0 %v3644
      %v4769 = vpop.xlane.xlu0 %4768
      %4770 = vmax.xlane.f32.xlu0 %v3647
      %v4771 = vpop.xlane.xlu0 %4770
      %4772 = vmax.xlane.f32.xlu0 %v3650
      %v4773 = vpop.xlane.xlu0 %4772
      %4774 = vmax.xlane.f32.xlu0 %v3653
      %v4775 = vpop.xlane.xlu0 %4774
      %4776 = vmax.xlane.f32.xlu0 %v3656
      %v4777 = vpop.xlane.xlu0 %4776
      %4778 = vmax.xlane.f32.xlu0 %v3659
      %v4779 = vpop.xlane.xlu0 %4778
      %4780 = vmax.xlane.f32.xlu0 %v3662
      %v4781 = vpop.xlane.xlu0 %4780
      %4782 = vmax.xlane.f32.xlu0 %v3665
      %v4783 = vpop.xlane.xlu0 %4782
      %4784 = vmax.xlane.f32.xlu0 %v3668
      %v4785 = vpop.xlane.xlu0 %4784
      %4786 = vmax.xlane.f32.xlu0 %v3671
      %v4787 = vpop.xlane.xlu0 %4786
      %4788 = vmax.xlane.f32.xlu0 %v3674
      %v4789 = vpop.xlane.xlu0 %4788
      %4790 = vmax.xlane.f32.xlu0 %v3677
      %v4791 = vpop.xlane.xlu0 %4790
      %4792 = vmax.xlane.f32.xlu0 %v3680
      %v4793 = vpop.xlane.xlu0 %4792
      %4794 = vmax.xlane.f32.xlu0 %v3683
      %v4795 = vpop.xlane.xlu0 %4794
      %4796 = vmax.xlane.f32.xlu0 %v3686
      %v4797 = vpop.xlane.xlu0 %4796
      %4798 = vmax.xlane.f32.xlu0 %v3689
      %v4799 = vpop.xlane.xlu0 %4798
      %4800 = vmax.xlane.f32.xlu0 %v3692
      %v4801 = vpop.xlane.xlu0 %4800
      %4802 = vmax.xlane.f32.xlu0 %v3695
      %v4803 = vpop.xlane.xlu0 %4802
      %4804 = vmax.xlane.f32.xlu0 %v3698
      %v4805 = vpop.xlane.xlu0 %4804
      %4806 = vmax.xlane.f32.xlu0 %v3701
      %v4807 = vpop.xlane.xlu0 %4806
      %4808 = vmax.xlane.f32.xlu0 %v3704
      %v4809 = vpop.xlane.xlu0 %4808
      %4810 = vmax.xlane.f32.xlu0 %v3707
      %v4811 = vpop.xlane.xlu0 %4810
      %4812 = vmax.xlane.f32.xlu0 %v3710
      %v4813 = vpop.xlane.xlu0 %4812
      %4814 = vmax.xlane.f32.xlu0 %v3713
      %v4815 = vpop.xlane.xlu0 %4814
      %4816 = vmax.xlane.f32.xlu0 %v3716
      %v4817 = vpop.xlane.xlu0 %4816
      %4818 = vmax.xlane.f32.xlu0 %v3719
      %v4819 = vpop.xlane.xlu0 %4818
      %4820 = vmax.xlane.f32.xlu0 %v3722
      %v4821 = vpop.xlane.xlu0 %4820
      %4822 = vmax.xlane.f32.xlu0 %v3725
      %v4823 = vpop.xlane.xlu0 %4822
      %4824 = vmax.xlane.f32.xlu0 %v3728
      %v4825 = vpop.xlane.xlu0 %4824
      %4826 = vmax.xlane.f32.xlu0 %v3731
      %v4827 = vpop.xlane.xlu0 %4826
      %4828 = vmax.xlane.f32.xlu0 %v3734
      %v4829 = vpop.xlane.xlu0 %4828
      %4830 = vmax.xlane.f32.xlu0 %v3737
      %v4831 = vpop.xlane.xlu0 %4830
      %4832 = vmax.xlane.f32.xlu0 %v3740
      %v4833 = vpop.xlane.xlu0 %4832
      %4834 = vmax.xlane.f32.xlu0 %v3743
      %v4835 = vpop.xlane.xlu0 %4834
      %4836 = vmax.xlane.f32.xlu0 %v3746
      %v4837 = vpop.xlane.xlu0 %4836
      %4838 = vmax.xlane.f32.xlu0 %v3749
      %v4839 = vpop.xlane.xlu0 %4838
      %4840 = vmax.xlane.f32.xlu0 %v3752
      %v4841 = vpop.xlane.xlu0 %4840
      %4842 = vmax.xlane.f32.xlu0 %v3755
      %v4843 = vpop.xlane.xlu0 %4842
      %4844 = vmax.xlane.f32.xlu0 %v3758
      %v4845 = vpop.xlane.xlu0 %4844
      %4846 = vmax.xlane.f32.xlu0 %v3761
      %v4847 = vpop.xlane.xlu0 %4846
      %4848 = vmax.xlane.f32.xlu0 %v3764
      %v4849 = vpop.xlane.xlu0 %4848
      %4850 = vmax.xlane.f32.xlu0 %v3767
      %v4851 = vpop.xlane.xlu0 %4850
      %4852 = vmax.xlane.f32.xlu0 %v3770
      %v4853 = vpop.xlane.xlu0 %4852
      %4854 = vmax.xlane.f32.xlu0 %v3773
      %v4855 = vpop.xlane.xlu0 %4854
      %4856 = vmax.xlane.f32.xlu0 %v3776
      %v4857 = vpop.xlane.xlu0 %4856
      %4858 = vmax.xlane.f32.xlu0 %v3779
      %v4859 = vpop.xlane.xlu0 %4858
      %4860 = vmax.xlane.f32.xlu0 %v3782
      %v4861 = vpop.xlane.xlu0 %4860
      %4862 = vmax.xlane.f32.xlu0 %v3785
      %v4863 = vpop.xlane.xlu0 %4862
      %4864 = vmax.xlane.f32.xlu0 %v3788
      %v4865 = vpop.xlane.xlu0 %4864
      %4866 = vmax.xlane.f32.xlu0 %v3791
      %v4867 = vpop.xlane.xlu0 %4866
      %4868 = vmax.xlane.f32.xlu0 %v3794
      %v4869 = vpop.xlane.xlu0 %4868
      %4870 = vmax.xlane.f32.xlu0 %v3797
      %v4871 = vpop.xlane.xlu0 %4870
      %4872 = vmax.xlane.f32.xlu0 %v3800
      %v4873 = vpop.xlane.xlu0 %4872
      %4874 = vmax.xlane.f32.xlu0 %v3803
      %v4875 = vpop.xlane.xlu0 %4874
      %4876 = vmax.xlane.f32.xlu0 %v3806
      %v4877 = vpop.xlane.xlu0 %4876
      %4878 = vmax.xlane.f32.xlu0 %v3809
      %v4879 = vpop.xlane.xlu0 %4878
      %4880 = vmax.xlane.f32.xlu0 %v3812
      %v4881 = vpop.xlane.xlu0 %4880
      %4882 = vmax.xlane.f32.xlu0 %v3815
      %v4883 = vpop.xlane.xlu0 %4882
      %4884 = vmax.xlane.f32.xlu0 %v3818
      %v4885 = vpop.xlane.xlu0 %4884
      %4886 = vmax.xlane.f32.xlu0 %v3821
      %v4887 = vpop.xlane.xlu0 %4886
      %4888 = vmax.xlane.f32.xlu0 %v3824
      %v4889 = vpop.xlane.xlu0 %4888
      %4890 = vmax.xlane.f32.xlu0 %v3827
      %v4891 = vpop.xlane.xlu0 %4890
      %4892 = vmax.xlane.f32.xlu0 %v3830
      %v4893 = vpop.xlane.xlu0 %4892
      %4894 = vmax.xlane.f32.xlu0 %v3833
      %v4895 = vpop.xlane.xlu0 %4894
      %4896 = vmax.xlane.f32.xlu0 %v3836
      %v4897 = vpop.xlane.xlu0 %4896
      %4898 = vmax.xlane.f32.xlu0 %v3839
      %v4899 = vpop.xlane.xlu0 %4898
      %4900 = vmax.xlane.f32.xlu0 %v3842
      %v4901 = vpop.xlane.xlu0 %4900
      %4902 = vmax.xlane.f32.xlu0 %v3845
      %v4903 = vpop.xlane.xlu0 %4902
      %4904 = vmax.xlane.f32.xlu0 %v3848
      %v4905 = vpop.xlane.xlu0 %4904
      %4906 = vmax.xlane.f32.xlu0 %v3851
      %v4907 = vpop.xlane.xlu0 %4906
      %4908 = vmax.xlane.f32.xlu0 %v3854
      %v4909 = vpop.xlane.xlu0 %4908
      %4910 = vmax.xlane.f32.xlu0 %v3857
      %v4911 = vpop.xlane.xlu0 %4910
      %4912 = vmax.xlane.f32.xlu0 %v3860
      %v4913 = vpop.xlane.xlu0 %4912
      %4914 = vmax.xlane.f32.xlu0 %v3863
      %v4915 = vpop.xlane.xlu0 %4914
      %4916 = vmax.xlane.f32.xlu0 %v3866
      %v4917 = vpop.xlane.xlu0 %4916
      %4918 = vmax.xlane.f32.xlu0 %v3869
      %v4919 = vpop.xlane.xlu0 %4918
      %4920 = vmax.xlane.f32.xlu0 %v3872
      %v4921 = vpop.xlane.xlu0 %4920
      %4922 = vmax.xlane.f32.xlu0 %v3875
      %v4923 = vpop.xlane.xlu0 %4922
      %4924 = vmax.xlane.f32.xlu0 %v3878
      %v4925 = vpop.xlane.xlu0 %4924
      %4926 = vmax.xlane.f32.xlu0 %v3881
      %v4927 = vpop.xlane.xlu0 %4926
      %4928 = vmax.xlane.f32.xlu0 %v3884
      %v4929 = vpop.xlane.xlu0 %4928
      %4930 = vmax.xlane.f32.xlu0 %v3887
      %v4931 = vpop.xlane.xlu0 %4930
      %4932 = vmax.xlane.f32.xlu0 %v3890
      %v4933 = vpop.xlane.xlu0 %4932
      %4934 = vmax.xlane.f32.xlu0 %v3893
      %v4935 = vpop.xlane.xlu0 %4934
      %4936 = vmax.xlane.f32.xlu0 %v3896
      %v4937 = vpop.xlane.xlu0 %4936
      %4938 = vmax.xlane.f32.xlu0 %v3899
      %v4939 = vpop.xlane.xlu0 %4938
      %4940 = vmax.xlane.f32.xlu0 %v3902
      %v4941 = vpop.xlane.xlu0 %4940
      %4942 = vmax.xlane.f32.xlu0 %v3905
      %v4943 = vpop.xlane.xlu0 %4942
      %4944 = vmax.xlane.f32.xlu0 %v3908
      %v4945 = vpop.xlane.xlu0 %4944
      %4946 = vmax.xlane.f32.xlu0 %v3911
      %v4947 = vpop.xlane.xlu0 %4946
      %4948 = vmax.xlane.f32.xlu0 %v3914
      %v4949 = vpop.xlane.xlu0 %4948
      %4950 = vmax.xlane.f32.xlu0 %v3917
      %v4951 = vpop.xlane.xlu0 %4950
      %4952 = vmax.xlane.f32.xlu0 %v3920
      %v4953 = vpop.xlane.xlu0 %4952
      %4954 = vmax.xlane.f32.xlu0 %v3923
      %v4955 = vpop.xlane.xlu0 %4954
      %4956 = vmax.xlane.f32.xlu0 %v3926
      %v4957 = vpop.xlane.xlu0 %4956
      %4958 = vmax.xlane.f32.xlu0 %v3929
      %v4959 = vpop.xlane.xlu0 %4958
      %v4960 = vld [vmem:[%s304] sm:$0xff]
      %v4961 = vld [vmem:[%s304 + $0x8] sm:$0xff]
      %v4962 = vld [vmem:[%s304 + $0x10] sm:$0xff]
      %v4963 = vld [vmem:[%s304 + $0x18] sm:$0xff]
      %v4964 = vld [vmem:[%s304 + $0x20] sm:$0xff]
      %v4965 = vld [vmem:[%s304 + $0x28] sm:$0xff]
      %v4966 = vld [vmem:[%s304 + $0x30] sm:$0xff]
      %v4967 = vld [vmem:[%s304 + $0x38] sm:$0xff]
      %v4968 = vld [vmem:[%s304 + $0x40] sm:$0xff]
      %v4969 = vld [vmem:[%s304 + $0x48] sm:$0xff]
      %v4970 = vld [vmem:[%s304 + $0x50] sm:$0xff]
      %v4971 = vld [vmem:[%s304 + $0x58] sm:$0xff]
      %v4972 = vld [vmem:[%s304 + $0x60] sm:$0xff]
      %v4973 = vld [vmem:[%s304 + $0x68] sm:$0xff]
      %v4974 = vld [vmem:[%s304 + $0x70] sm:$0xff]
      %v4975 = vld [vmem:[%s304 + $0x78] sm:$0xff]
      %v4976 = vld [vmem:[%s304 + $0x80] sm:$0xff]
      %v4977 = vld [vmem:[%s304 + $0x88] sm:$0xff]
      %v4978 = vld [vmem:[%s304 + $0x90] sm:$0xff]
      %v4979 = vld [vmem:[%s304 + $0x98] sm:$0xff]
      %v4980 = vld [vmem:[%s304 + $0xa0] sm:$0xff]
      %v4981 = vld [vmem:[%s304 + $0xa8] sm:$0xff]
      %v4982 = vld [vmem:[%s304 + $0xb0] sm:$0xff]
      %v4983 = vld [vmem:[%s304 + $0xb8] sm:$0xff]
      %v4984 = vld [vmem:[%s304 + $0xc0] sm:$0xff]
      %v4985 = vld [vmem:[%s304 + $0xc8] sm:$0xff]
      %v4986 = vld [vmem:[%s304 + $0xd0] sm:$0xff]
      %v4987 = vld [vmem:[%s304 + $0xd8] sm:$0xff]
      %v4988 = vld [vmem:[%s304 + $0xe0] sm:$0xff]
      %v4989 = vld [vmem:[%s304 + $0xe8] sm:$0xff]
      %v4990 = vld [vmem:[%s304 + $0xf0] sm:$0xff]
      %v4991 = vld [vmem:[%s304 + $0xf8] sm:$0xff]
      %v4992 = vld [vmem:[%s304 + $0x100] sm:$0xff]
      %v4993 = vld [vmem:[%s304 + $0x108] sm:$0xff]
      %v4994 = vld [vmem:[%s304 + $0x110] sm:$0xff]
      %v4995 = vld [vmem:[%s304 + $0x118] sm:$0xff]
      %v4996 = vld [vmem:[%s304 + $0x120] sm:$0xff]
      %v4997 = vld [vmem:[%s304 + $0x128] sm:$0xff]
      %v4998 = vld [vmem:[%s304 + $0x130] sm:$0xff]
      %v4999 = vld [vmem:[%s304 + $0x138] sm:$0xff]
      %v5000 = vld [vmem:[%s304 + $0x140] sm:$0xff]
      %v5001 = vld [vmem:[%s304 + $0x148] sm:$0xff]
      %v5002 = vld [vmem:[%s304 + $0x150] sm:$0xff]
      %v5003 = vld [vmem:[%s304 + $0x158] sm:$0xff]
      %v5004 = vld [vmem:[%s304 + $0x160] sm:$0xff]
      %v5005 = vld [vmem:[%s304 + $0x168] sm:$0xff]
      %v5006 = vld [vmem:[%s304 + $0x170] sm:$0xff]
      %v5007 = vld [vmem:[%s304 + $0x178] sm:$0xff]
      %v5008 = vld [vmem:[%s304 + $0x180] sm:$0xff]
      %v5009 = vld [vmem:[%s304 + $0x188] sm:$0xff]
      %v5010 = vld [vmem:[%s304 + $0x190] sm:$0xff]
      %v5011 = vld [vmem:[%s304 + $0x198] sm:$0xff]
      %v5012 = vld [vmem:[%s304 + $0x1a0] sm:$0xff]
      %v5013 = vld [vmem:[%s304 + $0x1a8] sm:$0xff]
      %v5014 = vld [vmem:[%s304 + $0x1b0] sm:$0xff]
      %v5015 = vld [vmem:[%s304 + $0x1b8] sm:$0xff]
      %v5016 = vld [vmem:[%s304 + $0x1c0] sm:$0xff]
      %v5017 = vld [vmem:[%s304 + $0x1c8] sm:$0xff]
      %v5018 = vld [vmem:[%s304 + $0x1d0] sm:$0xff]
      %v5019 = vld [vmem:[%s304 + $0x1d8] sm:$0xff]
      %v5020 = vld [vmem:[%s304 + $0x1e0] sm:$0xff]
      %v5021 = vld [vmem:[%s304 + $0x1e8] sm:$0xff]
      %v5022 = vld [vmem:[%s304 + $0x1f0] sm:$0xff]
      %v5023 = vld [vmem:[%s304 + $0x1f8] sm:$0xff]
      %v5024 = vld [vmem:[%s304 + $0x200] sm:$0xff]
      %v5025 = vld [vmem:[%s304 + $0x208] sm:$0xff]
      %v5026 = vld [vmem:[%s304 + $0x210] sm:$0xff]
      %v5027 = vld [vmem:[%s304 + $0x218] sm:$0xff]
      %v5028 = vld [vmem:[%s304 + $0x220] sm:$0xff]
      %v5029 = vld [vmem:[%s304 + $0x228] sm:$0xff]
      %v5030 = vld [vmem:[%s304 + $0x230] sm:$0xff]
      %v5031 = vld [vmem:[%s304 + $0x238] sm:$0xff]
      %v5032 = vld [vmem:[%s304 + $0x240] sm:$0xff]
      %v5033 = vld [vmem:[%s304 + $0x248] sm:$0xff]
      %v5034 = vld [vmem:[%s304 + $0x250] sm:$0xff]
      %v5035 = vld [vmem:[%s304 + $0x258] sm:$0xff]
      %v5036 = vld [vmem:[%s304 + $0x260] sm:$0xff]
      %v5037 = vld [vmem:[%s304 + $0x268] sm:$0xff]
      %v5038 = vld [vmem:[%s304 + $0x270] sm:$0xff]
      %v5039 = vld [vmem:[%s304 + $0x278] sm:$0xff]
      %v5040 = vld [vmem:[%s304 + $0x280] sm:$0xff]
      %v5041 = vld [vmem:[%s304 + $0x288] sm:$0xff]
      %v5042 = vld [vmem:[%s304 + $0x290] sm:$0xff]
      %v5043 = vld [vmem:[%s304 + $0x298] sm:$0xff]
      %v5044 = vld [vmem:[%s304 + $0x2a0] sm:$0xff]
      %v5045 = vld [vmem:[%s304 + $0x2a8] sm:$0xff]
      %v5046 = vld [vmem:[%s304 + $0x2b0] sm:$0xff]
      %v5047 = vld [vmem:[%s304 + $0x2b8] sm:$0xff]
      %v5048 = vld [vmem:[%s304 + $0x2c0] sm:$0xff]
      %v5049 = vld [vmem:[%s304 + $0x2c8] sm:$0xff]
      %v5050 = vld [vmem:[%s304 + $0x2d0] sm:$0xff]
      %v5051 = vld [vmem:[%s304 + $0x2d8] sm:$0xff]
      %v5052 = vld [vmem:[%s304 + $0x2e0] sm:$0xff]
      %v5053 = vld [vmem:[%s304 + $0x2e8] sm:$0xff]
      %v5054 = vld [vmem:[%s304 + $0x2f0] sm:$0xff]
      %v5055 = vld [vmem:[%s304 + $0x2f8] sm:$0xff]
      %v5056 = vld [vmem:[%s304 + $0x300] sm:$0xff]
      %v5057 = vld [vmem:[%s304 + $0x308] sm:$0xff]
      %v5058 = vld [vmem:[%s304 + $0x310] sm:$0xff]
      %v5059 = vld [vmem:[%s304 + $0x318] sm:$0xff]
      %v5060 = vld [vmem:[%s304 + $0x320] sm:$0xff]
      %v5061 = vld [vmem:[%s304 + $0x328] sm:$0xff]
      %v5062 = vld [vmem:[%s304 + $0x330] sm:$0xff]
      %v5063 = vld [vmem:[%s304 + $0x338] sm:$0xff]
      %v5064 = vld [vmem:[%s304 + $0x340] sm:$0xff]
      %v5065 = vld [vmem:[%s304 + $0x348] sm:$0xff]
      %v5066 = vld [vmem:[%s304 + $0x350] sm:$0xff]
      %v5067 = vld [vmem:[%s304 + $0x358] sm:$0xff]
      %v5068 = vld [vmem:[%s304 + $0x360] sm:$0xff]
      %v5069 = vld [vmem:[%s304 + $0x368] sm:$0xff]
      %v5070 = vld [vmem:[%s304 + $0x370] sm:$0xff]
      %v5071 = vld [vmem:[%s304 + $0x378] sm:$0xff]
      %v5072 = vld [vmem:[%s304 + $0x380] sm:$0xff]
      %v5073 = vld [vmem:[%s304 + $0x388] sm:$0xff]
      %v5074 = vld [vmem:[%s304 + $0x390] sm:$0xff]
      %v5075 = vld [vmem:[%s304 + $0x398] sm:$0xff]
      %v5076 = vld [vmem:[%s304 + $0x3a0] sm:$0xff]
      %v5077 = vld [vmem:[%s304 + $0x3a8] sm:$0xff]
      %v5078 = vld [vmem:[%s304 + $0x3b0] sm:$0xff]
      %v5079 = vld [vmem:[%s304 + $0x3b8] sm:$0xff]
      %v5080 = vld [vmem:[%s304 + $0x3c0] sm:$0xff]
      %v5081 = vld [vmem:[%s304 + $0x3c8] sm:$0xff]
      %v5082 = vld [vmem:[%s304 + $0x3d0] sm:$0xff]
      %v5083 = vld [vmem:[%s304 + $0x3d8] sm:$0xff]
      %v5084 = vld [vmem:[%s304 + $0x3e0] sm:$0xff]
      %v5085 = vld [vmem:[%s304 + $0x3e8] sm:$0xff]
      %v5086 = vld [vmem:[%s304 + $0x3f0] sm:$0xff]
      %v5087 = vld [vmem:[%s304 + $0x3f8] sm:$0xff]
      %v5088 = vmax.f32 %v4960, %v4705
      %v5089 = vmax.f32 %v4961, %v4707
      %v5090 = vmax.f32 %v4962, %v4709
      %v5091 = vmax.f32 %v4963, %v4711
      %v5092 = vmax.f32 %v4964, %v4713
      %v5093 = vmax.f32 %v4965, %v4715
      %v5094 = vmax.f32 %v4966, %v4717
      %v5095 = vmax.f32 %v4967, %v4719
      %v5096 = vmax.f32 %v4968, %v4721
      %v5097 = vmax.f32 %v4969, %v4723
      %v5098 = vmax.f32 %v4970, %v4725
      %v5099 = vmax.f32 %v4971, %v4727
      %v5100 = vmax.f32 %v4972, %v4729
      %v5101 = vmax.f32 %v4973, %v4731
      %v5102 = vmax.f32 %v4974, %v4733
      %v5103 = vmax.f32 %v4975, %v4735
      %v5104 = vmax.f32 %v4976, %v4737
      %v5105 = vmax.f32 %v4977, %v4739
      %v5106 = vmax.f32 %v4978, %v4741
      %v5107 = vmax.f32 %v4979, %v4743
      %v5108 = vmax.f32 %v4980, %v4745
      %v5109 = vmax.f32 %v4981, %v4747
      %v5110 = vmax.f32 %v4982, %v4749
      %v5111 = vmax.f32 %v4983, %v4751
      %v5112 = vmax.f32 %v4984, %v4753
      %v5113 = vmax.f32 %v4985, %v4755
      %v5114 = vmax.f32 %v4986, %v4757
      %v5115 = vmax.f32 %v4987, %v4759
      %v5116 = vmax.f32 %v4988, %v4761
      %v5117 = vmax.f32 %v4989, %v4763
      %v5118 = vmax.f32 %v4990, %v4765
      %v5119 = vmax.f32 %v4991, %v4767
      %v5120 = vmax.f32 %v4992, %v4769
      %v5121 = vmax.f32 %v4993, %v4771
      %v5122 = vmax.f32 %v4994, %v4773
      %v5123 = vmax.f32 %v4995, %v4775
      %v5124 = vmax.f32 %v4996, %v4777
      %v5125 = vmax.f32 %v4997, %v4779
      %v5126 = vmax.f32 %v4998, %v4781
      %v5127 = vmax.f32 %v4999, %v4783
      %v5128 = vmax.f32 %v5000, %v4785
      %v5129 = vmax.f32 %v5001, %v4787
      %v5130 = vmax.f32 %v5002, %v4789
      %v5131 = vmax.f32 %v5003, %v4791
      %v5132 = vmax.f32 %v5004, %v4793
      %v5133 = vmax.f32 %v5005, %v4795
      %v5134 = vmax.f32 %v5006, %v4797
      %v5135 = vmax.f32 %v5007, %v4799
      %v5136 = vmax.f32 %v5008, %v4801
      %v5137 = vmax.f32 %v5009, %v4803
      %v5138 = vmax.f32 %v5010, %v4805
      %v5139 = vmax.f32 %v5011, %v4807
      %v5140 = vmax.f32 %v5012, %v4809
      %v5141 = vmax.f32 %v5013, %v4811
      %v5142 = vmax.f32 %v5014, %v4813
      %v5143 = vmax.f32 %v5015, %v4815
      %v5144 = vmax.f32 %v5016, %v4817
      %v5145 = vmax.f32 %v5017, %v4819
      %v5146 = vmax.f32 %v5018, %v4821
      %v5147 = vmax.f32 %v5019, %v4823
      %v5148 = vmax.f32 %v5020, %v4825
      %v5149 = vmax.f32 %v5021, %v4827
      %v5150 = vmax.f32 %v5022, %v4829
      %v5151 = vmax.f32 %v5023, %v4831
      %v5152 = vmax.f32 %v5024, %v4833
      %v5153 = vmax.f32 %v5025, %v4835
      %v5154 = vmax.f32 %v5026, %v4837
      %v5155 = vmax.f32 %v5027, %v4839
      %v5156 = vmax.f32 %v5028, %v4841
      %v5157 = vmax.f32 %v5029, %v4843
      %v5158 = vmax.f32 %v5030, %v4845
      %v5159 = vmax.f32 %v5031, %v4847
      %v5160 = vmax.f32 %v5032, %v4849
      %v5161 = vmax.f32 %v5033, %v4851
      %v5162 = vmax.f32 %v5034, %v4853
      %v5163 = vmax.f32 %v5035, %v4855
      %v5164 = vmax.f32 %v5036, %v4857
      %v5165 = vmax.f32 %v5037, %v4859
      %v5166 = vmax.f32 %v5038, %v4861
      %v5167 = vmax.f32 %v5039, %v4863
      %v5168 = vmax.f32 %v5040, %v4865
      %v5169 = vmax.f32 %v5041, %v4867
      %v5170 = vmax.f32 %v5042, %v4869
      %v5171 = vmax.f32 %v5043, %v4871
      %v5172 = vmax.f32 %v5044, %v4873
      %v5173 = vmax.f32 %v5045, %v4875
      %v5174 = vmax.f32 %v5046, %v4877
      %v5175 = vmax.f32 %v5047, %v4879
      %v5176 = vmax.f32 %v5048, %v4881
      %v5177 = vmax.f32 %v5049, %v4883
      %v5178 = vmax.f32 %v5050, %v4885
      %v5179 = vmax.f32 %v5051, %v4887
      %v5180 = vmax.f32 %v5052, %v4889
      %v5181 = vmax.f32 %v5053, %v4891
      %v5182 = vmax.f32 %v5054, %v4893
      %v5183 = vmax.f32 %v5055, %v4895
      %v5184 = vmax.f32 %v5056, %v4897
      %v5185 = vmax.f32 %v5057, %v4899
      %v5186 = vmax.f32 %v5058, %v4901
      %v5187 = vmax.f32 %v5059, %v4903
      %v5188 = vmax.f32 %v5060, %v4905
      %v5189 = vmax.f32 %v5061, %v4907
      %v5190 = vmax.f32 %v5062, %v4909
      %v5191 = vmax.f32 %v5063, %v4911
      %v5192 = vmax.f32 %v5064, %v4913
      %v5193 = vmax.f32 %v5065, %v4915
      %v5194 = vmax.f32 %v5066, %v4917
      %v5195 = vmax.f32 %v5067, %v4919
      %v5196 = vmax.f32 %v5068, %v4921
      %v5197 = vmax.f32 %v5069, %v4923
      %v5198 = vmax.f32 %v5070, %v4925
      %v5199 = vmax.f32 %v5071, %v4927
      %v5200 = vmax.f32 %v5072, %v4929
      %v5201 = vmax.f32 %v5073, %v4931
      %v5202 = vmax.f32 %v5074, %v4933
      %v5203 = vmax.f32 %v5075, %v4935
      %v5204 = vmax.f32 %v5076, %v4937
      %v5205 = vmax.f32 %v5077, %v4939
      %v5206 = vmax.f32 %v5078, %v4941
      %v5207 = vmax.f32 %v5079, %v4943
      %v5208 = vmax.f32 %v5080, %v4945
      %v5209 = vmax.f32 %v5081, %v4947
      %v5210 = vmax.f32 %v5082, %v4949
      %v5211 = vmax.f32 %v5083, %v4951
      %v5212 = vmax.f32 %v5084, %v4953
      %v5213 = vmax.f32 %v5085, %v4955
      %v5214 = vmax.f32 %v5086, %v4957
      %v5215 = vmax.f32 %v5087, %v4959
      %vm5216 = vcmask 15368
      %5217 = vst.msk [vmem:[%s304] sm:$0xff] %vm5216, %v5088
      %5218 = vst.msk [vmem:[%s304 + $0x8] sm:$0xff] %vm5216, %v5089
      %5219 = vst.msk [vmem:[%s304 + $0x10] sm:$0xff] %vm5216, %v5090
      %5220 = vst.msk [vmem:[%s304 + $0x18] sm:$0xff] %vm5216, %v5091
      %5221 = vst.msk [vmem:[%s304 + $0x20] sm:$0xff] %vm5216, %v5092
      %5222 = vst.msk [vmem:[%s304 + $0x28] sm:$0xff] %vm5216, %v5093
      %5223 = vst.msk [vmem:[%s304 + $0x30] sm:$0xff] %vm5216, %v5094
      %5224 = vst.msk [vmem:[%s304 + $0x38] sm:$0xff] %vm5216, %v5095
      %5225 = vst.msk [vmem:[%s304 + $0x40] sm:$0xff] %vm5216, %v5096
      %5226 = vst.msk [vmem:[%s304 + $0x48] sm:$0xff] %vm5216, %v5097
      %5227 = vst.msk [vmem:[%s304 + $0x50] sm:$0xff] %vm5216, %v5098
      %5228 = vst.msk [vmem:[%s304 + $0x58] sm:$0xff] %vm5216, %v5099
      %5229 = vst.msk [vmem:[%s304 + $0x60] sm:$0xff] %vm5216, %v5100
      %5230 = vst.msk [vmem:[%s304 + $0x68] sm:$0xff] %vm5216, %v5101
      %5231 = vst.msk [vmem:[%s304 + $0x70] sm:$0xff] %vm5216, %v5102
      %5232 = vst.msk [vmem:[%s304 + $0x78] sm:$0xff] %vm5216, %v5103
      %5233 = vst.msk [vmem:[%s304 + $0x80] sm:$0xff] %vm5216, %v5104
      %5234 = vst.msk [vmem:[%s304 + $0x88] sm:$0xff] %vm5216, %v5105
      %5235 = vst.msk [vmem:[%s304 + $0x90] sm:$0xff] %vm5216, %v5106
      %5236 = vst.msk [vmem:[%s304 + $0x98] sm:$0xff] %vm5216, %v5107
      %5237 = vst.msk [vmem:[%s304 + $0xa0] sm:$0xff] %vm5216, %v5108
      %5238 = vst.msk [vmem:[%s304 + $0xa8] sm:$0xff] %vm5216, %v5109
      %5239 = vst.msk [vmem:[%s304 + $0xb0] sm:$0xff] %vm5216, %v5110
      %5240 = vst.msk [vmem:[%s304 + $0xb8] sm:$0xff] %vm5216, %v5111
      %5241 = vst.msk [vmem:[%s304 + $0xc0] sm:$0xff] %vm5216, %v5112
      %5242 = vst.msk [vmem:[%s304 + $0xc8] sm:$0xff] %vm5216, %v5113
      %5243 = vst.msk [vmem:[%s304 + $0xd0] sm:$0xff] %vm5216, %v5114
      %5244 = vst.msk [vmem:[%s304 + $0xd8] sm:$0xff] %vm5216, %v5115
      %5245 = vst.msk [vmem:[%s304 + $0xe0] sm:$0xff] %vm5216, %v5116
      %5246 = vst.msk [vmem:[%s304 + $0xe8] sm:$0xff] %vm5216, %v5117
      %5247 = vst.msk [vmem:[%s304 + $0xf0] sm:$0xff] %vm5216, %v5118
      %5248 = vst.msk [vmem:[%s304 + $0xf8] sm:$0xff] %vm5216, %v5119
      %5249 = vst.msk [vmem:[%s304 + $0x100] sm:$0xff] %vm5216, %v5120
      %5250 = vst.msk [vmem:[%s304 + $0x108] sm:$0xff] %vm5216, %v5121
      %5251 = vst.msk [vmem:[%s304 + $0x110] sm:$0xff] %vm5216, %v5122
      %5252 = vst.msk [vmem:[%s304 + $0x118] sm:$0xff] %vm5216, %v5123
      %5253 = vst.msk [vmem:[%s304 + $0x120] sm:$0xff] %vm5216, %v5124
      %5254 = vst.msk [vmem:[%s304 + $0x128] sm:$0xff] %vm5216, %v5125
      %5255 = vst.msk [vmem:[%s304 + $0x130] sm:$0xff] %vm5216, %v5126
      %5256 = vst.msk [vmem:[%s304 + $0x138] sm:$0xff] %vm5216, %v5127
      %5257 = vst.msk [vmem:[%s304 + $0x140] sm:$0xff] %vm5216, %v5128
      %5258 = vst.msk [vmem:[%s304 + $0x148] sm:$0xff] %vm5216, %v5129
      %5259 = vst.msk [vmem:[%s304 + $0x150] sm:$0xff] %vm5216, %v5130
      %5260 = vst.msk [vmem:[%s304 + $0x158] sm:$0xff] %vm5216, %v5131
      %5261 = vst.msk [vmem:[%s304 + $0x160] sm:$0xff] %vm5216, %v5132
      %5262 = vst.msk [vmem:[%s304 + $0x168] sm:$0xff] %vm5216, %v5133
      %5263 = vst.msk [vmem:[%s304 + $0x170] sm:$0xff] %vm5216, %v5134
      %5264 = vst.msk [vmem:[%s304 + $0x178] sm:$0xff] %vm5216, %v5135
      %5265 = vst.msk [vmem:[%s304 + $0x180] sm:$0xff] %vm5216, %v5136
      %5266 = vst.msk [vmem:[%s304 + $0x188] sm:$0xff] %vm5216, %v5137
      %5267 = vst.msk [vmem:[%s304 + $0x190] sm:$0xff] %vm5216, %v5138
      %5268 = vst.msk [vmem:[%s304 + $0x198] sm:$0xff] %vm5216, %v5139
      %5269 = vst.msk [vmem:[%s304 + $0x1a0] sm:$0xff] %vm5216, %v5140
      %5270 = vst.msk [vmem:[%s304 + $0x1a8] sm:$0xff] %vm5216, %v5141
      %5271 = vst.msk [vmem:[%s304 + $0x1b0] sm:$0xff] %vm5216, %v5142
      %5272 = vst.msk [vmem:[%s304 + $0x1b8] sm:$0xff] %vm5216, %v5143
      %5273 = vst.msk [vmem:[%s304 + $0x1c0] sm:$0xff] %vm5216, %v5144
      %5274 = vst.msk [vmem:[%s304 + $0x1c8] sm:$0xff] %vm5216, %v5145
      %5275 = vst.msk [vmem:[%s304 + $0x1d0] sm:$0xff] %vm5216, %v5146
      %5276 = vst.msk [vmem:[%s304 + $0x1d8] sm:$0xff] %vm5216, %v5147
      %5277 = vst.msk [vmem:[%s304 + $0x1e0] sm:$0xff] %vm5216, %v5148
      %5278 = vst.msk [vmem:[%s304 + $0x1e8] sm:$0xff] %vm5216, %v5149
      %5279 = vst.msk [vmem:[%s304 + $0x1f0] sm:$0xff] %vm5216, %v5150
      %5280 = vst.msk [vmem:[%s304 + $0x1f8] sm:$0xff] %vm5216, %v5151
      %5281 = vst.msk [vmem:[%s304 + $0x200] sm:$0xff] %vm5216, %v5152
      %5282 = vst.msk [vmem:[%s304 + $0x208] sm:$0xff] %vm5216, %v5153
      %5283 = vst.msk [vmem:[%s304 + $0x210] sm:$0xff] %vm5216, %v5154
      %5284 = vst.msk [vmem:[%s304 + $0x218] sm:$0xff] %vm5216, %v5155
      %5285 = vst.msk [vmem:[%s304 + $0x220] sm:$0xff] %vm5216, %v5156
      %5286 = vst.msk [vmem:[%s304 + $0x228] sm:$0xff] %vm5216, %v5157
      %5287 = vst.msk [vmem:[%s304 + $0x230] sm:$0xff] %vm5216, %v5158
      %5288 = vst.msk [vmem:[%s304 + $0x238] sm:$0xff] %vm5216, %v5159
      %5289 = vst.msk [vmem:[%s304 + $0x240] sm:$0xff] %vm5216, %v5160
      %5290 = vst.msk [vmem:[%s304 + $0x248] sm:$0xff] %vm5216, %v5161
      %5291 = vst.msk [vmem:[%s304 + $0x250] sm:$0xff] %vm5216, %v5162
      %5292 = vst.msk [vmem:[%s304 + $0x258] sm:$0xff] %vm5216, %v5163
      %5293 = vst.msk [vmem:[%s304 + $0x260] sm:$0xff] %vm5216, %v5164
      %5294 = vst.msk [vmem:[%s304 + $0x268] sm:$0xff] %vm5216, %v5165
      %5295 = vst.msk [vmem:[%s304 + $0x270] sm:$0xff] %vm5216, %v5166
      %5296 = vst.msk [vmem:[%s304 + $0x278] sm:$0xff] %vm5216, %v5167
      %5297 = vst.msk [vmem:[%s304 + $0x280] sm:$0xff] %vm5216, %v5168
      %5298 = vst.msk [vmem:[%s304 + $0x288] sm:$0xff] %vm5216, %v5169
      %5299 = vst.msk [vmem:[%s304 + $0x290] sm:$0xff] %vm5216, %v5170
      %5300 = vst.msk [vmem:[%s304 + $0x298] sm:$0xff] %vm5216, %v5171
      %5301 = vst.msk [vmem:[%s304 + $0x2a0] sm:$0xff] %vm5216, %v5172
      %5302 = vst.msk [vmem:[%s304 + $0x2a8] sm:$0xff] %vm5216, %v5173
      %5303 = vst.msk [vmem:[%s304 + $0x2b0] sm:$0xff] %vm5216, %v5174
      %5304 = vst.msk [vmem:[%s304 + $0x2b8] sm:$0xff] %vm5216, %v5175
      %5305 = vst.msk [vmem:[%s304 + $0x2c0] sm:$0xff] %vm5216, %v5176
      %5306 = vst.msk [vmem:[%s304 + $0x2c8] sm:$0xff] %vm5216, %v5177
      %5307 = vst.msk [vmem:[%s304 + $0x2d0] sm:$0xff] %vm5216, %v5178
      %5308 = vst.msk [vmem:[%s304 + $0x2d8] sm:$0xff] %vm5216, %v5179
      %5309 = vst.msk [vmem:[%s304 + $0x2e0] sm:$0xff] %vm5216, %v5180
      %5310 = vst.msk [vmem:[%s304 + $0x2e8] sm:$0xff] %vm5216, %v5181
      %5311 = vst.msk [vmem:[%s304 + $0x2f0] sm:$0xff] %vm5216, %v5182
      %5312 = vst.msk [vmem:[%s304 + $0x2f8] sm:$0xff] %vm5216, %v5183
      %5313 = vst.msk [vmem:[%s304 + $0x300] sm:$0xff] %vm5216, %v5184
      %5314 = vst.msk [vmem:[%s304 + $0x308] sm:$0xff] %vm5216, %v5185
      %5315 = vst.msk [vmem:[%s304 + $0x310] sm:$0xff] %vm5216, %v5186
      %5316 = vst.msk [vmem:[%s304 + $0x318] sm:$0xff] %vm5216, %v5187
      %5317 = vst.msk [vmem:[%s304 + $0x320] sm:$0xff] %vm5216, %v5188
      %5318 = vst.msk [vmem:[%s304 + $0x328] sm:$0xff] %vm5216, %v5189
      %5319 = vst.msk [vmem:[%s304 + $0x330] sm:$0xff] %vm5216, %v5190
      %5320 = vst.msk [vmem:[%s304 + $0x338] sm:$0xff] %vm5216, %v5191
      %5321 = vst.msk [vmem:[%s304 + $0x340] sm:$0xff] %vm5216, %v5192
      %5322 = vst.msk [vmem:[%s304 + $0x348] sm:$0xff] %vm5216, %v5193
      %5323 = vst.msk [vmem:[%s304 + $0x350] sm:$0xff] %vm5216, %v5194
      %5324 = vst.msk [vmem:[%s304 + $0x358] sm:$0xff] %vm5216, %v5195
      %5325 = vst.msk [vmem:[%s304 + $0x360] sm:$0xff] %vm5216, %v5196
      %5326 = vst.msk [vmem:[%s304 + $0x368] sm:$0xff] %vm5216, %v5197
      %5327 = vst.msk [vmem:[%s304 + $0x370] sm:$0xff] %vm5216, %v5198
      %5328 = vst.msk [vmem:[%s304 + $0x378] sm:$0xff] %vm5216, %v5199
      %5329 = vst.msk [vmem:[%s304 + $0x380] sm:$0xff] %vm5216, %v5200
      %5330 = vst.msk [vmem:[%s304 + $0x388] sm:$0xff] %vm5216, %v5201
      %5331 = vst.msk [vmem:[%s304 + $0x390] sm:$0xff] %vm5216, %v5202
      %5332 = vst.msk [vmem:[%s304 + $0x398] sm:$0xff] %vm5216, %v5203
      %5333 = vst.msk [vmem:[%s304 + $0x3a0] sm:$0xff] %vm5216, %v5204
      %5334 = vst.msk [vmem:[%s304 + $0x3a8] sm:$0xff] %vm5216, %v5205
      %5335 = vst.msk [vmem:[%s304 + $0x3b0] sm:$0xff] %vm5216, %v5206
      %5336 = vst.msk [vmem:[%s304 + $0x3b8] sm:$0xff] %vm5216, %v5207
      %5337 = vst.msk [vmem:[%s304 + $0x3c0] sm:$0xff] %vm5216, %v5208
      %5338 = vst.msk [vmem:[%s304 + $0x3c8] sm:$0xff] %vm5216, %v5209
      %5339 = vst.msk [vmem:[%s304 + $0x3d0] sm:$0xff] %vm5216, %v5210
      %5340 = vst.msk [vmem:[%s304 + $0x3d8] sm:$0xff] %vm5216, %v5211
      %5341 = vst.msk [vmem:[%s304 + $0x3e0] sm:$0xff] %vm5216, %v5212
      %5342 = vst.msk [vmem:[%s304 + $0x3e8] sm:$0xff] %vm5216, %v5213
      %5343 = vst.msk [vmem:[%s304 + $0x3f0] sm:$0xff] %vm5216, %v5214
      %5344 = vst.msk [vmem:[%s304 + $0x3f8] sm:$0xff] %vm5216, %v5215
      %5345 = vmax.xlane.f32.xlu0 %v3549
      %v5346 = vpop.xlane.xlu0 %5345
      %5347 = vmax.xlane.f32.xlu0 %v3552
      %v5348 = vpop.xlane.xlu0 %5347
      %5349 = vmax.xlane.f32.xlu0 %v3555
      %v5350 = vpop.xlane.xlu0 %5349
      %5351 = vmax.xlane.f32.xlu0 %v3558
      %v5352 = vpop.xlane.xlu0 %5351
      %5353 = vmax.xlane.f32.xlu0 %v3561
      %v5354 = vpop.xlane.xlu0 %5353
      %5355 = vmax.xlane.f32.xlu0 %v3564
      %v5356 = vpop.xlane.xlu0 %5355
      %5357 = vmax.xlane.f32.xlu0 %v3567
      %v5358 = vpop.xlane.xlu0 %5357
      %5359 = vmax.xlane.f32.xlu0 %v3570
      %v5360 = vpop.xlane.xlu0 %5359
      %5361 = vmax.xlane.f32.xlu0 %v3573
      %v5362 = vpop.xlane.xlu0 %5361
      %5363 = vmax.xlane.f32.xlu0 %v3576
      %v5364 = vpop.xlane.xlu0 %5363
      %5365 = vmax.xlane.f32.xlu0 %v3579
      %v5366 = vpop.xlane.xlu0 %5365
      %5367 = vmax.xlane.f32.xlu0 %v3582
      %v5368 = vpop.xlane.xlu0 %5367
      %5369 = vmax.xlane.f32.xlu0 %v3585
      %v5370 = vpop.xlane.xlu0 %5369
      %5371 = vmax.xlane.f32.xlu0 %v3588
      %v5372 = vpop.xlane.xlu0 %5371
      %5373 = vmax.xlane.f32.xlu0 %v3591
      %v5374 = vpop.xlane.xlu0 %5373
      %5375 = vmax.xlane.f32.xlu0 %v3594
      %v5376 = vpop.xlane.xlu0 %5375
      %5377 = vmax.xlane.f32.xlu0 %v3597
      %v5378 = vpop.xlane.xlu0 %5377
      %5379 = vmax.xlane.f32.xlu0 %v3600
      %v5380 = vpop.xlane.xlu0 %5379
      %5381 = vmax.xlane.f32.xlu0 %v3603
      %v5382 = vpop.xlane.xlu0 %5381
      %5383 = vmax.xlane.f32.xlu0 %v3606
      %v5384 = vpop.xlane.xlu0 %5383
      %5385 = vmax.xlane.f32.xlu0 %v3609
      %v5386 = vpop.xlane.xlu0 %5385
      %5387 = vmax.xlane.f32.xlu0 %v3612
      %v5388 = vpop.xlane.xlu0 %5387
      %5389 = vmax.xlane.f32.xlu0 %v3615
      %v5390 = vpop.xlane.xlu0 %5389
      %5391 = vmax.xlane.f32.xlu0 %v3618
      %v5392 = vpop.xlane.xlu0 %5391
      %5393 = vmax.xlane.f32.xlu0 %v3621
      %v5394 = vpop.xlane.xlu0 %5393
      %5395 = vmax.xlane.f32.xlu0 %v3624
      %v5396 = vpop.xlane.xlu0 %5395
      %5397 = vmax.xlane.f32.xlu0 %v3627
      %v5398 = vpop.xlane.xlu0 %5397
      %5399 = vmax.xlane.f32.xlu0 %v3630
      %v5400 = vpop.xlane.xlu0 %5399
      %5401 = vmax.xlane.f32.xlu0 %v3633
      %v5402 = vpop.xlane.xlu0 %5401
      %5403 = vmax.xlane.f32.xlu0 %v3636
      %v5404 = vpop.xlane.xlu0 %5403
      %5405 = vmax.xlane.f32.xlu0 %v3639
      %v5406 = vpop.xlane.xlu0 %5405
      %5407 = vmax.xlane.f32.xlu0 %v3642
      %v5408 = vpop.xlane.xlu0 %5407
      %5409 = vmax.xlane.f32.xlu0 %v3645
      %v5410 = vpop.xlane.xlu0 %5409
      %5411 = vmax.xlane.f32.xlu0 %v3648
      %v5412 = vpop.xlane.xlu0 %5411
      %5413 = vmax.xlane.f32.xlu0 %v3651
      %v5414 = vpop.xlane.xlu0 %5413
      %5415 = vmax.xlane.f32.xlu0 %v3654
      %v5416 = vpop.xlane.xlu0 %5415
      %5417 = vmax.xlane.f32.xlu0 %v3657
      %v5418 = vpop.xlane.xlu0 %5417
      %5419 = vmax.xlane.f32.xlu0 %v3660
      %v5420 = vpop.xlane.xlu0 %5419
      %5421 = vmax.xlane.f32.xlu0 %v3663
      %v5422 = vpop.xlane.xlu0 %5421
      %5423 = vmax.xlane.f32.xlu0 %v3666
      %v5424 = vpop.xlane.xlu0 %5423
      %5425 = vmax.xlane.f32.xlu0 %v3669
      %v5426 = vpop.xlane.xlu0 %5425
      %5427 = vmax.xlane.f32.xlu0 %v3672
      %v5428 = vpop.xlane.xlu0 %5427
      %5429 = vmax.xlane.f32.xlu0 %v3675
      %v5430 = vpop.xlane.xlu0 %5429
      %5431 = vmax.xlane.f32.xlu0 %v3678
      %v5432 = vpop.xlane.xlu0 %5431
      %5433 = vmax.xlane.f32.xlu0 %v3681
      %v5434 = vpop.xlane.xlu0 %5433
      %5435 = vmax.xlane.f32.xlu0 %v3684
      %v5436 = vpop.xlane.xlu0 %5435
      %5437 = vmax.xlane.f32.xlu0 %v3687
      %v5438 = vpop.xlane.xlu0 %5437
      %5439 = vmax.xlane.f32.xlu0 %v3690
      %v5440 = vpop.xlane.xlu0 %5439
      %5441 = vmax.xlane.f32.xlu0 %v3693
      %v5442 = vpop.xlane.xlu0 %5441
      %5443 = vmax.xlane.f32.xlu0 %v3696
      %v5444 = vpop.xlane.xlu0 %5443
      %5445 = vmax.xlane.f32.xlu0 %v3699
      %v5446 = vpop.xlane.xlu0 %5445
      %5447 = vmax.xlane.f32.xlu0 %v3702
      %v5448 = vpop.xlane.xlu0 %5447
      %5449 = vmax.xlane.f32.xlu0 %v3705
      %v5450 = vpop.xlane.xlu0 %5449
      %5451 = vmax.xlane.f32.xlu0 %v3708
      %v5452 = vpop.xlane.xlu0 %5451
      %5453 = vmax.xlane.f32.xlu0 %v3711
      %v5454 = vpop.xlane.xlu0 %5453
      %5455 = vmax.xlane.f32.xlu0 %v3714
      %v5456 = vpop.xlane.xlu0 %5455
      %5457 = vmax.xlane.f32.xlu0 %v3717
      %v5458 = vpop.xlane.xlu0 %5457
      %5459 = vmax.xlane.f32.xlu0 %v3720
      %v5460 = vpop.xlane.xlu0 %5459
      %5461 = vmax.xlane.f32.xlu0 %v3723
      %v5462 = vpop.xlane.xlu0 %5461
      %5463 = vmax.xlane.f32.xlu0 %v3726
      %v5464 = vpop.xlane.xlu0 %5463
      %5465 = vmax.xlane.f32.xlu0 %v3729
      %v5466 = vpop.xlane.xlu0 %5465
      %5467 = vmax.xlane.f32.xlu0 %v3732
      %v5468 = vpop.xlane.xlu0 %5467
      %5469 = vmax.xlane.f32.xlu0 %v3735
      %v5470 = vpop.xlane.xlu0 %5469
      %5471 = vmax.xlane.f32.xlu0 %v3738
      %v5472 = vpop.xlane.xlu0 %5471
      %5473 = vmax.xlane.f32.xlu0 %v3741
      %v5474 = vpop.xlane.xlu0 %5473
      %5475 = vmax.xlane.f32.xlu0 %v3744
      %v5476 = vpop.xlane.xlu0 %5475
      %5477 = vmax.xlane.f32.xlu0 %v3747
      %v5478 = vpop.xlane.xlu0 %5477
      %5479 = vmax.xlane.f32.xlu0 %v3750
      %v5480 = vpop.xlane.xlu0 %5479
      %5481 = vmax.xlane.f32.xlu0 %v3753
      %v5482 = vpop.xlane.xlu0 %5481
      %5483 = vmax.xlane.f32.xlu0 %v3756
      %v5484 = vpop.xlane.xlu0 %5483
      %5485 = vmax.xlane.f32.xlu0 %v3759
      %v5486 = vpop.xlane.xlu0 %5485
      %5487 = vmax.xlane.f32.xlu0 %v3762
      %v5488 = vpop.xlane.xlu0 %5487
      %5489 = vmax.xlane.f32.xlu0 %v3765
      %v5490 = vpop.xlane.xlu0 %5489
      %5491 = vmax.xlane.f32.xlu0 %v3768
      %v5492 = vpop.xlane.xlu0 %5491
      %5493 = vmax.xlane.f32.xlu0 %v3771
      %v5494 = vpop.xlane.xlu0 %5493
      %5495 = vmax.xlane.f32.xlu0 %v3774
      %v5496 = vpop.xlane.xlu0 %5495
      %5497 = vmax.xlane.f32.xlu0 %v3777
      %v5498 = vpop.xlane.xlu0 %5497
      %5499 = vmax.xlane.f32.xlu0 %v3780
      %v5500 = vpop.xlane.xlu0 %5499
      %5501 = vmax.xlane.f32.xlu0 %v3783
      %v5502 = vpop.xlane.xlu0 %5501
      %5503 = vmax.xlane.f32.xlu0 %v3786
      %v5504 = vpop.xlane.xlu0 %5503
      %5505 = vmax.xlane.f32.xlu0 %v3789
      %v5506 = vpop.xlane.xlu0 %5505
      %5507 = vmax.xlane.f32.xlu0 %v3792
      %v5508 = vpop.xlane.xlu0 %5507
      %5509 = vmax.xlane.f32.xlu0 %v3795
      %v5510 = vpop.xlane.xlu0 %5509
      %5511 = vmax.xlane.f32.xlu0 %v3798
      %v5512 = vpop.xlane.xlu0 %5511
      %5513 = vmax.xlane.f32.xlu0 %v3801
      %v5514 = vpop.xlane.xlu0 %5513
      %5515 = vmax.xlane.f32.xlu0 %v3804
      %v5516 = vpop.xlane.xlu0 %5515
      %5517 = vmax.xlane.f32.xlu0 %v3807
      %v5518 = vpop.xlane.xlu0 %5517
      %5519 = vmax.xlane.f32.xlu0 %v3810
      %v5520 = vpop.xlane.xlu0 %5519
      %5521 = vmax.xlane.f32.xlu0 %v3813
      %v5522 = vpop.xlane.xlu0 %5521
      %5523 = vmax.xlane.f32.xlu0 %v3816
      %v5524 = vpop.xlane.xlu0 %5523
      %5525 = vmax.xlane.f32.xlu0 %v3819
      %v5526 = vpop.xlane.xlu0 %5525
      %5527 = vmax.xlane.f32.xlu0 %v3822
      %v5528 = vpop.xlane.xlu0 %5527
      %5529 = vmax.xlane.f32.xlu0 %v3825
      %v5530 = vpop.xlane.xlu0 %5529
      %5531 = vmax.xlane.f32.xlu0 %v3828
      %v5532 = vpop.xlane.xlu0 %5531
      %5533 = vmax.xlane.f32.xlu0 %v3831
      %v5534 = vpop.xlane.xlu0 %5533
      %5535 = vmax.xlane.f32.xlu0 %v3834
      %v5536 = vpop.xlane.xlu0 %5535
      %5537 = vmax.xlane.f32.xlu0 %v3837
      %v5538 = vpop.xlane.xlu0 %5537
      %5539 = vmax.xlane.f32.xlu0 %v3840
      %v5540 = vpop.xlane.xlu0 %5539
      %5541 = vmax.xlane.f32.xlu0 %v3843
      %v5542 = vpop.xlane.xlu0 %5541
      %5543 = vmax.xlane.f32.xlu0 %v3846
      %v5544 = vpop.xlane.xlu0 %5543
      %5545 = vmax.xlane.f32.xlu0 %v3849
      %v5546 = vpop.xlane.xlu0 %5545
      %5547 = vmax.xlane.f32.xlu0 %v3852
      %v5548 = vpop.xlane.xlu0 %5547
      %5549 = vmax.xlane.f32.xlu0 %v3855
      %v5550 = vpop.xlane.xlu0 %5549
      %5551 = vmax.xlane.f32.xlu0 %v3858
      %v5552 = vpop.xlane.xlu0 %5551
      %5553 = vmax.xlane.f32.xlu0 %v3861
      %v5554 = vpop.xlane.xlu0 %5553
      %5555 = vmax.xlane.f32.xlu0 %v3864
      %v5556 = vpop.xlane.xlu0 %5555
      %5557 = vmax.xlane.f32.xlu0 %v3867
      %v5558 = vpop.xlane.xlu0 %5557
      %5559 = vmax.xlane.f32.xlu0 %v3870
      %v5560 = vpop.xlane.xlu0 %5559
      %5561 = vmax.xlane.f32.xlu0 %v3873
      %v5562 = vpop.xlane.xlu0 %5561
      %5563 = vmax.xlane.f32.xlu0 %v3876
      %v5564 = vpop.xlane.xlu0 %5563
      %5565 = vmax.xlane.f32.xlu0 %v3879
      %v5566 = vpop.xlane.xlu0 %5565
      %5567 = vmax.xlane.f32.xlu0 %v3882
      %v5568 = vpop.xlane.xlu0 %5567
      %5569 = vmax.xlane.f32.xlu0 %v3885
      %v5570 = vpop.xlane.xlu0 %5569
      %5571 = vmax.xlane.f32.xlu0 %v3888
      %v5572 = vpop.xlane.xlu0 %5571
      %5573 = vmax.xlane.f32.xlu0 %v3891
      %v5574 = vpop.xlane.xlu0 %5573
      %5575 = vmax.xlane.f32.xlu0 %v3894
      %v5576 = vpop.xlane.xlu0 %5575
      %5577 = vmax.xlane.f32.xlu0 %v3897
      %v5578 = vpop.xlane.xlu0 %5577
      %5579 = vmax.xlane.f32.xlu0 %v3900
      %v5580 = vpop.xlane.xlu0 %5579
      %5581 = vmax.xlane.f32.xlu0 %v3903
      %v5582 = vpop.xlane.xlu0 %5581
      %5583 = vmax.xlane.f32.xlu0 %v3906
      %v5584 = vpop.xlane.xlu0 %5583
      %5585 = vmax.xlane.f32.xlu0 %v3909
      %v5586 = vpop.xlane.xlu0 %5585
      %5587 = vmax.xlane.f32.xlu0 %v3912
      %v5588 = vpop.xlane.xlu0 %5587
      %5589 = vmax.xlane.f32.xlu0 %v3915
      %v5590 = vpop.xlane.xlu0 %5589
      %5591 = vmax.xlane.f32.xlu0 %v3918
      %v5592 = vpop.xlane.xlu0 %5591
      %5593 = vmax.xlane.f32.xlu0 %v3921
      %v5594 = vpop.xlane.xlu0 %5593
      %5595 = vmax.xlane.f32.xlu0 %v3924
      %v5596 = vpop.xlane.xlu0 %5595
      %5597 = vmax.xlane.f32.xlu0 %v3927
      %v5598 = vpop.xlane.xlu0 %5597
      %5599 = vmax.xlane.f32.xlu0 %v3930
      %v5600 = vpop.xlane.xlu0 %5599
      %v5601 = vld [vmem:[%s304] sm:$0xff]
      %v5602 = vld [vmem:[%s304 + $0x8] sm:$0xff]
      %v5603 = vld [vmem:[%s304 + $0x10] sm:$0xff]
      %v5604 = vld [vmem:[%s304 + $0x18] sm:$0xff]
      %v5605 = vld [vmem:[%s304 + $0x20] sm:$0xff]
      %v5606 = vld [vmem:[%s304 + $0x28] sm:$0xff]
      %v5607 = vld [vmem:[%s304 + $0x30] sm:$0xff]
      %v5608 = vld [vmem:[%s304 + $0x38] sm:$0xff]
      %v5609 = vld [vmem:[%s304 + $0x40] sm:$0xff]
      %v5610 = vld [vmem:[%s304 + $0x48] sm:$0xff]
      %v5611 = vld [vmem:[%s304 + $0x50] sm:$0xff]
      %v5612 = vld [vmem:[%s304 + $0x58] sm:$0xff]
      %v5613 = vld [vmem:[%s304 + $0x60] sm:$0xff]
      %v5614 = vld [vmem:[%s304 + $0x68] sm:$0xff]
      %v5615 = vld [vmem:[%s304 + $0x70] sm:$0xff]
      %v5616 = vld [vmem:[%s304 + $0x78] sm:$0xff]
      %v5617 = vld [vmem:[%s304 + $0x80] sm:$0xff]
      %v5618 = vld [vmem:[%s304 + $0x88] sm:$0xff]
      %v5619 = vld [vmem:[%s304 + $0x90] sm:$0xff]
      %v5620 = vld [vmem:[%s304 + $0x98] sm:$0xff]
      %v5621 = vld [vmem:[%s304 + $0xa0] sm:$0xff]
      %v5622 = vld [vmem:[%s304 + $0xa8] sm:$0xff]
      %v5623 = vld [vmem:[%s304 + $0xb0] sm:$0xff]
      %v5624 = vld [vmem:[%s304 + $0xb8] sm:$0xff]
      %v5625 = vld [vmem:[%s304 + $0xc0] sm:$0xff]
      %v5626 = vld [vmem:[%s304 + $0xc8] sm:$0xff]
      %v5627 = vld [vmem:[%s304 + $0xd0] sm:$0xff]
      %v5628 = vld [vmem:[%s304 + $0xd8] sm:$0xff]
      %v5629 = vld [vmem:[%s304 + $0xe0] sm:$0xff]
      %v5630 = vld [vmem:[%s304 + $0xe8] sm:$0xff]
      %v5631 = vld [vmem:[%s304 + $0xf0] sm:$0xff]
      %v5632 = vld [vmem:[%s304 + $0xf8] sm:$0xff]
      %v5633 = vld [vmem:[%s304 + $0x100] sm:$0xff]
      %v5634 = vld [vmem:[%s304 + $0x108] sm:$0xff]
      %v5635 = vld [vmem:[%s304 + $0x110] sm:$0xff]
      %v5636 = vld [vmem:[%s304 + $0x118] sm:$0xff]
      %v5637 = vld [vmem:[%s304 + $0x120] sm:$0xff]
      %v5638 = vld [vmem:[%s304 + $0x128] sm:$0xff]
      %v5639 = vld [vmem:[%s304 + $0x130] sm:$0xff]
      %v5640 = vld [vmem:[%s304 + $0x138] sm:$0xff]
      %v5641 = vld [vmem:[%s304 + $0x140] sm:$0xff]
      %v5642 = vld [vmem:[%s304 + $0x148] sm:$0xff]
      %v5643 = vld [vmem:[%s304 + $0x150] sm:$0xff]
      %v5644 = vld [vmem:[%s304 + $0x158] sm:$0xff]
      %v5645 = vld [vmem:[%s304 + $0x160] sm:$0xff]
      %v5646 = vld [vmem:[%s304 + $0x168] sm:$0xff]
      %v5647 = vld [vmem:[%s304 + $0x170] sm:$0xff]
      %v5648 = vld [vmem:[%s304 + $0x178] sm:$0xff]
      %v5649 = vld [vmem:[%s304 + $0x180] sm:$0xff]
      %v5650 = vld [vmem:[%s304 + $0x188] sm:$0xff]
      %v5651 = vld [vmem:[%s304 + $0x190] sm:$0xff]
      %v5652 = vld [vmem:[%s304 + $0x198] sm:$0xff]
      %v5653 = vld [vmem:[%s304 + $0x1a0] sm:$0xff]
      %v5654 = vld [vmem:[%s304 + $0x1a8] sm:$0xff]
      %v5655 = vld [vmem:[%s304 + $0x1b0] sm:$0xff]
      %v5656 = vld [vmem:[%s304 + $0x1b8] sm:$0xff]
      %v5657 = vld [vmem:[%s304 + $0x1c0] sm:$0xff]
      %v5658 = vld [vmem:[%s304 + $0x1c8] sm:$0xff]
      %v5659 = vld [vmem:[%s304 + $0x1d0] sm:$0xff]
      %v5660 = vld [vmem:[%s304 + $0x1d8] sm:$0xff]
      %v5661 = vld [vmem:[%s304 + $0x1e0] sm:$0xff]
      %v5662 = vld [vmem:[%s304 + $0x1e8] sm:$0xff]
      %v5663 = vld [vmem:[%s304 + $0x1f0] sm:$0xff]
      %v5664 = vld [vmem:[%s304 + $0x1f8] sm:$0xff]
      %v5665 = vld [vmem:[%s304 + $0x200] sm:$0xff]
      %v5666 = vld [vmem:[%s304 + $0x208] sm:$0xff]
      %v5667 = vld [vmem:[%s304 + $0x210] sm:$0xff]
      %v5668 = vld [vmem:[%s304 + $0x218] sm:$0xff]
      %v5669 = vld [vmem:[%s304 + $0x220] sm:$0xff]
      %v5670 = vld [vmem:[%s304 + $0x228] sm:$0xff]
      %v5671 = vld [vmem:[%s304 + $0x230] sm:$0xff]
      %v5672 = vld [vmem:[%s304 + $0x238] sm:$0xff]
      %v5673 = vld [vmem:[%s304 + $0x240] sm:$0xff]
      %v5674 = vld [vmem:[%s304 + $0x248] sm:$0xff]
      %v5675 = vld [vmem:[%s304 + $0x250] sm:$0xff]
      %v5676 = vld [vmem:[%s304 + $0x258] sm:$0xff]
      %v5677 = vld [vmem:[%s304 + $0x260] sm:$0xff]
      %v5678 = vld [vmem:[%s304 + $0x268] sm:$0xff]
      %v5679 = vld [vmem:[%s304 + $0x270] sm:$0xff]
      %v5680 = vld [vmem:[%s304 + $0x278] sm:$0xff]
      %v5681 = vld [vmem:[%s304 + $0x280] sm:$0xff]
      %v5682 = vld [vmem:[%s304 + $0x288] sm:$0xff]
      %v5683 = vld [vmem:[%s304 + $0x290] sm:$0xff]
      %v5684 = vld [vmem:[%s304 + $0x298] sm:$0xff]
      %v5685 = vld [vmem:[%s304 + $0x2a0] sm:$0xff]
      %v5686 = vld [vmem:[%s304 + $0x2a8] sm:$0xff]
      %v5687 = vld [vmem:[%s304 + $0x2b0] sm:$0xff]
      %v5688 = vld [vmem:[%s304 + $0x2b8] sm:$0xff]
      %v5689 = vld [vmem:[%s304 + $0x2c0] sm:$0xff]
      %v5690 = vld [vmem:[%s304 + $0x2c8] sm:$0xff]
      %v5691 = vld [vmem:[%s304 + $0x2d0] sm:$0xff]
      %v5692 = vld [vmem:[%s304 + $0x2d8] sm:$0xff]
      %v5693 = vld [vmem:[%s304 + $0x2e0] sm:$0xff]
      %v5694 = vld [vmem:[%s304 + $0x2e8] sm:$0xff]
      %v5695 = vld [vmem:[%s304 + $0x2f0] sm:$0xff]
      %v5696 = vld [vmem:[%s304 + $0x2f8] sm:$0xff]
      %v5697 = vld [vmem:[%s304 + $0x300] sm:$0xff]
      %v5698 = vld [vmem:[%s304 + $0x308] sm:$0xff]
      %v5699 = vld [vmem:[%s304 + $0x310] sm:$0xff]
      %v5700 = vld [vmem:[%s304 + $0x318] sm:$0xff]
      %v5701 = vld [vmem:[%s304 + $0x320] sm:$0xff]
      %v5702 = vld [vmem:[%s304 + $0x328] sm:$0xff]
      %v5703 = vld [vmem:[%s304 + $0x330] sm:$0xff]
      %v5704 = vld [vmem:[%s304 + $0x338] sm:$0xff]
      %v5705 = vld [vmem:[%s304 + $0x340] sm:$0xff]
      %v5706 = vld [vmem:[%s304 + $0x348] sm:$0xff]
      %v5707 = vld [vmem:[%s304 + $0x350] sm:$0xff]
      %v5708 = vld [vmem:[%s304 + $0x358] sm:$0xff]
      %v5709 = vld [vmem:[%s304 + $0x360] sm:$0xff]
      %v5710 = vld [vmem:[%s304 + $0x368] sm:$0xff]
      %v5711 = vld [vmem:[%s304 + $0x370] sm:$0xff]
      %v5712 = vld [vmem:[%s304 + $0x378] sm:$0xff]
      %v5713 = vld [vmem:[%s304 + $0x380] sm:$0xff]
      %v5714 = vld [vmem:[%s304 + $0x388] sm:$0xff]
      %v5715 = vld [vmem:[%s304 + $0x390] sm:$0xff]
      %v5716 = vld [vmem:[%s304 + $0x398] sm:$0xff]
      %v5717 = vld [vmem:[%s304 + $0x3a0] sm:$0xff]
      %v5718 = vld [vmem:[%s304 + $0x3a8] sm:$0xff]
      %v5719 = vld [vmem:[%s304 + $0x3b0] sm:$0xff]
      %v5720 = vld [vmem:[%s304 + $0x3b8] sm:$0xff]
      %v5721 = vld [vmem:[%s304 + $0x3c0] sm:$0xff]
      %v5722 = vld [vmem:[%s304 + $0x3c8] sm:$0xff]
      %v5723 = vld [vmem:[%s304 + $0x3d0] sm:$0xff]
      %v5724 = vld [vmem:[%s304 + $0x3d8] sm:$0xff]
      %v5725 = vld [vmem:[%s304 + $0x3e0] sm:$0xff]
      %v5726 = vld [vmem:[%s304 + $0x3e8] sm:$0xff]
      %v5727 = vld [vmem:[%s304 + $0x3f0] sm:$0xff]
      %v5728 = vld [vmem:[%s304 + $0x3f8] sm:$0xff]
      %v5729 = vmax.f32 %v5601, %v5346
      %v5730 = vmax.f32 %v5602, %v5348
      %v5731 = vmax.f32 %v5603, %v5350
      %v5732 = vmax.f32 %v5604, %v5352
      %v5733 = vmax.f32 %v5605, %v5354
      %v5734 = vmax.f32 %v5606, %v5356
      %v5735 = vmax.f32 %v5607, %v5358
      %v5736 = vmax.f32 %v5608, %v5360
      %v5737 = vmax.f32 %v5609, %v5362
      %v5738 = vmax.f32 %v5610, %v5364
      %v5739 = vmax.f32 %v5611, %v5366
      %v5740 = vmax.f32 %v5612, %v5368
      %v5741 = vmax.f32 %v5613, %v5370
      %v5742 = vmax.f32 %v5614, %v5372
      %v5743 = vmax.f32 %v5615, %v5374
      %v5744 = vmax.f32 %v5616, %v5376
      %v5745 = vmax.f32 %v5617, %v5378
      %v5746 = vmax.f32 %v5618, %v5380
      %v5747 = vmax.f32 %v5619, %v5382
      %v5748 = vmax.f32 %v5620, %v5384
      %v5749 = vmax.f32 %v5621, %v5386
      %v5750 = vmax.f32 %v5622, %v5388
      %v5751 = vmax.f32 %v5623, %v5390
      %v5752 = vmax.f32 %v5624, %v5392
      %v5753 = vmax.f32 %v5625, %v5394
      %v5754 = vmax.f32 %v5626, %v5396
      %v5755 = vmax.f32 %v5627, %v5398
      %v5756 = vmax.f32 %v5628, %v5400
      %v5757 = vmax.f32 %v5629, %v5402
      %v5758 = vmax.f32 %v5630, %v5404
      %v5759 = vmax.f32 %v5631, %v5406
      %v5760 = vmax.f32 %v5632, %v5408
      %v5761 = vmax.f32 %v5633, %v5410
      %v5762 = vmax.f32 %v5634, %v5412
      %v5763 = vmax.f32 %v5635, %v5414
      %v5764 = vmax.f32 %v5636, %v5416
      %v5765 = vmax.f32 %v5637, %v5418
      %v5766 = vmax.f32 %v5638, %v5420
      %v5767 = vmax.f32 %v5639, %v5422
      %v5768 = vmax.f32 %v5640, %v5424
      %v5769 = vmax.f32 %v5641, %v5426
      %v5770 = vmax.f32 %v5642, %v5428
      %v5771 = vmax.f32 %v5643, %v5430
      %v5772 = vmax.f32 %v5644, %v5432
      %v5773 = vmax.f32 %v5645, %v5434
      %v5774 = vmax.f32 %v5646, %v5436
      %v5775 = vmax.f32 %v5647, %v5438
      %v5776 = vmax.f32 %v5648, %v5440
      %v5777 = vmax.f32 %v5649, %v5442
      %v5778 = vmax.f32 %v5650, %v5444
      %v5779 = vmax.f32 %v5651, %v5446
      %v5780 = vmax.f32 %v5652, %v5448
      %v5781 = vmax.f32 %v5653, %v5450
      %v5782 = vmax.f32 %v5654, %v5452
      %v5783 = vmax.f32 %v5655, %v5454
      %v5784 = vmax.f32 %v5656, %v5456
      %v5785 = vmax.f32 %v5657, %v5458
      %v5786 = vmax.f32 %v5658, %v5460
      %v5787 = vmax.f32 %v5659, %v5462
      %v5788 = vmax.f32 %v5660, %v5464
      %v5789 = vmax.f32 %v5661, %v5466
      %v5790 = vmax.f32 %v5662, %v5468
      %v5791 = vmax.f32 %v5663, %v5470
      %v5792 = vmax.f32 %v5664, %v5472
      %v5793 = vmax.f32 %v5665, %v5474
      %v5794 = vmax.f32 %v5666, %v5476
      %v5795 = vmax.f32 %v5667, %v5478
      %v5796 = vmax.f32 %v5668, %v5480
      %v5797 = vmax.f32 %v5669, %v5482
      %v5798 = vmax.f32 %v5670, %v5484
      %v5799 = vmax.f32 %v5671, %v5486
      %v5800 = vmax.f32 %v5672, %v5488
      %v5801 = vmax.f32 %v5673, %v5490
      %v5802 = vmax.f32 %v5674, %v5492
      %v5803 = vmax.f32 %v5675, %v5494
      %v5804 = vmax.f32 %v5676, %v5496
      %v5805 = vmax.f32 %v5677, %v5498
      %v5806 = vmax.f32 %v5678, %v5500
      %v5807 = vmax.f32 %v5679, %v5502
      %v5808 = vmax.f32 %v5680, %v5504
      %v5809 = vmax.f32 %v5681, %v5506
      %v5810 = vmax.f32 %v5682, %v5508
      %v5811 = vmax.f32 %v5683, %v5510
      %v5812 = vmax.f32 %v5684, %v5512
      %v5813 = vmax.f32 %v5685, %v5514
      %v5814 = vmax.f32 %v5686, %v5516
      %v5815 = vmax.f32 %v5687, %v5518
      %v5816 = vmax.f32 %v5688, %v5520
      %v5817 = vmax.f32 %v5689, %v5522
      %v5818 = vmax.f32 %v5690, %v5524
      %v5819 = vmax.f32 %v5691, %v5526
      %v5820 = vmax.f32 %v5692, %v5528
      %v5821 = vmax.f32 %v5693, %v5530
      %v5822 = vmax.f32 %v5694, %v5532
      %v5823 = vmax.f32 %v5695, %v5534
      %v5824 = vmax.f32 %v5696, %v5536
      %v5825 = vmax.f32 %v5697, %v5538
      %v5826 = vmax.f32 %v5698, %v5540
      %v5827 = vmax.f32 %v5699, %v5542
      %v5828 = vmax.f32 %v5700, %v5544
      %v5829 = vmax.f32 %v5701, %v5546
      %v5830 = vmax.f32 %v5702, %v5548
      %v5831 = vmax.f32 %v5703, %v5550
      %v5832 = vmax.f32 %v5704, %v5552
      %v5833 = vmax.f32 %v5705, %v5554
      %v5834 = vmax.f32 %v5706, %v5556
      %v5835 = vmax.f32 %v5707, %v5558
      %v5836 = vmax.f32 %v5708, %v5560
      %v5837 = vmax.f32 %v5709, %v5562
      %v5838 = vmax.f32 %v5710, %v5564
      %v5839 = vmax.f32 %v5711, %v5566
      %v5840 = vmax.f32 %v5712, %v5568
      %v5841 = vmax.f32 %v5713, %v5570
      %v5842 = vmax.f32 %v5714, %v5572
      %v5843 = vmax.f32 %v5715, %v5574
      %v5844 = vmax.f32 %v5716, %v5576
      %v5845 = vmax.f32 %v5717, %v5578
      %v5846 = vmax.f32 %v5718, %v5580
      %v5847 = vmax.f32 %v5719, %v5582
      %v5848 = vmax.f32 %v5720, %v5584
      %v5849 = vmax.f32 %v5721, %v5586
      %v5850 = vmax.f32 %v5722, %v5588
      %v5851 = vmax.f32 %v5723, %v5590
      %v5852 = vmax.f32 %v5724, %v5592
      %v5853 = vmax.f32 %v5725, %v5594
      %v5854 = vmax.f32 %v5726, %v5596
      %v5855 = vmax.f32 %v5727, %v5598
      %v5856 = vmax.f32 %v5728, %v5600
      %vm5857 = vcmask 23568
      %5858 = vst.msk [vmem:[%s304] sm:$0xff] %vm5857, %v5729
      %5859 = vst.msk [vmem:[%s304 + $0x8] sm:$0xff] %vm5857, %v5730
      %5860 = vst.msk [vmem:[%s304 + $0x10] sm:$0xff] %vm5857, %v5731
      %5861 = vst.msk [vmem:[%s304 + $0x18] sm:$0xff] %vm5857, %v5732
      %5862 = vst.msk [vmem:[%s304 + $0x20] sm:$0xff] %vm5857, %v5733
      %5863 = vst.msk [vmem:[%s304 + $0x28] sm:$0xff] %vm5857, %v5734
      %5864 = vst.msk [vmem:[%s304 + $0x30] sm:$0xff] %vm5857, %v5735
      %5865 = vst.msk [vmem:[%s304 + $0x38] sm:$0xff] %vm5857, %v5736
      %5866 = vst.msk [vmem:[%s304 + $0x40] sm:$0xff] %vm5857, %v5737
      %5867 = vst.msk [vmem:[%s304 + $0x48] sm:$0xff] %vm5857, %v5738
      %5868 = vst.msk [vmem:[%s304 + $0x50] sm:$0xff] %vm5857, %v5739
      %5869 = vst.msk [vmem:[%s304 + $0x58] sm:$0xff] %vm5857, %v5740
      %5870 = vst.msk [vmem:[%s304 + $0x60] sm:$0xff] %vm5857, %v5741
      %5871 = vst.msk [vmem:[%s304 + $0x68] sm:$0xff] %vm5857, %v5742
      %5872 = vst.msk [vmem:[%s304 + $0x70] sm:$0xff] %vm5857, %v5743
      %5873 = vst.msk [vmem:[%s304 + $0x78] sm:$0xff] %vm5857, %v5744
      %5874 = vst.msk [vmem:[%s304 + $0x80] sm:$0xff] %vm5857, %v5745
      %5875 = vst.msk [vmem:[%s304 + $0x88] sm:$0xff] %vm5857, %v5746
      %5876 = vst.msk [vmem:[%s304 + $0x90] sm:$0xff] %vm5857, %v5747
      %5877 = vst.msk [vmem:[%s304 + $0x98] sm:$0xff] %vm5857, %v5748
      %5878 = vst.msk [vmem:[%s304 + $0xa0] sm:$0xff] %vm5857, %v5749
      %5879 = vst.msk [vmem:[%s304 + $0xa8] sm:$0xff] %vm5857, %v5750
      %5880 = vst.msk [vmem:[%s304 + $0xb0] sm:$0xff] %vm5857, %v5751
      %5881 = vst.msk [vmem:[%s304 + $0xb8] sm:$0xff] %vm5857, %v5752
      %5882 = vst.msk [vmem:[%s304 + $0xc0] sm:$0xff] %vm5857, %v5753
      %5883 = vst.msk [vmem:[%s304 + $0xc8] sm:$0xff] %vm5857, %v5754
      %5884 = vst.msk [vmem:[%s304 + $0xd0] sm:$0xff] %vm5857, %v5755
      %5885 = vst.msk [vmem:[%s304 + $0xd8] sm:$0xff] %vm5857, %v5756
      %5886 = vst.msk [vmem:[%s304 + $0xe0] sm:$0xff] %vm5857, %v5757
      %5887 = vst.msk [vmem:[%s304 + $0xe8] sm:$0xff] %vm5857, %v5758
      %5888 = vst.msk [vmem:[%s304 + $0xf0] sm:$0xff] %vm5857, %v5759
      %5889 = vst.msk [vmem:[%s304 + $0xf8] sm:$0xff] %vm5857, %v5760
      %5890 = vst.msk [vmem:[%s304 + $0x100] sm:$0xff] %vm5857, %v5761
      %5891 = vst.msk [vmem:[%s304 + $0x108] sm:$0xff] %vm5857, %v5762
      %5892 = vst.msk [vmem:[%s304 + $0x110] sm:$0xff] %vm5857, %v5763
      %5893 = vst.msk [vmem:[%s304 + $0x118] sm:$0xff] %vm5857, %v5764
      %5894 = vst.msk [vmem:[%s304 + $0x120] sm:$0xff] %vm5857, %v5765
      %5895 = vst.msk [vmem:[%s304 + $0x128] sm:$0xff] %vm5857, %v5766
      %5896 = vst.msk [vmem:[%s304 + $0x130] sm:$0xff] %vm5857, %v5767
      %5897 = vst.msk [vmem:[%s304 + $0x138] sm:$0xff] %vm5857, %v5768
      %5898 = vst.msk [vmem:[%s304 + $0x140] sm:$0xff] %vm5857, %v5769
      %5899 = vst.msk [vmem:[%s304 + $0x148] sm:$0xff] %vm5857, %v5770
      %5900 = vst.msk [vmem:[%s304 + $0x150] sm:$0xff] %vm5857, %v5771
      %5901 = vst.msk [vmem:[%s304 + $0x158] sm:$0xff] %vm5857, %v5772
      %5902 = vst.msk [vmem:[%s304 + $0x160] sm:$0xff] %vm5857, %v5773
      %5903 = vst.msk [vmem:[%s304 + $0x168] sm:$0xff] %vm5857, %v5774
      %5904 = vst.msk [vmem:[%s304 + $0x170] sm:$0xff] %vm5857, %v5775
      %5905 = vst.msk [vmem:[%s304 + $0x178] sm:$0xff] %vm5857, %v5776
      %5906 = vst.msk [vmem:[%s304 + $0x180] sm:$0xff] %vm5857, %v5777
      %5907 = vst.msk [vmem:[%s304 + $0x188] sm:$0xff] %vm5857, %v5778
      %5908 = vst.msk [vmem:[%s304 + $0x190] sm:$0xff] %vm5857, %v5779
      %5909 = vst.msk [vmem:[%s304 + $0x198] sm:$0xff] %vm5857, %v5780
      %5910 = vst.msk [vmem:[%s304 + $0x1a0] sm:$0xff] %vm5857, %v5781
      %5911 = vst.msk [vmem:[%s304 + $0x1a8] sm:$0xff] %vm5857, %v5782
      %5912 = vst.msk [vmem:[%s304 + $0x1b0] sm:$0xff] %vm5857, %v5783
      %5913 = vst.msk [vmem:[%s304 + $0x1b8] sm:$0xff] %vm5857, %v5784
      %5914 = vst.msk [vmem:[%s304 + $0x1c0] sm:$0xff] %vm5857, %v5785
      %5915 = vst.msk [vmem:[%s304 + $0x1c8] sm:$0xff] %vm5857, %v5786
      %5916 = vst.msk [vmem:[%s304 + $0x1d0] sm:$0xff] %vm5857, %v5787
      %5917 = vst.msk [vmem:[%s304 + $0x1d8] sm:$0xff] %vm5857, %v5788
      %5918 = vst.msk [vmem:[%s304 + $0x1e0] sm:$0xff] %vm5857, %v5789
      %5919 = vst.msk [vmem:[%s304 + $0x1e8] sm:$0xff] %vm5857, %v5790
      %5920 = vst.msk [vmem:[%s304 + $0x1f0] sm:$0xff] %vm5857, %v5791
      %5921 = vst.msk [vmem:[%s304 + $0x1f8] sm:$0xff] %vm5857, %v5792
      %5922 = vst.msk [vmem:[%s304 + $0x200] sm:$0xff] %vm5857, %v5793
      %5923 = vst.msk [vmem:[%s304 + $0x208] sm:$0xff] %vm5857, %v5794
      %5924 = vst.msk [vmem:[%s304 + $0x210] sm:$0xff] %vm5857, %v5795
      %5925 = vst.msk [vmem:[%s304 + $0x218] sm:$0xff] %vm5857, %v5796
      %5926 = vst.msk [vmem:[%s304 + $0x220] sm:$0xff] %vm5857, %v5797
      %5927 = vst.msk [vmem:[%s304 + $0x228] sm:$0xff] %vm5857, %v5798
      %5928 = vst.msk [vmem:[%s304 + $0x230] sm:$0xff] %vm5857, %v5799
      %5929 = vst.msk [vmem:[%s304 + $0x238] sm:$0xff] %vm5857, %v5800
      %5930 = vst.msk [vmem:[%s304 + $0x240] sm:$0xff] %vm5857, %v5801
      %5931 = vst.msk [vmem:[%s304 + $0x248] sm:$0xff] %vm5857, %v5802
      %5932 = vst.msk [vmem:[%s304 + $0x250] sm:$0xff] %vm5857, %v5803
      %5933 = vst.msk [vmem:[%s304 + $0x258] sm:$0xff] %vm5857, %v5804
      %5934 = vst.msk [vmem:[%s304 + $0x260] sm:$0xff] %vm5857, %v5805
      %5935 = vst.msk [vmem:[%s304 + $0x268] sm:$0xff] %vm5857, %v5806
      %5936 = vst.msk [vmem:[%s304 + $0x270] sm:$0xff] %vm5857, %v5807
      %5937 = vst.msk [vmem:[%s304 + $0x278] sm:$0xff] %vm5857, %v5808
      %5938 = vst.msk [vmem:[%s304 + $0x280] sm:$0xff] %vm5857, %v5809
      %5939 = vst.msk [vmem:[%s304 + $0x288] sm:$0xff] %vm5857, %v5810
      %5940 = vst.msk [vmem:[%s304 + $0x290] sm:$0xff] %vm5857, %v5811
      %5941 = vst.msk [vmem:[%s304 + $0x298] sm:$0xff] %vm5857, %v5812
      %5942 = vst.msk [vmem:[%s304 + $0x2a0] sm:$0xff] %vm5857, %v5813
      %5943 = vst.msk [vmem:[%s304 + $0x2a8] sm:$0xff] %vm5857, %v5814
      %5944 = vst.msk [vmem:[%s304 + $0x2b0] sm:$0xff] %vm5857, %v5815
      %5945 = vst.msk [vmem:[%s304 + $0x2b8] sm:$0xff] %vm5857, %v5816
      %5946 = vst.msk [vmem:[%s304 + $0x2c0] sm:$0xff] %vm5857, %v5817
      %5947 = vst.msk [vmem:[%s304 + $0x2c8] sm:$0xff] %vm5857, %v5818
      %5948 = vst.msk [vmem:[%s304 + $0x2d0] sm:$0xff] %vm5857, %v5819
      %5949 = vst.msk [vmem:[%s304 + $0x2d8] sm:$0xff] %vm5857, %v5820
      %5950 = vst.msk [vmem:[%s304 + $0x2e0] sm:$0xff] %vm5857, %v5821
      %5951 = vst.msk [vmem:[%s304 + $0x2e8] sm:$0xff] %vm5857, %v5822
      %5952 = vst.msk [vmem:[%s304 + $0x2f0] sm:$0xff] %vm5857, %v5823
      %5953 = vst.msk [vmem:[%s304 + $0x2f8] sm:$0xff] %vm5857, %v5824
      %5954 = vst.msk [vmem:[%s304 + $0x300] sm:$0xff] %vm5857, %v5825
      %5955 = vst.msk [vmem:[%s304 + $0x308] sm:$0xff] %vm5857, %v5826
      %5956 = vst.msk [vmem:[%s304 + $0x310] sm:$0xff] %vm5857, %v5827
      %5957 = vst.msk [vmem:[%s304 + $0x318] sm:$0xff] %vm5857, %v5828
      %5958 = vst.msk [vmem:[%s304 + $0x320] sm:$0xff] %vm5857, %v5829
      %5959 = vst.msk [vmem:[%s304 + $0x328] sm:$0xff] %vm5857, %v5830
      %5960 = vst.msk [vmem:[%s304 + $0x330] sm:$0xff] %vm5857, %v5831
      %5961 = vst.msk [vmem:[%s304 + $0x338] sm:$0xff] %vm5857, %v5832
      %5962 = vst.msk [vmem:[%s304 + $0x340] sm:$0xff] %vm5857, %v5833
      %5963 = vst.msk [vmem:[%s304 + $0x348] sm:$0xff] %vm5857, %v5834
      %5964 = vst.msk [vmem:[%s304 + $0x350] sm:$0xff] %vm5857, %v5835
      %5965 = vst.msk [vmem:[%s304 + $0x358] sm:$0xff] %vm5857, %v5836
      %5966 = vst.msk [vmem:[%s304 + $0x360] sm:$0xff] %vm5857, %v5837
      %5967 = vst.msk [vmem:[%s304 + $0x368] sm:$0xff] %vm5857, %v5838
      %5968 = vst.msk [vmem:[%s304 + $0x370] sm:$0xff] %vm5857, %v5839
      %5969 = vst.msk [vmem:[%s304 + $0x378] sm:$0xff] %vm5857, %v5840
      %5970 = vst.msk [vmem:[%s304 + $0x380] sm:$0xff] %vm5857, %v5841
      %5971 = vst.msk [vmem:[%s304 + $0x388] sm:$0xff] %vm5857, %v5842
      %5972 = vst.msk [vmem:[%s304 + $0x390] sm:$0xff] %vm5857, %v5843
      %5973 = vst.msk [vmem:[%s304 + $0x398] sm:$0xff] %vm5857, %v5844
      %5974 = vst.msk [vmem:[%s304 + $0x3a0] sm:$0xff] %vm5857, %v5845
      %5975 = vst.msk [vmem:[%s304 + $0x3a8] sm:$0xff] %vm5857, %v5846
      %5976 = vst.msk [vmem:[%s304 + $0x3b0] sm:$0xff] %vm5857, %v5847
      %5977 = vst.msk [vmem:[%s304 + $0x3b8] sm:$0xff] %vm5857, %v5848
      %5978 = vst.msk [vmem:[%s304 + $0x3c0] sm:$0xff] %vm5857, %v5849
      %5979 = vst.msk [vmem:[%s304 + $0x3c8] sm:$0xff] %vm5857, %v5850
      %5980 = vst.msk [vmem:[%s304 + $0x3d0] sm:$0xff] %vm5857, %v5851
      %5981 = vst.msk [vmem:[%s304 + $0x3d8] sm:$0xff] %vm5857, %v5852
      %5982 = vst.msk [vmem:[%s304 + $0x3e0] sm:$0xff] %vm5857, %v5853
      %5983 = vst.msk [vmem:[%s304 + $0x3e8] sm:$0xff] %vm5857, %v5854
      %5984 = vst.msk [vmem:[%s304 + $0x3f0] sm:$0xff] %vm5857, %v5855
      %5985 = vst.msk [vmem:[%s304 + $0x3f8] sm:$0xff] %vm5857, %v5856
      %p5986 = scmp.lt.s32.totalorder %s22, 1
      %s5987 = scalar_select %p5986, %s22, 1
      %s5988 = smul.addr %s5987, 128
      %s5989 = smul.addr %s5988, 8
      %s5990 = scalar_lea.vmem %s7, %s5989
      // Predicated region
      $region53: #{transform_forward.3} parent=47 // pred_check
        %p5991 = pneg %p202
      $region54: #{transform_forward.3} parent=47 // pred_check_branch
        %5993 = sbr.rel (%p5991) target = $region56
      $region55: #{transform_forward.3} parent=47 // pred_region
        _
      $region56: #{transform_forward.3} parent=47 // pred_fallthru
        _
    $region48: #{transform_forward.3} parent=5 // pred_fallthru
      _
    %p5994 = scmp.le.s32.totalorder 2, %s13
    // Predicated region
    $region57: #{transform_forward.3} parent=5 // pred_check
      %p5995 = pneg %p5994
    $region58: #{transform_forward.3} parent=5 // pred_check_branch
      %5997 = sbr.rel (%p5995) target = $region60
    $region59: #{transform_forward.3} parent=5 // pred_region
      %s5998 = ssub.s32 %s13, 2
      // Predicated region
      $region61: #{transform_forward.3} parent=59 // pred_check
        %p5999 = pneg %p208
      $region62: #{transform_forward.3} parent=59 // pred_check_branch
        %6001 = sbr.rel (%p5999) target = $region64
      $region63: #{transform_forward.3} parent=59 // pred_region
        %p6002 = scmp.lt.s32.totalorder %s24, 1
        %s6003 = scalar_select %p6002, %s24, 1
        %s6004 = smul.addr %s6003, 128
        %s6005 = smul.addr %s6004, 8
        %s6006 = scalar_lea.vmem %s7, %s6005
      $region64: #{transform_forward.3} parent=59 // pred_fallthru
        _
    $region60: #{transform_forward.3} parent=5 // pred_fallthru
      _
  $region6: #{transform_forward.3} parent=0 // loop_footer
    %s17 = sadd.s32 1, %s13
  $region7: #{transform_forward.3} parent=0 // loop_footer_branch
    %12 = sbr.rel target = $region3
  $region8: #{transform_forward.3} parent=0 // loop_exit
    _

</llo_original>
